<compile_context>
chip_gen: v5e
topology: v5e:2x2
jax: 0.10.0
libtpu: 0.0.40
codegen_flags: <defaults>
</compile_context>

<pallas_src>
import math
import functools

import jax
import jax.numpy as jnp
from jax.experimental import pallas as pl
from jax.experimental.pallas import tpu as pltpu


# ----------------------------------------------------------------------------
# Constants
# ----------------------------------------------------------------------------
_Q_DIM = 144 + 3               # 147 pose outputs
_SM_DIM = 29 * 3 + 69 + 6      # 162 spring-mass outputs
_N_FORCE = 29 * 3              # first 87 channels get tanh*500+510
_OUT_PAD = 256                 # lane-dense padded output width
_SQRT1_2 = 1.0 / math.sqrt(2.0)


# ----------------------------------------------------------------------------
# In-kernel math helpers (traced inside the Pallas kernel)
# ----------------------------------------------------------------------------
def _erf(x):
    """Abramowitz & Stegun 7.1.26 erf approximation (|abs err| < 1.5e-7)."""
    a1, a2, a3, a4, a5 = (0.254829592, -0.284496736, 1.421413741,
                          -1.453152027, 1.061405429)
    p = 0.3275911
    sign = jnp.where(x < 0.0, -1.0, 1.0)
    ax = jnp.abs(x)
    t = 1.0 / (1.0 + p * ax)
    poly = ((((a5 * t + a4) * t + a3) * t + a2) * t + a1) * t
    return sign * (1.0 - poly * jnp.exp(-ax * ax))


def _gelu(x):
    return 0.5 * x * (1.0 + _erf(x * _SQRT1_2))


def _layernorm(x, g, b, eps=1e-5):
    mean = jnp.mean(x, axis=-1, keepdims=True)
    var = jnp.mean(jnp.square(x - mean), axis=-1, keepdims=True)
    return (x - mean) * jax.lax.rsqrt(var + eps) * g + b


def _attn_core(q, k, v, wo, bo, *, nhead, mask=None):
    """Per-head softmax attention on full-width Q/K/V values.

    q: [Sq, D], k/v: [Sk, D], wo: [D, D], bo: [1, D].  Per-head lane slices
    (static, Dh wide); output projection accumulated from sublane-aligned row
    slices of Wo (== concat-heads @ Wo)."""
    Dh = q.shape[-1] // nhead
    scale = 1.0 / math.sqrt(Dh)
    acc = None
    for h in range(nhead):                     # static unroll, VMEM-resident
        lo = h * Dh
        qh = q[:, lo:lo + Dh]
        kh = k[:, lo:lo + Dh]
        vh = v[:, lo:lo + Dh]
        s = jnp.dot(qh, kh.T, preferred_element_type=jnp.float32) * scale
        if mask is not None:
            s = s + mask
        s = s - jnp.max(s, axis=-1, keepdims=True)
        p = jnp.exp(s)
        p = p * pl.reciprocal(jnp.sum(p, axis=-1, keepdims=True), approx=True)
        ctx = jnp.dot(p, vh, preferred_element_type=jnp.float32)
        proj = jnp.dot(ctx, wo[lo:lo + Dh, :],
                       preferred_element_type=jnp.float32)
        acc = proj if acc is None else acc + proj
    return acc + bo


def _self_attn(x, wqkv, bqkv, wo, bo, *, nhead, mask=None):
    D = x.shape[-1]
    qkv = jnp.dot(x, wqkv, preferred_element_type=jnp.float32) + bqkv
    return _attn_core(qkv[:, :D], qkv[:, D:2 * D], qkv[:, 2 * D:],
                      wo, bo, nhead=nhead, mask=mask)


def _cross_attn(x, mem, wq, bq, wkv, bkv, wo, bo, *, nhead):
    D = x.shape[-1]
    q = jnp.dot(x, wq, preferred_element_type=jnp.float32) + bq
    kv = jnp.dot(mem, wkv, preferred_element_type=jnp.float32) + bkv
    return _attn_core(q, kv[:, :D], kv[:, D:], wo, bo, nhead=nhead)


# ----------------------------------------------------------------------------
# THE fused kernel: whole PhysPT forward for one batch element
# ----------------------------------------------------------------------------
def _physpt_kernel(src_ref, tgt_ref, pe_ref,
                   emb_w1, emb_b1, emb_w2, emb_b2,
                   enc_wqkv, enc_bqkv, enc_wo,
                   enc_wf1, enc_bf1, enc_wf2, enc_vec,
                   dec_swqkv, dec_sbqkv, dec_swo,
                   dec_cwq, dec_cwkv, dec_cbkv, dec_cwo,
                   dec_wf1, dec_bf1, dec_wf2, dec_vec,
                   head_w1, head_b1, head_w2, head_b2,
                   q_out_ref, sm_out_ref,
                   *, nhead, nlayers, sqrt_d, n_force):
    pe = pe_ref[...]                                   # [S, D]
    S = pe.shape[0]

    # masks / shift matrix built once, reused across layers
    r = jax.lax.broadcasted_iota(jnp.int32, (S, S), 0)
    c = jax.lax.broadcasted_iota(jnp.int32, (S, S), 1)
    causal_neg = jnp.where(c > r, -1e30, 0.0)          # finite; no NaN risk
    shift_mat = (r == c + 1).astype(jnp.float32)       # sub-diagonal ones

    def emb_mlp(x):                                    # linear->GELU->linear
        h = _gelu(jnp.dot(x, emb_w1[...],
                          preferred_element_type=jnp.float32) + emb_b1[...])
        return (jnp.dot(h, emb_w2[...],
                        preferred_element_type=jnp.float32) + emb_b2[...])

    # ---------------- encoder ----------------
    z = emb_mlp(src_ref[...]) * sqrt_d + pe            # dropout -> identity
    for l in range(nlayers):
        vec = enc_vec[l]                               # [6, D] packed vectors
        a = _self_attn(z, enc_wqkv[l], enc_bqkv[l], enc_wo[l], vec[0:1],
                       nhead=nhead, mask=None)
        z = _layernorm(z + a, vec[1:2], vec[2:3])
        h = jnp.maximum(
            jnp.dot(z, enc_wf1[l], preferred_element_type=jnp.float32)
            + enc_bf1[l], 0.0)
        f = jnp.dot(h, enc_wf2[l],
                    preferred_element_type=jnp.float32) + vec[3:4]
        z = _layernorm(z + f, vec[4:5], vec[5:6])

    # ---------------- decoder (teacher forced, train branch) ----------------
    t = emb_mlp(tgt_ref[...])                          # [S, D]
    t = jnp.dot(shift_mat, t, preferred_element_type=jnp.float32)  # zero start
    y = t * sqrt_d + pe                                # scale AFTER shift

    for l in range(nlayers):
        vec = dec_vec[l]                               # [10, D] packed vectors
        a = _self_attn(y, dec_swqkv[l], dec_sbqkv[l], dec_swo[l], vec[0:1],
                       nhead=nhead, mask=causal_neg)
        y = _layernorm(y + a, vec[1:2], vec[2:3])
        cx = _cross_attn(y, z, dec_cwq[l], vec[3:4], dec_cwkv[l], dec_cbkv[l],
                         dec_cwo[l], vec[4:5], nhead=nhead)
        y = _layernorm(y + cx, vec[5:6], vec[6:7])
        # 2048-wide FFN: bf16 MXU operands, f32 accumulation
        h = jnp.dot(y.astype(jnp.bfloat16), dec_wf1[l],
                    preferred_element_type=jnp.float32) + dec_bf1[l]
        h = jnp.maximum(h, 0.0)
        f = jnp.dot(h.astype(jnp.bfloat16), dec_wf2[l],
                    preferred_element_type=jnp.float32) + vec[7:8]
        y = _layernorm(y + f, vec[8:9], vec[9:10])

    # ---------------- output heads (lane-dense padded to 256) ----------------
    hq = _gelu(jnp.dot(y, head_w1[0],
                       preferred_element_type=jnp.float32) + head_b1[0])
    q_out_ref[...] = (jnp.dot(hq, head_w2[0],
                              preferred_element_type=jnp.float32) + head_b2[0])

    hf = _gelu(jnp.dot(z, head_w1[1],
                       preferred_element_type=jnp.float32) + head_b1[1])
    sm = jnp.dot(hf, head_w2[1],
                 preferred_element_type=jnp.float32) + head_b2[1]
    cols = jax.lax.broadcasted_iota(jnp.int32, sm.shape, 1)
    sm_out_ref[...] = jnp.where(cols < n_force,
                                jnp.tanh(sm) * 500.0 + 510.0, sm)


# ----------------------------------------------------------------------------
# Wrapper: one pallas_call for the whole forward
# ----------------------------------------------------------------------------
def _full_spec(a):
    nd = a.ndim
    return pl.BlockSpec(a.shape, lambda b, _nd=nd: (0,) * _nd)


def _estimate_cost(cfg, B, S, weight_bytes):
    D, d_hid, FF = cfg["d_model"], cfg["d_hid"], cfg["dec_ffn"]
    f_dim, L, H = cfg["f_dim"], cfg["nlayers"], cfg["nhead"]
    Dh = D // H
    mm = lambda m, k, n: 2 * m * k * n
    self_attn = mm(S, D, 3 * D) + H * (2 * mm(S, Dh, S) + mm(S, Dh, D))
    cross_attn = (mm(S, D, D) + mm(S, D, 2 * D)
                  + H * (2 * mm(S, Dh, S) + mm(S, Dh, D)))
    per_b = 2 * (mm(S, f_dim, D) + mm(S, D, D))                     # emb MLPs
    per_b += L * (self_attn + mm(S, D, d_hid) + mm(S, d_hid, D))    # encoder
    per_b += L * (self_attn + cross_attn + mm(S, D, FF) + mm(S, FF, D))
    per_b += 2 * (mm(S, D, D) + mm(S, D, _OUT_PAD))                 # heads
    transc = B * S * (4 * L * H * S + 6 * D + _OUT_PAD + _SM_DIM)   # rough
    io_bytes = (2 * B * S * f_dim + 2 * B * S * _OUT_PAD) * 4
    return pl.CostEstimate(flops=B * per_b, transcendentals=transc,
                           bytes_accessed=weight_bytes + io_bytes)


def physpt_forward(params, src, tgt, cfg):
    S, B, f_dim = src.shape
    D, H, L = cfg["d_model"], cfg["nhead"], cfg["nlayers"]
    sqrt_d = math.sqrt(D)
    pe = params["pe"][:S]                               # [S, D]

    # batch-major layout: each grid step owns a contiguous [S, *] row block
    src_bm = jnp.transpose(src, (1, 0, 2)).reshape(B * S, f_dim)
    tgt_bm = jnp.transpose(tgt, (1, 0, 2)).reshape(B * S, f_dim)

    w = params
    weight_args = [pe,
                   w["emb_w1"], w["emb_b1"], w["emb_w2"], w["emb_b2"],
                   w["enc_wqkv"], w["enc_bqkv"], w["enc_wo"],
                   w["enc_wf1"], w["enc_bf1"], w["enc_wf2"], w["enc_vec"],
                   w["dec_swqkv"], w["dec_sbqkv"], w["dec_swo"],
                   w["dec_cwq"], w["dec_cwkv"], w["dec_cbkv"], w["dec_cwo"],
                   w["dec_wf1"], w["dec_bf1"], w["dec_wf2"], w["dec_vec"],
                   w["head_w1"], w["head_b1"], w["head_w2"], w["head_b2"]]
    weight_bytes = int(sum(a.size * a.dtype.itemsize for a in weight_args))

    in_specs = ([pl.BlockSpec((S, f_dim), lambda b: (b, 0)),
                 pl.BlockSpec((S, f_dim), lambda b: (b, 0))]
                + [_full_spec(a) for a in weight_args])

    kernel = functools.partial(_physpt_kernel, nhead=H, nlayers=L,
                               sqrt_d=sqrt_d, n_force=_N_FORCE)

    q_pad, sm_pad = pl.pallas_call(
        kernel,
        out_shape=(jax.ShapeDtypeStruct((B * S, _OUT_PAD), jnp.float32),
                   jax.ShapeDtypeStruct((B * S, _OUT_PAD), jnp.float32)),
        grid=(B,),
        in_specs=in_specs,
        out_specs=(pl.BlockSpec((S, _OUT_PAD), lambda b: (b, 0)),
                   pl.BlockSpec((S, _OUT_PAD), lambda b: (b, 0))),
        compiler_params=pltpu.CompilerParams(
            dimension_semantics=("parallel",)),
        cost_estimate=_estimate_cost(cfg, B, S, weight_bytes),
    )(src_bm, tgt_bm, *weight_args)

    # batch-major reshape == the reference's .transpose(0, 1); drop padding
    pred_q = q_pad[:, :_Q_DIM].reshape(B, S, _Q_DIM)
    pred_springmass = sm_pad[:, :_SM_DIM].reshape(B, S, _SM_DIM)
    return pred_q, pred_springmass


# ----------------------------------------------------------------------------
# Deterministic parameter initialization (stacked / packed layouts)
# ----------------------------------------------------------------------------
def positional_encoding(max_len, d_model):
    position = jnp.arange(max_len, dtype=jnp.float32)[:, None]
    div_term = jnp.exp(jnp.arange(0, d_model, 2, dtype=jnp.float32)
                       * (-math.log(10000.0) / d_model))
    pe = jnp.zeros((max_len, d_model), jnp.float32)
    pe = pe.at[:, 0::2].set(jnp.sin(position * div_term))
    pe = pe.at[:, 1::2].set(jnp.cos(position * div_term))
    return pe


def init_params(key, cfg):
    D, d_hid, FF = cfg["d_model"], cfg["d_hid"], cfg["dec_ffn"]
    f_dim, L = cfg["f_dim"], cfg["nlayers"]
    scale = 0.02
    ks = iter(jax.random.split(key, 64))

    def nrm(shape):
        return jax.random.normal(next(ks), shape, jnp.float32) * scale

    def ln_rows():                                     # gamma=1, beta=0 rows
        return [jnp.ones((L, 1, D), jnp.float32),
                jnp.zeros((L, 1, D), jnp.float32)]

    # encoder-layer packed vectors: [bo, ln1g, ln1b, bf2, ln2g, ln2b]
    enc_vec = jnp.concatenate(
        [nrm((L, 1, D))] + ln_rows() + [nrm((L, 1, D))] + ln_rows(), axis=1)
    # decoder-layer packed vectors:
    #   [sbo, ln1g, ln1b, cbq, cbo, ln2g, ln2b, bf2, ln3g, ln3b]
    dec_vec = jnp.concatenate(
        [nrm((L, 1, D))] + ln_rows()
        + [nrm((L, 1, D)), nrm((L, 1, D))] + ln_rows()
        + [nrm((L, 1, D))] + ln_rows(), axis=1)

    def pad_head(dout):
        w = nrm((D, dout))
        b = nrm((1, dout))
        wpad = jnp.zeros((D, _OUT_PAD), jnp.float32).at[:, :dout].set(w)
        bpad = jnp.zeros((1, _OUT_PAD), jnp.float32).at[:, :dout].set(b)
        return wpad, bpad

    dq_w2, dq_b2 = pad_head(_Q_DIM)
    fm_w2, fm_b2 = pad_head(_SM_DIM)

    return {
        # shared feature-embedding MLP (used for src and tgt)
        "emb_w1": nrm((f_dim, D)), "emb_b1": nrm((1, D)),
        "emb_w2": nrm((D, D)), "emb_b2": nrm((1, D)),
        # encoder layers (stacked along leading nlayers axis)
        "enc_wqkv": nrm((L, D, 3 * D)), "enc_bqkv": nrm((L, 1, 3 * D)),
        "enc_wo": nrm((L, D, D)),
        "enc_wf1": nrm((L, D, d_hid)), "enc_bf1": nrm((L, 1, d_hid)),
        "enc_wf2": nrm((L, d_hid, D)),
        "enc_vec": enc_vec,
        # decoder layers
        "dec_swqkv": nrm((L, D, 3 * D)), "dec_sbqkv": nrm((L, 1, 3 * D)),
        "dec_swo": nrm((L, D, D)),
        "dec_cwq": nrm((L, D, D)), "dec_cwkv": nrm((L, D, 2 * D)),
        "dec_cbkv": nrm((L, 1, 2 * D)), "dec_cwo": nrm((L, D, D)),
        "dec_wf1": nrm((L, D, FF)).astype(jnp.bfloat16),      # bf16 MXU operands
        "dec_bf1": nrm((L, 1, FF)),
        "dec_wf2": nrm((L, FF, D)).astype(jnp.bfloat16),
        "dec_vec": dec_vec,
        # output heads: [0] = pose decoder (147), [1] = force decoder (162)
        "head_w1": jnp.stack([nrm((D, D)), nrm((D, D))]),
        "head_b1": jnp.stack([nrm((1, D)), nrm((1, D))]),
        "head_w2": jnp.stack([dq_w2, fm_w2]),
        "head_b2": jnp.stack([dq_b2, fm_b2]),
        "pe": positional_encoding(64, D),
    }


# ----------------------------------------------------------------------------
if __name__ == "__main__":
    cfg = dict(
        seqlen=8, batch=2, f_dim=16,
        d_model=32, nhead=4, d_hid=64, nlayers=2,
        dec_ffn=2048,   # nn.TransformerDecoderLayer default dim_feedforward
    )
    key = jax.random.PRNGKey(0)
    kp, ks, kt = jax.random.split(key, 3)
    params = init_params(kp, cfg)
    src = jax.random.normal(ks, (cfg["seqlen"], cfg["batch"], cfg["f_dim"]),
                            jnp.float32)
    tgt = jax.random.normal(kt, (cfg["seqlen"], cfg["batch"], cfg["f_dim"]),
                            jnp.float32)

    fwd = jax.jit(lambda p, s, t: physpt_forward(p, s, t, cfg))
    pred_q, pred_springmass = fwd(params, src, tgt)
    jax.block_until_ready((pred_q, pred_springmass))

    assert pred_q.shape == (cfg["batch"], cfg["seqlen"], _Q_DIM), pred_q.shape
    assert pred_springmass.shape == (cfg["batch"], cfg["seqlen"], _SM_DIM), \
        pred_springmass.shape
    assert bool(jnp.all(jnp.isfinite(pred_q)))
    assert bool(jnp.all(jnp.isfinite(pred_springmass)))
    print("KERNEL_OK")
</pallas_src>

<mosaic_0001>
module attributes {stable_mosaic.version = 11 : i64} {
  func.func @_physpt_kernel(%arg0: i32, %arg1: memref<8x16xf32, #tpu.memory_space<vmem>>, %arg2: memref<8x16xf32, #tpu.memory_space<vmem>>, %arg3: memref<8x32xf32, #tpu.memory_space<vmem>>, %arg4: memref<16x32xf32, #tpu.memory_space<vmem>>, %arg5: memref<1x32xf32, #tpu.memory_space<vmem>>, %arg6: memref<32x32xf32, #tpu.memory_space<vmem>>, %arg7: memref<1x32xf32, #tpu.memory_space<vmem>>, %arg8: memref<2x32x96xf32, #tpu.memory_space<vmem>>, %arg9: memref<2x1x96xf32, #tpu.memory_space<vmem>>, %arg10: memref<2x32x32xf32, #tpu.memory_space<vmem>>, %arg11: memref<2x32x64xf32, #tpu.memory_space<vmem>>, %arg12: memref<2x1x64xf32, #tpu.memory_space<vmem>>, %arg13: memref<2x64x32xf32, #tpu.memory_space<vmem>>, %arg14: memref<2x6x32xf32, #tpu.memory_space<vmem>>, %arg15: memref<2x32x96xf32, #tpu.memory_space<vmem>>, %arg16: memref<2x1x96xf32, #tpu.memory_space<vmem>>, %arg17: memref<2x32x32xf32, #tpu.memory_space<vmem>>, %arg18: memref<2x32x32xf32, #tpu.memory_space<vmem>>, %arg19: memref<2x32x64xf32, #tpu.memory_space<vmem>>, %arg20: memref<2x1x64xf32, #tpu.memory_space<vmem>>, %arg21: memref<2x32x32xf32, #tpu.memory_space<vmem>>, %arg22: memref<2x32x2048xbf16, #tpu.memory_space<vmem>>, %arg23: memref<2x1x2048xf32, #tpu.memory_space<vmem>>, %arg24: memref<2x2048x32xbf16, #tpu.memory_space<vmem>>, %arg25: memref<2x10x32xf32, #tpu.memory_space<vmem>>, %arg26: memref<2x32x32xf32, #tpu.memory_space<vmem>>, %arg27: memref<2x1x32xf32, #tpu.memory_space<vmem>>, %arg28: memref<2x32x256xf32, #tpu.memory_space<vmem>>, %arg29: memref<2x1x256xf32, #tpu.memory_space<vmem>>, %arg30: memref<8x256xf32, #tpu.memory_space<vmem>>, %arg31: memref<8x256xf32, #tpu.memory_space<vmem>>) attributes {dimension_semantics = [#tpu.dimension_semantics<parallel>], iteration_bounds = array<i64: 2>, scalar_prefetch = 0 : i64, scratch_operands = 0 : i64, tpu.core_type = #tpu.core_type<tc>, window_params = [{transform_indices = @transform_0, window_bounds = array<i64: 8, 16>}, {transform_indices = @transform_1, window_bounds = array<i64: 8, 16>}, {pipeline_mode = #tpu.pipeline_mode<synchronous>, transform_indices = @transform_2, window_bounds = array<i64: 8, 32>}, {pipeline_mode = #tpu.pipeline_mode<synchronous>, transform_indices = @transform_3, window_bounds = array<i64: 16, 32>}, {pipeline_mode = #tpu.pipeline_mode<synchronous>, transform_indices = @transform_4, window_bounds = array<i64: 1, 32>}, {pipeline_mode = #tpu.pipeline_mode<synchronous>, transform_indices = @transform_5, window_bounds = array<i64: 32, 32>}, {pipeline_mode = #tpu.pipeline_mode<synchronous>, transform_indices = @transform_6, window_bounds = array<i64: 1, 32>}, {pipeline_mode = #tpu.pipeline_mode<synchronous>, transform_indices = @transform_7, window_bounds = array<i64: 2, 32, 96>}, {pipeline_mode = #tpu.pipeline_mode<synchronous>, transform_indices = @transform_8, window_bounds = array<i64: 2, 1, 96>}, {pipeline_mode = #tpu.pipeline_mode<synchronous>, transform_indices = @transform_9, window_bounds = array<i64: 2, 32, 32>}, {pipeline_mode = #tpu.pipeline_mode<synchronous>, transform_indices = @transform_10, window_bounds = array<i64: 2, 32, 64>}, {pipeline_mode = #tpu.pipeline_mode<synchronous>, transform_indices = @transform_11, window_bounds = array<i64: 2, 1, 64>}, {pipeline_mode = #tpu.pipeline_mode<synchronous>, transform_indices = @transform_12, window_bounds = array<i64: 2, 64, 32>}, {pipeline_mode = #tpu.pipeline_mode<synchronous>, transform_indices = @transform_13, window_bounds = array<i64: 2, 6, 32>}, {pipeline_mode = #tpu.pipeline_mode<synchronous>, transform_indices = @transform_14, window_bounds = array<i64: 2, 32, 96>}, {pipeline_mode = #tpu.pipeline_mode<synchronous>, transform_indices = @transform_15, window_bounds = array<i64: 2, 1, 96>}, {pipeline_mode = #tpu.pipeline_mode<synchronous>, transform_indices = @transform_16, window_bounds = array<i64: 2, 32, 32>}, {pipeline_mode = #tpu.pipeline_mode<synchronous>, transform_indices = @transform_17, window_bounds = array<i64: 2, 32, 32>}, {pipeline_mode = #tpu.pipeline_mode<synchronous>, transform_indices = @transform_18, window_bounds = array<i64: 2, 32, 64>}, {pipeline_mode = #tpu.pipeline_mode<synchronous>, transform_indices = @transform_19, window_bounds = array<i64: 2, 1, 64>}, {pipeline_mode = #tpu.pipeline_mode<synchronous>, transform_indices = @transform_20, window_bounds = array<i64: 2, 32, 32>}, {pipeline_mode = #tpu.pipeline_mode<synchronous>, transform_indices = @transform_21, window_bounds = array<i64: 2, 32, 2048>}, {pipeline_mode = #tpu.pipeline_mode<synchronous>, transform_indices = @transform_22, window_bounds = array<i64: 2, 1, 2048>}, {pipeline_mode = #tpu.pipeline_mode<synchronous>, transform_indices = @transform_23, window_bounds = array<i64: 2, 2048, 32>}, {pipeline_mode = #tpu.pipeline_mode<synchronous>, transform_indices = @transform_24, window_bounds = array<i64: 2, 10, 32>}, {pipeline_mode = #tpu.pipeline_mode<synchronous>, transform_indices = @transform_25, window_bounds = array<i64: 2, 32, 32>}, {pipeline_mode = #tpu.pipeline_mode<synchronous>, transform_indices = @transform_26, window_bounds = array<i64: 2, 1, 32>}, {pipeline_mode = #tpu.pipeline_mode<synchronous>, transform_indices = @transform_27, window_bounds = array<i64: 2, 32, 256>}, {pipeline_mode = #tpu.pipeline_mode<synchronous>, transform_indices = @transform_28, window_bounds = array<i64: 2, 1, 256>}, {transform_indices = @transform_29, window_bounds = array<i64: 8, 256>}, {transform_indices = @transform_30, window_bounds = array<i64: 8, 256>}]} {
    %c0 = arith.constant 0 : index
    %c0_0 = arith.constant 0 : index
    %0 = vector.load %arg3[%c0, %c0_0] : memref<8x32xf32, #tpu.memory_space<vmem>>, vector<8x32xf32>
    %1 = tpu.iota {dimensions = array<i32: 0>} : vector<8x8xi32>
    %2 = tpu.iota {dimensions = array<i32: 1>} : vector<8x8xi32>
    %3 = arith.cmpi sgt, %2, %1 : vector<8x8xi32>
    %cst = arith.constant -1.000000e+30 : f32
    %cst_1 = arith.constant 0.000000e+00 : f32
    %4 = vector.broadcast %cst : f32 to vector<8x8xf32>
    %5 = vector.broadcast %cst_1 : f32 to vector<8x8xf32>
    %6 = arith.select %3, %4, %5 : vector<8x8xi1>, vector<8x8xf32>
    %c1_i32 = arith.constant 1 : i32
    %7 = vector.broadcast %c1_i32 : i32 to vector<8x8xi32>
    %8 = arith.addi %2, %7 : vector<8x8xi32>
    %9 = arith.cmpi eq, %1, %8 : vector<8x8xi32>
    %10 = arith.extui %9 : vector<8x8xi1> to vector<8x8xi32>
    %11 = arith.sitofp %10 : vector<8x8xi32> to vector<8x8xf32>
    %c0_2 = arith.constant 0 : index
    %c0_3 = arith.constant 0 : index
    %12 = vector.load %arg1[%c0_2, %c0_3] : memref<8x16xf32, #tpu.memory_space<vmem>>, vector<8x16xf32>
    %c0_4 = arith.constant 0 : index
    %c0_5 = arith.constant 0 : index
    %13 = vector.load %arg4[%c0_4, %c0_5] : memref<16x32xf32, #tpu.memory_space<vmem>>, vector<16x32xf32>
    %cst_6 = arith.constant dense<0.000000e+00> : vector<8x32xf32>
    %14 = tpu.matmul %12, %13, %cst_6 {dimension_numbers = #tpu.dot_dimension_numbers<[1], [0], [0], [1], [0, 0, 1, 1], [], []>} : vector<8x16xf32>, vector<16x32xf32>, vector<8x32xf32> -> vector<8x32xf32>
    %c0_7 = arith.constant 0 : index
    %c0_8 = arith.constant 0 : index
    %15 = vector.load %arg5[%c0_7, %c0_8] : memref<1x32xf32, #tpu.memory_space<vmem>>, vector<1x32xf32>
    %16 = vector.broadcast %15 : vector<1x32xf32> to vector<8x32xf32>
    %17 = arith.addf %14, %16 : vector<8x32xf32>
    %cst_9 = arith.constant 5.000000e-01 : f32
    %18 = vector.broadcast %cst_9 : f32 to vector<8x32xf32>
    %19 = arith.mulf %18, %17 : vector<8x32xf32>
    %cst_10 = arith.constant 0.707106769 : f32
    %20 = vector.broadcast %cst_10 : f32 to vector<8x32xf32>
    %21 = arith.mulf %17, %20 : vector<8x32xf32>
    %cst_11 = arith.constant 0.000000e+00 : f32
    %22 = vector.broadcast %cst_11 : f32 to vector<8x32xf32>
    %23 = arith.cmpf olt, %21, %22 : vector<8x32xf32>
    %cst_12 = arith.constant -1.000000e+00 : f32
    %cst_13 = arith.constant 1.000000e+00 : f32
    %24 = vector.broadcast %cst_12 : f32 to vector<8x32xf32>
    %25 = vector.broadcast %cst_13 : f32 to vector<8x32xf32>
    %26 = arith.select %23, %24, %25 : vector<8x32xi1>, vector<8x32xf32>
    %27 = math.absf %21 : vector<8x32xf32>
    %cst_14 = arith.constant 0.327591091 : f32
    %28 = vector.broadcast %cst_14 : f32 to vector<8x32xf32>
    %29 = arith.mulf %28, %27 : vector<8x32xf32>
    %cst_15 = arith.constant 1.000000e+00 : f32
    %30 = vector.broadcast %cst_15 : f32 to vector<8x32xf32>
    %31 = arith.addf %30, %29 : vector<8x32xf32>
    %cst_16 = arith.constant 1.000000e+00 : f32
    %32 = vector.broadcast %cst_16 : f32 to vector<8x32xf32>
    %33 = arith.divf %32, %31 : vector<8x32xf32>
    %cst_17 = arith.constant 1.06140542 : f32
    %34 = vector.broadcast %cst_17 : f32 to vector<8x32xf32>
    %35 = arith.mulf %34, %33 : vector<8x32xf32>
    %cst_18 = arith.constant -1.45315206 : f32
    %36 = vector.broadcast %cst_18 : f32 to vector<8x32xf32>
    %37 = arith.addf %35, %36 : vector<8x32xf32>
    %38 = arith.mulf %37, %33 : vector<8x32xf32>
    %cst_19 = arith.constant 1.42141378 : f32
    %39 = vector.broadcast %cst_19 : f32 to vector<8x32xf32>
    %40 = arith.addf %38, %39 : vector<8x32xf32>
    %41 = arith.mulf %40, %33 : vector<8x32xf32>
    %cst_20 = arith.constant -0.284496725 : f32
    %42 = vector.broadcast %cst_20 : f32 to vector<8x32xf32>
    %43 = arith.addf %41, %42 : vector<8x32xf32>
    %44 = arith.mulf %43, %33 : vector<8x32xf32>
    %cst_21 = arith.constant 0.254829586 : f32
    %45 = vector.broadcast %cst_21 : f32 to vector<8x32xf32>
    %46 = arith.addf %44, %45 : vector<8x32xf32>
    %47 = arith.mulf %46, %33 : vector<8x32xf32>
    %cst_22 = arith.constant 0.000000e+00 : f32
    %48 = vector.broadcast %cst_22 : f32 to vector<8x32xf32>
    %49 = arith.subf %48, %27 : vector<8x32xf32>
    %50 = arith.mulf %49, %27 : vector<8x32xf32>
    %51 = math.exp %50 : vector<8x32xf32>
    %52 = arith.mulf %47, %51 : vector<8x32xf32>
    %cst_23 = arith.constant 1.000000e+00 : f32
    %53 = vector.broadcast %cst_23 : f32 to vector<8x32xf32>
    %54 = arith.subf %53, %52 : vector<8x32xf32>
    %55 = arith.mulf %26, %54 : vector<8x32xf32>
    %cst_24 = arith.constant 1.000000e+00 : f32
    %56 = vector.broadcast %cst_24 : f32 to vector<8x32xf32>
    %57 = arith.addf %56, %55 : vector<8x32xf32>
    %58 = arith.mulf %19, %57 : vector<8x32xf32>
    %c0_25 = arith.constant 0 : index
    %c0_26 = arith.constant 0 : index
    %59 = vector.load %arg6[%c0_25, %c0_26] : memref<32x32xf32, #tpu.memory_space<vmem>>, vector<32x32xf32>
    %cst_27 = arith.constant dense<0.000000e+00> : vector<8x32xf32>
    %60 = tpu.matmul %58, %59, %cst_27 {dimension_numbers = #tpu.dot_dimension_numbers<[1], [0], [0], [1], [0, 0, 1, 1], [], []>} : vector<8x32xf32>, vector<32x32xf32>, vector<8x32xf32> -> vector<8x32xf32>
    %c0_28 = arith.constant 0 : index
    %c0_29 = arith.constant 0 : index
    %61 = vector.load %arg7[%c0_28, %c0_29] : memref<1x32xf32, #tpu.memory_space<vmem>>, vector<1x32xf32>
    %62 = vector.broadcast %61 : vector<1x32xf32> to vector<8x32xf32>
    %63 = arith.addf %60, %62 : vector<8x32xf32>
    %cst_30 = arith.constant 5.65685415 : f32
    %64 = vector.broadcast %cst_30 : f32 to vector<8x32xf32>
    %65 = arith.mulf %63, %64 : vector<8x32xf32>
    %66 = arith.addf %65, %0 : vector<8x32xf32>
    %c0_31 = arith.constant 0 : index
    %c0_32 = arith.constant 0 : index
    %c0_33 = arith.constant 0 : index
    %67 = vector.load %arg14[%c0_31, %c0_32, %c0_33] : memref<2x6x32xf32, #tpu.memory_space<vmem>>, vector<1x6x32xf32>
    %68 = vector.shape_cast %67 : vector<1x6x32xf32> to vector<6x32xf32>
    %c0_34 = arith.constant 0 : index
    %c0_35 = arith.constant 0 : index
    %c0_36 = arith.constant 0 : index
    %69 = vector.load %arg8[%c0_34, %c0_35, %c0_36] : memref<2x32x96xf32, #tpu.memory_space<vmem>>, vector<1x32x96xf32>
    %70 = vector.shape_cast %69 : vector<1x32x96xf32> to vector<32x96xf32>
    %c0_37 = arith.constant 0 : index
    %c0_38 = arith.constant 0 : index
    %c0_39 = arith.constant 0 : index
    %71 = vector.load %arg9[%c0_37, %c0_38, %c0_39] : memref<2x1x96xf32, #tpu.memory_space<vmem>>, vector<1x1x96xf32>
    %72 = vector.shape_cast %71 : vector<1x1x96xf32> to vector<1x96xf32>
    %c0_40 = arith.constant 0 : index
    %c0_41 = arith.constant 0 : index
    %c0_42 = arith.constant 0 : index
    %73 = vector.load %arg10[%c0_40, %c0_41, %c0_42] : memref<2x32x32xf32, #tpu.memory_space<vmem>>, vector<1x32x32xf32>
    %74 = vector.shape_cast %73 : vector<1x32x32xf32> to vector<32x32xf32>
    %75 = vector.extract_strided_slice %68 {offsets = [0, 0], sizes = [1, 32], strides = [1, 1]} : vector<6x32xf32> to vector<1x32xf32>
    %cst_43 = arith.constant dense<0.000000e+00> : vector<8x96xf32>
    %76 = tpu.matmul %66, %70, %cst_43 {dimension_numbers = #tpu.dot_dimension_numbers<[1], [0], [0], [1], [0, 0, 1, 1], [], []>} : vector<8x32xf32>, vector<32x96xf32>, vector<8x96xf32> -> vector<8x96xf32>
    %77 = vector.broadcast %72 : vector<1x96xf32> to vector<8x96xf32>
    %78 = arith.addf %76, %77 : vector<8x96xf32>
    %79 = vector.extract_strided_slice %78 {offsets = [0, 0], sizes = [8, 32], strides = [1, 1]} : vector<8x96xf32> to vector<8x32xf32>
    %80 = vector.extract_strided_slice %78 {offsets = [0, 32], sizes = [8, 32], strides = [1, 1]} : vector<8x96xf32> to vector<8x32xf32>
    %81 = vector.extract_strided_slice %78 {offsets = [0, 64], sizes = [8, 32], strides = [1, 1]} : vector<8x96xf32> to vector<8x32xf32>
    %82 = vector.extract_strided_slice %79 {offsets = [0, 0], sizes = [8, 8], strides = [1, 1]} : vector<8x32xf32> to vector<8x8xf32>
    %83 = vector.extract_strided_slice %80 {offsets = [0, 0], sizes = [8, 8], strides = [1, 1]} : vector<8x32xf32> to vector<8x8xf32>
    %84 = vector.extract_strided_slice %81 {offsets = [0, 0], sizes = [8, 8], strides = [1, 1]} : vector<8x32xf32> to vector<8x8xf32>
    %85 = tpu.transpose %83, [1, 0] : vector<8x8xf32> -> vector<8x8xf32>
    %cst_44 = arith.constant dense<0.000000e+00> : vector<8x8xf32>
    %86 = tpu.matmul %82, %85, %cst_44 {dimension_numbers = #tpu.dot_dimension_numbers<[1], [0], [0], [1], [0, 0, 1, 1], [], []>} : vector<8x8xf32>, vector<8x8xf32>, vector<8x8xf32> -> vector<8x8xf32>
    %cst_45 = arith.constant 0.353553385 : f32
    %87 = vector.broadcast %cst_45 : f32 to vector<8x8xf32>
    %88 = arith.mulf %86, %87 : vector<8x8xf32>
    %cst_46 = arith.constant dense<0xFF800000> : vector<8xf32>
    %89 = vector.multi_reduction <maximumf>, %88, %cst_46 [1] : vector<8x8xf32> to vector<8xf32>
    %90 = vector.shape_cast %89 : vector<8xf32> to vector<8x1xf32>
    %91 = vector.broadcast %90 : vector<8x1xf32> to vector<8x8xf32>
    %92 = arith.subf %88, %91 : vector<8x8xf32>
    %93 = math.exp %92 : vector<8x8xf32>
    %cst_47 = arith.constant dense<0.000000e+00> : vector<8xf32>
    %94 = vector.multi_reduction <add>, %93, %cst_47 [1] : vector<8x8xf32> to vector<8xf32>
    %95 = vector.shape_cast %94 : vector<8xf32> to vector<8x1xf32>
    %96 = tpu.reciprocal %95 {approx = true} : vector<8x1xf32> -> vector<8x1xf32>
    %97 = vector.broadcast %96 : vector<8x1xf32> to vector<8x8xf32>
    %98 = arith.mulf %93, %97 : vector<8x8xf32>
    %cst_48 = arith.constant dense<0.000000e+00> : vector<8x8xf32>
    %99 = tpu.matmul %98, %84, %cst_48 {dimension_numbers = #tpu.dot_dimension_numbers<[1], [0], [0], [1], [0, 0, 1, 1], [], []>} : vector<8x8xf32>, vector<8x8xf32>, vector<8x8xf32> -> vector<8x8xf32>
    %100 = vector.extract_strided_slice %74 {offsets = [0, 0], sizes = [8, 32], strides = [1, 1]} : vector<32x32xf32> to vector<8x32xf32>
    %cst_49 = arith.constant dense<0.000000e+00> : vector<8x32xf32>
    %101 = tpu.matmul %99, %100, %cst_49 {dimension_numbers = #tpu.dot_dimension_numbers<[1], [0], [0], [1], [0, 0, 1, 1], [], []>} : vector<8x8xf32>, vector<8x32xf32>, vector<8x32xf32> -> vector<8x32xf32>
    %102 = vector.extract_strided_slice %79 {offsets = [0, 8], sizes = [8, 8], strides = [1, 1]} : vector<8x32xf32> to vector<8x8xf32>
    %103 = vector.extract_strided_slice %80 {offsets = [0, 8], sizes = [8, 8], strides = [1, 1]} : vector<8x32xf32> to vector<8x8xf32>
    %104 = vector.extract_strided_slice %81 {offsets = [0, 8], sizes = [8, 8], strides = [1, 1]} : vector<8x32xf32> to vector<8x8xf32>
    %105 = tpu.transpose %103, [1, 0] : vector<8x8xf32> -> vector<8x8xf32>
    %cst_50 = arith.constant dense<0.000000e+00> : vector<8x8xf32>
    %106 = tpu.matmul %102, %105, %cst_50 {dimension_numbers = #tpu.dot_dimension_numbers<[1], [0], [0], [1], [0, 0, 1, 1], [], []>} : vector<8x8xf32>, vector<8x8xf32>, vector<8x8xf32> -> vector<8x8xf32>
    %cst_51 = arith.constant 0.353553385 : f32
    %107 = vector.broadcast %cst_51 : f32 to vector<8x8xf32>
    %108 = arith.mulf %106, %107 : vector<8x8xf32>
    %cst_52 = arith.constant dense<0xFF800000> : vector<8xf32>
    %109 = vector.multi_reduction <maximumf>, %108, %cst_52 [1] : vector<8x8xf32> to vector<8xf32>
    %110 = vector.shape_cast %109 : vector<8xf32> to vector<8x1xf32>
    %111 = vector.broadcast %110 : vector<8x1xf32> to vector<8x8xf32>
    %112 = arith.subf %108, %111 : vector<8x8xf32>
    %113 = math.exp %112 : vector<8x8xf32>
    %cst_53 = arith.constant dense<0.000000e+00> : vector<8xf32>
    %114 = vector.multi_reduction <add>, %113, %cst_53 [1] : vector<8x8xf32> to vector<8xf32>
    %115 = vector.shape_cast %114 : vector<8xf32> to vector<8x1xf32>
    %116 = tpu.reciprocal %115 {approx = true} : vector<8x1xf32> -> vector<8x1xf32>
    %117 = vector.broadcast %116 : vector<8x1xf32> to vector<8x8xf32>
    %118 = arith.mulf %113, %117 : vector<8x8xf32>
    %cst_54 = arith.constant dense<0.000000e+00> : vector<8x8xf32>
    %119 = tpu.matmul %118, %104, %cst_54 {dimension_numbers = #tpu.dot_dimension_numbers<[1], [0], [0], [1], [0, 0, 1, 1], [], []>} : vector<8x8xf32>, vector<8x8xf32>, vector<8x8xf32> -> vector<8x8xf32>
    %120 = vector.extract_strided_slice %74 {offsets = [8, 0], sizes = [8, 32], strides = [1, 1]} : vector<32x32xf32> to vector<8x32xf32>
    %cst_55 = arith.constant dense<0.000000e+00> : vector<8x32xf32>
    %121 = tpu.matmul %119, %120, %cst_55 {dimension_numbers = #tpu.dot_dimension_numbers<[1], [0], [0], [1], [0, 0, 1, 1], [], []>} : vector<8x8xf32>, vector<8x32xf32>, vector<8x32xf32> -> vector<8x32xf32>
    %122 = arith.addf %101, %121 : vector<8x32xf32>
    %123 = vector.extract_strided_slice %79 {offsets = [0, 16], sizes = [8, 8], strides = [1, 1]} : vector<8x32xf32> to vector<8x8xf32>
    %124 = vector.extract_strided_slice %80 {offsets = [0, 16], sizes = [8, 8], strides = [1, 1]} : vector<8x32xf32> to vector<8x8xf32>
    %125 = vector.extract_strided_slice %81 {offsets = [0, 16], sizes = [8, 8], strides = [1, 1]} : vector<8x32xf32> to vector<8x8xf32>
    %126 = tpu.transpose %124, [1, 0] : vector<8x8xf32> -> vector<8x8xf32>
    %cst_56 = arith.constant dense<0.000000e+00> : vector<8x8xf32>
    %127 = tpu.matmul %123, %126, %cst_56 {dimension_numbers = #tpu.dot_dimension_numbers<[1], [0], [0], [1], [0, 0, 1, 1], [], []>} : vector<8x8xf32>, vector<8x8xf32>, vector<8x8xf32> -> vector<8x8xf32>
    %cst_57 = arith.constant 0.353553385 : f32
    %128 = vector.broadcast %cst_57 : f32 to vector<8x8xf32>
    %129 = arith.mulf %127, %128 : vector<8x8xf32>
    %cst_58 = arith.constant dense<0xFF800000> : vector<8xf32>
    %130 = vector.multi_reduction <maximumf>, %129, %cst_58 [1] : vector<8x8xf32> to vector<8xf32>
    %131 = vector.shape_cast %130 : vector<8xf32> to vector<8x1xf32>
    %132 = vector.broadcast %131 : vector<8x1xf32> to vector<8x8xf32>
    %133 = arith.subf %129, %132 : vector<8x8xf32>
    %134 = math.exp %133 : vector<8x8xf32>
    %cst_59 = arith.constant dense<0.000000e+00> : vector<8xf32>
    %135 = vector.multi_reduction <add>, %134, %cst_59 [1] : vector<8x8xf32> to vector<8xf32>
    %136 = vector.shape_cast %135 : vector<8xf32> to vector<8x1xf32>
    %137 = tpu.reciprocal %136 {approx = true} : vector<8x1xf32> -> vector<8x1xf32>
    %138 = vector.broadcast %137 : vector<8x1xf32> to vector<8x8xf32>
    %139 = arith.mulf %134, %138 : vector<8x8xf32>
    %cst_60 = arith.constant dense<0.000000e+00> : vector<8x8xf32>
    %140 = tpu.matmul %139, %125, %cst_60 {dimension_numbers = #tpu.dot_dimension_numbers<[1], [0], [0], [1], [0, 0, 1, 1], [], []>} : vector<8x8xf32>, vector<8x8xf32>, vector<8x8xf32> -> vector<8x8xf32>
    %141 = vector.extract_strided_slice %74 {offsets = [16, 0], sizes = [8, 32], strides = [1, 1]} : vector<32x32xf32> to vector<8x32xf32>
    %cst_61 = arith.constant dense<0.000000e+00> : vector<8x32xf32>
    %142 = tpu.matmul %140, %141, %cst_61 {dimension_numbers = #tpu.dot_dimension_numbers<[1], [0], [0], [1], [0, 0, 1, 1], [], []>} : vector<8x8xf32>, vector<8x32xf32>, vector<8x32xf32> -> vector<8x32xf32>
    %143 = arith.addf %122, %142 : vector<8x32xf32>
    %144 = vector.extract_strided_slice %79 {offsets = [0, 24], sizes = [8, 8], strides = [1, 1]} : vector<8x32xf32> to vector<8x8xf32>
    %145 = vector.extract_strided_slice %80 {offsets = [0, 24], sizes = [8, 8], strides = [1, 1]} : vector<8x32xf32> to vector<8x8xf32>
    %146 = vector.extract_strided_slice %81 {offsets = [0, 24], sizes = [8, 8], strides = [1, 1]} : vector<8x32xf32> to vector<8x8xf32>
    %147 = tpu.transpose %145, [1, 0] : vector<8x8xf32> -> vector<8x8xf32>
    %cst_62 = arith.constant dense<0.000000e+00> : vector<8x8xf32>
    %148 = tpu.matmul %144, %147, %cst_62 {dimension_numbers = #tpu.dot_dimension_numbers<[1], [0], [0], [1], [0, 0, 1, 1], [], []>} : vector<8x8xf32>, vector<8x8xf32>, vector<8x8xf32> -> vector<8x8xf32>
    %cst_63 = arith.constant 0.353553385 : f32
    %149 = vector.broadcast %cst_63 : f32 to vector<8x8xf32>
    %150 = arith.mulf %148, %149 : vector<8x8xf32>
    %cst_64 = arith.constant dense<0xFF800000> : vector<8xf32>
    %151 = vector.multi_reduction <maximumf>, %150, %cst_64 [1] : vector<8x8xf32> to vector<8xf32>
    %152 = vector.shape_cast %151 : vector<8xf32> to vector<8x1xf32>
    %153 = vector.broadcast %152 : vector<8x1xf32> to vector<8x8xf32>
    %154 = arith.subf %150, %153 : vector<8x8xf32>
    %155 = math.exp %154 : vector<8x8xf32>
    %cst_65 = arith.constant dense<0.000000e+00> : vector<8xf32>
    %156 = vector.multi_reduction <add>, %155, %cst_65 [1] : vector<8x8xf32> to vector<8xf32>
    %157 = vector.shape_cast %156 : vector<8xf32> to vector<8x1xf32>
    %158 = tpu.reciprocal %157 {approx = true} : vector<8x1xf32> -> vector<8x1xf32>
    %159 = vector.broadcast %158 : vector<8x1xf32> to vector<8x8xf32>
    %160 = arith.mulf %155, %159 : vector<8x8xf32>
    %cst_66 = arith.constant dense<0.000000e+00> : vector<8x8xf32>
    %161 = tpu.matmul %160, %146, %cst_66 {dimension_numbers = #tpu.dot_dimension_numbers<[1], [0], [0], [1], [0, 0, 1, 1], [], []>} : vector<8x8xf32>, vector<8x8xf32>, vector<8x8xf32> -> vector<8x8xf32>
    %162 = vector.extract_strided_slice %74 {offsets = [24, 0], sizes = [8, 32], strides = [1, 1]} : vector<32x32xf32> to vector<8x32xf32>
    %cst_67 = arith.constant dense<0.000000e+00> : vector<8x32xf32>
    %163 = tpu.matmul %161, %162, %cst_67 {dimension_numbers = #tpu.dot_dimension_numbers<[1], [0], [0], [1], [0, 0, 1, 1], [], []>} : vector<8x8xf32>, vector<8x32xf32>, vector<8x32xf32> -> vector<8x32xf32>
    %164 = arith.addf %143, %163 : vector<8x32xf32>
    %165 = vector.broadcast %75 : vector<1x32xf32> to vector<8x32xf32>
    %166 = arith.addf %164, %165 : vector<8x32xf32>
    %167 = arith.addf %66, %166 : vector<8x32xf32>
    %168 = vector.extract_strided_slice %68 {offsets = [1, 0], sizes = [1, 32], strides = [1, 1]} : vector<6x32xf32> to vector<1x32xf32>
    %169 = vector.extract_strided_slice %68 {offsets = [2, 0], sizes = [1, 32], strides = [1, 1]} : vector<6x32xf32> to vector<1x32xf32>
    %cst_68 = arith.constant dense<0.000000e+00> : vector<8xf32>
    %170 = vector.multi_reduction <add>, %167, %cst_68 [1] : vector<8x32xf32> to vector<8xf32>
    %171 = vector.shape_cast %170 : vector<8xf32> to vector<8x1xf32>
    %cst_69 = arith.constant 3.200000e+01 : f32
    %172 = vector.broadcast %cst_69 : f32 to vector<8x1xf32>
    %173 = arith.divf %171, %172 : vector<8x1xf32>
    %174 = vector.broadcast %173 : vector<8x1xf32> to vector<8x32xf32>
    %175 = arith.subf %167, %174 : vector<8x32xf32>
    %176 = arith.mulf %175, %175 : vector<8x32xf32>
    %cst_70 = arith.constant dense<0.000000e+00> : vector<8xf32>
    %177 = vector.multi_reduction <add>, %176, %cst_70 [1] : vector<8x32xf32> to vector<8xf32>
    %178 = vector.shape_cast %177 : vector<8xf32> to vector<8x1xf32>
    %cst_71 = arith.constant 3.200000e+01 : f32
    %179 = vector.broadcast %cst_71 : f32 to vector<8x1xf32>
    %180 = arith.divf %178, %179 : vector<8x1xf32>
    %181 = vector.broadcast %173 : vector<8x1xf32> to vector<8x32xf32>
    %182 = arith.subf %167, %181 : vector<8x32xf32>
    %cst_72 = arith.constant 9.99999974E-6 : f32
    %183 = vector.broadcast %cst_72 : f32 to vector<8x1xf32>
    %184 = arith.addf %180, %183 : vector<8x1xf32>
    %185 = math.rsqrt %184 : vector<8x1xf32>
    %186 = vector.broadcast %185 : vector<8x1xf32> to vector<8x32xf32>
    %187 = arith.mulf %182, %186 : vector<8x32xf32>
    %188 = vector.broadcast %168 : vector<1x32xf32> to vector<8x32xf32>
    %189 = arith.mulf %187, %188 : vector<8x32xf32>
    %190 = vector.broadcast %169 : vector<1x32xf32> to vector<8x32xf32>
    %191 = arith.addf %189, %190 : vector<8x32xf32>
    %c0_73 = arith.constant 0 : index
    %c0_74 = arith.constant 0 : index
    %c0_75 = arith.constant 0 : index
    %192 = vector.load %arg11[%c0_73, %c0_74, %c0_75] : memref<2x32x64xf32, #tpu.memory_space<vmem>>, vector<1x32x64xf32>
    %193 = vector.shape_cast %192 : vector<1x32x64xf32> to vector<32x64xf32>
    %cst_76 = arith.constant dense<0.000000e+00> : vector<8x64xf32>
    %194 = tpu.matmul %191, %193, %cst_76 {dimension_numbers = #tpu.dot_dimension_numbers<[1], [0], [0], [1], [0, 0, 1, 1], [], []>} : vector<8x32xf32>, vector<32x64xf32>, vector<8x64xf32> -> vector<8x64xf32>
    %c0_77 = arith.constant 0 : index
    %c0_78 = arith.constant 0 : index
    %c0_79 = arith.constant 0 : index
    %195 = vector.load %arg12[%c0_77, %c0_78, %c0_79] : memref<2x1x64xf32, #tpu.memory_space<vmem>>, vector<1x1x64xf32>
    %196 = vector.shape_cast %195 : vector<1x1x64xf32> to vector<1x64xf32>
    %197 = vector.broadcast %196 : vector<1x64xf32> to vector<8x64xf32>
    %198 = arith.addf %194, %197 : vector<8x64xf32>
    %cst_80 = arith.constant 0.000000e+00 : f32
    %199 = vector.broadcast %cst_80 : f32 to vector<8x64xf32>
    %200 = arith.maximumf %198, %199 : vector<8x64xf32>
    %c0_81 = arith.constant 0 : index
    %c0_82 = arith.constant 0 : index
    %c0_83 = arith.constant 0 : index
    %201 = vector.load %arg13[%c0_81, %c0_82, %c0_83] : memref<2x64x32xf32, #tpu.memory_space<vmem>>, vector<1x64x32xf32>
    %202 = vector.shape_cast %201 : vector<1x64x32xf32> to vector<64x32xf32>
    %cst_84 = arith.constant dense<0.000000e+00> : vector<8x32xf32>
    %203 = tpu.matmul %200, %202, %cst_84 {dimension_numbers = #tpu.dot_dimension_numbers<[1], [0], [0], [1], [0, 0, 1, 1], [], []>} : vector<8x64xf32>, vector<64x32xf32>, vector<8x32xf32> -> vector<8x32xf32>
    %204 = vector.extract_strided_slice %68 {offsets = [3, 0], sizes = [1, 32], strides = [1, 1]} : vector<6x32xf32> to vector<1x32xf32>
    %205 = vector.broadcast %204 : vector<1x32xf32> to vector<8x32xf32>
    %206 = arith.addf %203, %205 : vector<8x32xf32>
    %207 = arith.addf %191, %206 : vector<8x32xf32>
    %208 = vector.extract_strided_slice %68 {offsets = [4, 0], sizes = [1, 32], strides = [1, 1]} : vector<6x32xf32> to vector<1x32xf32>
    %209 = vector.extract_strided_slice %68 {offsets = [5, 0], sizes = [1, 32], strides = [1, 1]} : vector<6x32xf32> to vector<1x32xf32>
    %cst_85 = arith.constant dense<0.000000e+00> : vector<8xf32>
    %210 = vector.multi_reduction <add>, %207, %cst_85 [1] : vector<8x32xf32> to vector<8xf32>
    %211 = vector.shape_cast %210 : vector<8xf32> to vector<8x1xf32>
    %cst_86 = arith.constant 3.200000e+01 : f32
    %212 = vector.broadcast %cst_86 : f32 to vector<8x1xf32>
    %213 = arith.divf %211, %212 : vector<8x1xf32>
    %214 = vector.broadcast %213 : vector<8x1xf32> to vector<8x32xf32>
    %215 = arith.subf %207, %214 : vector<8x32xf32>
    %216 = arith.mulf %215, %215 : vector<8x32xf32>
    %cst_87 = arith.constant dense<0.000000e+00> : vector<8xf32>
    %217 = vector.multi_reduction <add>, %216, %cst_87 [1] : vector<8x32xf32> to vector<8xf32>
    %218 = vector.shape_cast %217 : vector<8xf32> to vector<8x1xf32>
    %cst_88 = arith.constant 3.200000e+01 : f32
    %219 = vector.broadcast %cst_88 : f32 to vector<8x1xf32>
    %220 = arith.divf %218, %219 : vector<8x1xf32>
    %221 = vector.broadcast %213 : vector<8x1xf32> to vector<8x32xf32>
    %222 = arith.subf %207, %221 : vector<8x32xf32>
    %cst_89 = arith.constant 9.99999974E-6 : f32
    %223 = vector.broadcast %cst_89 : f32 to vector<8x1xf32>
    %224 = arith.addf %220, %223 : vector<8x1xf32>
    %225 = math.rsqrt %224 : vector<8x1xf32>
    %226 = vector.broadcast %225 : vector<8x1xf32> to vector<8x32xf32>
    %227 = arith.mulf %222, %226 : vector<8x32xf32>
    %228 = vector.broadcast %208 : vector<1x32xf32> to vector<8x32xf32>
    %229 = arith.mulf %227, %228 : vector<8x32xf32>
    %230 = vector.broadcast %209 : vector<1x32xf32> to vector<8x32xf32>
    %231 = arith.addf %229, %230 : vector<8x32xf32>
    %c1 = arith.constant 1 : index
    %c0_90 = arith.constant 0 : index
    %c0_91 = arith.constant 0 : index
    %232 = vector.load %arg14[%c1, %c0_90, %c0_91] : memref<2x6x32xf32, #tpu.memory_space<vmem>>, vector<1x6x32xf32>
    %233 = vector.shape_cast %232 : vector<1x6x32xf32> to vector<6x32xf32>
    %c1_92 = arith.constant 1 : index
    %c0_93 = arith.constant 0 : index
    %c0_94 = arith.constant 0 : index
    %234 = vector.load %arg8[%c1_92, %c0_93, %c0_94] : memref<2x32x96xf32, #tpu.memory_space<vmem>>, vector<1x32x96xf32>
    %235 = vector.shape_cast %234 : vector<1x32x96xf32> to vector<32x96xf32>
    %c1_95 = arith.constant 1 : index
    %c0_96 = arith.constant 0 : index
    %c0_97 = arith.constant 0 : index
    %236 = vector.load %arg9[%c1_95, %c0_96, %c0_97] : memref<2x1x96xf32, #tpu.memory_space<vmem>>, vector<1x1x96xf32>
    %237 = vector.shape_cast %236 : vector<1x1x96xf32> to vector<1x96xf32>
    %c1_98 = arith.constant 1 : index
    %c0_99 = arith.constant 0 : index
    %c0_100 = arith.constant 0 : index
    %238 = vector.load %arg10[%c1_98, %c0_99, %c0_100] : memref<2x32x32xf32, #tpu.memory_space<vmem>>, vector<1x32x32xf32>
    %239 = vector.shape_cast %238 : vector<1x32x32xf32> to vector<32x32xf32>
    %240 = vector.extract_strided_slice %233 {offsets = [0, 0], sizes = [1, 32], strides = [1, 1]} : vector<6x32xf32> to vector<1x32xf32>
    %cst_101 = arith.constant dense<0.000000e+00> : vector<8x96xf32>
    %241 = tpu.matmul %231, %235, %cst_101 {dimension_numbers = #tpu.dot_dimension_numbers<[1], [0], [0], [1], [0, 0, 1, 1], [], []>} : vector<8x32xf32>, vector<32x96xf32>, vector<8x96xf32> -> vector<8x96xf32>
    %242 = vector.broadcast %237 : vector<1x96xf32> to vector<8x96xf32>
    %243 = arith.addf %241, %242 : vector<8x96xf32>
    %244 = vector.extract_strided_slice %243 {offsets = [0, 0], sizes = [8, 32], strides = [1, 1]} : vector<8x96xf32> to vector<8x32xf32>
    %245 = vector.extract_strided_slice %243 {offsets = [0, 32], sizes = [8, 32], strides = [1, 1]} : vector<8x96xf32> to vector<8x32xf32>
    %246 = vector.extract_strided_slice %243 {offsets = [0, 64], sizes = [8, 32], strides = [1, 1]} : vector<8x96xf32> to vector<8x32xf32>
    %247 = vector.extract_strided_slice %244 {offsets = [0, 0], sizes = [8, 8], strides = [1, 1]} : vector<8x32xf32> to vector<8x8xf32>
    %248 = vector.extract_strided_slice %245 {offsets = [0, 0], sizes = [8, 8], strides = [1, 1]} : vector<8x32xf32> to vector<8x8xf32>
    %249 = vector.extract_strided_slice %246 {offsets = [0, 0], sizes = [8, 8], strides = [1, 1]} : vector<8x32xf32> to vector<8x8xf32>
    %250 = tpu.transpose %248, [1, 0] : vector<8x8xf32> -> vector<8x8xf32>
    %cst_102 = arith.constant dense<0.000000e+00> : vector<8x8xf32>
    %251 = tpu.matmul %247, %250, %cst_102 {dimension_numbers = #tpu.dot_dimension_numbers<[1], [0], [0], [1], [0, 0, 1, 1], [], []>} : vector<8x8xf32>, vector<8x8xf32>, vector<8x8xf32> -> vector<8x8xf32>
    %cst_103 = arith.constant 0.353553385 : f32
    %252 = vector.broadcast %cst_103 : f32 to vector<8x8xf32>
    %253 = arith.mulf %251, %252 : vector<8x8xf32>
    %cst_104 = arith.constant dense<0xFF800000> : vector<8xf32>
    %254 = vector.multi_reduction <maximumf>, %253, %cst_104 [1] : vector<8x8xf32> to vector<8xf32>
    %255 = vector.shape_cast %254 : vector<8xf32> to vector<8x1xf32>
    %256 = vector.broadcast %255 : vector<8x1xf32> to vector<8x8xf32>
    %257 = arith.subf %253, %256 : vector<8x8xf32>
    %258 = math.exp %257 : vector<8x8xf32>
    %cst_105 = arith.constant dense<0.000000e+00> : vector<8xf32>
    %259 = vector.multi_reduction <add>, %258, %cst_105 [1] : vector<8x8xf32> to vector<8xf32>
    %260 = vector.shape_cast %259 : vector<8xf32> to vector<8x1xf32>
    %261 = tpu.reciprocal %260 {approx = true} : vector<8x1xf32> -> vector<8x1xf32>
    %262 = vector.broadcast %261 : vector<8x1xf32> to vector<8x8xf32>
    %263 = arith.mulf %258, %262 : vector<8x8xf32>
    %cst_106 = arith.constant dense<0.000000e+00> : vector<8x8xf32>
    %264 = tpu.matmul %263, %249, %cst_106 {dimension_numbers = #tpu.dot_dimension_numbers<[1], [0], [0], [1], [0, 0, 1, 1], [], []>} : vector<8x8xf32>, vector<8x8xf32>, vector<8x8xf32> -> vector<8x8xf32>
    %265 = vector.extract_strided_slice %239 {offsets = [0, 0], sizes = [8, 32], strides = [1, 1]} : vector<32x32xf32> to vector<8x32xf32>
    %cst_107 = arith.constant dense<0.000000e+00> : vector<8x32xf32>
    %266 = tpu.matmul %264, %265, %cst_107 {dimension_numbers = #tpu.dot_dimension_numbers<[1], [0], [0], [1], [0, 0, 1, 1], [], []>} : vector<8x8xf32>, vector<8x32xf32>, vector<8x32xf32> -> vector<8x32xf32>
    %267 = vector.extract_strided_slice %244 {offsets = [0, 8], sizes = [8, 8], strides = [1, 1]} : vector<8x32xf32> to vector<8x8xf32>
    %268 = vector.extract_strided_slice %245 {offsets = [0, 8], sizes = [8, 8], strides = [1, 1]} : vector<8x32xf32> to vector<8x8xf32>
    %269 = vector.extract_strided_slice %246 {offsets = [0, 8], sizes = [8, 8], strides = [1, 1]} : vector<8x32xf32> to vector<8x8xf32>
    %270 = tpu.transpose %268, [1, 0] : vector<8x8xf32> -> vector<8x8xf32>
    %cst_108 = arith.constant dense<0.000000e+00> : vector<8x8xf32>
    %271 = tpu.matmul %267, %270, %cst_108 {dimension_numbers = #tpu.dot_dimension_numbers<[1], [0], [0], [1], [0, 0, 1, 1], [], []>} : vector<8x8xf32>, vector<8x8xf32>, vector<8x8xf32> -> vector<8x8xf32>
    %cst_109 = arith.constant 0.353553385 : f32
    %272 = vector.broadcast %cst_109 : f32 to vector<8x8xf32>
    %273 = arith.mulf %271, %272 : vector<8x8xf32>
    %cst_110 = arith.constant dense<0xFF800000> : vector<8xf32>
    %274 = vector.multi_reduction <maximumf>, %273, %cst_110 [1] : vector<8x8xf32> to vector<8xf32>
    %275 = vector.shape_cast %274 : vector<8xf32> to vector<8x1xf32>
    %276 = vector.broadcast %275 : vector<8x1xf32> to vector<8x8xf32>
    %277 = arith.subf %273, %276 : vector<8x8xf32>
    %278 = math.exp %277 : vector<8x8xf32>
    %cst_111 = arith.constant dense<0.000000e+00> : vector<8xf32>
    %279 = vector.multi_reduction <add>, %278, %cst_111 [1] : vector<8x8xf32> to vector<8xf32>
    %280 = vector.shape_cast %279 : vector<8xf32> to vector<8x1xf32>
    %281 = tpu.reciprocal %280 {approx = true} : vector<8x1xf32> -> vector<8x1xf32>
    %282 = vector.broadcast %281 : vector<8x1xf32> to vector<8x8xf32>
    %283 = arith.mulf %278, %282 : vector<8x8xf32>
    %cst_112 = arith.constant dense<0.000000e+00> : vector<8x8xf32>
    %284 = tpu.matmul %283, %269, %cst_112 {dimension_numbers = #tpu.dot_dimension_numbers<[1], [0], [0], [1], [0, 0, 1, 1], [], []>} : vector<8x8xf32>, vector<8x8xf32>, vector<8x8xf32> -> vector<8x8xf32>
    %285 = vector.extract_strided_slice %239 {offsets = [8, 0], sizes = [8, 32], strides = [1, 1]} : vector<32x32xf32> to vector<8x32xf32>
    %cst_113 = arith.constant dense<0.000000e+00> : vector<8x32xf32>
    %286 = tpu.matmul %284, %285, %cst_113 {dimension_numbers = #tpu.dot_dimension_numbers<[1], [0], [0], [1], [0, 0, 1, 1], [], []>} : vector<8x8xf32>, vector<8x32xf32>, vector<8x32xf32> -> vector<8x32xf32>
    %287 = arith.addf %266, %286 : vector<8x32xf32>
    %288 = vector.extract_strided_slice %244 {offsets = [0, 16], sizes = [8, 8], strides = [1, 1]} : vector<8x32xf32> to vector<8x8xf32>
    %289 = vector.extract_strided_slice %245 {offsets = [0, 16], sizes = [8, 8], strides = [1, 1]} : vector<8x32xf32> to vector<8x8xf32>
    %290 = vector.extract_strided_slice %246 {offsets = [0, 16], sizes = [8, 8], strides = [1, 1]} : vector<8x32xf32> to vector<8x8xf32>
    %291 = tpu.transpose %289, [1, 0] : vector<8x8xf32> -> vector<8x8xf32>
    %cst_114 = arith.constant dense<0.000000e+00> : vector<8x8xf32>
    %292 = tpu.matmul %288, %291, %cst_114 {dimension_numbers = #tpu.dot_dimension_numbers<[1], [0], [0], [1], [0, 0, 1, 1], [], []>} : vector<8x8xf32>, vector<8x8xf32>, vector<8x8xf32> -> vector<8x8xf32>
    %cst_115 = arith.constant 0.353553385 : f32
    %293 = vector.broadcast %cst_115 : f32 to vector<8x8xf32>
    %294 = arith.mulf %292, %293 : vector<8x8xf32>
    %cst_116 = arith.constant dense<0xFF800000> : vector<8xf32>
    %295 = vector.multi_reduction <maximumf>, %294, %cst_116 [1] : vector<8x8xf32> to vector<8xf32>
    %296 = vector.shape_cast %295 : vector<8xf32> to vector<8x1xf32>
    %297 = vector.broadcast %296 : vector<8x1xf32> to vector<8x8xf32>
    %298 = arith.subf %294, %297 : vector<8x8xf32>
    %299 = math.exp %298 : vector<8x8xf32>
    %cst_117 = arith.constant dense<0.000000e+00> : vector<8xf32>
    %300 = vector.multi_reduction <add>, %299, %cst_117 [1] : vector<8x8xf32> to vector<8xf32>
    %301 = vector.shape_cast %300 : vector<8xf32> to vector<8x1xf32>
    %302 = tpu.reciprocal %301 {approx = true} : vector<8x1xf32> -> vector<8x1xf32>
    %303 = vector.broadcast %302 : vector<8x1xf32> to vector<8x8xf32>
    %304 = arith.mulf %299, %303 : vector<8x8xf32>
    %cst_118 = arith.constant dense<0.000000e+00> : vector<8x8xf32>
    %305 = tpu.matmul %304, %290, %cst_118 {dimension_numbers = #tpu.dot_dimension_numbers<[1], [0], [0], [1], [0, 0, 1, 1], [], []>} : vector<8x8xf32>, vector<8x8xf32>, vector<8x8xf32> -> vector<8x8xf32>
    %306 = vector.extract_strided_slice %239 {offsets = [16, 0], sizes = [8, 32], strides = [1, 1]} : vector<32x32xf32> to vector<8x32xf32>
    %cst_119 = arith.constant dense<0.000000e+00> : vector<8x32xf32>
    %307 = tpu.matmul %305, %306, %cst_119 {dimension_numbers = #tpu.dot_dimension_numbers<[1], [0], [0], [1], [0, 0, 1, 1], [], []>} : vector<8x8xf32>, vector<8x32xf32>, vector<8x32xf32> -> vector<8x32xf32>
    %308 = arith.addf %287, %307 : vector<8x32xf32>
    %309 = vector.extract_strided_slice %244 {offsets = [0, 24], sizes = [8, 8], strides = [1, 1]} : vector<8x32xf32> to vector<8x8xf32>
    %310 = vector.extract_strided_slice %245 {offsets = [0, 24], sizes = [8, 8], strides = [1, 1]} : vector<8x32xf32> to vector<8x8xf32>
    %311 = vector.extract_strided_slice %246 {offsets = [0, 24], sizes = [8, 8], strides = [1, 1]} : vector<8x32xf32> to vector<8x8xf32>
    %312 = tpu.transpose %310, [1, 0] : vector<8x8xf32> -> vector<8x8xf32>
    %cst_120 = arith.constant dense<0.000000e+00> : vector<8x8xf32>
    %313 = tpu.matmul %309, %312, %cst_120 {dimension_numbers = #tpu.dot_dimension_numbers<[1], [0], [0], [1], [0, 0, 1, 1], [], []>} : vector<8x8xf32>, vector<8x8xf32>, vector<8x8xf32> -> vector<8x8xf32>
    %cst_121 = arith.constant 0.353553385 : f32
    %314 = vector.broadcast %cst_121 : f32 to vector<8x8xf32>
    %315 = arith.mulf %313, %314 : vector<8x8xf32>
    %cst_122 = arith.constant dense<0xFF800000> : vector<8xf32>
    %316 = vector.multi_reduction <maximumf>, %315, %cst_122 [1] : vector<8x8xf32> to vector<8xf32>
    %317 = vector.shape_cast %316 : vector<8xf32> to vector<8x1xf32>
    %318 = vector.broadcast %317 : vector<8x1xf32> to vector<8x8xf32>
    %319 = arith.subf %315, %318 : vector<8x8xf32>
    %320 = math.exp %319 : vector<8x8xf32>
    %cst_123 = arith.constant dense<0.000000e+00> : vector<8xf32>
    %321 = vector.multi_reduction <add>, %320, %cst_123 [1] : vector<8x8xf32> to vector<8xf32>
    %322 = vector.shape_cast %321 : vector<8xf32> to vector<8x1xf32>
    %323 = tpu.reciprocal %322 {approx = true} : vector<8x1xf32> -> vector<8x1xf32>
    %324 = vector.broadcast %323 : vector<8x1xf32> to vector<8x8xf32>
    %325 = arith.mulf %320, %324 : vector<8x8xf32>
    %cst_124 = arith.constant dense<0.000000e+00> : vector<8x8xf32>
    %326 = tpu.matmul %325, %311, %cst_124 {dimension_numbers = #tpu.dot_dimension_numbers<[1], [0], [0], [1], [0, 0, 1, 1], [], []>} : vector<8x8xf32>, vector<8x8xf32>, vector<8x8xf32> -> vector<8x8xf32>
    %327 = vector.extract_strided_slice %239 {offsets = [24, 0], sizes = [8, 32], strides = [1, 1]} : vector<32x32xf32> to vector<8x32xf32>
    %cst_125 = arith.constant dense<0.000000e+00> : vector<8x32xf32>
    %328 = tpu.matmul %326, %327, %cst_125 {dimension_numbers = #tpu.dot_dimension_numbers<[1], [0], [0], [1], [0, 0, 1, 1], [], []>} : vector<8x8xf32>, vector<8x32xf32>, vector<8x32xf32> -> vector<8x32xf32>
    %329 = arith.addf %308, %328 : vector<8x32xf32>
    %330 = vector.broadcast %240 : vector<1x32xf32> to vector<8x32xf32>
    %331 = arith.addf %329, %330 : vector<8x32xf32>
    %332 = arith.addf %231, %331 : vector<8x32xf32>
    %333 = vector.extract_strided_slice %233 {offsets = [1, 0], sizes = [1, 32], strides = [1, 1]} : vector<6x32xf32> to vector<1x32xf32>
    %334 = vector.extract_strided_slice %233 {offsets = [2, 0], sizes = [1, 32], strides = [1, 1]} : vector<6x32xf32> to vector<1x32xf32>
    %cst_126 = arith.constant dense<0.000000e+00> : vector<8xf32>
    %335 = vector.multi_reduction <add>, %332, %cst_126 [1] : vector<8x32xf32> to vector<8xf32>
    %336 = vector.shape_cast %335 : vector<8xf32> to vector<8x1xf32>
    %cst_127 = arith.constant 3.200000e+01 : f32
    %337 = vector.broadcast %cst_127 : f32 to vector<8x1xf32>
    %338 = arith.divf %336, %337 : vector<8x1xf32>
    %339 = vector.broadcast %338 : vector<8x1xf32> to vector<8x32xf32>
    %340 = arith.subf %332, %339 : vector<8x32xf32>
    %341 = arith.mulf %340, %340 : vector<8x32xf32>
    %cst_128 = arith.constant dense<0.000000e+00> : vector<8xf32>
    %342 = vector.multi_reduction <add>, %341, %cst_128 [1] : vector<8x32xf32> to vector<8xf32>
    %343 = vector.shape_cast %342 : vector<8xf32> to vector<8x1xf32>
    %cst_129 = arith.constant 3.200000e+01 : f32
    %344 = vector.broadcast %cst_129 : f32 to vector<8x1xf32>
    %345 = arith.divf %343, %344 : vector<8x1xf32>
    %346 = vector.broadcast %338 : vector<8x1xf32> to vector<8x32xf32>
    %347 = arith.subf %332, %346 : vector<8x32xf32>
    %cst_130 = arith.constant 9.99999974E-6 : f32
    %348 = vector.broadcast %cst_130 : f32 to vector<8x1xf32>
    %349 = arith.addf %345, %348 : vector<8x1xf32>
    %350 = math.rsqrt %349 : vector<8x1xf32>
    %351 = vector.broadcast %350 : vector<8x1xf32> to vector<8x32xf32>
    %352 = arith.mulf %347, %351 : vector<8x32xf32>
    %353 = vector.broadcast %333 : vector<1x32xf32> to vector<8x32xf32>
    %354 = arith.mulf %352, %353 : vector<8x32xf32>
    %355 = vector.broadcast %334 : vector<1x32xf32> to vector<8x32xf32>
    %356 = arith.addf %354, %355 : vector<8x32xf32>
    %c1_131 = arith.constant 1 : index
    %c0_132 = arith.constant 0 : index
    %c0_133 = arith.constant 0 : index
    %357 = vector.load %arg11[%c1_131, %c0_132, %c0_133] : memref<2x32x64xf32, #tpu.memory_space<vmem>>, vector<1x32x64xf32>
    %358 = vector.shape_cast %357 : vector<1x32x64xf32> to vector<32x64xf32>
    %cst_134 = arith.constant dense<0.000000e+00> : vector<8x64xf32>
    %359 = tpu.matmul %356, %358, %cst_134 {dimension_numbers = #tpu.dot_dimension_numbers<[1], [0], [0], [1], [0, 0, 1, 1], [], []>} : vector<8x32xf32>, vector<32x64xf32>, vector<8x64xf32> -> vector<8x64xf32>
    %c1_135 = arith.constant 1 : index
    %c0_136 = arith.constant 0 : index
    %c0_137 = arith.constant 0 : index
    %360 = vector.load %arg12[%c1_135, %c0_136, %c0_137] : memref<2x1x64xf32, #tpu.memory_space<vmem>>, vector<1x1x64xf32>
    %361 = vector.shape_cast %360 : vector<1x1x64xf32> to vector<1x64xf32>
    %362 = vector.broadcast %361 : vector<1x64xf32> to vector<8x64xf32>
    %363 = arith.addf %359, %362 : vector<8x64xf32>
    %cst_138 = arith.constant 0.000000e+00 : f32
    %364 = vector.broadcast %cst_138 : f32 to vector<8x64xf32>
    %365 = arith.maximumf %363, %364 : vector<8x64xf32>
    %c1_139 = arith.constant 1 : index
    %c0_140 = arith.constant 0 : index
    %c0_141 = arith.constant 0 : index
    %366 = vector.load %arg13[%c1_139, %c0_140, %c0_141] : memref<2x64x32xf32, #tpu.memory_space<vmem>>, vector<1x64x32xf32>
    %367 = vector.shape_cast %366 : vector<1x64x32xf32> to vector<64x32xf32>
    %cst_142 = arith.constant dense<0.000000e+00> : vector<8x32xf32>
    %368 = tpu.matmul %365, %367, %cst_142 {dimension_numbers = #tpu.dot_dimension_numbers<[1], [0], [0], [1], [0, 0, 1, 1], [], []>} : vector<8x64xf32>, vector<64x32xf32>, vector<8x32xf32> -> vector<8x32xf32>
    %369 = vector.extract_strided_slice %233 {offsets = [3, 0], sizes = [1, 32], strides = [1, 1]} : vector<6x32xf32> to vector<1x32xf32>
    %370 = vector.broadcast %369 : vector<1x32xf32> to vector<8x32xf32>
    %371 = arith.addf %368, %370 : vector<8x32xf32>
    %372 = arith.addf %356, %371 : vector<8x32xf32>
    %373 = vector.extract_strided_slice %233 {offsets = [4, 0], sizes = [1, 32], strides = [1, 1]} : vector<6x32xf32> to vector<1x32xf32>
    %374 = vector.extract_strided_slice %233 {offsets = [5, 0], sizes = [1, 32], strides = [1, 1]} : vector<6x32xf32> to vector<1x32xf32>
    %cst_143 = arith.constant dense<0.000000e+00> : vector<8xf32>
    %375 = vector.multi_reduction <add>, %372, %cst_143 [1] : vector<8x32xf32> to vector<8xf32>
    %376 = vector.shape_cast %375 : vector<8xf32> to vector<8x1xf32>
    %cst_144 = arith.constant 3.200000e+01 : f32
    %377 = vector.broadcast %cst_144 : f32 to vector<8x1xf32>
    %378 = arith.divf %376, %377 : vector<8x1xf32>
    %379 = vector.broadcast %378 : vector<8x1xf32> to vector<8x32xf32>
    %380 = arith.subf %372, %379 : vector<8x32xf32>
    %381 = arith.mulf %380, %380 : vector<8x32xf32>
    %cst_145 = arith.constant dense<0.000000e+00> : vector<8xf32>
    %382 = vector.multi_reduction <add>, %381, %cst_145 [1] : vector<8x32xf32> to vector<8xf32>
    %383 = vector.shape_cast %382 : vector<8xf32> to vector<8x1xf32>
    %cst_146 = arith.constant 3.200000e+01 : f32
    %384 = vector.broadcast %cst_146 : f32 to vector<8x1xf32>
    %385 = arith.divf %383, %384 : vector<8x1xf32>
    %386 = vector.broadcast %378 : vector<8x1xf32> to vector<8x32xf32>
    %387 = arith.subf %372, %386 : vector<8x32xf32>
    %cst_147 = arith.constant 9.99999974E-6 : f32
    %388 = vector.broadcast %cst_147 : f32 to vector<8x1xf32>
    %389 = arith.addf %385, %388 : vector<8x1xf32>
    %390 = math.rsqrt %389 : vector<8x1xf32>
    %391 = vector.broadcast %390 : vector<8x1xf32> to vector<8x32xf32>
    %392 = arith.mulf %387, %391 : vector<8x32xf32>
    %393 = vector.broadcast %373 : vector<1x32xf32> to vector<8x32xf32>
    %394 = arith.mulf %392, %393 : vector<8x32xf32>
    %395 = vector.broadcast %374 : vector<1x32xf32> to vector<8x32xf32>
    %396 = arith.addf %394, %395 : vector<8x32xf32>
    %c0_148 = arith.constant 0 : index
    %c0_149 = arith.constant 0 : index
    %397 = vector.load %arg2[%c0_148, %c0_149] : memref<8x16xf32, #tpu.memory_space<vmem>>, vector<8x16xf32>
    %c0_150 = arith.constant 0 : index
    %c0_151 = arith.constant 0 : index
    %398 = vector.load %arg4[%c0_150, %c0_151] : memref<16x32xf32, #tpu.memory_space<vmem>>, vector<16x32xf32>
    %cst_152 = arith.constant dense<0.000000e+00> : vector<8x32xf32>
    %399 = tpu.matmul %397, %398, %cst_152 {dimension_numbers = #tpu.dot_dimension_numbers<[1], [0], [0], [1], [0, 0, 1, 1], [], []>} : vector<8x16xf32>, vector<16x32xf32>, vector<8x32xf32> -> vector<8x32xf32>
    %c0_153 = arith.constant 0 : index
    %c0_154 = arith.constant 0 : index
    %400 = vector.load %arg5[%c0_153, %c0_154] : memref<1x32xf32, #tpu.memory_space<vmem>>, vector<1x32xf32>
    %401 = vector.broadcast %400 : vector<1x32xf32> to vector<8x32xf32>
    %402 = arith.addf %399, %401 : vector<8x32xf32>
    %cst_155 = arith.constant 5.000000e-01 : f32
    %403 = vector.broadcast %cst_155 : f32 to vector<8x32xf32>
    %404 = arith.mulf %403, %402 : vector<8x32xf32>
    %cst_156 = arith.constant 0.707106769 : f32
    %405 = vector.broadcast %cst_156 : f32 to vector<8x32xf32>
    %406 = arith.mulf %402, %405 : vector<8x32xf32>
    %cst_157 = arith.constant 0.000000e+00 : f32
    %407 = vector.broadcast %cst_157 : f32 to vector<8x32xf32>
    %408 = arith.cmpf olt, %406, %407 : vector<8x32xf32>
    %cst_158 = arith.constant -1.000000e+00 : f32
    %cst_159 = arith.constant 1.000000e+00 : f32
    %409 = vector.broadcast %cst_158 : f32 to vector<8x32xf32>
    %410 = vector.broadcast %cst_159 : f32 to vector<8x32xf32>
    %411 = arith.select %408, %409, %410 : vector<8x32xi1>, vector<8x32xf32>
    %412 = math.absf %406 : vector<8x32xf32>
    %cst_160 = arith.constant 0.327591091 : f32
    %413 = vector.broadcast %cst_160 : f32 to vector<8x32xf32>
    %414 = arith.mulf %413, %412 : vector<8x32xf32>
    %cst_161 = arith.constant 1.000000e+00 : f32
    %415 = vector.broadcast %cst_161 : f32 to vector<8x32xf32>
    %416 = arith.addf %415, %414 : vector<8x32xf32>
    %cst_162 = arith.constant 1.000000e+00 : f32
    %417 = vector.broadcast %cst_162 : f32 to vector<8x32xf32>
    %418 = arith.divf %417, %416 : vector<8x32xf32>
    %cst_163 = arith.constant 1.06140542 : f32
    %419 = vector.broadcast %cst_163 : f32 to vector<8x32xf32>
    %420 = arith.mulf %419, %418 : vector<8x32xf32>
    %cst_164 = arith.constant -1.45315206 : f32
    %421 = vector.broadcast %cst_164 : f32 to vector<8x32xf32>
    %422 = arith.addf %420, %421 : vector<8x32xf32>
    %423 = arith.mulf %422, %418 : vector<8x32xf32>
    %cst_165 = arith.constant 1.42141378 : f32
    %424 = vector.broadcast %cst_165 : f32 to vector<8x32xf32>
    %425 = arith.addf %423, %424 : vector<8x32xf32>
    %426 = arith.mulf %425, %418 : vector<8x32xf32>
    %cst_166 = arith.constant -0.284496725 : f32
    %427 = vector.broadcast %cst_166 : f32 to vector<8x32xf32>
    %428 = arith.addf %426, %427 : vector<8x32xf32>
    %429 = arith.mulf %428, %418 : vector<8x32xf32>
    %cst_167 = arith.constant 0.254829586 : f32
    %430 = vector.broadcast %cst_167 : f32 to vector<8x32xf32>
    %431 = arith.addf %429, %430 : vector<8x32xf32>
    %432 = arith.mulf %431, %418 : vector<8x32xf32>
    %cst_168 = arith.constant 0.000000e+00 : f32
    %433 = vector.broadcast %cst_168 : f32 to vector<8x32xf32>
    %434 = arith.subf %433, %412 : vector<8x32xf32>
    %435 = arith.mulf %434, %412 : vector<8x32xf32>
    %436 = math.exp %435 : vector<8x32xf32>
    %437 = arith.mulf %432, %436 : vector<8x32xf32>
    %cst_169 = arith.constant 1.000000e+00 : f32
    %438 = vector.broadcast %cst_169 : f32 to vector<8x32xf32>
    %439 = arith.subf %438, %437 : vector<8x32xf32>
    %440 = arith.mulf %411, %439 : vector<8x32xf32>
    %cst_170 = arith.constant 1.000000e+00 : f32
    %441 = vector.broadcast %cst_170 : f32 to vector<8x32xf32>
    %442 = arith.addf %441, %440 : vector<8x32xf32>
    %443 = arith.mulf %404, %442 : vector<8x32xf32>
    %c0_171 = arith.constant 0 : index
    %c0_172 = arith.constant 0 : index
    %444 = vector.load %arg6[%c0_171, %c0_172] : memref<32x32xf32, #tpu.memory_space<vmem>>, vector<32x32xf32>
    %cst_173 = arith.constant dense<0.000000e+00> : vector<8x32xf32>
    %445 = tpu.matmul %443, %444, %cst_173 {dimension_numbers = #tpu.dot_dimension_numbers<[1], [0], [0], [1], [0, 0, 1, 1], [], []>} : vector<8x32xf32>, vector<32x32xf32>, vector<8x32xf32> -> vector<8x32xf32>
    %c0_174 = arith.constant 0 : index
    %c0_175 = arith.constant 0 : index
    %446 = vector.load %arg7[%c0_174, %c0_175] : memref<1x32xf32, #tpu.memory_space<vmem>>, vector<1x32xf32>
    %447 = vector.broadcast %446 : vector<1x32xf32> to vector<8x32xf32>
    %448 = arith.addf %445, %447 : vector<8x32xf32>
    %cst_176 = arith.constant dense<0.000000e+00> : vector<8x32xf32>
    %449 = tpu.matmul %11, %448, %cst_176 {dimension_numbers = #tpu.dot_dimension_numbers<[1], [0], [0], [1], [0, 0, 1, 1], [], []>} : vector<8x8xf32>, vector<8x32xf32>, vector<8x32xf32> -> vector<8x32xf32>
    %cst_177 = arith.constant 5.65685415 : f32
    %450 = vector.broadcast %cst_177 : f32 to vector<8x32xf32>
    %451 = arith.mulf %449, %450 : vector<8x32xf32>
    %452 = arith.addf %451, %0 : vector<8x32xf32>
    %c0_178 = arith.constant 0 : index
    %c0_179 = arith.constant 0 : index
    %c0_180 = arith.constant 0 : index
    %453 = vector.load %arg25[%c0_178, %c0_179, %c0_180] : memref<2x10x32xf32, #tpu.memory_space<vmem>>, vector<1x10x32xf32>
    %454 = vector.shape_cast %453 : vector<1x10x32xf32> to vector<10x32xf32>
    %c0_181 = arith.constant 0 : index
    %c0_182 = arith.constant 0 : index
    %c0_183 = arith.constant 0 : index
    %455 = vector.load %arg15[%c0_181, %c0_182, %c0_183] : memref<2x32x96xf32, #tpu.memory_space<vmem>>, vector<1x32x96xf32>
    %456 = vector.shape_cast %455 : vector<1x32x96xf32> to vector<32x96xf32>
    %c0_184 = arith.constant 0 : index
    %c0_185 = arith.constant 0 : index
    %c0_186 = arith.constant 0 : index
    %457 = vector.load %arg16[%c0_184, %c0_185, %c0_186] : memref<2x1x96xf32, #tpu.memory_space<vmem>>, vector<1x1x96xf32>
    %458 = vector.shape_cast %457 : vector<1x1x96xf32> to vector<1x96xf32>
    %c0_187 = arith.constant 0 : index
    %c0_188 = arith.constant 0 : index
    %c0_189 = arith.constant 0 : index
    %459 = vector.load %arg17[%c0_187, %c0_188, %c0_189] : memref<2x32x32xf32, #tpu.memory_space<vmem>>, vector<1x32x32xf32>
    %460 = vector.shape_cast %459 : vector<1x32x32xf32> to vector<32x32xf32>
    %461 = vector.extract_strided_slice %454 {offsets = [0, 0], sizes = [1, 32], strides = [1, 1]} : vector<10x32xf32> to vector<1x32xf32>
    %cst_190 = arith.constant dense<0.000000e+00> : vector<8x96xf32>
    %462 = tpu.matmul %452, %456, %cst_190 {dimension_numbers = #tpu.dot_dimension_numbers<[1], [0], [0], [1], [0, 0, 1, 1], [], []>} : vector<8x32xf32>, vector<32x96xf32>, vector<8x96xf32> -> vector<8x96xf32>
    %463 = vector.broadcast %458 : vector<1x96xf32> to vector<8x96xf32>
    %464 = arith.addf %462, %463 : vector<8x96xf32>
    %465 = vector.extract_strided_slice %464 {offsets = [0, 0], sizes = [8, 32], strides = [1, 1]} : vector<8x96xf32> to vector<8x32xf32>
    %466 = vector.extract_strided_slice %464 {offsets = [0, 32], sizes = [8, 32], strides = [1, 1]} : vector<8x96xf32> to vector<8x32xf32>
    %467 = vector.extract_strided_slice %464 {offsets = [0, 64], sizes = [8, 32], strides = [1, 1]} : vector<8x96xf32> to vector<8x32xf32>
    %468 = vector.extract_strided_slice %465 {offsets = [0, 0], sizes = [8, 8], strides = [1, 1]} : vector<8x32xf32> to vector<8x8xf32>
    %469 = vector.extract_strided_slice %466 {offsets = [0, 0], sizes = [8, 8], strides = [1, 1]} : vector<8x32xf32> to vector<8x8xf32>
    %470 = vector.extract_strided_slice %467 {offsets = [0, 0], sizes = [8, 8], strides = [1, 1]} : vector<8x32xf32> to vector<8x8xf32>
    %471 = tpu.transpose %469, [1, 0] : vector<8x8xf32> -> vector<8x8xf32>
    %cst_191 = arith.constant dense<0.000000e+00> : vector<8x8xf32>
    %472 = tpu.matmul %468, %471, %cst_191 {dimension_numbers = #tpu.dot_dimension_numbers<[1], [0], [0], [1], [0, 0, 1, 1], [], []>} : vector<8x8xf32>, vector<8x8xf32>, vector<8x8xf32> -> vector<8x8xf32>
    %cst_192 = arith.constant 0.353553385 : f32
    %473 = vector.broadcast %cst_192 : f32 to vector<8x8xf32>
    %474 = arith.mulf %472, %473 : vector<8x8xf32>
    %475 = arith.addf %474, %6 : vector<8x8xf32>
    %cst_193 = arith.constant dense<0xFF800000> : vector<8xf32>
    %476 = vector.multi_reduction <maximumf>, %475, %cst_193 [1] : vector<8x8xf32> to vector<8xf32>
    %477 = vector.shape_cast %476 : vector<8xf32> to vector<8x1xf32>
    %478 = vector.broadcast %477 : vector<8x1xf32> to vector<8x8xf32>
    %479 = arith.subf %475, %478 : vector<8x8xf32>
    %480 = math.exp %479 : vector<8x8xf32>
    %cst_194 = arith.constant dense<0.000000e+00> : vector<8xf32>
    %481 = vector.multi_reduction <add>, %480, %cst_194 [1] : vector<8x8xf32> to vector<8xf32>
    %482 = vector.shape_cast %481 : vector<8xf32> to vector<8x1xf32>
    %483 = tpu.reciprocal %482 {approx = true} : vector<8x1xf32> -> vector<8x1xf32>
    %484 = vector.broadcast %483 : vector<8x1xf32> to vector<8x8xf32>
    %485 = arith.mulf %480, %484 : vector<8x8xf32>
    %cst_195 = arith.constant dense<0.000000e+00> : vector<8x8xf32>
    %486 = tpu.matmul %485, %470, %cst_195 {dimension_numbers = #tpu.dot_dimension_numbers<[1], [0], [0], [1], [0, 0, 1, 1], [], []>} : vector<8x8xf32>, vector<8x8xf32>, vector<8x8xf32> -> vector<8x8xf32>
    %487 = vector.extract_strided_slice %460 {offsets = [0, 0], sizes = [8, 32], strides = [1, 1]} : vector<32x32xf32> to vector<8x32xf32>
    %cst_196 = arith.constant dense<0.000000e+00> : vector<8x32xf32>
    %488 = tpu.matmul %486, %487, %cst_196 {dimension_numbers = #tpu.dot_dimension_numbers<[1], [0], [0], [1], [0, 0, 1, 1], [], []>} : vector<8x8xf32>, vector<8x32xf32>, vector<8x32xf32> -> vector<8x32xf32>
    %489 = vector.extract_strided_slice %465 {offsets = [0, 8], sizes = [8, 8], strides = [1, 1]} : vector<8x32xf32> to vector<8x8xf32>
    %490 = vector.extract_strided_slice %466 {offsets = [0, 8], sizes = [8, 8], strides = [1, 1]} : vector<8x32xf32> to vector<8x8xf32>
    %491 = vector.extract_strided_slice %467 {offsets = [0, 8], sizes = [8, 8], strides = [1, 1]} : vector<8x32xf32> to vector<8x8xf32>
    %492 = tpu.transpose %490, [1, 0] : vector<8x8xf32> -> vector<8x8xf32>
    %cst_197 = arith.constant dense<0.000000e+00> : vector<8x8xf32>
    %493 = tpu.matmul %489, %492, %cst_197 {dimension_numbers = #tpu.dot_dimension_numbers<[1], [0], [0], [1], [0, 0, 1, 1], [], []>} : vector<8x8xf32>, vector<8x8xf32>, vector<8x8xf32> -> vector<8x8xf32>
    %cst_198 = arith.constant 0.353553385 : f32
    %494 = vector.broadcast %cst_198 : f32 to vector<8x8xf32>
    %495 = arith.mulf %493, %494 : vector<8x8xf32>
    %496 = arith.addf %495, %6 : vector<8x8xf32>
    %cst_199 = arith.constant dense<0xFF800000> : vector<8xf32>
    %497 = vector.multi_reduction <maximumf>, %496, %cst_199 [1] : vector<8x8xf32> to vector<8xf32>
    %498 = vector.shape_cast %497 : vector<8xf32> to vector<8x1xf32>
    %499 = vector.broadcast %498 : vector<8x1xf32> to vector<8x8xf32>
    %500 = arith.subf %496, %499 : vector<8x8xf32>
    %501 = math.exp %500 : vector<8x8xf32>
    %cst_200 = arith.constant dense<0.000000e+00> : vector<8xf32>
    %502 = vector.multi_reduction <add>, %501, %cst_200 [1] : vector<8x8xf32> to vector<8xf32>
    %503 = vector.shape_cast %502 : vector<8xf32> to vector<8x1xf32>
    %504 = tpu.reciprocal %503 {approx = true} : vector<8x1xf32> -> vector<8x1xf32>
    %505 = vector.broadcast %504 : vector<8x1xf32> to vector<8x8xf32>
    %506 = arith.mulf %501, %505 : vector<8x8xf32>
    %cst_201 = arith.constant dense<0.000000e+00> : vector<8x8xf32>
    %507 = tpu.matmul %506, %491, %cst_201 {dimension_numbers = #tpu.dot_dimension_numbers<[1], [0], [0], [1], [0, 0, 1, 1], [], []>} : vector<8x8xf32>, vector<8x8xf32>, vector<8x8xf32> -> vector<8x8xf32>
    %508 = vector.extract_strided_slice %460 {offsets = [8, 0], sizes = [8, 32], strides = [1, 1]} : vector<32x32xf32> to vector<8x32xf32>
    %cst_202 = arith.constant dense<0.000000e+00> : vector<8x32xf32>
    %509 = tpu.matmul %507, %508, %cst_202 {dimension_numbers = #tpu.dot_dimension_numbers<[1], [0], [0], [1], [0, 0, 1, 1], [], []>} : vector<8x8xf32>, vector<8x32xf32>, vector<8x32xf32> -> vector<8x32xf32>
    %510 = arith.addf %488, %509 : vector<8x32xf32>
    %511 = vector.extract_strided_slice %465 {offsets = [0, 16], sizes = [8, 8], strides = [1, 1]} : vector<8x32xf32> to vector<8x8xf32>
    %512 = vector.extract_strided_slice %466 {offsets = [0, 16], sizes = [8, 8], strides = [1, 1]} : vector<8x32xf32> to vector<8x8xf32>
    %513 = vector.extract_strided_slice %467 {offsets = [0, 16], sizes = [8, 8], strides = [1, 1]} : vector<8x32xf32> to vector<8x8xf32>
    %514 = tpu.transpose %512, [1, 0] : vector<8x8xf32> -> vector<8x8xf32>
    %cst_203 = arith.constant dense<0.000000e+00> : vector<8x8xf32>
    %515 = tpu.matmul %511, %514, %cst_203 {dimension_numbers = #tpu.dot_dimension_numbers<[1], [0], [0], [1], [0, 0, 1, 1], [], []>} : vector<8x8xf32>, vector<8x8xf32>, vector<8x8xf32> -> vector<8x8xf32>
    %cst_204 = arith.constant 0.353553385 : f32
    %516 = vector.broadcast %cst_204 : f32 to vector<8x8xf32>
    %517 = arith.mulf %515, %516 : vector<8x8xf32>
    %518 = arith.addf %517, %6 : vector<8x8xf32>
    %cst_205 = arith.constant dense<0xFF800000> : vector<8xf32>
    %519 = vector.multi_reduction <maximumf>, %518, %cst_205 [1] : vector<8x8xf32> to vector<8xf32>
    %520 = vector.shape_cast %519 : vector<8xf32> to vector<8x1xf32>
    %521 = vector.broadcast %520 : vector<8x1xf32> to vector<8x8xf32>
    %522 = arith.subf %518, %521 : vector<8x8xf32>
    %523 = math.exp %522 : vector<8x8xf32>
    %cst_206 = arith.constant dense<0.000000e+00> : vector<8xf32>
    %524 = vector.multi_reduction <add>, %523, %cst_206 [1] : vector<8x8xf32> to vector<8xf32>
    %525 = vector.shape_cast %524 : vector<8xf32> to vector<8x1xf32>
    %526 = tpu.reciprocal %525 {approx = true} : vector<8x1xf32> -> vector<8x1xf32>
    %527 = vector.broadcast %526 : vector<8x1xf32> to vector<8x8xf32>
    %528 = arith.mulf %523, %527 : vector<8x8xf32>
    %cst_207 = arith.constant dense<0.000000e+00> : vector<8x8xf32>
    %529 = tpu.matmul %528, %513, %cst_207 {dimension_numbers = #tpu.dot_dimension_numbers<[1], [0], [0], [1], [0, 0, 1, 1], [], []>} : vector<8x8xf32>, vector<8x8xf32>, vector<8x8xf32> -> vector<8x8xf32>
    %530 = vector.extract_strided_slice %460 {offsets = [16, 0], sizes = [8, 32], strides = [1, 1]} : vector<32x32xf32> to vector<8x32xf32>
    %cst_208 = arith.constant dense<0.000000e+00> : vector<8x32xf32>
    %531 = tpu.matmul %529, %530, %cst_208 {dimension_numbers = #tpu.dot_dimension_numbers<[1], [0], [0], [1], [0, 0, 1, 1], [], []>} : vector<8x8xf32>, vector<8x32xf32>, vector<8x32xf32> -> vector<8x32xf32>
    %532 = arith.addf %510, %531 : vector<8x32xf32>
    %533 = vector.extract_strided_slice %465 {offsets = [0, 24], sizes = [8, 8], strides = [1, 1]} : vector<8x32xf32> to vector<8x8xf32>
    %534 = vector.extract_strided_slice %466 {offsets = [0, 24], sizes = [8, 8], strides = [1, 1]} : vector<8x32xf32> to vector<8x8xf32>
    %535 = vector.extract_strided_slice %467 {offsets = [0, 24], sizes = [8, 8], strides = [1, 1]} : vector<8x32xf32> to vector<8x8xf32>
    %536 = tpu.transpose %534, [1, 0] : vector<8x8xf32> -> vector<8x8xf32>
    %cst_209 = arith.constant dense<0.000000e+00> : vector<8x8xf32>
    %537 = tpu.matmul %533, %536, %cst_209 {dimension_numbers = #tpu.dot_dimension_numbers<[1], [0], [0], [1], [0, 0, 1, 1], [], []>} : vector<8x8xf32>, vector<8x8xf32>, vector<8x8xf32> -> vector<8x8xf32>
    %cst_210 = arith.constant 0.353553385 : f32
    %538 = vector.broadcast %cst_210 : f32 to vector<8x8xf32>
    %539 = arith.mulf %537, %538 : vector<8x8xf32>
    %540 = arith.addf %539, %6 : vector<8x8xf32>
    %cst_211 = arith.constant dense<0xFF800000> : vector<8xf32>
    %541 = vector.multi_reduction <maximumf>, %540, %cst_211 [1] : vector<8x8xf32> to vector<8xf32>
    %542 = vector.shape_cast %541 : vector<8xf32> to vector<8x1xf32>
    %543 = vector.broadcast %542 : vector<8x1xf32> to vector<8x8xf32>
    %544 = arith.subf %540, %543 : vector<8x8xf32>
    %545 = math.exp %544 : vector<8x8xf32>
    %cst_212 = arith.constant dense<0.000000e+00> : vector<8xf32>
    %546 = vector.multi_reduction <add>, %545, %cst_212 [1] : vector<8x8xf32> to vector<8xf32>
    %547 = vector.shape_cast %546 : vector<8xf32> to vector<8x1xf32>
    %548 = tpu.reciprocal %547 {approx = true} : vector<8x1xf32> -> vector<8x1xf32>
    %549 = vector.broadcast %548 : vector<8x1xf32> to vector<8x8xf32>
    %550 = arith.mulf %545, %549 : vector<8x8xf32>
    %cst_213 = arith.constant dense<0.000000e+00> : vector<8x8xf32>
    %551 = tpu.matmul %550, %535, %cst_213 {dimension_numbers = #tpu.dot_dimension_numbers<[1], [0], [0], [1], [0, 0, 1, 1], [], []>} : vector<8x8xf32>, vector<8x8xf32>, vector<8x8xf32> -> vector<8x8xf32>
    %552 = vector.extract_strided_slice %460 {offsets = [24, 0], sizes = [8, 32], strides = [1, 1]} : vector<32x32xf32> to vector<8x32xf32>
    %cst_214 = arith.constant dense<0.000000e+00> : vector<8x32xf32>
    %553 = tpu.matmul %551, %552, %cst_214 {dimension_numbers = #tpu.dot_dimension_numbers<[1], [0], [0], [1], [0, 0, 1, 1], [], []>} : vector<8x8xf32>, vector<8x32xf32>, vector<8x32xf32> -> vector<8x32xf32>
    %554 = arith.addf %532, %553 : vector<8x32xf32>
    %555 = vector.broadcast %461 : vector<1x32xf32> to vector<8x32xf32>
    %556 = arith.addf %554, %555 : vector<8x32xf32>
    %557 = arith.addf %452, %556 : vector<8x32xf32>
    %558 = vector.extract_strided_slice %454 {offsets = [1, 0], sizes = [1, 32], strides = [1, 1]} : vector<10x32xf32> to vector<1x32xf32>
    %559 = vector.extract_strided_slice %454 {offsets = [2, 0], sizes = [1, 32], strides = [1, 1]} : vector<10x32xf32> to vector<1x32xf32>
    %cst_215 = arith.constant dense<0.000000e+00> : vector<8xf32>
    %560 = vector.multi_reduction <add>, %557, %cst_215 [1] : vector<8x32xf32> to vector<8xf32>
    %561 = vector.shape_cast %560 : vector<8xf32> to vector<8x1xf32>
    %cst_216 = arith.constant 3.200000e+01 : f32
    %562 = vector.broadcast %cst_216 : f32 to vector<8x1xf32>
    %563 = arith.divf %561, %562 : vector<8x1xf32>
    %564 = vector.broadcast %563 : vector<8x1xf32> to vector<8x32xf32>
    %565 = arith.subf %557, %564 : vector<8x32xf32>
    %566 = arith.mulf %565, %565 : vector<8x32xf32>
    %cst_217 = arith.constant dense<0.000000e+00> : vector<8xf32>
    %567 = vector.multi_reduction <add>, %566, %cst_217 [1] : vector<8x32xf32> to vector<8xf32>
    %568 = vector.shape_cast %567 : vector<8xf32> to vector<8x1xf32>
    %cst_218 = arith.constant 3.200000e+01 : f32
    %569 = vector.broadcast %cst_218 : f32 to vector<8x1xf32>
    %570 = arith.divf %568, %569 : vector<8x1xf32>
    %571 = vector.broadcast %563 : vector<8x1xf32> to vector<8x32xf32>
    %572 = arith.subf %557, %571 : vector<8x32xf32>
    %cst_219 = arith.constant 9.99999974E-6 : f32
    %573 = vector.broadcast %cst_219 : f32 to vector<8x1xf32>
    %574 = arith.addf %570, %573 : vector<8x1xf32>
    %575 = math.rsqrt %574 : vector<8x1xf32>
    %576 = vector.broadcast %575 : vector<8x1xf32> to vector<8x32xf32>
    %577 = arith.mulf %572, %576 : vector<8x32xf32>
    %578 = vector.broadcast %558 : vector<1x32xf32> to vector<8x32xf32>
    %579 = arith.mulf %577, %578 : vector<8x32xf32>
    %580 = vector.broadcast %559 : vector<1x32xf32> to vector<8x32xf32>
    %581 = arith.addf %579, %580 : vector<8x32xf32>
    %c0_220 = arith.constant 0 : index
    %c0_221 = arith.constant 0 : index
    %c0_222 = arith.constant 0 : index
    %582 = vector.load %arg18[%c0_220, %c0_221, %c0_222] : memref<2x32x32xf32, #tpu.memory_space<vmem>>, vector<1x32x32xf32>
    %583 = vector.shape_cast %582 : vector<1x32x32xf32> to vector<32x32xf32>
    %584 = vector.extract_strided_slice %454 {offsets = [3, 0], sizes = [1, 32], strides = [1, 1]} : vector<10x32xf32> to vector<1x32xf32>
    %c0_223 = arith.constant 0 : index
    %c0_224 = arith.constant 0 : index
    %c0_225 = arith.constant 0 : index
    %585 = vector.load %arg19[%c0_223, %c0_224, %c0_225] : memref<2x32x64xf32, #tpu.memory_space<vmem>>, vector<1x32x64xf32>
    %586 = vector.shape_cast %585 : vector<1x32x64xf32> to vector<32x64xf32>
    %c0_226 = arith.constant 0 : index
    %c0_227 = arith.constant 0 : index
    %c0_228 = arith.constant 0 : index
    %587 = vector.load %arg20[%c0_226, %c0_227, %c0_228] : memref<2x1x64xf32, #tpu.memory_space<vmem>>, vector<1x1x64xf32>
    %588 = vector.shape_cast %587 : vector<1x1x64xf32> to vector<1x64xf32>
    %c0_229 = arith.constant 0 : index
    %c0_230 = arith.constant 0 : index
    %c0_231 = arith.constant 0 : index
    %589 = vector.load %arg21[%c0_229, %c0_230, %c0_231] : memref<2x32x32xf32, #tpu.memory_space<vmem>>, vector<1x32x32xf32>
    %590 = vector.shape_cast %589 : vector<1x32x32xf32> to vector<32x32xf32>
    %591 = vector.extract_strided_slice %454 {offsets = [4, 0], sizes = [1, 32], strides = [1, 1]} : vector<10x32xf32> to vector<1x32xf32>
    %cst_232 = arith.constant dense<0.000000e+00> : vector<8x32xf32>
    %592 = tpu.matmul %581, %583, %cst_232 {dimension_numbers = #tpu.dot_dimension_numbers<[1], [0], [0], [1], [0, 0, 1, 1], [], []>} : vector<8x32xf32>, vector<32x32xf32>, vector<8x32xf32> -> vector<8x32xf32>
    %593 = vector.broadcast %584 : vector<1x32xf32> to vector<8x32xf32>
    %594 = arith.addf %592, %593 : vector<8x32xf32>
    %cst_233 = arith.constant dense<0.000000e+00> : vector<8x64xf32>
    %595 = tpu.matmul %396, %586, %cst_233 {dimension_numbers = #tpu.dot_dimension_numbers<[1], [0], [0], [1], [0, 0, 1, 1], [], []>} : vector<8x32xf32>, vector<32x64xf32>, vector<8x64xf32> -> vector<8x64xf32>
    %596 = vector.broadcast %588 : vector<1x64xf32> to vector<8x64xf32>
    %597 = arith.addf %595, %596 : vector<8x64xf32>
    %598 = vector.extract_strided_slice %597 {offsets = [0, 0], sizes = [8, 32], strides = [1, 1]} : vector<8x64xf32> to vector<8x32xf32>
    %599 = vector.extract_strided_slice %597 {offsets = [0, 32], sizes = [8, 32], strides = [1, 1]} : vector<8x64xf32> to vector<8x32xf32>
    %600 = vector.extract_strided_slice %594 {offsets = [0, 0], sizes = [8, 8], strides = [1, 1]} : vector<8x32xf32> to vector<8x8xf32>
    %601 = vector.extract_strided_slice %598 {offsets = [0, 0], sizes = [8, 8], strides = [1, 1]} : vector<8x32xf32> to vector<8x8xf32>
    %602 = vector.extract_strided_slice %599 {offsets = [0, 0], sizes = [8, 8], strides = [1, 1]} : vector<8x32xf32> to vector<8x8xf32>
    %603 = tpu.transpose %601, [1, 0] : vector<8x8xf32> -> vector<8x8xf32>
    %cst_234 = arith.constant dense<0.000000e+00> : vector<8x8xf32>
    %604 = tpu.matmul %600, %603, %cst_234 {dimension_numbers = #tpu.dot_dimension_numbers<[1], [0], [0], [1], [0, 0, 1, 1], [], []>} : vector<8x8xf32>, vector<8x8xf32>, vector<8x8xf32> -> vector<8x8xf32>
    %cst_235 = arith.constant 0.353553385 : f32
    %605 = vector.broadcast %cst_235 : f32 to vector<8x8xf32>
    %606 = arith.mulf %604, %605 : vector<8x8xf32>
    %cst_236 = arith.constant dense<0xFF800000> : vector<8xf32>
    %607 = vector.multi_reduction <maximumf>, %606, %cst_236 [1] : vector<8x8xf32> to vector<8xf32>
    %608 = vector.shape_cast %607 : vector<8xf32> to vector<8x1xf32>
    %609 = vector.broadcast %608 : vector<8x1xf32> to vector<8x8xf32>
    %610 = arith.subf %606, %609 : vector<8x8xf32>
    %611 = math.exp %610 : vector<8x8xf32>
    %cst_237 = arith.constant dense<0.000000e+00> : vector<8xf32>
    %612 = vector.multi_reduction <add>, %611, %cst_237 [1] : vector<8x8xf32> to vector<8xf32>
    %613 = vector.shape_cast %612 : vector<8xf32> to vector<8x1xf32>
    %614 = tpu.reciprocal %613 {approx = true} : vector<8x1xf32> -> vector<8x1xf32>
    %615 = vector.broadcast %614 : vector<8x1xf32> to vector<8x8xf32>
    %616 = arith.mulf %611, %615 : vector<8x8xf32>
    %cst_238 = arith.constant dense<0.000000e+00> : vector<8x8xf32>
    %617 = tpu.matmul %616, %602, %cst_238 {dimension_numbers = #tpu.dot_dimension_numbers<[1], [0], [0], [1], [0, 0, 1, 1], [], []>} : vector<8x8xf32>, vector<8x8xf32>, vector<8x8xf32> -> vector<8x8xf32>
    %618 = vector.extract_strided_slice %590 {offsets = [0, 0], sizes = [8, 32], strides = [1, 1]} : vector<32x32xf32> to vector<8x32xf32>
    %cst_239 = arith.constant dense<0.000000e+00> : vector<8x32xf32>
    %619 = tpu.matmul %617, %618, %cst_239 {dimension_numbers = #tpu.dot_dimension_numbers<[1], [0], [0], [1], [0, 0, 1, 1], [], []>} : vector<8x8xf32>, vector<8x32xf32>, vector<8x32xf32> -> vector<8x32xf32>
    %620 = vector.extract_strided_slice %594 {offsets = [0, 8], sizes = [8, 8], strides = [1, 1]} : vector<8x32xf32> to vector<8x8xf32>
    %621 = vector.extract_strided_slice %598 {offsets = [0, 8], sizes = [8, 8], strides = [1, 1]} : vector<8x32xf32> to vector<8x8xf32>
    %622 = vector.extract_strided_slice %599 {offsets = [0, 8], sizes = [8, 8], strides = [1, 1]} : vector<8x32xf32> to vector<8x8xf32>
    %623 = tpu.transpose %621, [1, 0] : vector<8x8xf32> -> vector<8x8xf32>
    %cst_240 = arith.constant dense<0.000000e+00> : vector<8x8xf32>
    %624 = tpu.matmul %620, %623, %cst_240 {dimension_numbers = #tpu.dot_dimension_numbers<[1], [0], [0], [1], [0, 0, 1, 1], [], []>} : vector<8x8xf32>, vector<8x8xf32>, vector<8x8xf32> -> vector<8x8xf32>
    %cst_241 = arith.constant 0.353553385 : f32
    %625 = vector.broadcast %cst_241 : f32 to vector<8x8xf32>
    %626 = arith.mulf %624, %625 : vector<8x8xf32>
    %cst_242 = arith.constant dense<0xFF800000> : vector<8xf32>
    %627 = vector.multi_reduction <maximumf>, %626, %cst_242 [1] : vector<8x8xf32> to vector<8xf32>
    %628 = vector.shape_cast %627 : vector<8xf32> to vector<8x1xf32>
    %629 = vector.broadcast %628 : vector<8x1xf32> to vector<8x8xf32>
    %630 = arith.subf %626, %629 : vector<8x8xf32>
    %631 = math.exp %630 : vector<8x8xf32>
    %cst_243 = arith.constant dense<0.000000e+00> : vector<8xf32>
    %632 = vector.multi_reduction <add>, %631, %cst_243 [1] : vector<8x8xf32> to vector<8xf32>
    %633 = vector.shape_cast %632 : vector<8xf32> to vector<8x1xf32>
    %634 = tpu.reciprocal %633 {approx = true} : vector<8x1xf32> -> vector<8x1xf32>
    %635 = vector.broadcast %634 : vector<8x1xf32> to vector<8x8xf32>
    %636 = arith.mulf %631, %635 : vector<8x8xf32>
    %cst_244 = arith.constant dense<0.000000e+00> : vector<8x8xf32>
    %637 = tpu.matmul %636, %622, %cst_244 {dimension_numbers = #tpu.dot_dimension_numbers<[1], [0], [0], [1], [0, 0, 1, 1], [], []>} : vector<8x8xf32>, vector<8x8xf32>, vector<8x8xf32> -> vector<8x8xf32>
    %638 = vector.extract_strided_slice %590 {offsets = [8, 0], sizes = [8, 32], strides = [1, 1]} : vector<32x32xf32> to vector<8x32xf32>
    %cst_245 = arith.constant dense<0.000000e+00> : vector<8x32xf32>
    %639 = tpu.matmul %637, %638, %cst_245 {dimension_numbers = #tpu.dot_dimension_numbers<[1], [0], [0], [1], [0, 0, 1, 1], [], []>} : vector<8x8xf32>, vector<8x32xf32>, vector<8x32xf32> -> vector<8x32xf32>
    %640 = arith.addf %619, %639 : vector<8x32xf32>
    %641 = vector.extract_strided_slice %594 {offsets = [0, 16], sizes = [8, 8], strides = [1, 1]} : vector<8x32xf32> to vector<8x8xf32>
    %642 = vector.extract_strided_slice %598 {offsets = [0, 16], sizes = [8, 8], strides = [1, 1]} : vector<8x32xf32> to vector<8x8xf32>
    %643 = vector.extract_strided_slice %599 {offsets = [0, 16], sizes = [8, 8], strides = [1, 1]} : vector<8x32xf32> to vector<8x8xf32>
    %644 = tpu.transpose %642, [1, 0] : vector<8x8xf32> -> vector<8x8xf32>
    %cst_246 = arith.constant dense<0.000000e+00> : vector<8x8xf32>
    %645 = tpu.matmul %641, %644, %cst_246 {dimension_numbers = #tpu.dot_dimension_numbers<[1], [0], [0], [1], [0, 0, 1, 1], [], []>} : vector<8x8xf32>, vector<8x8xf32>, vector<8x8xf32> -> vector<8x8xf32>
    %cst_247 = arith.constant 0.353553385 : f32
    %646 = vector.broadcast %cst_247 : f32 to vector<8x8xf32>
    %647 = arith.mulf %645, %646 : vector<8x8xf32>
    %cst_248 = arith.constant dense<0xFF800000> : vector<8xf32>
    %648 = vector.multi_reduction <maximumf>, %647, %cst_248 [1] : vector<8x8xf32> to vector<8xf32>
    %649 = vector.shape_cast %648 : vector<8xf32> to vector<8x1xf32>
    %650 = vector.broadcast %649 : vector<8x1xf32> to vector<8x8xf32>
    %651 = arith.subf %647, %650 : vector<8x8xf32>
    %652 = math.exp %651 : vector<8x8xf32>
    %cst_249 = arith.constant dense<0.000000e+00> : vector<8xf32>
    %653 = vector.multi_reduction <add>, %652, %cst_249 [1] : vector<8x8xf32> to vector<8xf32>
    %654 = vector.shape_cast %653 : vector<8xf32> to vector<8x1xf32>
    %655 = tpu.reciprocal %654 {approx = true} : vector<8x1xf32> -> vector<8x1xf32>
    %656 = vector.broadcast %655 : vector<8x1xf32> to vector<8x8xf32>
    %657 = arith.mulf %652, %656 : vector<8x8xf32>
    %cst_250 = arith.constant dense<0.000000e+00> : vector<8x8xf32>
    %658 = tpu.matmul %657, %643, %cst_250 {dimension_numbers = #tpu.dot_dimension_numbers<[1], [0], [0], [1], [0, 0, 1, 1], [], []>} : vector<8x8xf32>, vector<8x8xf32>, vector<8x8xf32> -> vector<8x8xf32>
    %659 = vector.extract_strided_slice %590 {offsets = [16, 0], sizes = [8, 32], strides = [1, 1]} : vector<32x32xf32> to vector<8x32xf32>
    %cst_251 = arith.constant dense<0.000000e+00> : vector<8x32xf32>
    %660 = tpu.matmul %658, %659, %cst_251 {dimension_numbers = #tpu.dot_dimension_numbers<[1], [0], [0], [1], [0, 0, 1, 1], [], []>} : vector<8x8xf32>, vector<8x32xf32>, vector<8x32xf32> -> vector<8x32xf32>
    %661 = arith.addf %640, %660 : vector<8x32xf32>
    %662 = vector.extract_strided_slice %594 {offsets = [0, 24], sizes = [8, 8], strides = [1, 1]} : vector<8x32xf32> to vector<8x8xf32>
    %663 = vector.extract_strided_slice %598 {offsets = [0, 24], sizes = [8, 8], strides = [1, 1]} : vector<8x32xf32> to vector<8x8xf32>
    %664 = vector.extract_strided_slice %599 {offsets = [0, 24], sizes = [8, 8], strides = [1, 1]} : vector<8x32xf32> to vector<8x8xf32>
    %665 = tpu.transpose %663, [1, 0] : vector<8x8xf32> -> vector<8x8xf32>
    %cst_252 = arith.constant dense<0.000000e+00> : vector<8x8xf32>
    %666 = tpu.matmul %662, %665, %cst_252 {dimension_numbers = #tpu.dot_dimension_numbers<[1], [0], [0], [1], [0, 0, 1, 1], [], []>} : vector<8x8xf32>, vector<8x8xf32>, vector<8x8xf32> -> vector<8x8xf32>
    %cst_253 = arith.constant 0.353553385 : f32
    %667 = vector.broadcast %cst_253 : f32 to vector<8x8xf32>
    %668 = arith.mulf %666, %667 : vector<8x8xf32>
    %cst_254 = arith.constant dense<0xFF800000> : vector<8xf32>
    %669 = vector.multi_reduction <maximumf>, %668, %cst_254 [1] : vector<8x8xf32> to vector<8xf32>
    %670 = vector.shape_cast %669 : vector<8xf32> to vector<8x1xf32>
    %671 = vector.broadcast %670 : vector<8x1xf32> to vector<8x8xf32>
    %672 = arith.subf %668, %671 : vector<8x8xf32>
    %673 = math.exp %672 : vector<8x8xf32>
    %cst_255 = arith.constant dense<0.000000e+00> : vector<8xf32>
    %674 = vector.multi_reduction <add>, %673, %cst_255 [1] : vector<8x8xf32> to vector<8xf32>
    %675 = vector.shape_cast %674 : vector<8xf32> to vector<8x1xf32>
    %676 = tpu.reciprocal %675 {approx = true} : vector<8x1xf32> -> vector<8x1xf32>
    %677 = vector.broadcast %676 : vector<8x1xf32> to vector<8x8xf32>
    %678 = arith.mulf %673, %677 : vector<8x8xf32>
    %cst_256 = arith.constant dense<0.000000e+00> : vector<8x8xf32>
    %679 = tpu.matmul %678, %664, %cst_256 {dimension_numbers = #tpu.dot_dimension_numbers<[1], [0], [0], [1], [0, 0, 1, 1], [], []>} : vector<8x8xf32>, vector<8x8xf32>, vector<8x8xf32> -> vector<8x8xf32>
    %680 = vector.extract_strided_slice %590 {offsets = [24, 0], sizes = [8, 32], strides = [1, 1]} : vector<32x32xf32> to vector<8x32xf32>
    %cst_257 = arith.constant dense<0.000000e+00> : vector<8x32xf32>
    %681 = tpu.matmul %679, %680, %cst_257 {dimension_numbers = #tpu.dot_dimension_numbers<[1], [0], [0], [1], [0, 0, 1, 1], [], []>} : vector<8x8xf32>, vector<8x32xf32>, vector<8x32xf32> -> vector<8x32xf32>
    %682 = arith.addf %661, %681 : vector<8x32xf32>
    %683 = vector.broadcast %591 : vector<1x32xf32> to vector<8x32xf32>
    %684 = arith.addf %682, %683 : vector<8x32xf32>
    %685 = arith.addf %581, %684 : vector<8x32xf32>
    %686 = vector.extract_strided_slice %454 {offsets = [5, 0], sizes = [1, 32], strides = [1, 1]} : vector<10x32xf32> to vector<1x32xf32>
    %687 = vector.extract_strided_slice %454 {offsets = [6, 0], sizes = [1, 32], strides = [1, 1]} : vector<10x32xf32> to vector<1x32xf32>
    %cst_258 = arith.constant dense<0.000000e+00> : vector<8xf32>
    %688 = vector.multi_reduction <add>, %685, %cst_258 [1] : vector<8x32xf32> to vector<8xf32>
    %689 = vector.shape_cast %688 : vector<8xf32> to vector<8x1xf32>
    %cst_259 = arith.constant 3.200000e+01 : f32
    %690 = vector.broadcast %cst_259 : f32 to vector<8x1xf32>
    %691 = arith.divf %689, %690 : vector<8x1xf32>
    %692 = vector.broadcast %691 : vector<8x1xf32> to vector<8x32xf32>
    %693 = arith.subf %685, %692 : vector<8x32xf32>
    %694 = arith.mulf %693, %693 : vector<8x32xf32>
    %cst_260 = arith.constant dense<0.000000e+00> : vector<8xf32>
    %695 = vector.multi_reduction <add>, %694, %cst_260 [1] : vector<8x32xf32> to vector<8xf32>
    %696 = vector.shape_cast %695 : vector<8xf32> to vector<8x1xf32>
    %cst_261 = arith.constant 3.200000e+01 : f32
    %697 = vector.broadcast %cst_261 : f32 to vector<8x1xf32>
    %698 = arith.divf %696, %697 : vector<8x1xf32>
    %699 = vector.broadcast %691 : vector<8x1xf32> to vector<8x32xf32>
    %700 = arith.subf %685, %699 : vector<8x32xf32>
    %cst_262 = arith.constant 9.99999974E-6 : f32
    %701 = vector.broadcast %cst_262 : f32 to vector<8x1xf32>
    %702 = arith.addf %698, %701 : vector<8x1xf32>
    %703 = math.rsqrt %702 : vector<8x1xf32>
    %704 = vector.broadcast %703 : vector<8x1xf32> to vector<8x32xf32>
    %705 = arith.mulf %700, %704 : vector<8x32xf32>
    %706 = vector.broadcast %686 : vector<1x32xf32> to vector<8x32xf32>
    %707 = arith.mulf %705, %706 : vector<8x32xf32>
    %708 = vector.broadcast %687 : vector<1x32xf32> to vector<8x32xf32>
    %709 = arith.addf %707, %708 : vector<8x32xf32>
    %710 = arith.truncf %709 : vector<8x32xf32> to vector<8x32xbf16>
    %c0_263 = arith.constant 0 : index
    %c0_264 = arith.constant 0 : index
    %c0_265 = arith.constant 0 : index
    %711 = vector.load %arg22[%c0_263, %c0_264, %c0_265] : memref<2x32x2048xbf16, #tpu.memory_space<vmem>>, vector<1x32x2048xbf16>
    %712 = vector.shape_cast %711 : vector<1x32x2048xbf16> to vector<32x2048xbf16>
    %cst_266 = arith.constant dense<0.000000e+00> : vector<8x2048xf32>
    %713 = tpu.matmul %710, %712, %cst_266 {dimension_numbers = #tpu.dot_dimension_numbers<[1], [0], [0], [1], [0, 0, 1, 1], [], []>} : vector<8x32xbf16>, vector<32x2048xbf16>, vector<8x2048xf32> -> vector<8x2048xf32>
    %c0_267 = arith.constant 0 : index
    %c0_268 = arith.constant 0 : index
    %c0_269 = arith.constant 0 : index
    %714 = vector.load %arg23[%c0_267, %c0_268, %c0_269] : memref<2x1x2048xf32, #tpu.memory_space<vmem>>, vector<1x1x2048xf32>
    %715 = vector.shape_cast %714 : vector<1x1x2048xf32> to vector<1x2048xf32>
    %716 = vector.broadcast %715 : vector<1x2048xf32> to vector<8x2048xf32>
    %717 = arith.addf %713, %716 : vector<8x2048xf32>
    %cst_270 = arith.constant 0.000000e+00 : f32
    %718 = vector.broadcast %cst_270 : f32 to vector<8x2048xf32>
    %719 = arith.maximumf %717, %718 : vector<8x2048xf32>
    %720 = arith.truncf %719 : vector<8x2048xf32> to vector<8x2048xbf16>
    %c0_271 = arith.constant 0 : index
    %c0_272 = arith.constant 0 : index
    %c0_273 = arith.constant 0 : index
    %721 = vector.load %arg24[%c0_271, %c0_272, %c0_273] : memref<2x2048x32xbf16, #tpu.memory_space<vmem>>, vector<1x2048x32xbf16>
    %722 = vector.shape_cast %721 : vector<1x2048x32xbf16> to vector<2048x32xbf16>
    %cst_274 = arith.constant dense<0.000000e+00> : vector<8x32xf32>
    %723 = tpu.matmul %720, %722, %cst_274 {dimension_numbers = #tpu.dot_dimension_numbers<[1], [0], [0], [1], [0, 0, 1, 1], [], []>} : vector<8x2048xbf16>, vector<2048x32xbf16>, vector<8x32xf32> -> vector<8x32xf32>
    %724 = vector.extract_strided_slice %454 {offsets = [7, 0], sizes = [1, 32], strides = [1, 1]} : vector<10x32xf32> to vector<1x32xf32>
    %725 = vector.broadcast %724 : vector<1x32xf32> to vector<8x32xf32>
    %726 = arith.addf %723, %725 : vector<8x32xf32>
    %727 = arith.addf %709, %726 : vector<8x32xf32>
    %728 = vector.extract_strided_slice %454 {offsets = [8, 0], sizes = [1, 32], strides = [1, 1]} : vector<10x32xf32> to vector<1x32xf32>
    %729 = vector.extract_strided_slice %454 {offsets = [9, 0], sizes = [1, 32], strides = [1, 1]} : vector<10x32xf32> to vector<1x32xf32>
    %cst_275 = arith.constant dense<0.000000e+00> : vector<8xf32>
    %730 = vector.multi_reduction <add>, %727, %cst_275 [1] : vector<8x32xf32> to vector<8xf32>
    %731 = vector.shape_cast %730 : vector<8xf32> to vector<8x1xf32>
    %cst_276 = arith.constant 3.200000e+01 : f32
    %732 = vector.broadcast %cst_276 : f32 to vector<8x1xf32>
    %733 = arith.divf %731, %732 : vector<8x1xf32>
    %734 = vector.broadcast %733 : vector<8x1xf32> to vector<8x32xf32>
    %735 = arith.subf %727, %734 : vector<8x32xf32>
    %736 = arith.mulf %735, %735 : vector<8x32xf32>
    %cst_277 = arith.constant dense<0.000000e+00> : vector<8xf32>
    %737 = vector.multi_reduction <add>, %736, %cst_277 [1] : vector<8x32xf32> to vector<8xf32>
    %738 = vector.shape_cast %737 : vector<8xf32> to vector<8x1xf32>
    %cst_278 = arith.constant 3.200000e+01 : f32
    %739 = vector.broadcast %cst_278 : f32 to vector<8x1xf32>
    %740 = arith.divf %738, %739 : vector<8x1xf32>
    %741 = vector.broadcast %733 : vector<8x1xf32> to vector<8x32xf32>
    %742 = arith.subf %727, %741 : vector<8x32xf32>
    %cst_279 = arith.constant 9.99999974E-6 : f32
    %743 = vector.broadcast %cst_279 : f32 to vector<8x1xf32>
    %744 = arith.addf %740, %743 : vector<8x1xf32>
    %745 = math.rsqrt %744 : vector<8x1xf32>
    %746 = vector.broadcast %745 : vector<8x1xf32> to vector<8x32xf32>
    %747 = arith.mulf %742, %746 : vector<8x32xf32>
    %748 = vector.broadcast %728 : vector<1x32xf32> to vector<8x32xf32>
    %749 = arith.mulf %747, %748 : vector<8x32xf32>
    %750 = vector.broadcast %729 : vector<1x32xf32> to vector<8x32xf32>
    %751 = arith.addf %749, %750 : vector<8x32xf32>
    %c1_280 = arith.constant 1 : index
    %c0_281 = arith.constant 0 : index
    %c0_282 = arith.constant 0 : index
    %752 = vector.load %arg25[%c1_280, %c0_281, %c0_282] : memref<2x10x32xf32, #tpu.memory_space<vmem>>, vector<1x10x32xf32>
    %753 = vector.shape_cast %752 : vector<1x10x32xf32> to vector<10x32xf32>
    %c1_283 = arith.constant 1 : index
    %c0_284 = arith.constant 0 : index
    %c0_285 = arith.constant 0 : index
    %754 = vector.load %arg15[%c1_283, %c0_284, %c0_285] : memref<2x32x96xf32, #tpu.memory_space<vmem>>, vector<1x32x96xf32>
    %755 = vector.shape_cast %754 : vector<1x32x96xf32> to vector<32x96xf32>
    %c1_286 = arith.constant 1 : index
    %c0_287 = arith.constant 0 : index
    %c0_288 = arith.constant 0 : index
    %756 = vector.load %arg16[%c1_286, %c0_287, %c0_288] : memref<2x1x96xf32, #tpu.memory_space<vmem>>, vector<1x1x96xf32>
    %757 = vector.shape_cast %756 : vector<1x1x96xf32> to vector<1x96xf32>
    %c1_289 = arith.constant 1 : index
    %c0_290 = arith.constant 0 : index
    %c0_291 = arith.constant 0 : index
    %758 = vector.load %arg17[%c1_289, %c0_290, %c0_291] : memref<2x32x32xf32, #tpu.memory_space<vmem>>, vector<1x32x32xf32>
    %759 = vector.shape_cast %758 : vector<1x32x32xf32> to vector<32x32xf32>
    %760 = vector.extract_strided_slice %753 {offsets = [0, 0], sizes = [1, 32], strides = [1, 1]} : vector<10x32xf32> to vector<1x32xf32>
    %cst_292 = arith.constant dense<0.000000e+00> : vector<8x96xf32>
    %761 = tpu.matmul %751, %755, %cst_292 {dimension_numbers = #tpu.dot_dimension_numbers<[1], [0], [0], [1], [0, 0, 1, 1], [], []>} : vector<8x32xf32>, vector<32x96xf32>, vector<8x96xf32> -> vector<8x96xf32>
    %762 = vector.broadcast %757 : vector<1x96xf32> to vector<8x96xf32>
    %763 = arith.addf %761, %762 : vector<8x96xf32>
    %764 = vector.extract_strided_slice %763 {offsets = [0, 0], sizes = [8, 32], strides = [1, 1]} : vector<8x96xf32> to vector<8x32xf32>
    %765 = vector.extract_strided_slice %763 {offsets = [0, 32], sizes = [8, 32], strides = [1, 1]} : vector<8x96xf32> to vector<8x32xf32>
    %766 = vector.extract_strided_slice %763 {offsets = [0, 64], sizes = [8, 32], strides = [1, 1]} : vector<8x96xf32> to vector<8x32xf32>
    %767 = vector.extract_strided_slice %764 {offsets = [0, 0], sizes = [8, 8], strides = [1, 1]} : vector<8x32xf32> to vector<8x8xf32>
    %768 = vector.extract_strided_slice %765 {offsets = [0, 0], sizes = [8, 8], strides = [1, 1]} : vector<8x32xf32> to vector<8x8xf32>
    %769 = vector.extract_strided_slice %766 {offsets = [0, 0], sizes = [8, 8], strides = [1, 1]} : vector<8x32xf32> to vector<8x8xf32>
    %770 = tpu.transpose %768, [1, 0] : vector<8x8xf32> -> vector<8x8xf32>
    %cst_293 = arith.constant dense<0.000000e+00> : vector<8x8xf32>
    %771 = tpu.matmul %767, %770, %cst_293 {dimension_numbers = #tpu.dot_dimension_numbers<[1], [0], [0], [1], [0, 0, 1, 1], [], []>} : vector<8x8xf32>, vector<8x8xf32>, vector<8x8xf32> -> vector<8x8xf32>
    %cst_294 = arith.constant 0.353553385 : f32
    %772 = vector.broadcast %cst_294 : f32 to vector<8x8xf32>
    %773 = arith.mulf %771, %772 : vector<8x8xf32>
    %774 = arith.addf %773, %6 : vector<8x8xf32>
    %cst_295 = arith.constant dense<0xFF800000> : vector<8xf32>
    %775 = vector.multi_reduction <maximumf>, %774, %cst_295 [1] : vector<8x8xf32> to vector<8xf32>
    %776 = vector.shape_cast %775 : vector<8xf32> to vector<8x1xf32>
    %777 = vector.broadcast %776 : vector<8x1xf32> to vector<8x8xf32>
    %778 = arith.subf %774, %777 : vector<8x8xf32>
    %779 = math.exp %778 : vector<8x8xf32>
    %cst_296 = arith.constant dense<0.000000e+00> : vector<8xf32>
    %780 = vector.multi_reduction <add>, %779, %cst_296 [1] : vector<8x8xf32> to vector<8xf32>
    %781 = vector.shape_cast %780 : vector<8xf32> to vector<8x1xf32>
    %782 = tpu.reciprocal %781 {approx = true} : vector<8x1xf32> -> vector<8x1xf32>
    %783 = vector.broadcast %782 : vector<8x1xf32> to vector<8x8xf32>
    %784 = arith.mulf %779, %783 : vector<8x8xf32>
    %cst_297 = arith.constant dense<0.000000e+00> : vector<8x8xf32>
    %785 = tpu.matmul %784, %769, %cst_297 {dimension_numbers = #tpu.dot_dimension_numbers<[1], [0], [0], [1], [0, 0, 1, 1], [], []>} : vector<8x8xf32>, vector<8x8xf32>, vector<8x8xf32> -> vector<8x8xf32>
    %786 = vector.extract_strided_slice %759 {offsets = [0, 0], sizes = [8, 32], strides = [1, 1]} : vector<32x32xf32> to vector<8x32xf32>
    %cst_298 = arith.constant dense<0.000000e+00> : vector<8x32xf32>
    %787 = tpu.matmul %785, %786, %cst_298 {dimension_numbers = #tpu.dot_dimension_numbers<[1], [0], [0], [1], [0, 0, 1, 1], [], []>} : vector<8x8xf32>, vector<8x32xf32>, vector<8x32xf32> -> vector<8x32xf32>
    %788 = vector.extract_strided_slice %764 {offsets = [0, 8], sizes = [8, 8], strides = [1, 1]} : vector<8x32xf32> to vector<8x8xf32>
    %789 = vector.extract_strided_slice %765 {offsets = [0, 8], sizes = [8, 8], strides = [1, 1]} : vector<8x32xf32> to vector<8x8xf32>
    %790 = vector.extract_strided_slice %766 {offsets = [0, 8], sizes = [8, 8], strides = [1, 1]} : vector<8x32xf32> to vector<8x8xf32>
    %791 = tpu.transpose %789, [1, 0] : vector<8x8xf32> -> vector<8x8xf32>
    %cst_299 = arith.constant dense<0.000000e+00> : vector<8x8xf32>
    %792 = tpu.matmul %788, %791, %cst_299 {dimension_numbers = #tpu.dot_dimension_numbers<[1], [0], [0], [1], [0, 0, 1, 1], [], []>} : vector<8x8xf32>, vector<8x8xf32>, vector<8x8xf32> -> vector<8x8xf32>
    %cst_300 = arith.constant 0.353553385 : f32
    %793 = vector.broadcast %cst_300 : f32 to vector<8x8xf32>
    %794 = arith.mulf %792, %793 : vector<8x8xf32>
    %795 = arith.addf %794, %6 : vector<8x8xf32>
    %cst_301 = arith.constant dense<0xFF800000> : vector<8xf32>
    %796 = vector.multi_reduction <maximumf>, %795, %cst_301 [1] : vector<8x8xf32> to vector<8xf32>
    %797 = vector.shape_cast %796 : vector<8xf32> to vector<8x1xf32>
    %798 = vector.broadcast %797 : vector<8x1xf32> to vector<8x8xf32>
    %799 = arith.subf %795, %798 : vector<8x8xf32>
    %800 = math.exp %799 : vector<8x8xf32>
    %cst_302 = arith.constant dense<0.000000e+00> : vector<8xf32>
    %801 = vector.multi_reduction <add>, %800, %cst_302 [1] : vector<8x8xf32> to vector<8xf32>
    %802 = vector.shape_cast %801 : vector<8xf32> to vector<8x1xf32>
    %803 = tpu.reciprocal %802 {approx = true} : vector<8x1xf32> -> vector<8x1xf32>
    %804 = vector.broadcast %803 : vector<8x1xf32> to vector<8x8xf32>
    %805 = arith.mulf %800, %804 : vector<8x8xf32>
    %cst_303 = arith.constant dense<0.000000e+00> : vector<8x8xf32>
    %806 = tpu.matmul %805, %790, %cst_303 {dimension_numbers = #tpu.dot_dimension_numbers<[1], [0], [0], [1], [0, 0, 1, 1], [], []>} : vector<8x8xf32>, vector<8x8xf32>, vector<8x8xf32> -> vector<8x8xf32>
    %807 = vector.extract_strided_slice %759 {offsets = [8, 0], sizes = [8, 32], strides = [1, 1]} : vector<32x32xf32> to vector<8x32xf32>
    %cst_304 = arith.constant dense<0.000000e+00> : vector<8x32xf32>
    %808 = tpu.matmul %806, %807, %cst_304 {dimension_numbers = #tpu.dot_dimension_numbers<[1], [0], [0], [1], [0, 0, 1, 1], [], []>} : vector<8x8xf32>, vector<8x32xf32>, vector<8x32xf32> -> vector<8x32xf32>
    %809 = arith.addf %787, %808 : vector<8x32xf32>
    %810 = vector.extract_strided_slice %764 {offsets = [0, 16], sizes = [8, 8], strides = [1, 1]} : vector<8x32xf32> to vector<8x8xf32>
    %811 = vector.extract_strided_slice %765 {offsets = [0, 16], sizes = [8, 8], strides = [1, 1]} : vector<8x32xf32> to vector<8x8xf32>
    %812 = vector.extract_strided_slice %766 {offsets = [0, 16], sizes = [8, 8], strides = [1, 1]} : vector<8x32xf32> to vector<8x8xf32>
    %813 = tpu.transpose %811, [1, 0] : vector<8x8xf32> -> vector<8x8xf32>
    %cst_305 = arith.constant dense<0.000000e+00> : vector<8x8xf32>
    %814 = tpu.matmul %810, %813, %cst_305 {dimension_numbers = #tpu.dot_dimension_numbers<[1], [0], [0], [1], [0, 0, 1, 1], [], []>} : vector<8x8xf32>, vector<8x8xf32>, vector<8x8xf32> -> vector<8x8xf32>
    %cst_306 = arith.constant 0.353553385 : f32
    %815 = vector.broadcast %cst_306 : f32 to vector<8x8xf32>
    %816 = arith.mulf %814, %815 : vector<8x8xf32>
    %817 = arith.addf %816, %6 : vector<8x8xf32>
    %cst_307 = arith.constant dense<0xFF800000> : vector<8xf32>
    %818 = vector.multi_reduction <maximumf>, %817, %cst_307 [1] : vector<8x8xf32> to vector<8xf32>
    %819 = vector.shape_cast %818 : vector<8xf32> to vector<8x1xf32>
    %820 = vector.broadcast %819 : vector<8x1xf32> to vector<8x8xf32>
    %821 = arith.subf %817, %820 : vector<8x8xf32>
    %822 = math.exp %821 : vector<8x8xf32>
    %cst_308 = arith.constant dense<0.000000e+00> : vector<8xf32>
    %823 = vector.multi_reduction <add>, %822, %cst_308 [1] : vector<8x8xf32> to vector<8xf32>
    %824 = vector.shape_cast %823 : vector<8xf32> to vector<8x1xf32>
    %825 = tpu.reciprocal %824 {approx = true} : vector<8x1xf32> -> vector<8x1xf32>
    %826 = vector.broadcast %825 : vector<8x1xf32> to vector<8x8xf32>
    %827 = arith.mulf %822, %826 : vector<8x8xf32>
    %cst_309 = arith.constant dense<0.000000e+00> : vector<8x8xf32>
    %828 = tpu.matmul %827, %812, %cst_309 {dimension_numbers = #tpu.dot_dimension_numbers<[1], [0], [0], [1], [0, 0, 1, 1], [], []>} : vector<8x8xf32>, vector<8x8xf32>, vector<8x8xf32> -> vector<8x8xf32>
    %829 = vector.extract_strided_slice %759 {offsets = [16, 0], sizes = [8, 32], strides = [1, 1]} : vector<32x32xf32> to vector<8x32xf32>
    %cst_310 = arith.constant dense<0.000000e+00> : vector<8x32xf32>
    %830 = tpu.matmul %828, %829, %cst_310 {dimension_numbers = #tpu.dot_dimension_numbers<[1], [0], [0], [1], [0, 0, 1, 1], [], []>} : vector<8x8xf32>, vector<8x32xf32>, vector<8x32xf32> -> vector<8x32xf32>
    %831 = arith.addf %809, %830 : vector<8x32xf32>
    %832 = vector.extract_strided_slice %764 {offsets = [0, 24], sizes = [8, 8], strides = [1, 1]} : vector<8x32xf32> to vector<8x8xf32>
    %833 = vector.extract_strided_slice %765 {offsets = [0, 24], sizes = [8, 8], strides = [1, 1]} : vector<8x32xf32> to vector<8x8xf32>
    %834 = vector.extract_strided_slice %766 {offsets = [0, 24], sizes = [8, 8], strides = [1, 1]} : vector<8x32xf32> to vector<8x8xf32>
    %835 = tpu.transpose %833, [1, 0] : vector<8x8xf32> -> vector<8x8xf32>
    %cst_311 = arith.constant dense<0.000000e+00> : vector<8x8xf32>
    %836 = tpu.matmul %832, %835, %cst_311 {dimension_numbers = #tpu.dot_dimension_numbers<[1], [0], [0], [1], [0, 0, 1, 1], [], []>} : vector<8x8xf32>, vector<8x8xf32>, vector<8x8xf32> -> vector<8x8xf32>
    %cst_312 = arith.constant 0.353553385 : f32
    %837 = vector.broadcast %cst_312 : f32 to vector<8x8xf32>
    %838 = arith.mulf %836, %837 : vector<8x8xf32>
    %839 = arith.addf %838, %6 : vector<8x8xf32>
    %cst_313 = arith.constant dense<0xFF800000> : vector<8xf32>
    %840 = vector.multi_reduction <maximumf>, %839, %cst_313 [1] : vector<8x8xf32> to vector<8xf32>
    %841 = vector.shape_cast %840 : vector<8xf32> to vector<8x1xf32>
    %842 = vector.broadcast %841 : vector<8x1xf32> to vector<8x8xf32>
    %843 = arith.subf %839, %842 : vector<8x8xf32>
    %844 = math.exp %843 : vector<8x8xf32>
    %cst_314 = arith.constant dense<0.000000e+00> : vector<8xf32>
    %845 = vector.multi_reduction <add>, %844, %cst_314 [1] : vector<8x8xf32> to vector<8xf32>
    %846 = vector.shape_cast %845 : vector<8xf32> to vector<8x1xf32>
    %847 = tpu.reciprocal %846 {approx = true} : vector<8x1xf32> -> vector<8x1xf32>
    %848 = vector.broadcast %847 : vector<8x1xf32> to vector<8x8xf32>
    %849 = arith.mulf %844, %848 : vector<8x8xf32>
    %cst_315 = arith.constant dense<0.000000e+00> : vector<8x8xf32>
    %850 = tpu.matmul %849, %834, %cst_315 {dimension_numbers = #tpu.dot_dimension_numbers<[1], [0], [0], [1], [0, 0, 1, 1], [], []>} : vector<8x8xf32>, vector<8x8xf32>, vector<8x8xf32> -> vector<8x8xf32>
    %851 = vector.extract_strided_slice %759 {offsets = [24, 0], sizes = [8, 32], strides = [1, 1]} : vector<32x32xf32> to vector<8x32xf32>
    %cst_316 = arith.constant dense<0.000000e+00> : vector<8x32xf32>
    %852 = tpu.matmul %850, %851, %cst_316 {dimension_numbers = #tpu.dot_dimension_numbers<[1], [0], [0], [1], [0, 0, 1, 1], [], []>} : vector<8x8xf32>, vector<8x32xf32>, vector<8x32xf32> -> vector<8x32xf32>
    %853 = arith.addf %831, %852 : vector<8x32xf32>
    %854 = vector.broadcast %760 : vector<1x32xf32> to vector<8x32xf32>
    %855 = arith.addf %853, %854 : vector<8x32xf32>
    %856 = arith.addf %751, %855 : vector<8x32xf32>
    %857 = vector.extract_strided_slice %753 {offsets = [1, 0], sizes = [1, 32], strides = [1, 1]} : vector<10x32xf32> to vector<1x32xf32>
    %858 = vector.extract_strided_slice %753 {offsets = [2, 0], sizes = [1, 32], strides = [1, 1]} : vector<10x32xf32> to vector<1x32xf32>
    %cst_317 = arith.constant dense<0.000000e+00> : vector<8xf32>
    %859 = vector.multi_reduction <add>, %856, %cst_317 [1] : vector<8x32xf32> to vector<8xf32>
    %860 = vector.shape_cast %859 : vector<8xf32> to vector<8x1xf32>
    %cst_318 = arith.constant 3.200000e+01 : f32
    %861 = vector.broadcast %cst_318 : f32 to vector<8x1xf32>
    %862 = arith.divf %860, %861 : vector<8x1xf32>
    %863 = vector.broadcast %862 : vector<8x1xf32> to vector<8x32xf32>
    %864 = arith.subf %856, %863 : vector<8x32xf32>
    %865 = arith.mulf %864, %864 : vector<8x32xf32>
    %cst_319 = arith.constant dense<0.000000e+00> : vector<8xf32>
    %866 = vector.multi_reduction <add>, %865, %cst_319 [1] : vector<8x32xf32> to vector<8xf32>
    %867 = vector.shape_cast %866 : vector<8xf32> to vector<8x1xf32>
    %cst_320 = arith.constant 3.200000e+01 : f32
    %868 = vector.broadcast %cst_320 : f32 to vector<8x1xf32>
    %869 = arith.divf %867, %868 : vector<8x1xf32>
    %870 = vector.broadcast %862 : vector<8x1xf32> to vector<8x32xf32>
    %871 = arith.subf %856, %870 : vector<8x32xf32>
    %cst_321 = arith.constant 9.99999974E-6 : f32
    %872 = vector.broadcast %cst_321 : f32 to vector<8x1xf32>
    %873 = arith.addf %869, %872 : vector<8x1xf32>
    %874 = math.rsqrt %873 : vector<8x1xf32>
    %875 = vector.broadcast %874 : vector<8x1xf32> to vector<8x32xf32>
    %876 = arith.mulf %871, %875 : vector<8x32xf32>
    %877 = vector.broadcast %857 : vector<1x32xf32> to vector<8x32xf32>
    %878 = arith.mulf %876, %877 : vector<8x32xf32>
    %879 = vector.broadcast %858 : vector<1x32xf32> to vector<8x32xf32>
    %880 = arith.addf %878, %879 : vector<8x32xf32>
    %c1_322 = arith.constant 1 : index
    %c0_323 = arith.constant 0 : index
    %c0_324 = arith.constant 0 : index
    %881 = vector.load %arg18[%c1_322, %c0_323, %c0_324] : memref<2x32x32xf32, #tpu.memory_space<vmem>>, vector<1x32x32xf32>
    %882 = vector.shape_cast %881 : vector<1x32x32xf32> to vector<32x32xf32>
    %883 = vector.extract_strided_slice %753 {offsets = [3, 0], sizes = [1, 32], strides = [1, 1]} : vector<10x32xf32> to vector<1x32xf32>
    %c1_325 = arith.constant 1 : index
    %c0_326 = arith.constant 0 : index
    %c0_327 = arith.constant 0 : index
    %884 = vector.load %arg19[%c1_325, %c0_326, %c0_327] : memref<2x32x64xf32, #tpu.memory_space<vmem>>, vector<1x32x64xf32>
    %885 = vector.shape_cast %884 : vector<1x32x64xf32> to vector<32x64xf32>
    %c1_328 = arith.constant 1 : index
    %c0_329 = arith.constant 0 : index
    %c0_330 = arith.constant 0 : index
    %886 = vector.load %arg20[%c1_328, %c0_329, %c0_330] : memref<2x1x64xf32, #tpu.memory_space<vmem>>, vector<1x1x64xf32>
    %887 = vector.shape_cast %886 : vector<1x1x64xf32> to vector<1x64xf32>
    %c1_331 = arith.constant 1 : index
    %c0_332 = arith.constant 0 : index
    %c0_333 = arith.constant 0 : index
    %888 = vector.load %arg21[%c1_331, %c0_332, %c0_333] : memref<2x32x32xf32, #tpu.memory_space<vmem>>, vector<1x32x32xf32>
    %889 = vector.shape_cast %888 : vector<1x32x32xf32> to vector<32x32xf32>
    %890 = vector.extract_strided_slice %753 {offsets = [4, 0], sizes = [1, 32], strides = [1, 1]} : vector<10x32xf32> to vector<1x32xf32>
    %cst_334 = arith.constant dense<0.000000e+00> : vector<8x32xf32>
    %891 = tpu.matmul %880, %882, %cst_334 {dimension_numbers = #tpu.dot_dimension_numbers<[1], [0], [0], [1], [0, 0, 1, 1], [], []>} : vector<8x32xf32>, vector<32x32xf32>, vector<8x32xf32> -> vector<8x32xf32>
    %892 = vector.broadcast %883 : vector<1x32xf32> to vector<8x32xf32>
    %893 = arith.addf %891, %892 : vector<8x32xf32>
    %cst_335 = arith.constant dense<0.000000e+00> : vector<8x64xf32>
    %894 = tpu.matmul %396, %885, %cst_335 {dimension_numbers = #tpu.dot_dimension_numbers<[1], [0], [0], [1], [0, 0, 1, 1], [], []>} : vector<8x32xf32>, vector<32x64xf32>, vector<8x64xf32> -> vector<8x64xf32>
    %895 = vector.broadcast %887 : vector<1x64xf32> to vector<8x64xf32>
    %896 = arith.addf %894, %895 : vector<8x64xf32>
    %897 = vector.extract_strided_slice %896 {offsets = [0, 0], sizes = [8, 32], strides = [1, 1]} : vector<8x64xf32> to vector<8x32xf32>
    %898 = vector.extract_strided_slice %896 {offsets = [0, 32], sizes = [8, 32], strides = [1, 1]} : vector<8x64xf32> to vector<8x32xf32>
    %899 = vector.extract_strided_slice %893 {offsets = [0, 0], sizes = [8, 8], strides = [1, 1]} : vector<8x32xf32> to vector<8x8xf32>
    %900 = vector.extract_strided_slice %897 {offsets = [0, 0], sizes = [8, 8], strides = [1, 1]} : vector<8x32xf32> to vector<8x8xf32>
    %901 = vector.extract_strided_slice %898 {offsets = [0, 0], sizes = [8, 8], strides = [1, 1]} : vector<8x32xf32> to vector<8x8xf32>
    %902 = tpu.transpose %900, [1, 0] : vector<8x8xf32> -> vector<8x8xf32>
    %cst_336 = arith.constant dense<0.000000e+00> : vector<8x8xf32>
    %903 = tpu.matmul %899, %902, %cst_336 {dimension_numbers = #tpu.dot_dimension_numbers<[1], [0], [0], [1], [0, 0, 1, 1], [], []>} : vector<8x8xf32>, vector<8x8xf32>, vector<8x8xf32> -> vector<8x8xf32>
    %cst_337 = arith.constant 0.353553385 : f32
    %904 = vector.broadcast %cst_337 : f32 to vector<8x8xf32>
    %905 = arith.mulf %903, %904 : vector<8x8xf32>
    %cst_338 = arith.constant dense<0xFF800000> : vector<8xf32>
    %906 = vector.multi_reduction <maximumf>, %905, %cst_338 [1] : vector<8x8xf32> to vector<8xf32>
    %907 = vector.shape_cast %906 : vector<8xf32> to vector<8x1xf32>
    %908 = vector.broadcast %907 : vector<8x1xf32> to vector<8x8xf32>
    %909 = arith.subf %905, %908 : vector<8x8xf32>
    %910 = math.exp %909 : vector<8x8xf32>
    %cst_339 = arith.constant dense<0.000000e+00> : vector<8xf32>
    %911 = vector.multi_reduction <add>, %910, %cst_339 [1] : vector<8x8xf32> to vector<8xf32>
    %912 = vector.shape_cast %911 : vector<8xf32> to vector<8x1xf32>
    %913 = tpu.reciprocal %912 {approx = true} : vector<8x1xf32> -> vector<8x1xf32>
    %914 = vector.broadcast %913 : vector<8x1xf32> to vector<8x8xf32>
    %915 = arith.mulf %910, %914 : vector<8x8xf32>
    %cst_340 = arith.constant dense<0.000000e+00> : vector<8x8xf32>
    %916 = tpu.matmul %915, %901, %cst_340 {dimension_numbers = #tpu.dot_dimension_numbers<[1], [0], [0], [1], [0, 0, 1, 1], [], []>} : vector<8x8xf32>, vector<8x8xf32>, vector<8x8xf32> -> vector<8x8xf32>
    %917 = vector.extract_strided_slice %889 {offsets = [0, 0], sizes = [8, 32], strides = [1, 1]} : vector<32x32xf32> to vector<8x32xf32>
    %cst_341 = arith.constant dense<0.000000e+00> : vector<8x32xf32>
    %918 = tpu.matmul %916, %917, %cst_341 {dimension_numbers = #tpu.dot_dimension_numbers<[1], [0], [0], [1], [0, 0, 1, 1], [], []>} : vector<8x8xf32>, vector<8x32xf32>, vector<8x32xf32> -> vector<8x32xf32>
    %919 = vector.extract_strided_slice %893 {offsets = [0, 8], sizes = [8, 8], strides = [1, 1]} : vector<8x32xf32> to vector<8x8xf32>
    %920 = vector.extract_strided_slice %897 {offsets = [0, 8], sizes = [8, 8], strides = [1, 1]} : vector<8x32xf32> to vector<8x8xf32>
    %921 = vector.extract_strided_slice %898 {offsets = [0, 8], sizes = [8, 8], strides = [1, 1]} : vector<8x32xf32> to vector<8x8xf32>
    %922 = tpu.transpose %920, [1, 0] : vector<8x8xf32> -> vector<8x8xf32>
    %cst_342 = arith.constant dense<0.000000e+00> : vector<8x8xf32>
    %923 = tpu.matmul %919, %922, %cst_342 {dimension_numbers = #tpu.dot_dimension_numbers<[1], [0], [0], [1], [0, 0, 1, 1], [], []>} : vector<8x8xf32>, vector<8x8xf32>, vector<8x8xf32> -> vector<8x8xf32>
    %cst_343 = arith.constant 0.353553385 : f32
    %924 = vector.broadcast %cst_343 : f32 to vector<8x8xf32>
    %925 = arith.mulf %923, %924 : vector<8x8xf32>
    %cst_344 = arith.constant dense<0xFF800000> : vector<8xf32>
    %926 = vector.multi_reduction <maximumf>, %925, %cst_344 [1] : vector<8x8xf32> to vector<8xf32>
    %927 = vector.shape_cast %926 : vector<8xf32> to vector<8x1xf32>
    %928 = vector.broadcast %927 : vector<8x1xf32> to vector<8x8xf32>
    %929 = arith.subf %925, %928 : vector<8x8xf32>
    %930 = math.exp %929 : vector<8x8xf32>
    %cst_345 = arith.constant dense<0.000000e+00> : vector<8xf32>
    %931 = vector.multi_reduction <add>, %930, %cst_345 [1] : vector<8x8xf32> to vector<8xf32>
    %932 = vector.shape_cast %931 : vector<8xf32> to vector<8x1xf32>
    %933 = tpu.reciprocal %932 {approx = true} : vector<8x1xf32> -> vector<8x1xf32>
    %934 = vector.broadcast %933 : vector<8x1xf32> to vector<8x8xf32>
    %935 = arith.mulf %930, %934 : vector<8x8xf32>
    %cst_346 = arith.constant dense<0.000000e+00> : vector<8x8xf32>
    %936 = tpu.matmul %935, %921, %cst_346 {dimension_numbers = #tpu.dot_dimension_numbers<[1], [0], [0], [1], [0, 0, 1, 1], [], []>} : vector<8x8xf32>, vector<8x8xf32>, vector<8x8xf32> -> vector<8x8xf32>
    %937 = vector.extract_strided_slice %889 {offsets = [8, 0], sizes = [8, 32], strides = [1, 1]} : vector<32x32xf32> to vector<8x32xf32>
    %cst_347 = arith.constant dense<0.000000e+00> : vector<8x32xf32>
    %938 = tpu.matmul %936, %937, %cst_347 {dimension_numbers = #tpu.dot_dimension_numbers<[1], [0], [0], [1], [0, 0, 1, 1], [], []>} : vector<8x8xf32>, vector<8x32xf32>, vector<8x32xf32> -> vector<8x32xf32>
    %939 = arith.addf %918, %938 : vector<8x32xf32>
    %940 = vector.extract_strided_slice %893 {offsets = [0, 16], sizes = [8, 8], strides = [1, 1]} : vector<8x32xf32> to vector<8x8xf32>
    %941 = vector.extract_strided_slice %897 {offsets = [0, 16], sizes = [8, 8], strides = [1, 1]} : vector<8x32xf32> to vector<8x8xf32>
    %942 = vector.extract_strided_slice %898 {offsets = [0, 16], sizes = [8, 8], strides = [1, 1]} : vector<8x32xf32> to vector<8x8xf32>
    %943 = tpu.transpose %941, [1, 0] : vector<8x8xf32> -> vector<8x8xf32>
    %cst_348 = arith.constant dense<0.000000e+00> : vector<8x8xf32>
    %944 = tpu.matmul %940, %943, %cst_348 {dimension_numbers = #tpu.dot_dimension_numbers<[1], [0], [0], [1], [0, 0, 1, 1], [], []>} : vector<8x8xf32>, vector<8x8xf32>, vector<8x8xf32> -> vector<8x8xf32>
    %cst_349 = arith.constant 0.353553385 : f32
    %945 = vector.broadcast %cst_349 : f32 to vector<8x8xf32>
    %946 = arith.mulf %944, %945 : vector<8x8xf32>
    %cst_350 = arith.constant dense<0xFF800000> : vector<8xf32>
    %947 = vector.multi_reduction <maximumf>, %946, %cst_350 [1] : vector<8x8xf32> to vector<8xf32>
    %948 = vector.shape_cast %947 : vector<8xf32> to vector<8x1xf32>
    %949 = vector.broadcast %948 : vector<8x1xf32> to vector<8x8xf32>
    %950 = arith.subf %946, %949 : vector<8x8xf32>
    %951 = math.exp %950 : vector<8x8xf32>
    %cst_351 = arith.constant dense<0.000000e+00> : vector<8xf32>
    %952 = vector.multi_reduction <add>, %951, %cst_351 [1] : vector<8x8xf32> to vector<8xf32>
    %953 = vector.shape_cast %952 : vector<8xf32> to vector<8x1xf32>
    %954 = tpu.reciprocal %953 {approx = true} : vector<8x1xf32> -> vector<8x1xf32>
    %955 = vector.broadcast %954 : vector<8x1xf32> to vector<8x8xf32>
    %956 = arith.mulf %951, %955 : vector<8x8xf32>
    %cst_352 = arith.constant dense<0.000000e+00> : vector<8x8xf32>
    %957 = tpu.matmul %956, %942, %cst_352 {dimension_numbers = #tpu.dot_dimension_numbers<[1], [0], [0], [1], [0, 0, 1, 1], [], []>} : vector<8x8xf32>, vector<8x8xf32>, vector<8x8xf32> -> vector<8x8xf32>
    %958 = vector.extract_strided_slice %889 {offsets = [16, 0], sizes = [8, 32], strides = [1, 1]} : vector<32x32xf32> to vector<8x32xf32>
    %cst_353 = arith.constant dense<0.000000e+00> : vector<8x32xf32>
    %959 = tpu.matmul %957, %958, %cst_353 {dimension_numbers = #tpu.dot_dimension_numbers<[1], [0], [0], [1], [0, 0, 1, 1], [], []>} : vector<8x8xf32>, vector<8x32xf32>, vector<8x32xf32> -> vector<8x32xf32>
    %960 = arith.addf %939, %959 : vector<8x32xf32>
    %961 = vector.extract_strided_slice %893 {offsets = [0, 24], sizes = [8, 8], strides = [1, 1]} : vector<8x32xf32> to vector<8x8xf32>
    %962 = vector.extract_strided_slice %897 {offsets = [0, 24], sizes = [8, 8], strides = [1, 1]} : vector<8x32xf32> to vector<8x8xf32>
    %963 = vector.extract_strided_slice %898 {offsets = [0, 24], sizes = [8, 8], strides = [1, 1]} : vector<8x32xf32> to vector<8x8xf32>
    %964 = tpu.transpose %962, [1, 0] : vector<8x8xf32> -> vector<8x8xf32>
    %cst_354 = arith.constant dense<0.000000e+00> : vector<8x8xf32>
    %965 = tpu.matmul %961, %964, %cst_354 {dimension_numbers = #tpu.dot_dimension_numbers<[1], [0], [0], [1], [0, 0, 1, 1], [], []>} : vector<8x8xf32>, vector<8x8xf32>, vector<8x8xf32> -> vector<8x8xf32>
    %cst_355 = arith.constant 0.353553385 : f32
    %966 = vector.broadcast %cst_355 : f32 to vector<8x8xf32>
    %967 = arith.mulf %965, %966 : vector<8x8xf32>
    %cst_356 = arith.constant dense<0xFF800000> : vector<8xf32>
    %968 = vector.multi_reduction <maximumf>, %967, %cst_356 [1] : vector<8x8xf32> to vector<8xf32>
    %969 = vector.shape_cast %968 : vector<8xf32> to vector<8x1xf32>
    %970 = vector.broadcast %969 : vector<8x1xf32> to vector<8x8xf32>
    %971 = arith.subf %967, %970 : vector<8x8xf32>
    %972 = math.exp %971 : vector<8x8xf32>
    %cst_357 = arith.constant dense<0.000000e+00> : vector<8xf32>
    %973 = vector.multi_reduction <add>, %972, %cst_357 [1] : vector<8x8xf32> to vector<8xf32>
    %974 = vector.shape_cast %973 : vector<8xf32> to vector<8x1xf32>
    %975 = tpu.reciprocal %974 {approx = true} : vector<8x1xf32> -> vector<8x1xf32>
    %976 = vector.broadcast %975 : vector<8x1xf32> to vector<8x8xf32>
    %977 = arith.mulf %972, %976 : vector<8x8xf32>
    %cst_358 = arith.constant dense<0.000000e+00> : vector<8x8xf32>
    %978 = tpu.matmul %977, %963, %cst_358 {dimension_numbers = #tpu.dot_dimension_numbers<[1], [0], [0], [1], [0, 0, 1, 1], [], []>} : vector<8x8xf32>, vector<8x8xf32>, vector<8x8xf32> -> vector<8x8xf32>
    %979 = vector.extract_strided_slice %889 {offsets = [24, 0], sizes = [8, 32], strides = [1, 1]} : vector<32x32xf32> to vector<8x32xf32>
    %cst_359 = arith.constant dense<0.000000e+00> : vector<8x32xf32>
    %980 = tpu.matmul %978, %979, %cst_359 {dimension_numbers = #tpu.dot_dimension_numbers<[1], [0], [0], [1], [0, 0, 1, 1], [], []>} : vector<8x8xf32>, vector<8x32xf32>, vector<8x32xf32> -> vector<8x32xf32>
    %981 = arith.addf %960, %980 : vector<8x32xf32>
    %982 = vector.broadcast %890 : vector<1x32xf32> to vector<8x32xf32>
    %983 = arith.addf %981, %982 : vector<8x32xf32>
    %984 = arith.addf %880, %983 : vector<8x32xf32>
    %985 = vector.extract_strided_slice %753 {offsets = [5, 0], sizes = [1, 32], strides = [1, 1]} : vector<10x32xf32> to vector<1x32xf32>
    %986 = vector.extract_strided_slice %753 {offsets = [6, 0], sizes = [1, 32], strides = [1, 1]} : vector<10x32xf32> to vector<1x32xf32>
    %cst_360 = arith.constant dense<0.000000e+00> : vector<8xf32>
    %987 = vector.multi_reduction <add>, %984, %cst_360 [1] : vector<8x32xf32> to vector<8xf32>
    %988 = vector.shape_cast %987 : vector<8xf32> to vector<8x1xf32>
    %cst_361 = arith.constant 3.200000e+01 : f32
    %989 = vector.broadcast %cst_361 : f32 to vector<8x1xf32>
    %990 = arith.divf %988, %989 : vector<8x1xf32>
    %991 = vector.broadcast %990 : vector<8x1xf32> to vector<8x32xf32>
    %992 = arith.subf %984, %991 : vector<8x32xf32>
    %993 = arith.mulf %992, %992 : vector<8x32xf32>
    %cst_362 = arith.constant dense<0.000000e+00> : vector<8xf32>
    %994 = vector.multi_reduction <add>, %993, %cst_362 [1] : vector<8x32xf32> to vector<8xf32>
    %995 = vector.shape_cast %994 : vector<8xf32> to vector<8x1xf32>
    %cst_363 = arith.constant 3.200000e+01 : f32
    %996 = vector.broadcast %cst_363 : f32 to vector<8x1xf32>
    %997 = arith.divf %995, %996 : vector<8x1xf32>
    %998 = vector.broadcast %990 : vector<8x1xf32> to vector<8x32xf32>
    %999 = arith.subf %984, %998 : vector<8x32xf32>
    %cst_364 = arith.constant 9.99999974E-6 : f32
    %1000 = vector.broadcast %cst_364 : f32 to vector<8x1xf32>
    %1001 = arith.addf %997, %1000 : vector<8x1xf32>
    %1002 = math.rsqrt %1001 : vector<8x1xf32>
    %1003 = vector.broadcast %1002 : vector<8x1xf32> to vector<8x32xf32>
    %1004 = arith.mulf %999, %1003 : vector<8x32xf32>
    %1005 = vector.broadcast %985 : vector<1x32xf32> to vector<8x32xf32>
    %1006 = arith.mulf %1004, %1005 : vector<8x32xf32>
    %1007 = vector.broadcast %986 : vector<1x32xf32> to vector<8x32xf32>
    %1008 = arith.addf %1006, %1007 : vector<8x32xf32>
    %1009 = arith.truncf %1008 : vector<8x32xf32> to vector<8x32xbf16>
    %c1_365 = arith.constant 1 : index
    %c0_366 = arith.constant 0 : index
    %c0_367 = arith.constant 0 : index
    %1010 = vector.load %arg22[%c1_365, %c0_366, %c0_367] : memref<2x32x2048xbf16, #tpu.memory_space<vmem>>, vector<1x32x2048xbf16>
    %1011 = vector.shape_cast %1010 : vector<1x32x2048xbf16> to vector<32x2048xbf16>
    %cst_368 = arith.constant dense<0.000000e+00> : vector<8x2048xf32>
    %1012 = tpu.matmul %1009, %1011, %cst_368 {dimension_numbers = #tpu.dot_dimension_numbers<[1], [0], [0], [1], [0, 0, 1, 1], [], []>} : vector<8x32xbf16>, vector<32x2048xbf16>, vector<8x2048xf32> -> vector<8x2048xf32>
    %c1_369 = arith.constant 1 : index
    %c0_370 = arith.constant 0 : index
    %c0_371 = arith.constant 0 : index
    %1013 = vector.load %arg23[%c1_369, %c0_370, %c0_371] : memref<2x1x2048xf32, #tpu.memory_space<vmem>>, vector<1x1x2048xf32>
    %1014 = vector.shape_cast %1013 : vector<1x1x2048xf32> to vector<1x2048xf32>
    %1015 = vector.broadcast %1014 : vector<1x2048xf32> to vector<8x2048xf32>
    %1016 = arith.addf %1012, %1015 : vector<8x2048xf32>
    %cst_372 = arith.constant 0.000000e+00 : f32
    %1017 = vector.broadcast %cst_372 : f32 to vector<8x2048xf32>
    %1018 = arith.maximumf %1016, %1017 : vector<8x2048xf32>
    %1019 = arith.truncf %1018 : vector<8x2048xf32> to vector<8x2048xbf16>
    %c1_373 = arith.constant 1 : index
    %c0_374 = arith.constant 0 : index
    %c0_375 = arith.constant 0 : index
    %1020 = vector.load %arg24[%c1_373, %c0_374, %c0_375] : memref<2x2048x32xbf16, #tpu.memory_space<vmem>>, vector<1x2048x32xbf16>
    %1021 = vector.shape_cast %1020 : vector<1x2048x32xbf16> to vector<2048x32xbf16>
    %cst_376 = arith.constant dense<0.000000e+00> : vector<8x32xf32>
    %1022 = tpu.matmul %1019, %1021, %cst_376 {dimension_numbers = #tpu.dot_dimension_numbers<[1], [0], [0], [1], [0, 0, 1, 1], [], []>} : vector<8x2048xbf16>, vector<2048x32xbf16>, vector<8x32xf32> -> vector<8x32xf32>
    %1023 = vector.extract_strided_slice %753 {offsets = [7, 0], sizes = [1, 32], strides = [1, 1]} : vector<10x32xf32> to vector<1x32xf32>
    %1024 = vector.broadcast %1023 : vector<1x32xf32> to vector<8x32xf32>
    %1025 = arith.addf %1022, %1024 : vector<8x32xf32>
    %1026 = arith.addf %1008, %1025 : vector<8x32xf32>
    %1027 = vector.extract_strided_slice %753 {offsets = [8, 0], sizes = [1, 32], strides = [1, 1]} : vector<10x32xf32> to vector<1x32xf32>
    %1028 = vector.extract_strided_slice %753 {offsets = [9, 0], sizes = [1, 32], strides = [1, 1]} : vector<10x32xf32> to vector<1x32xf32>
    %cst_377 = arith.constant dense<0.000000e+00> : vector<8xf32>
    %1029 = vector.multi_reduction <add>, %1026, %cst_377 [1] : vector<8x32xf32> to vector<8xf32>
    %1030 = vector.shape_cast %1029 : vector<8xf32> to vector<8x1xf32>
    %cst_378 = arith.constant 3.200000e+01 : f32
    %1031 = vector.broadcast %cst_378 : f32 to vector<8x1xf32>
    %1032 = arith.divf %1030, %1031 : vector<8x1xf32>
    %1033 = vector.broadcast %1032 : vector<8x1xf32> to vector<8x32xf32>
    %1034 = arith.subf %1026, %1033 : vector<8x32xf32>
    %1035 = arith.mulf %1034, %1034 : vector<8x32xf32>
    %cst_379 = arith.constant dense<0.000000e+00> : vector<8xf32>
    %1036 = vector.multi_reduction <add>, %1035, %cst_379 [1] : vector<8x32xf32> to vector<8xf32>
    %1037 = vector.shape_cast %1036 : vector<8xf32> to vector<8x1xf32>
    %cst_380 = arith.constant 3.200000e+01 : f32
    %1038 = vector.broadcast %cst_380 : f32 to vector<8x1xf32>
    %1039 = arith.divf %1037, %1038 : vector<8x1xf32>
    %1040 = vector.broadcast %1032 : vector<8x1xf32> to vector<8x32xf32>
    %1041 = arith.subf %1026, %1040 : vector<8x32xf32>
    %cst_381 = arith.constant 9.99999974E-6 : f32
    %1042 = vector.broadcast %cst_381 : f32 to vector<8x1xf32>
    %1043 = arith.addf %1039, %1042 : vector<8x1xf32>
    %1044 = math.rsqrt %1043 : vector<8x1xf32>
    %1045 = vector.broadcast %1044 : vector<8x1xf32> to vector<8x32xf32>
    %1046 = arith.mulf %1041, %1045 : vector<8x32xf32>
    %1047 = vector.broadcast %1027 : vector<1x32xf32> to vector<8x32xf32>
    %1048 = arith.mulf %1046, %1047 : vector<8x32xf32>
    %1049 = vector.broadcast %1028 : vector<1x32xf32> to vector<8x32xf32>
    %1050 = arith.addf %1048, %1049 : vector<8x32xf32>
    %c0_382 = arith.constant 0 : index
    %c0_383 = arith.constant 0 : index
    %c0_384 = arith.constant 0 : index
    %1051 = vector.load %arg26[%c0_382, %c0_383, %c0_384] : memref<2x32x32xf32, #tpu.memory_space<vmem>>, vector<1x32x32xf32>
    %1052 = vector.shape_cast %1051 : vector<1x32x32xf32> to vector<32x32xf32>
    %cst_385 = arith.constant dense<0.000000e+00> : vector<8x32xf32>
    %1053 = tpu.matmul %1050, %1052, %cst_385 {dimension_numbers = #tpu.dot_dimension_numbers<[1], [0], [0], [1], [0, 0, 1, 1], [], []>} : vector<8x32xf32>, vector<32x32xf32>, vector<8x32xf32> -> vector<8x32xf32>
    %c0_386 = arith.constant 0 : index
    %c0_387 = arith.constant 0 : index
    %c0_388 = arith.constant 0 : index
    %1054 = vector.load %arg27[%c0_386, %c0_387, %c0_388] : memref<2x1x32xf32, #tpu.memory_space<vmem>>, vector<1x1x32xf32>
    %1055 = vector.shape_cast %1054 : vector<1x1x32xf32> to vector<1x32xf32>
    %1056 = vector.broadcast %1055 : vector<1x32xf32> to vector<8x32xf32>
    %1057 = arith.addf %1053, %1056 : vector<8x32xf32>
    %cst_389 = arith.constant 5.000000e-01 : f32
    %1058 = vector.broadcast %cst_389 : f32 to vector<8x32xf32>
    %1059 = arith.mulf %1058, %1057 : vector<8x32xf32>
    %cst_390 = arith.constant 0.707106769 : f32
    %1060 = vector.broadcast %cst_390 : f32 to vector<8x32xf32>
    %1061 = arith.mulf %1057, %1060 : vector<8x32xf32>
    %cst_391 = arith.constant 0.000000e+00 : f32
    %1062 = vector.broadcast %cst_391 : f32 to vector<8x32xf32>
    %1063 = arith.cmpf olt, %1061, %1062 : vector<8x32xf32>
    %cst_392 = arith.constant -1.000000e+00 : f32
    %cst_393 = arith.constant 1.000000e+00 : f32
    %1064 = vector.broadcast %cst_392 : f32 to vector<8x32xf32>
    %1065 = vector.broadcast %cst_393 : f32 to vector<8x32xf32>
    %1066 = arith.select %1063, %1064, %1065 : vector<8x32xi1>, vector<8x32xf32>
    %1067 = math.absf %1061 : vector<8x32xf32>
    %cst_394 = arith.constant 0.327591091 : f32
    %1068 = vector.broadcast %cst_394 : f32 to vector<8x32xf32>
    %1069 = arith.mulf %1068, %1067 : vector<8x32xf32>
    %cst_395 = arith.constant 1.000000e+00 : f32
    %1070 = vector.broadcast %cst_395 : f32 to vector<8x32xf32>
    %1071 = arith.addf %1070, %1069 : vector<8x32xf32>
    %cst_396 = arith.constant 1.000000e+00 : f32
    %1072 = vector.broadcast %cst_396 : f32 to vector<8x32xf32>
    %1073 = arith.divf %1072, %1071 : vector<8x32xf32>
    %cst_397 = arith.constant 1.06140542 : f32
    %1074 = vector.broadcast %cst_397 : f32 to vector<8x32xf32>
    %1075 = arith.mulf %1074, %1073 : vector<8x32xf32>
    %cst_398 = arith.constant -1.45315206 : f32
    %1076 = vector.broadcast %cst_398 : f32 to vector<8x32xf32>
    %1077 = arith.addf %1075, %1076 : vector<8x32xf32>
    %1078 = arith.mulf %1077, %1073 : vector<8x32xf32>
    %cst_399 = arith.constant 1.42141378 : f32
    %1079 = vector.broadcast %cst_399 : f32 to vector<8x32xf32>
    %1080 = arith.addf %1078, %1079 : vector<8x32xf32>
    %1081 = arith.mulf %1080, %1073 : vector<8x32xf32>
    %cst_400 = arith.constant -0.284496725 : f32
    %1082 = vector.broadcast %cst_400 : f32 to vector<8x32xf32>
    %1083 = arith.addf %1081, %1082 : vector<8x32xf32>
    %1084 = arith.mulf %1083, %1073 : vector<8x32xf32>
    %cst_401 = arith.constant 0.254829586 : f32
    %1085 = vector.broadcast %cst_401 : f32 to vector<8x32xf32>
    %1086 = arith.addf %1084, %1085 : vector<8x32xf32>
    %1087 = arith.mulf %1086, %1073 : vector<8x32xf32>
    %cst_402 = arith.constant 0.000000e+00 : f32
    %1088 = vector.broadcast %cst_402 : f32 to vector<8x32xf32>
    %1089 = arith.subf %1088, %1067 : vector<8x32xf32>
    %1090 = arith.mulf %1089, %1067 : vector<8x32xf32>
    %1091 = math.exp %1090 : vector<8x32xf32>
    %1092 = arith.mulf %1087, %1091 : vector<8x32xf32>
    %cst_403 = arith.constant 1.000000e+00 : f32
    %1093 = vector.broadcast %cst_403 : f32 to vector<8x32xf32>
    %1094 = arith.subf %1093, %1092 : vector<8x32xf32>
    %1095 = arith.mulf %1066, %1094 : vector<8x32xf32>
    %cst_404 = arith.constant 1.000000e+00 : f32
    %1096 = vector.broadcast %cst_404 : f32 to vector<8x32xf32>
    %1097 = arith.addf %1096, %1095 : vector<8x32xf32>
    %1098 = arith.mulf %1059, %1097 : vector<8x32xf32>
    %c0_405 = arith.constant 0 : index
    %c0_406 = arith.constant 0 : index
    %c0_407 = arith.constant 0 : index
    %1099 = vector.load %arg28[%c0_405, %c0_406, %c0_407] : memref<2x32x256xf32, #tpu.memory_space<vmem>>, vector<1x32x256xf32>
    %1100 = vector.shape_cast %1099 : vector<1x32x256xf32> to vector<32x256xf32>
    %cst_408 = arith.constant dense<0.000000e+00> : vector<8x256xf32>
    %1101 = tpu.matmul %1098, %1100, %cst_408 {dimension_numbers = #tpu.dot_dimension_numbers<[1], [0], [0], [1], [0, 0, 1, 1], [], []>} : vector<8x32xf32>, vector<32x256xf32>, vector<8x256xf32> -> vector<8x256xf32>
    %c0_409 = arith.constant 0 : index
    %c0_410 = arith.constant 0 : index
    %c0_411 = arith.constant 0 : index
    %1102 = vector.load %arg29[%c0_409, %c0_410, %c0_411] : memref<2x1x256xf32, #tpu.memory_space<vmem>>, vector<1x1x256xf32>
    %1103 = vector.shape_cast %1102 : vector<1x1x256xf32> to vector<1x256xf32>
    %1104 = vector.broadcast %1103 : vector<1x256xf32> to vector<8x256xf32>
    %1105 = arith.addf %1101, %1104 : vector<8x256xf32>
    %c0_412 = arith.constant 0 : index
    %c0_413 = arith.constant 0 : index
    %1106 = vector.load %arg30[%c0_412, %c0_413] : memref<8x256xf32, #tpu.memory_space<vmem>>, vector<8x256xf32>
    tpu.vector_store %arg30[%c0_412, %c0_413], %1105 {strides = array<i32>} : memref<8x256xf32, #tpu.memory_space<vmem>>, vector<8x256xf32>,
    %c1_414 = arith.constant 1 : index
    %c0_415 = arith.constant 0 : index
    %c0_416 = arith.constant 0 : index
    %1107 = vector.load %arg26[%c1_414, %c0_415, %c0_416] : memref<2x32x32xf32, #tpu.memory_space<vmem>>, vector<1x32x32xf32>
    %1108 = vector.shape_cast %1107 : vector<1x32x32xf32> to vector<32x32xf32>
    %cst_417 = arith.constant dense<0.000000e+00> : vector<8x32xf32>
    %1109 = tpu.matmul %396, %1108, %cst_417 {dimension_numbers = #tpu.dot_dimension_numbers<[1], [0], [0], [1], [0, 0, 1, 1], [], []>} : vector<8x32xf32>, vector<32x32xf32>, vector<8x32xf32> -> vector<8x32xf32>
    %c1_418 = arith.constant 1 : index
    %c0_419 = arith.constant 0 : index
    %c0_420 = arith.constant 0 : index
    %1110 = vector.load %arg27[%c1_418, %c0_419, %c0_420] : memref<2x1x32xf32, #tpu.memory_space<vmem>>, vector<1x1x32xf32>
    %1111 = vector.shape_cast %1110 : vector<1x1x32xf32> to vector<1x32xf32>
    %1112 = vector.broadcast %1111 : vector<1x32xf32> to vector<8x32xf32>
    %1113 = arith.addf %1109, %1112 : vector<8x32xf32>
    %cst_421 = arith.constant 5.000000e-01 : f32
    %1114 = vector.broadcast %cst_421 : f32 to vector<8x32xf32>
    %1115 = arith.mulf %1114, %1113 : vector<8x32xf32>
    %cst_422 = arith.constant 0.707106769 : f32
    %1116 = vector.broadcast %cst_422 : f32 to vector<8x32xf32>
    %1117 = arith.mulf %1113, %1116 : vector<8x32xf32>
    %cst_423 = arith.constant 0.000000e+00 : f32
    %1118 = vector.broadcast %cst_423 : f32 to vector<8x32xf32>
    %1119 = arith.cmpf olt, %1117, %1118 : vector<8x32xf32>
    %cst_424 = arith.constant -1.000000e+00 : f32
    %cst_425 = arith.constant 1.000000e+00 : f32
    %1120 = vector.broadcast %cst_424 : f32 to vector<8x32xf32>
    %1121 = vector.broadcast %cst_425 : f32 to vector<8x32xf32>
    %1122 = arith.select %1119, %1120, %1121 : vector<8x32xi1>, vector<8x32xf32>
    %1123 = math.absf %1117 : vector<8x32xf32>
    %cst_426 = arith.constant 0.327591091 : f32
    %1124 = vector.broadcast %cst_426 : f32 to vector<8x32xf32>
    %1125 = arith.mulf %1124, %1123 : vector<8x32xf32>
    %cst_427 = arith.constant 1.000000e+00 : f32
    %1126 = vector.broadcast %cst_427 : f32 to vector<8x32xf32>
    %1127 = arith.addf %1126, %1125 : vector<8x32xf32>
    %cst_428 = arith.constant 1.000000e+00 : f32
    %1128 = vector.broadcast %cst_428 : f32 to vector<8x32xf32>
    %1129 = arith.divf %1128, %1127 : vector<8x32xf32>
    %cst_429 = arith.constant 1.06140542 : f32
    %1130 = vector.broadcast %cst_429 : f32 to vector<8x32xf32>
    %1131 = arith.mulf %1130, %1129 : vector<8x32xf32>
    %cst_430 = arith.constant -1.45315206 : f32
    %1132 = vector.broadcast %cst_430 : f32 to vector<8x32xf32>
    %1133 = arith.addf %1131, %1132 : vector<8x32xf32>
    %1134 = arith.mulf %1133, %1129 : vector<8x32xf32>
    %cst_431 = arith.constant 1.42141378 : f32
    %1135 = vector.broadcast %cst_431 : f32 to vector<8x32xf32>
    %1136 = arith.addf %1134, %1135 : vector<8x32xf32>
    %1137 = arith.mulf %1136, %1129 : vector<8x32xf32>
    %cst_432 = arith.constant -0.284496725 : f32
    %1138 = vector.broadcast %cst_432 : f32 to vector<8x32xf32>
    %1139 = arith.addf %1137, %1138 : vector<8x32xf32>
    %1140 = arith.mulf %1139, %1129 : vector<8x32xf32>
    %cst_433 = arith.constant 0.254829586 : f32
    %1141 = vector.broadcast %cst_433 : f32 to vector<8x32xf32>
    %1142 = arith.addf %1140, %1141 : vector<8x32xf32>
    %1143 = arith.mulf %1142, %1129 : vector<8x32xf32>
    %cst_434 = arith.constant 0.000000e+00 : f32
    %1144 = vector.broadcast %cst_434 : f32 to vector<8x32xf32>
    %1145 = arith.subf %1144, %1123 : vector<8x32xf32>
    %1146 = arith.mulf %1145, %1123 : vector<8x32xf32>
    %1147 = math.exp %1146 : vector<8x32xf32>
    %1148 = arith.mulf %1143, %1147 : vector<8x32xf32>
    %cst_435 = arith.constant 1.000000e+00 : f32
    %1149 = vector.broadcast %cst_435 : f32 to vector<8x32xf32>
    %1150 = arith.subf %1149, %1148 : vector<8x32xf32>
    %1151 = arith.mulf %1122, %1150 : vector<8x32xf32>
    %cst_436 = arith.constant 1.000000e+00 : f32
    %1152 = vector.broadcast %cst_436 : f32 to vector<8x32xf32>
    %1153 = arith.addf %1152, %1151 : vector<8x32xf32>
    %1154 = arith.mulf %1115, %1153 : vector<8x32xf32>
    %c1_437 = arith.constant 1 : index
    %c0_438 = arith.constant 0 : index
    %c0_439 = arith.constant 0 : index
    %1155 = vector.load %arg28[%c1_437, %c0_438, %c0_439] : memref<2x32x256xf32, #tpu.memory_space<vmem>>, vector<1x32x256xf32>
    %1156 = vector.shape_cast %1155 : vector<1x32x256xf32> to vector<32x256xf32>
    %cst_440 = arith.constant dense<0.000000e+00> : vector<8x256xf32>
    %1157 = tpu.matmul %1154, %1156, %cst_440 {dimension_numbers = #tpu.dot_dimension_numbers<[1], [0], [0], [1], [0, 0, 1, 1], [], []>} : vector<8x32xf32>, vector<32x256xf32>, vector<8x256xf32> -> vector<8x256xf32>
    %c1_441 = arith.constant 1 : index
    %c0_442 = arith.constant 0 : index
    %c0_443 = arith.constant 0 : index
    %1158 = vector.load %arg29[%c1_441, %c0_442, %c0_443] : memref<2x1x256xf32, #tpu.memory_space<vmem>>, vector<1x1x256xf32>
    %1159 = vector.shape_cast %1158 : vector<1x1x256xf32> to vector<1x256xf32>
    %1160 = vector.broadcast %1159 : vector<1x256xf32> to vector<8x256xf32>
    %1161 = arith.addf %1157, %1160 : vector<8x256xf32>
    %1162 = tpu.iota {dimensions = array<i32: 1>} : vector<8x256xi32>
    %c87_i32 = arith.constant 87 : i32
    %1163 = vector.broadcast %c87_i32 : i32 to vector<8x256xi32>
    %1164 = arith.cmpi slt, %1162, %1163 : vector<8x256xi32>
    %1165 = math.tanh %1161 : vector<8x256xf32>
    %cst_444 = arith.constant 5.000000e+02 : f32
    %1166 = vector.broadcast %cst_444 : f32 to vector<8x256xf32>
    %1167 = arith.mulf %1165, %1166 : vector<8x256xf32>
    %cst_445 = arith.constant 5.100000e+02 : f32
    %1168 = vector.broadcast %cst_445 : f32 to vector<8x256xf32>
    %1169 = arith.addf %1167, %1168 : vector<8x256xf32>
    %1170 = arith.select %1164, %1169, %1161 : vector<8x256xi1>, vector<8x256xf32>
    %c0_446 = arith.constant 0 : index
    %c0_447 = arith.constant 0 : index
    %1171 = vector.load %arg31[%c0_446, %c0_447] : memref<8x256xf32, #tpu.memory_space<vmem>>, vector<8x256xf32>
    tpu.vector_store %arg31[%c0_446, %c0_447], %1170 {strides = array<i32>} : memref<8x256xf32, #tpu.memory_space<vmem>>, vector<8x256xf32>,
    return
  }
  func.func @transform_0(%arg0: i32) -> (i32, i32) {
    %c0_i32 = arith.constant 0 : i32
    %c0_i32_0 = arith.constant 0 : i32
    return %arg0, %c0_i32 : i32, i32
  }
  func.func @transform_1(%arg0: i32) -> (i32, i32) {
    %c0_i32 = arith.constant 0 : i32
    %c0_i32_0 = arith.constant 0 : i32
    return %arg0, %c0_i32 : i32, i32
  }
  func.func @transform_2(%arg0: i32) -> (i32, i32) {
    %c0_i32 = arith.constant 0 : i32
    %c0_i32_0 = arith.constant 0 : i32
    %c0_i32_1 = arith.constant 0 : i32
    return %c0_i32, %c0_i32_0 : i32, i32
  }
  func.func @transform_3(%arg0: i32) -> (i32, i32) {
    %c0_i32 = arith.constant 0 : i32
    %c0_i32_0 = arith.constant 0 : i32
    %c0_i32_1 = arith.constant 0 : i32
    return %c0_i32, %c0_i32_0 : i32, i32
  }
  func.func @transform_4(%arg0: i32) -> (i32, i32) {
    %c0_i32 = arith.constant 0 : i32
    %c0_i32_0 = arith.constant 0 : i32
    %c0_i32_1 = arith.constant 0 : i32
    return %c0_i32, %c0_i32_0 : i32, i32
  }
  func.func @transform_5(%arg0: i32) -> (i32, i32) {
    %c0_i32 = arith.constant 0 : i32
    %c0_i32_0 = arith.constant 0 : i32
    %c0_i32_1 = arith.constant 0 : i32
    return %c0_i32, %c0_i32_0 : i32, i32
  }
  func.func @transform_6(%arg0: i32) -> (i32, i32) {
    %c0_i32 = arith.constant 0 : i32
    %c0_i32_0 = arith.constant 0 : i32
    %c0_i32_1 = arith.constant 0 : i32
    return %c0_i32, %c0_i32_0 : i32, i32
  }
  func.func @transform_7(%arg0: i32) -> (i32, i32, i32) {
    %c0_i32 = arith.constant 0 : i32
    %c0_i32_0 = arith.constant 0 : i32
    %c0_i32_1 = arith.constant 0 : i32
    %c0_i32_2 = arith.constant 0 : i32
    return %c0_i32, %c0_i32_0, %c0_i32_1 : i32, i32, i32
  }
  func.func @transform_8(%arg0: i32) -> (i32, i32, i32) {
    %c0_i32 = arith.constant 0 : i32
    %c0_i32_0 = arith.constant 0 : i32
    %c0_i32_1 = arith.constant 0 : i32
    %c0_i32_2 = arith.constant 0 : i32
    return %c0_i32, %c0_i32_0, %c0_i32_1 : i32, i32, i32
  }
  func.func @transform_9(%arg0: i32) -> (i32, i32, i32) {
    %c0_i32 = arith.constant 0 : i32
    %c0_i32_0 = arith.constant 0 : i32
    %c0_i32_1 = arith.constant 0 : i32
    %c0_i32_2 = arith.constant 0 : i32
    return %c0_i32, %c0_i32_0, %c0_i32_1 : i32, i32, i32
  }
  func.func @transform_10(%arg0: i32) -> (i32, i32, i32) {
    %c0_i32 = arith.constant 0 : i32
    %c0_i32_0 = arith.constant 0 : i32
    %c0_i32_1 = arith.constant 0 : i32
    %c0_i32_2 = arith.constant 0 : i32
    return %c0_i32, %c0_i32_0, %c0_i32_1 : i32, i32, i32
  }
  func.func @transform_11(%arg0: i32) -> (i32, i32, i32) {
    %c0_i32 = arith.constant 0 : i32
    %c0_i32_0 = arith.constant 0 : i32
    %c0_i32_1 = arith.constant 0 : i32
    %c0_i32_2 = arith.constant 0 : i32
    return %c0_i32, %c0_i32_0, %c0_i32_1 : i32, i32, i32
  }
  func.func @transform_12(%arg0: i32) -> (i32, i32, i32) {
    %c0_i32 = arith.constant 0 : i32
    %c0_i32_0 = arith.constant 0 : i32
    %c0_i32_1 = arith.constant 0 : i32
    %c0_i32_2 = arith.constant 0 : i32
    return %c0_i32, %c0_i32_0, %c0_i32_1 : i32, i32, i32
  }
  func.func @transform_13(%arg0: i32) -> (i32, i32, i32) {
    %c0_i32 = arith.constant 0 : i32
    %c0_i32_0 = arith.constant 0 : i32
    %c0_i32_1 = arith.constant 0 : i32
    %c0_i32_2 = arith.constant 0 : i32
    return %c0_i32, %c0_i32_0, %c0_i32_1 : i32, i32, i32
  }
  func.func @transform_14(%arg0: i32) -> (i32, i32, i32) {
    %c0_i32 = arith.constant 0 : i32
    %c0_i32_0 = arith.constant 0 : i32
    %c0_i32_1 = arith.constant 0 : i32
    %c0_i32_2 = arith.constant 0 : i32
    return %c0_i32, %c0_i32_0, %c0_i32_1 : i32, i32, i32
  }
  func.func @transform_15(%arg0: i32) -> (i32, i32, i32) {
    %c0_i32 = arith.constant 0 : i32
    %c0_i32_0 = arith.constant 0 : i32
    %c0_i32_1 = arith.constant 0 : i32
    %c0_i32_2 = arith.constant 0 : i32
    return %c0_i32, %c0_i32_0, %c0_i32_1 : i32, i32, i32
  }
  func.func @transform_16(%arg0: i32) -> (i32, i32, i32) {
    %c0_i32 = arith.constant 0 : i32
    %c0_i32_0 = arith.constant 0 : i32
    %c0_i32_1 = arith.constant 0 : i32
    %c0_i32_2 = arith.constant 0 : i32
    return %c0_i32, %c0_i32_0, %c0_i32_1 : i32, i32, i32
  }
  func.func @transform_17(%arg0: i32) -> (i32, i32, i32) {
    %c0_i32 = arith.constant 0 : i32
    %c0_i32_0 = arith.constant 0 : i32
    %c0_i32_1 = arith.constant 0 : i32
    %c0_i32_2 = arith.constant 0 : i32
    return %c0_i32, %c0_i32_0, %c0_i32_1 : i32, i32, i32
  }
  func.func @transform_18(%arg0: i32) -> (i32, i32, i32) {
    %c0_i32 = arith.constant 0 : i32
    %c0_i32_0 = arith.constant 0 : i32
    %c0_i32_1 = arith.constant 0 : i32
    %c0_i32_2 = arith.constant 0 : i32
    return %c0_i32, %c0_i32_0, %c0_i32_1 : i32, i32, i32
  }
  func.func @transform_19(%arg0: i32) -> (i32, i32, i32) {
    %c0_i32 = arith.constant 0 : i32
    %c0_i32_0 = arith.constant 0 : i32
    %c0_i32_1 = arith.constant 0 : i32
    %c0_i32_2 = arith.constant 0 : i32
    return %c0_i32, %c0_i32_0, %c0_i32_1 : i32, i32, i32
  }
  func.func @transform_20(%arg0: i32) -> (i32, i32, i32) {
    %c0_i32 = arith.constant 0 : i32
    %c0_i32_0 = arith.constant 0 : i32
    %c0_i32_1 = arith.constant 0 : i32
    %c0_i32_2 = arith.constant 0 : i32
    return %c0_i32, %c0_i32_0, %c0_i32_1 : i32, i32, i32
  }
  func.func @transform_21(%arg0: i32) -> (i32, i32, i32) {
    %c0_i32 = arith.constant 0 : i32
    %c0_i32_0 = arith.constant 0 : i32
    %c0_i32_1 = arith.constant 0 : i32
    %c0_i32_2 = arith.constant 0 : i32
    return %c0_i32, %c0_i32_0, %c0_i32_1 : i32, i32, i32
  }
  func.func @transform_22(%arg0: i32) -> (i32, i32, i32) {
    %c0_i32 = arith.constant 0 : i32
    %c0_i32_0 = arith.constant 0 : i32
    %c0_i32_1 = arith.constant 0 : i32
    %c0_i32_2 = arith.constant 0 : i32
    return %c0_i32, %c0_i32_0, %c0_i32_1 : i32, i32, i32
  }
  func.func @transform_23(%arg0: i32) -> (i32, i32, i32) {
    %c0_i32 = arith.constant 0 : i32
    %c0_i32_0 = arith.constant 0 : i32
    %c0_i32_1 = arith.constant 0 : i32
    %c0_i32_2 = arith.constant 0 : i32
    return %c0_i32, %c0_i32_0, %c0_i32_1 : i32, i32, i32
  }
  func.func @transform_24(%arg0: i32) -> (i32, i32, i32) {
    %c0_i32 = arith.constant 0 : i32
    %c0_i32_0 = arith.constant 0 : i32
    %c0_i32_1 = arith.constant 0 : i32
    %c0_i32_2 = arith.constant 0 : i32
    return %c0_i32, %c0_i32_0, %c0_i32_1 : i32, i32, i32
  }
  func.func @transform_25(%arg0: i32) -> (i32, i32, i32) {
    %c0_i32 = arith.constant 0 : i32
    %c0_i32_0 = arith.constant 0 : i32
    %c0_i32_1 = arith.constant 0 : i32
    %c0_i32_2 = arith.constant 0 : i32
    return %c0_i32, %c0_i32_0, %c0_i32_1 : i32, i32, i32
  }
  func.func @transform_26(%arg0: i32) -> (i32, i32, i32) {
    %c0_i32 = arith.constant 0 : i32
    %c0_i32_0 = arith.constant 0 : i32
    %c0_i32_1 = arith.constant 0 : i32
    %c0_i32_2 = arith.constant 0 : i32
    return %c0_i32, %c0_i32_0, %c0_i32_1 : i32, i32, i32
  }
  func.func @transform_27(%arg0: i32) -> (i32, i32, i32) {
    %c0_i32 = arith.constant 0 : i32
    %c0_i32_0 = arith.constant 0 : i32
    %c0_i32_1 = arith.constant 0 : i32
    %c0_i32_2 = arith.constant 0 : i32
    return %c0_i32, %c0_i32_0, %c0_i32_1 : i32, i32, i32
  }
  func.func @transform_28(%arg0: i32) -> (i32, i32, i32) {
    %c0_i32 = arith.constant 0 : i32
    %c0_i32_0 = arith.constant 0 : i32
    %c0_i32_1 = arith.constant 0 : i32
    %c0_i32_2 = arith.constant 0 : i32
    return %c0_i32, %c0_i32_0, %c0_i32_1 : i32, i32, i32
  }
  func.func @transform_29(%arg0: i32) -> (i32, i32) {
    %c0_i32 = arith.constant 0 : i32
    %c0_i32_0 = arith.constant 0 : i32
    return %arg0, %c0_i32 : i32, i32
  }
  func.func @transform_30(%arg0: i32) -> (i32, i32) {
    %c0_i32 = arith.constant 0 : i32
    %c0_i32_0 = arith.constant 0 : i32
    return %arg0, %c0_i32 : i32, i32
  }
}

</mosaic_0001>

<llo_original>
// kernel: _lambda_.1
$region0: #{_lambda_.1}
  #allocation0 [shape = 'u32[]', space=smem, size = 0x4, offset = 0x4, fixed_abs, tag = 'smem constant byte address 0x4 - core index']
  #allocation1 [shape = 'u32[72,128]{1,0:T(1,128)}', space=vmem, size = 0x9000, scoped, tag = 'internal scratch']
  %s0 = inlined_call_operand.smem [shape: u32[31], index: -1, kind: input, shape index: {}]
  %s1 = sld [smem:[%s0]]
  %s2 = scalar_lea.smem %s0, 1
  %s3 = sld [smem:[%s2]]
  %s4 = scalar_lea.smem %s0, 2
  %s5 = sld [smem:[%s4]]
  %s6 = scalar_lea.smem %s0, 3
  %s7 = sld [smem:[%s6]]
  %s8 = scalar_lea.smem %s0, 4
  %s9 = sld [smem:[%s8]]
  %s10 = scalar_lea.smem %s0, 5
  %s11 = sld [smem:[%s10]]
  %s12 = scalar_lea.smem %s0, 6
  %s13 = sld [smem:[%s12]]
  %s14 = scalar_lea.smem %s0, 7
  %s15 = sld [smem:[%s14]]
  %s16 = scalar_lea.smem %s0, 8
  %s17 = sld [smem:[%s16]]
  %s18 = scalar_lea.smem %s0, 9
  %s19 = sld [smem:[%s18]]
  %s20 = scalar_lea.smem %s0, 10
  %s21 = sld [smem:[%s20]]
  %s22 = scalar_lea.smem %s0, 11
  %s23 = sld [smem:[%s22]]
  %s24 = scalar_lea.smem %s0, 12
  %s25 = sld [smem:[%s24]]
  %s26 = scalar_lea.smem %s0, 13
  %s27 = sld [smem:[%s26]]
  %s28 = scalar_lea.smem %s0, 14
  %s29 = sld [smem:[%s28]]
  %s30 = scalar_lea.smem %s0, 15
  %s31 = sld [smem:[%s30]]
  %s32 = scalar_lea.smem %s0, 16
  %s33 = sld [smem:[%s32]]
  %s34 = scalar_lea.smem %s0, 17
  %s35 = sld [smem:[%s34]]
  %s36 = scalar_lea.smem %s0, 18
  %s37 = sld [smem:[%s36]]
  %s38 = scalar_lea.smem %s0, 19
  %s39 = sld [smem:[%s38]]
  %s40 = scalar_lea.smem %s0, 20
  %s41 = sld [smem:[%s40]]
  %s42 = scalar_lea.smem %s0, 21
  %s43 = sld [smem:[%s42]]
  %s44 = scalar_lea.smem %s0, 22
  %s45 = sld [smem:[%s44]]
  %s46 = scalar_lea.smem %s0, 23
  %s47 = sld [smem:[%s46]]
  %s48 = scalar_lea.smem %s0, 24
  %s49 = sld [smem:[%s48]]
  %s50 = scalar_lea.smem %s0, 25
  %s51 = sld [smem:[%s50]]
  %s52 = scalar_lea.smem %s0, 26
  %s53 = sld [smem:[%s52]]
  %s54 = scalar_lea.smem %s0, 27
  %s55 = sld [smem:[%s54]]
  %s56 = scalar_lea.smem %s0, 28
  %s57 = sld [smem:[%s56]]
  %s58 = scalar_lea.smem %s0, 29
  %s59 = sld [smem:[%s58]]
  %s60 = scalar_lea.smem %s0, 30
  %s61 = sld [smem:[%s60]]
  %62 = xla_tuple %s59, %s61
  %s63 = sld [smem:[#allocation0]]
  $region157: #{_lambda_.1} parent=0
    _
  %s65 = ssub.s32 1, %s63
  %s66 = scalar_select 0, %s65, %s63
  loop: start=0, step=1, limit=4
  $region2: #{_lambda_.1} parent=0 // loop_pre_header
    _
  $region3: #{_lambda_.1} parent=0 // loop_header
    %s68 = sphi 0, %s72
    %p69 = scmp.ge.s32.totalorder %s68, 4
    %s78 = sphi 0, %s80
    %s81 = sphi 0, %s78
    %s82 = sphi 0, %s81
    %s98 = sphi 0, %s82
    %s104 = sphi 0, %s106
    %s107 = sphi 0, %s104
    %s108 = sphi 0, %s107
    %s124 = sphi 0, %s108
    %s128 = sphi 0, %s128
    %s130 = sphi 0, %s128
    %s131 = sphi 0, %s130
    %s145 = sphi 0, %s131
    %s149 = sphi 0, %s149
    %s151 = sphi 0, %s149
    %s152 = sphi 0, %s151
    %s166 = sphi 0, %s152
    %s170 = sphi 0, %s170
    %s172 = sphi 0, %s170
    %s173 = sphi 0, %s172
    %s187 = sphi 0, %s173
    %s191 = sphi 0, %s191
    %s193 = sphi 0, %s191
    %s194 = sphi 0, %s193
    %s208 = sphi 0, %s194
    %s212 = sphi 0, %s212
    %s214 = sphi 0, %s212
    %s215 = sphi 0, %s214
    %s229 = sphi 0, %s215
    %s233 = sphi 0, %s233
    %s235 = sphi 0, %s233
    %s236 = sphi 0, %s235
    %s250 = sphi 0, %s236
    %s254 = sphi 0, %s254
    %s256 = sphi 0, %s254
    %s257 = sphi 0, %s256
    %s271 = sphi 0, %s257
    %s275 = sphi 0, %s275
    %s277 = sphi 0, %s275
    %s278 = sphi 0, %s277
    %s292 = sphi 0, %s278
    %s296 = sphi 0, %s296
    %s298 = sphi 0, %s296
    %s299 = sphi 0, %s298
    %s313 = sphi 0, %s299
    %s317 = sphi 0, %s317
    %s319 = sphi 0, %s317
    %s320 = sphi 0, %s319
    %s334 = sphi 0, %s320
    %s338 = sphi 0, %s338
    %s340 = sphi 0, %s338
    %s341 = sphi 0, %s340
    %s355 = sphi 0, %s341
    %s359 = sphi 0, %s359
    %s361 = sphi 0, %s359
    %s362 = sphi 0, %s361
    %s376 = sphi 0, %s362
    %s380 = sphi 0, %s380
    %s382 = sphi 0, %s380
    %s383 = sphi 0, %s382
    %s397 = sphi 0, %s383
    %s401 = sphi 0, %s401
    %s403 = sphi 0, %s401
    %s404 = sphi 0, %s403
    %s418 = sphi 0, %s404
    %s422 = sphi 0, %s422
    %s424 = sphi 0, %s422
    %s425 = sphi 0, %s424
    %s439 = sphi 0, %s425
    %s443 = sphi 0, %s443
    %s445 = sphi 0, %s443
    %s446 = sphi 0, %s445
    %s460 = sphi 0, %s446
    %s464 = sphi 0, %s464
    %s466 = sphi 0, %s464
    %s467 = sphi 0, %s466
    %s481 = sphi 0, %s467
    %s485 = sphi 0, %s485
    %s487 = sphi 0, %s485
    %s488 = sphi 0, %s487
    %s502 = sphi 0, %s488
    %s506 = sphi 0, %s506
    %s508 = sphi 0, %s506
    %s509 = sphi 0, %s508
    %s523 = sphi 0, %s509
    %s527 = sphi 0, %s527
    %s529 = sphi 0, %s527
    %s530 = sphi 0, %s529
    %s544 = sphi 0, %s530
    %s548 = sphi 0, %s548
    %s550 = sphi 0, %s548
    %s551 = sphi 0, %s550
    %s565 = sphi 0, %s551
    %s569 = sphi 0, %s569
    %s571 = sphi 0, %s569
    %s572 = sphi 0, %s571
    %s586 = sphi 0, %s572
    %s590 = sphi 0, %s590
    %s592 = sphi 0, %s590
    %s593 = sphi 0, %s592
    %s607 = sphi 0, %s593
    %s611 = sphi 0, %s611
    %s613 = sphi 0, %s611
    %s614 = sphi 0, %s613
    %s628 = sphi 0, %s614
    %s632 = sphi 0, %s632
    %s634 = sphi 0, %s632
    %s635 = sphi 0, %s634
    %s649 = sphi 0, %s635
    %s653 = sphi 0, %s653
    %s655 = sphi 0, %s653
    %s656 = sphi 0, %s655
    %s670 = sphi 0, %s656
    %s674 = sphi 0, %s674
    %s676 = sphi 0, %s674
    %s677 = sphi 0, %s676
    %s691 = sphi 0, %s677
    %s697 = sphi 0, %s699
    %s700 = sphi 0, %s697
    %s701 = sphi 0, %s700
    %s717 = sphi 0, %s701
    %s723 = sphi 0, %s725
    %s726 = sphi 0, %s723
    %s727 = sphi 0, %s726
    %s743 = sphi 0, %s727
  $region4: #{_lambda_.1} parent=0 // loop_header_branch
    %71 = sbr.rel (%p69) target = $region8
  $region5: #{_lambda_.1} parent=0 // loop_body
    %s73 = ssub.s32 %s68, 1
    %s74 = ssub.s32 %s68, 2
    %s75 = sadd.s32 %s68, 1
    %s76 = ssub.s32 %s68, %s75
    %p77 = scmp.eq.s32.totalorder %s76, 0
    %s79 = sadd.s32 %s78, 1
    %s80 = scalar_select %p77, %s78, %s79
    %p83 = pneg %p77
    %p84 = scmp.eq.s32.totalorder %s68, 1
    %p85 = por %p83, %p84
    %p86 = scmp.ne.s32.totalorder %s78, %s81
    %p87 = scmp.eq.s32.totalorder %s68, 0
    %p88 = por %p86, %p87
    %p89 = scmp.ne.s32.totalorder %s78, %s81
    %p90 = scmp.eq.s32.totalorder %s73, 1
    %p91 = por %p89, %p90
    %p92 = scmp.ne.s32.totalorder %s81, %s82
    %p93 = scmp.eq.s32.totalorder %s73, 0
    %p94 = por %p92, %p93
    %p95 = scmp.ne.s32.totalorder %s81, %s82
    %p96 = scmp.eq.s32.totalorder %s74, 1
    %p97 = por %p95, %p96
    %p99 = scmp.ne.s32.totalorder %s82, %s98
    %p100 = scmp.eq.s32.totalorder %s74, 0
    %p101 = por %p99, %p100
    %s102 = ssub.s32 %s68, %s75
    %p103 = scmp.eq.s32.totalorder %s102, 0
    %s105 = sadd.s32 %s104, 1
    %s106 = scalar_select %p103, %s104, %s105
    %p109 = pneg %p103
    %p110 = scmp.eq.s32.totalorder %s68, 1
    %p111 = por %p109, %p110
    %p112 = scmp.ne.s32.totalorder %s104, %s107
    %p113 = scmp.eq.s32.totalorder %s68, 0
    %p114 = por %p112, %p113
    %p115 = scmp.ne.s32.totalorder %s104, %s107
    %p116 = scmp.eq.s32.totalorder %s73, 1
    %p117 = por %p115, %p116
    %p118 = scmp.ne.s32.totalorder %s107, %s108
    %p119 = scmp.eq.s32.totalorder %s73, 0
    %p120 = por %p118, %p119
    %p121 = scmp.ne.s32.totalorder %s107, %s108
    %p122 = scmp.eq.s32.totalorder %s74, 1
    %p123 = por %p121, %p122
    %p125 = scmp.ne.s32.totalorder %s108, %s124
    %p126 = scmp.eq.s32.totalorder %s74, 0
    %p127 = por %p125, %p126
    %s129 = sadd.s32 %s128, 1
    %p132 = scmp.eq.s32.totalorder %s68, 1
    %p133 = scmp.ne.s32.totalorder %s128, %s130
    %p134 = scmp.eq.s32.totalorder %s68, 0
    %p135 = por %p133, %p134
    %p136 = scmp.ne.s32.totalorder %s128, %s130
    %p137 = scmp.eq.s32.totalorder %s73, 1
    %p138 = por %p136, %p137
    %p139 = scmp.ne.s32.totalorder %s130, %s131
    %p140 = scmp.eq.s32.totalorder %s73, 0
    %p141 = por %p139, %p140
    %p142 = scmp.ne.s32.totalorder %s130, %s131
    %p143 = scmp.eq.s32.totalorder %s74, 1
    %p144 = por %p142, %p143
    %p146 = scmp.ne.s32.totalorder %s131, %s145
    %p147 = scmp.eq.s32.totalorder %s74, 0
    %p148 = por %p146, %p147
    %s150 = sadd.s32 %s149, 1
    %p153 = scmp.eq.s32.totalorder %s68, 1
    %p154 = scmp.ne.s32.totalorder %s149, %s151
    %p155 = scmp.eq.s32.totalorder %s68, 0
    %p156 = por %p154, %p155
    %p157 = scmp.ne.s32.totalorder %s149, %s151
    %p158 = scmp.eq.s32.totalorder %s73, 1
    %p159 = por %p157, %p158
    %p160 = scmp.ne.s32.totalorder %s151, %s152
    %p161 = scmp.eq.s32.totalorder %s73, 0
    %p162 = por %p160, %p161
    %p163 = scmp.ne.s32.totalorder %s151, %s152
    %p164 = scmp.eq.s32.totalorder %s74, 1
    %p165 = por %p163, %p164
    %p167 = scmp.ne.s32.totalorder %s152, %s166
    %p168 = scmp.eq.s32.totalorder %s74, 0
    %p169 = por %p167, %p168
    %s171 = sadd.s32 %s170, 1
    %p174 = scmp.eq.s32.totalorder %s68, 1
    %p175 = scmp.ne.s32.totalorder %s170, %s172
    %p176 = scmp.eq.s32.totalorder %s68, 0
    %p177 = por %p175, %p176
    %p178 = scmp.ne.s32.totalorder %s170, %s172
    %p179 = scmp.eq.s32.totalorder %s73, 1
    %p180 = por %p178, %p179
    %p181 = scmp.ne.s32.totalorder %s172, %s173
    %p182 = scmp.eq.s32.totalorder %s73, 0
    %p183 = por %p181, %p182
    %p184 = scmp.ne.s32.totalorder %s172, %s173
    %p185 = scmp.eq.s32.totalorder %s74, 1
    %p186 = por %p184, %p185
    %p188 = scmp.ne.s32.totalorder %s173, %s187
    %p189 = scmp.eq.s32.totalorder %s74, 0
    %p190 = por %p188, %p189
    %s192 = sadd.s32 %s191, 1
    %p195 = scmp.eq.s32.totalorder %s68, 1
    %p196 = scmp.ne.s32.totalorder %s191, %s193
    %p197 = scmp.eq.s32.totalorder %s68, 0
    %p198 = por %p196, %p197
    %p199 = scmp.ne.s32.totalorder %s191, %s193
    %p200 = scmp.eq.s32.totalorder %s73, 1
    %p201 = por %p199, %p200
    %p202 = scmp.ne.s32.totalorder %s193, %s194
    %p203 = scmp.eq.s32.totalorder %s73, 0
    %p204 = por %p202, %p203
    %p205 = scmp.ne.s32.totalorder %s193, %s194
    %p206 = scmp.eq.s32.totalorder %s74, 1
    %p207 = por %p205, %p206
    %p209 = scmp.ne.s32.totalorder %s194, %s208
    %p210 = scmp.eq.s32.totalorder %s74, 0
    %p211 = por %p209, %p210
    %s213 = sadd.s32 %s212, 1
    %p216 = scmp.eq.s32.totalorder %s68, 1
    %p217 = scmp.ne.s32.totalorder %s212, %s214
    %p218 = scmp.eq.s32.totalorder %s68, 0
    %p219 = por %p217, %p218
    %p220 = scmp.ne.s32.totalorder %s212, %s214
    %p221 = scmp.eq.s32.totalorder %s73, 1
    %p222 = por %p220, %p221
    %p223 = scmp.ne.s32.totalorder %s214, %s215
    %p224 = scmp.eq.s32.totalorder %s73, 0
    %p225 = por %p223, %p224
    %p226 = scmp.ne.s32.totalorder %s214, %s215
    %p227 = scmp.eq.s32.totalorder %s74, 1
    %p228 = por %p226, %p227
    %p230 = scmp.ne.s32.totalorder %s215, %s229
    %p231 = scmp.eq.s32.totalorder %s74, 0
    %p232 = por %p230, %p231
    %s234 = sadd.s32 %s233, 1
    %p237 = scmp.eq.s32.totalorder %s68, 1
    %p238 = scmp.ne.s32.totalorder %s233, %s235
    %p239 = scmp.eq.s32.totalorder %s68, 0
    %p240 = por %p238, %p239
    %p241 = scmp.ne.s32.totalorder %s233, %s235
    %p242 = scmp.eq.s32.totalorder %s73, 1
    %p243 = por %p241, %p242
    %p244 = scmp.ne.s32.totalorder %s235, %s236
    %p245 = scmp.eq.s32.totalorder %s73, 0
    %p246 = por %p244, %p245
    %p247 = scmp.ne.s32.totalorder %s235, %s236
    %p248 = scmp.eq.s32.totalorder %s74, 1
    %p249 = por %p247, %p248
    %p251 = scmp.ne.s32.totalorder %s236, %s250
    %p252 = scmp.eq.s32.totalorder %s74, 0
    %p253 = por %p251, %p252
    %s255 = sadd.s32 %s254, 1
    %p258 = scmp.eq.s32.totalorder %s68, 1
    %p259 = scmp.ne.s32.totalorder %s254, %s256
    %p260 = scmp.eq.s32.totalorder %s68, 0
    %p261 = por %p259, %p260
    %p262 = scmp.ne.s32.totalorder %s254, %s256
    %p263 = scmp.eq.s32.totalorder %s73, 1
    %p264 = por %p262, %p263
    %p265 = scmp.ne.s32.totalorder %s256, %s257
    %p266 = scmp.eq.s32.totalorder %s73, 0
    %p267 = por %p265, %p266
    %p268 = scmp.ne.s32.totalorder %s256, %s257
    %p269 = scmp.eq.s32.totalorder %s74, 1
    %p270 = por %p268, %p269
    %p272 = scmp.ne.s32.totalorder %s257, %s271
    %p273 = scmp.eq.s32.totalorder %s74, 0
    %p274 = por %p272, %p273
    %s276 = sadd.s32 %s275, 1
    %p279 = scmp.eq.s32.totalorder %s68, 1
    %p280 = scmp.ne.s32.totalorder %s275, %s277
    %p281 = scmp.eq.s32.totalorder %s68, 0
    %p282 = por %p280, %p281
    %p283 = scmp.ne.s32.totalorder %s275, %s277
    %p284 = scmp.eq.s32.totalorder %s73, 1
    %p285 = por %p283, %p284
    %p286 = scmp.ne.s32.totalorder %s277, %s278
    %p287 = scmp.eq.s32.totalorder %s73, 0
    %p288 = por %p286, %p287
    %p289 = scmp.ne.s32.totalorder %s277, %s278
    %p290 = scmp.eq.s32.totalorder %s74, 1
    %p291 = por %p289, %p290
    %p293 = scmp.ne.s32.totalorder %s278, %s292
    %p294 = scmp.eq.s32.totalorder %s74, 0
    %p295 = por %p293, %p294
    %s297 = sadd.s32 %s296, 1
    %p300 = scmp.eq.s32.totalorder %s68, 1
    %p301 = scmp.ne.s32.totalorder %s296, %s298
    %p302 = scmp.eq.s32.totalorder %s68, 0
    %p303 = por %p301, %p302
    %p304 = scmp.ne.s32.totalorder %s296, %s298
    %p305 = scmp.eq.s32.totalorder %s73, 1
    %p306 = por %p304, %p305
    %p307 = scmp.ne.s32.totalorder %s298, %s299
    %p308 = scmp.eq.s32.totalorder %s73, 0
    %p309 = por %p307, %p308
    %p310 = scmp.ne.s32.totalorder %s298, %s299
    %p311 = scmp.eq.s32.totalorder %s74, 1
    %p312 = por %p310, %p311
    %p314 = scmp.ne.s32.totalorder %s299, %s313
    %p315 = scmp.eq.s32.totalorder %s74, 0
    %p316 = por %p314, %p315
    %s318 = sadd.s32 %s317, 1
    %p321 = scmp.eq.s32.totalorder %s68, 1
    %p322 = scmp.ne.s32.totalorder %s317, %s319
    %p323 = scmp.eq.s32.totalorder %s68, 0
    %p324 = por %p322, %p323
    %p325 = scmp.ne.s32.totalorder %s317, %s319
    %p326 = scmp.eq.s32.totalorder %s73, 1
    %p327 = por %p325, %p326
    %p328 = scmp.ne.s32.totalorder %s319, %s320
    %p329 = scmp.eq.s32.totalorder %s73, 0
    %p330 = por %p328, %p329
    %p331 = scmp.ne.s32.totalorder %s319, %s320
    %p332 = scmp.eq.s32.totalorder %s74, 1
    %p333 = por %p331, %p332
    %p335 = scmp.ne.s32.totalorder %s320, %s334
    %p336 = scmp.eq.s32.totalorder %s74, 0
    %p337 = por %p335, %p336
    %s339 = sadd.s32 %s338, 1
    %p342 = scmp.eq.s32.totalorder %s68, 1
    %p343 = scmp.ne.s32.totalorder %s338, %s340
    %p344 = scmp.eq.s32.totalorder %s68, 0
    %p345 = por %p343, %p344
    %p346 = scmp.ne.s32.totalorder %s338, %s340
    %p347 = scmp.eq.s32.totalorder %s73, 1
    %p348 = por %p346, %p347
    %p349 = scmp.ne.s32.totalorder %s340, %s341
    %p350 = scmp.eq.s32.totalorder %s73, 0
    %p351 = por %p349, %p350
    %p352 = scmp.ne.s32.totalorder %s340, %s341
    %p353 = scmp.eq.s32.totalorder %s74, 1
    %p354 = por %p352, %p353
    %p356 = scmp.ne.s32.totalorder %s341, %s355
    %p357 = scmp.eq.s32.totalorder %s74, 0
    %p358 = por %p356, %p357
    %s360 = sadd.s32 %s359, 1
    %p363 = scmp.eq.s32.totalorder %s68, 1
    %p364 = scmp.ne.s32.totalorder %s359, %s361
    %p365 = scmp.eq.s32.totalorder %s68, 0
    %p366 = por %p364, %p365
    %p367 = scmp.ne.s32.totalorder %s359, %s361
    %p368 = scmp.eq.s32.totalorder %s73, 1
    %p369 = por %p367, %p368
    %p370 = scmp.ne.s32.totalorder %s361, %s362
    %p371 = scmp.eq.s32.totalorder %s73, 0
    %p372 = por %p370, %p371
    %p373 = scmp.ne.s32.totalorder %s361, %s362
    %p374 = scmp.eq.s32.totalorder %s74, 1
    %p375 = por %p373, %p374
    %p377 = scmp.ne.s32.totalorder %s362, %s376
    %p378 = scmp.eq.s32.totalorder %s74, 0
    %p379 = por %p377, %p378
    %s381 = sadd.s32 %s380, 1
    %p384 = scmp.eq.s32.totalorder %s68, 1
    %p385 = scmp.ne.s32.totalorder %s380, %s382
    %p386 = scmp.eq.s32.totalorder %s68, 0
    %p387 = por %p385, %p386
    %p388 = scmp.ne.s32.totalorder %s380, %s382
    %p389 = scmp.eq.s32.totalorder %s73, 1
    %p390 = por %p388, %p389
    %p391 = scmp.ne.s32.totalorder %s382, %s383
    %p392 = scmp.eq.s32.totalorder %s73, 0
    %p393 = por %p391, %p392
    %p394 = scmp.ne.s32.totalorder %s382, %s383
    %p395 = scmp.eq.s32.totalorder %s74, 1
    %p396 = por %p394, %p395
    %p398 = scmp.ne.s32.totalorder %s383, %s397
    %p399 = scmp.eq.s32.totalorder %s74, 0
    %p400 = por %p398, %p399
    %s402 = sadd.s32 %s401, 1
    %p405 = scmp.eq.s32.totalorder %s68, 1
    %p406 = scmp.ne.s32.totalorder %s401, %s403
    %p407 = scmp.eq.s32.totalorder %s68, 0
    %p408 = por %p406, %p407
    %p409 = scmp.ne.s32.totalorder %s401, %s403
    %p410 = scmp.eq.s32.totalorder %s73, 1
    %p411 = por %p409, %p410
    %p412 = scmp.ne.s32.totalorder %s403, %s404
    %p413 = scmp.eq.s32.totalorder %s73, 0
    %p414 = por %p412, %p413
    %p415 = scmp.ne.s32.totalorder %s403, %s404
    %p416 = scmp.eq.s32.totalorder %s74, 1
    %p417 = por %p415, %p416
    %p419 = scmp.ne.s32.totalorder %s404, %s418
    %p420 = scmp.eq.s32.totalorder %s74, 0
    %p421 = por %p419, %p420
    %s423 = sadd.s32 %s422, 1
    %p426 = scmp.eq.s32.totalorder %s68, 1
    %p427 = scmp.ne.s32.totalorder %s422, %s424
    %p428 = scmp.eq.s32.totalorder %s68, 0
    %p429 = por %p427, %p428
    %p430 = scmp.ne.s32.totalorder %s422, %s424
    %p431 = scmp.eq.s32.totalorder %s73, 1
    %p432 = por %p430, %p431
    %p433 = scmp.ne.s32.totalorder %s424, %s425
    %p434 = scmp.eq.s32.totalorder %s73, 0
    %p435 = por %p433, %p434
    %p436 = scmp.ne.s32.totalorder %s424, %s425
    %p437 = scmp.eq.s32.totalorder %s74, 1
    %p438 = por %p436, %p437
    %p440 = scmp.ne.s32.totalorder %s425, %s439
    %p441 = scmp.eq.s32.totalorder %s74, 0
    %p442 = por %p440, %p441
    %s444 = sadd.s32 %s443, 1
    %p447 = scmp.eq.s32.totalorder %s68, 1
    %p448 = scmp.ne.s32.totalorder %s443, %s445
    %p449 = scmp.eq.s32.totalorder %s68, 0
    %p450 = por %p448, %p449
    %p451 = scmp.ne.s32.totalorder %s443, %s445
    %p452 = scmp.eq.s32.totalorder %s73, 1
    %p453 = por %p451, %p452
    %p454 = scmp.ne.s32.totalorder %s445, %s446
    %p455 = scmp.eq.s32.totalorder %s73, 0
    %p456 = por %p454, %p455
    %p457 = scmp.ne.s32.totalorder %s445, %s446
    %p458 = scmp.eq.s32.totalorder %s74, 1
    %p459 = por %p457, %p458
    %p461 = scmp.ne.s32.totalorder %s446, %s460
    %p462 = scmp.eq.s32.totalorder %s74, 0
    %p463 = por %p461, %p462
    %s465 = sadd.s32 %s464, 1
    %p468 = scmp.eq.s32.totalorder %s68, 1
    %p469 = scmp.ne.s32.totalorder %s464, %s466
    %p470 = scmp.eq.s32.totalorder %s68, 0
    %p471 = por %p469, %p470
    %p472 = scmp.ne.s32.totalorder %s464, %s466
    %p473 = scmp.eq.s32.totalorder %s73, 1
    %p474 = por %p472, %p473
    %p475 = scmp.ne.s32.totalorder %s466, %s467
    %p476 = scmp.eq.s32.totalorder %s73, 0
    %p477 = por %p475, %p476
    %p478 = scmp.ne.s32.totalorder %s466, %s467
    %p479 = scmp.eq.s32.totalorder %s74, 1
    %p480 = por %p478, %p479
    %p482 = scmp.ne.s32.totalorder %s467, %s481
    %p483 = scmp.eq.s32.totalorder %s74, 0
    %p484 = por %p482, %p483
    %s486 = sadd.s32 %s485, 1
    %p489 = scmp.eq.s32.totalorder %s68, 1
    %p490 = scmp.ne.s32.totalorder %s485, %s487
    %p491 = scmp.eq.s32.totalorder %s68, 0
    %p492 = por %p490, %p491
    %p493 = scmp.ne.s32.totalorder %s485, %s487
    %p494 = scmp.eq.s32.totalorder %s73, 1
    %p495 = por %p493, %p494
    %p496 = scmp.ne.s32.totalorder %s487, %s488
    %p497 = scmp.eq.s32.totalorder %s73, 0
    %p498 = por %p496, %p497
    %p499 = scmp.ne.s32.totalorder %s487, %s488
    %p500 = scmp.eq.s32.totalorder %s74, 1
    %p501 = por %p499, %p500
    %p503 = scmp.ne.s32.totalorder %s488, %s502
    %p504 = scmp.eq.s32.totalorder %s74, 0
    %p505 = por %p503, %p504
    %s507 = sadd.s32 %s506, 1
    %p510 = scmp.eq.s32.totalorder %s68, 1
    %p511 = scmp.ne.s32.totalorder %s506, %s508
    %p512 = scmp.eq.s32.totalorder %s68, 0
    %p513 = por %p511, %p512
    %p514 = scmp.ne.s32.totalorder %s506, %s508
    %p515 = scmp.eq.s32.totalorder %s73, 1
    %p516 = por %p514, %p515
    %p517 = scmp.ne.s32.totalorder %s508, %s509
    %p518 = scmp.eq.s32.totalorder %s73, 0
    %p519 = por %p517, %p518
    %p520 = scmp.ne.s32.totalorder %s508, %s509
    %p521 = scmp.eq.s32.totalorder %s74, 1
    %p522 = por %p520, %p521
    %p524 = scmp.ne.s32.totalorder %s509, %s523
    %p525 = scmp.eq.s32.totalorder %s74, 0
    %p526 = por %p524, %p525
    %s528 = sadd.s32 %s527, 1
    %p531 = scmp.eq.s32.totalorder %s68, 1
    %p532 = scmp.ne.s32.totalorder %s527, %s529
    %p533 = scmp.eq.s32.totalorder %s68, 0
    %p534 = por %p532, %p533
    %p535 = scmp.ne.s32.totalorder %s527, %s529
    %p536 = scmp.eq.s32.totalorder %s73, 1
    %p537 = por %p535, %p536
    %p538 = scmp.ne.s32.totalorder %s529, %s530
    %p539 = scmp.eq.s32.totalorder %s73, 0
    %p540 = por %p538, %p539
    %p541 = scmp.ne.s32.totalorder %s529, %s530
    %p542 = scmp.eq.s32.totalorder %s74, 1
    %p543 = por %p541, %p542
    %p545 = scmp.ne.s32.totalorder %s530, %s544
    %p546 = scmp.eq.s32.totalorder %s74, 0
    %p547 = por %p545, %p546
    %s549 = sadd.s32 %s548, 1
    %p552 = scmp.eq.s32.totalorder %s68, 1
    %p553 = scmp.ne.s32.totalorder %s548, %s550
    %p554 = scmp.eq.s32.totalorder %s68, 0
    %p555 = por %p553, %p554
    %p556 = scmp.ne.s32.totalorder %s548, %s550
    %p557 = scmp.eq.s32.totalorder %s73, 1
    %p558 = por %p556, %p557
    %p559 = scmp.ne.s32.totalorder %s550, %s551
    %p560 = scmp.eq.s32.totalorder %s73, 0
    %p561 = por %p559, %p560
    %p562 = scmp.ne.s32.totalorder %s550, %s551
    %p563 = scmp.eq.s32.totalorder %s74, 1
    %p564 = por %p562, %p563
    %p566 = scmp.ne.s32.totalorder %s551, %s565
    %p567 = scmp.eq.s32.totalorder %s74, 0
    %p568 = por %p566, %p567
    %s570 = sadd.s32 %s569, 1
    %p573 = scmp.eq.s32.totalorder %s68, 1
    %p574 = scmp.ne.s32.totalorder %s569, %s571
    %p575 = scmp.eq.s32.totalorder %s68, 0
    %p576 = por %p574, %p575
    %p577 = scmp.ne.s32.totalorder %s569, %s571
    %p578 = scmp.eq.s32.totalorder %s73, 1
    %p579 = por %p577, %p578
    %p580 = scmp.ne.s32.totalorder %s571, %s572
    %p581 = scmp.eq.s32.totalorder %s73, 0
    %p582 = por %p580, %p581
    %p583 = scmp.ne.s32.totalorder %s571, %s572
    %p584 = scmp.eq.s32.totalorder %s74, 1
    %p585 = por %p583, %p584
    %p587 = scmp.ne.s32.totalorder %s572, %s586
    %p588 = scmp.eq.s32.totalorder %s74, 0
    %p589 = por %p587, %p588
    %s591 = sadd.s32 %s590, 1
    %p594 = scmp.eq.s32.totalorder %s68, 1
    %p595 = scmp.ne.s32.totalorder %s590, %s592
    %p596 = scmp.eq.s32.totalorder %s68, 0
    %p597 = por %p595, %p596
    %p598 = scmp.ne.s32.totalorder %s590, %s592
    %p599 = scmp.eq.s32.totalorder %s73, 1
    %p600 = por %p598, %p599
    %p601 = scmp.ne.s32.totalorder %s592, %s593
    %p602 = scmp.eq.s32.totalorder %s73, 0
    %p603 = por %p601, %p602
    %p604 = scmp.ne.s32.totalorder %s592, %s593
    %p605 = scmp.eq.s32.totalorder %s74, 1
    %p606 = por %p604, %p605
    %p608 = scmp.ne.s32.totalorder %s593, %s607
    %p609 = scmp.eq.s32.totalorder %s74, 0
    %p610 = por %p608, %p609
    %s612 = sadd.s32 %s611, 1
    %p615 = scmp.eq.s32.totalorder %s68, 1
    %p616 = scmp.ne.s32.totalorder %s611, %s613
    %p617 = scmp.eq.s32.totalorder %s68, 0
    %p618 = por %p616, %p617
    %p619 = scmp.ne.s32.totalorder %s611, %s613
    %p620 = scmp.eq.s32.totalorder %s73, 1
    %p621 = por %p619, %p620
    %p622 = scmp.ne.s32.totalorder %s613, %s614
    %p623 = scmp.eq.s32.totalorder %s73, 0
    %p624 = por %p622, %p623
    %p625 = scmp.ne.s32.totalorder %s613, %s614
    %p626 = scmp.eq.s32.totalorder %s74, 1
    %p627 = por %p625, %p626
    %p629 = scmp.ne.s32.totalorder %s614, %s628
    %p630 = scmp.eq.s32.totalorder %s74, 0
    %p631 = por %p629, %p630
    %s633 = sadd.s32 %s632, 1
    %p636 = scmp.eq.s32.totalorder %s68, 1
    %p637 = scmp.ne.s32.totalorder %s632, %s634
    %p638 = scmp.eq.s32.totalorder %s68, 0
    %p639 = por %p637, %p638
    %p640 = scmp.ne.s32.totalorder %s632, %s634
    %p641 = scmp.eq.s32.totalorder %s73, 1
    %p642 = por %p640, %p641
    %p643 = scmp.ne.s32.totalorder %s634, %s635
    %p644 = scmp.eq.s32.totalorder %s73, 0
    %p645 = por %p643, %p644
    %p646 = scmp.ne.s32.totalorder %s634, %s635
    %p647 = scmp.eq.s32.totalorder %s74, 1
    %p648 = por %p646, %p647
    %p650 = scmp.ne.s32.totalorder %s635, %s649
    %p651 = scmp.eq.s32.totalorder %s74, 0
    %p652 = por %p650, %p651
    %s654 = sadd.s32 %s653, 1
    %p657 = scmp.eq.s32.totalorder %s68, 1
    %p658 = scmp.ne.s32.totalorder %s653, %s655
    %p659 = scmp.eq.s32.totalorder %s68, 0
    %p660 = por %p658, %p659
    %p661 = scmp.ne.s32.totalorder %s653, %s655
    %p662 = scmp.eq.s32.totalorder %s73, 1
    %p663 = por %p661, %p662
    %p664 = scmp.ne.s32.totalorder %s655, %s656
    %p665 = scmp.eq.s32.totalorder %s73, 0
    %p666 = por %p664, %p665
    %p667 = scmp.ne.s32.totalorder %s655, %s656
    %p668 = scmp.eq.s32.totalorder %s74, 1
    %p669 = por %p667, %p668
    %p671 = scmp.ne.s32.totalorder %s656, %s670
    %p672 = scmp.eq.s32.totalorder %s74, 0
    %p673 = por %p671, %p672
    %s675 = sadd.s32 %s674, 1
    %p678 = scmp.eq.s32.totalorder %s68, 1
    %p679 = scmp.ne.s32.totalorder %s674, %s676
    %p680 = scmp.eq.s32.totalorder %s68, 0
    %p681 = por %p679, %p680
    %p682 = scmp.ne.s32.totalorder %s674, %s676
    %p683 = scmp.eq.s32.totalorder %s73, 1
    %p684 = por %p682, %p683
    %p685 = scmp.ne.s32.totalorder %s676, %s677
    %p686 = scmp.eq.s32.totalorder %s73, 0
    %p687 = por %p685, %p686
    %p688 = scmp.ne.s32.totalorder %s676, %s677
    %p689 = scmp.eq.s32.totalorder %s74, 1
    %p690 = por %p688, %p689
    %p692 = scmp.ne.s32.totalorder %s677, %s691
    %p693 = scmp.eq.s32.totalorder %s74, 0
    %p694 = por %p692, %p693
    %s695 = ssub.s32 %s68, %s75
    %p696 = scmp.eq.s32.totalorder %s695, 0
    %s698 = sadd.s32 %s697, 1
    %s699 = scalar_select %p696, %s697, %s698
    %p702 = pneg %p696
    %p703 = scmp.eq.s32.totalorder %s68, 1
    %p704 = por %p702, %p703
    %p705 = scmp.ne.s32.totalorder %s697, %s700
    %p706 = scmp.eq.s32.totalorder %s68, 0
    %p707 = por %p705, %p706
    %p708 = scmp.ne.s32.totalorder %s697, %s700
    %p709 = scmp.eq.s32.totalorder %s73, 1
    %p710 = por %p708, %p709
    %p711 = scmp.ne.s32.totalorder %s700, %s701
    %p712 = scmp.eq.s32.totalorder %s73, 0
    %p713 = por %p711, %p712
    %p714 = scmp.ne.s32.totalorder %s700, %s701
    %p715 = scmp.eq.s32.totalorder %s74, 1
    %p716 = por %p714, %p715
    %p718 = scmp.ne.s32.totalorder %s701, %s717
    %p719 = scmp.eq.s32.totalorder %s74, 0
    %p720 = por %p718, %p719
    %s721 = ssub.s32 %s68, %s75
    %p722 = scmp.eq.s32.totalorder %s721, 0
    %s724 = sadd.s32 %s723, 1
    %s725 = scalar_select %p722, %s723, %s724
    %p728 = pneg %p722
    %p729 = scmp.eq.s32.totalorder %s68, 1
    %p730 = por %p728, %p729
    %p731 = scmp.ne.s32.totalorder %s723, %s726
    %p732 = scmp.eq.s32.totalorder %s68, 0
    %p733 = por %p731, %p732
    %p734 = scmp.ne.s32.totalorder %s723, %s726
    %p735 = scmp.eq.s32.totalorder %s73, 1
    %p736 = por %p734, %p735
    %p737 = scmp.ne.s32.totalorder %s726, %s727
    %p738 = scmp.eq.s32.totalorder %s73, 0
    %p739 = por %p737, %p738
    %p740 = scmp.ne.s32.totalorder %s726, %s727
    %p741 = scmp.eq.s32.totalorder %s74, 1
    %p742 = por %p740, %p741
    %p744 = scmp.ne.s32.totalorder %s727, %s743
    %p745 = scmp.eq.s32.totalorder %s74, 0
    %p746 = por %p744, %p745
    %p747 = scmp.le.s32.totalorder 1, %s68
    %p748 = scmp.lt.s32.totalorder %s68, 3
    %p749 = pnand %p747, %p748
    %p750 = pneg %p749
    // Predicated region
    $region9: #{_lambda_.1} parent=5 // pred_check
      _
    $region10: #{_lambda_.1} parent=5 // pred_check_branch
      %752 = sbr.rel (%p749) target = $region12
    $region11: #{_lambda_.1} parent=5 // pred_region
      %s753 = ssub.s32 %s68, 1
      // Predicated region
      $region13: #{_lambda_.1} parent=11 // pred_check
        %p754 = pneg %p141
      $region14: #{_lambda_.1} parent=11 // pred_check_branch
        %756 = sbr.rel (%p754) target = $region16
      $region15: #{_lambda_.1} parent=11 // pred_region
        _
      $region16: #{_lambda_.1} parent=11 // pred_fallthru
        _
      // Predicated region
      $region17: #{_lambda_.1} parent=11 // pred_check
        %p757 = pneg %p162
      $region18: #{_lambda_.1} parent=11 // pred_check_branch
        %759 = sbr.rel (%p757) target = $region20
      $region19: #{_lambda_.1} parent=11 // pred_region
        _
      $region20: #{_lambda_.1} parent=11 // pred_fallthru
        _
      // Predicated region
      $region21: #{_lambda_.1} parent=11 // pred_check
        %p760 = pneg %p183
      $region22: #{_lambda_.1} parent=11 // pred_check_branch
        %762 = sbr.rel (%p760) target = $region24
      $region23: #{_lambda_.1} parent=11 // pred_region
        _
      $region24: #{_lambda_.1} parent=11 // pred_fallthru
        _
      // Predicated region
      $region25: #{_lambda_.1} parent=11 // pred_check
        %p763 = pneg %p204
      $region26: #{_lambda_.1} parent=11 // pred_check_branch
        %765 = sbr.rel (%p763) target = $region28
      $region27: #{_lambda_.1} parent=11 // pred_region
        _
      $region28: #{_lambda_.1} parent=11 // pred_fallthru
        _
      // Predicated region
      $region29: #{_lambda_.1} parent=11 // pred_check
        %p766 = pneg %p225
      $region30: #{_lambda_.1} parent=11 // pred_check_branch
        %768 = sbr.rel (%p766) target = $region32
      $region31: #{_lambda_.1} parent=11 // pred_region
        _
      $region32: #{_lambda_.1} parent=11 // pred_fallthru
        _
      // Predicated region
      $region33: #{_lambda_.1} parent=11 // pred_check
        %p769 = pneg %p246
      $region34: #{_lambda_.1} parent=11 // pred_check_branch
        %771 = sbr.rel (%p769) target = $region36
      $region35: #{_lambda_.1} parent=11 // pred_region
        _
      $region36: #{_lambda_.1} parent=11 // pred_fallthru
        _
      // Predicated region
      $region37: #{_lambda_.1} parent=11 // pred_check
        %p772 = pneg %p267
      $region38: #{_lambda_.1} parent=11 // pred_check_branch
        %774 = sbr.rel (%p772) target = $region40
      $region39: #{_lambda_.1} parent=11 // pred_region
        _
      $region40: #{_lambda_.1} parent=11 // pred_fallthru
        _
      // Predicated region
      $region41: #{_lambda_.1} parent=11 // pred_check
        %p775 = pneg %p288
      $region42: #{_lambda_.1} parent=11 // pred_check_branch
        %777 = sbr.rel (%p775) target = $region44
      $region43: #{_lambda_.1} parent=11 // pred_region
        _
      $region44: #{_lambda_.1} parent=11 // pred_fallthru
        _
      // Predicated region
      $region45: #{_lambda_.1} parent=11 // pred_check
        %p778 = pneg %p309
      $region46: #{_lambda_.1} parent=11 // pred_check_branch
        %780 = sbr.rel (%p778) target = $region48
      $region47: #{_lambda_.1} parent=11 // pred_region
        _
      $region48: #{_lambda_.1} parent=11 // pred_fallthru
        _
      // Predicated region
      $region49: #{_lambda_.1} parent=11 // pred_check
        %p781 = pneg %p330
      $region50: #{_lambda_.1} parent=11 // pred_check_branch
        %783 = sbr.rel (%p781) target = $region52
      $region51: #{_lambda_.1} parent=11 // pred_region
        _
      $region52: #{_lambda_.1} parent=11 // pred_fallthru
        _
      // Predicated region
      $region53: #{_lambda_.1} parent=11 // pred_check
        %p784 = pneg %p351
      $region54: #{_lambda_.1} parent=11 // pred_check_branch
        %786 = sbr.rel (%p784) target = $region56
      $region55: #{_lambda_.1} parent=11 // pred_region
        _
      $region56: #{_lambda_.1} parent=11 // pred_fallthru
        _
      // Predicated region
      $region57: #{_lambda_.1} parent=11 // pred_check
        %p787 = pneg %p372
      $region58: #{_lambda_.1} parent=11 // pred_check_branch
        %789 = sbr.rel (%p787) target = $region60
      $region59: #{_lambda_.1} parent=11 // pred_region
        _
      $region60: #{_lambda_.1} parent=11 // pred_fallthru
        _
      // Predicated region
      $region61: #{_lambda_.1} parent=11 // pred_check
        %p790 = pneg %p393
      $region62: #{_lambda_.1} parent=11 // pred_check_branch
        %792 = sbr.rel (%p790) target = $region64
      $region63: #{_lambda_.1} parent=11 // pred_region
        _
      $region64: #{_lambda_.1} parent=11 // pred_fallthru
        _
      // Predicated region
      $region65: #{_lambda_.1} parent=11 // pred_check
        %p793 = pneg %p414
      $region66: #{_lambda_.1} parent=11 // pred_check_branch
        %795 = sbr.rel (%p793) target = $region68
      $region67: #{_lambda_.1} parent=11 // pred_region
        _
      $region68: #{_lambda_.1} parent=11 // pred_fallthru
        _
      // Predicated region
      $region69: #{_lambda_.1} parent=11 // pred_check
        %p796 = pneg %p435
      $region70: #{_lambda_.1} parent=11 // pred_check_branch
        %798 = sbr.rel (%p796) target = $region72
      $region71: #{_lambda_.1} parent=11 // pred_region
        _
      $region72: #{_lambda_.1} parent=11 // pred_fallthru
        _
      // Predicated region
      $region73: #{_lambda_.1} parent=11 // pred_check
        %p799 = pneg %p456
      $region74: #{_lambda_.1} parent=11 // pred_check_branch
        %801 = sbr.rel (%p799) target = $region76
      $region75: #{_lambda_.1} parent=11 // pred_region
        _
      $region76: #{_lambda_.1} parent=11 // pred_fallthru
        _
      // Predicated region
      $region77: #{_lambda_.1} parent=11 // pred_check
        %p802 = pneg %p477
      $region78: #{_lambda_.1} parent=11 // pred_check_branch
        %804 = sbr.rel (%p802) target = $region80
      $region79: #{_lambda_.1} parent=11 // pred_region
        _
      $region80: #{_lambda_.1} parent=11 // pred_fallthru
        _
      // Predicated region
      $region81: #{_lambda_.1} parent=11 // pred_check
        %p805 = pneg %p498
      $region82: #{_lambda_.1} parent=11 // pred_check_branch
        %807 = sbr.rel (%p805) target = $region84
      $region83: #{_lambda_.1} parent=11 // pred_region
        _
      $region84: #{_lambda_.1} parent=11 // pred_fallthru
        _
      // Predicated region
      $region85: #{_lambda_.1} parent=11 // pred_check
        %p808 = pneg %p519
      $region86: #{_lambda_.1} parent=11 // pred_check_branch
        %810 = sbr.rel (%p808) target = $region88
      $region87: #{_lambda_.1} parent=11 // pred_region
        _
      $region88: #{_lambda_.1} parent=11 // pred_fallthru
        _
      // Predicated region
      $region89: #{_lambda_.1} parent=11 // pred_check
        %p811 = pneg %p540
      $region90: #{_lambda_.1} parent=11 // pred_check_branch
        %813 = sbr.rel (%p811) target = $region92
      $region91: #{_lambda_.1} parent=11 // pred_region
        _
      $region92: #{_lambda_.1} parent=11 // pred_fallthru
        _
      // Predicated region
      $region93: #{_lambda_.1} parent=11 // pred_check
        %p814 = pneg %p561
      $region94: #{_lambda_.1} parent=11 // pred_check_branch
        %816 = sbr.rel (%p814) target = $region96
      $region95: #{_lambda_.1} parent=11 // pred_region
        _
      $region96: #{_lambda_.1} parent=11 // pred_fallthru
        _
      // Predicated region
      $region97: #{_lambda_.1} parent=11 // pred_check
        %p817 = pneg %p582
      $region98: #{_lambda_.1} parent=11 // pred_check_branch
        %819 = sbr.rel (%p817) target = $region100
      $region99: #{_lambda_.1} parent=11 // pred_region
        _
      $region100: #{_lambda_.1} parent=11 // pred_fallthru
        _
      // Predicated region
      $region101: #{_lambda_.1} parent=11 // pred_check
        %p820 = pneg %p603
      $region102: #{_lambda_.1} parent=11 // pred_check_branch
        %822 = sbr.rel (%p820) target = $region104
      $region103: #{_lambda_.1} parent=11 // pred_region
        _
      $region104: #{_lambda_.1} parent=11 // pred_fallthru
        _
      // Predicated region
      $region105: #{_lambda_.1} parent=11 // pred_check
        %p823 = pneg %p624
      $region106: #{_lambda_.1} parent=11 // pred_check_branch
        %825 = sbr.rel (%p823) target = $region108
      $region107: #{_lambda_.1} parent=11 // pred_region
        _
      $region108: #{_lambda_.1} parent=11 // pred_fallthru
        _
      // Predicated region
      $region109: #{_lambda_.1} parent=11 // pred_check
        %p826 = pneg %p645
      $region110: #{_lambda_.1} parent=11 // pred_check_branch
        %828 = sbr.rel (%p826) target = $region112
      $region111: #{_lambda_.1} parent=11 // pred_region
        _
      $region112: #{_lambda_.1} parent=11 // pred_fallthru
        _
      // Predicated region
      $region113: #{_lambda_.1} parent=11 // pred_check
        %p829 = pneg %p666
      $region114: #{_lambda_.1} parent=11 // pred_check_branch
        %831 = sbr.rel (%p829) target = $region116
      $region115: #{_lambda_.1} parent=11 // pred_region
        _
      $region116: #{_lambda_.1} parent=11 // pred_fallthru
        _
      // Predicated region
      $region117: #{_lambda_.1} parent=11 // pred_check
        %p832 = pneg %p687
      $region118: #{_lambda_.1} parent=11 // pred_check_branch
        %834 = sbr.rel (%p832) target = $region120
      $region119: #{_lambda_.1} parent=11 // pred_region
        _
      $region120: #{_lambda_.1} parent=11 // pred_fallthru
        _
    $region12: #{_lambda_.1} parent=5 // pred_fallthru
      _
    %p835 = scmp.lt.s32.totalorder %s68, 2
    // Predicated region
    $region121: #{_lambda_.1} parent=5 // pred_check
      %p836 = pneg %p835
    $region122: #{_lambda_.1} parent=5 // pred_check_branch
      %838 = sbr.rel (%p836) target = $region124
    $region123: #{_lambda_.1} parent=5 // pred_region
      // Predicated region
      $region125: #{_lambda_.1} parent=123 // pred_check
        %p839 = pneg %p88
      $region126: #{_lambda_.1} parent=123 // pred_check_branch
        %841 = sbr.rel (%p839) target = $region128
      $region127: #{_lambda_.1} parent=123 // pred_region
        %p842 = scmp.lt.s32.totalorder %s68, 1
        %s843 = scalar_select %p842, %s68, 1
        %s844 = smul.addr %s843, 8
        %s845 = scalar_lea.vmem %s1, %s844
      $region128: #{_lambda_.1} parent=123 // pred_fallthru
        _
      // Predicated region
      $region129: #{_lambda_.1} parent=123 // pred_check
        %p846 = pneg %p114
      $region130: #{_lambda_.1} parent=123 // pred_check_branch
        %848 = sbr.rel (%p846) target = $region132
      $region131: #{_lambda_.1} parent=123 // pred_region
        %p849 = scmp.lt.s32.totalorder %s68, 1
        %s850 = scalar_select %p849, %s68, 1
        %s851 = smul.addr %s850, 8
        %s852 = scalar_lea.vmem %s3, %s851
      $region132: #{_lambda_.1} parent=123 // pred_fallthru
        _
    $region124: #{_lambda_.1} parent=5 // pred_fallthru
      _
    %p853 = scmp.le.s32.totalorder 1, %s68
    %p854 = scmp.lt.s32.totalorder %s68, 3
    %p855 = pnand %p853, %p854
    %p856 = pneg %p855
    // Predicated region
    $region133: #{_lambda_.1} parent=5 // pred_check
      _
    $region134: #{_lambda_.1} parent=5 // pred_check_branch
      %858 = sbr.rel (%p855) target = $region136
    $region135: #{_lambda_.1} parent=5 // pred_region
      %s859 = ssub.s32 %s68, 1
      %p860 = scmp.lt.s32.totalorder %s73, 1
      %s861 = scalar_select %p860, %s73, 1
      %s862 = smul.addr %s861, 8
      %s863 = scalar_lea.vmem %s1, %s862
      %p864 = pneg %p94
      %p865 = pneg %p91
      %p866 = scmp.lt.s32.totalorder %s73, 1
      %s867 = scalar_select %p866, %s73, 1
      %s868 = smul.addr %s867, 8
      %s869 = scalar_lea.vmem %s3, %s868
      %p870 = pneg %p120
      %p871 = pneg %p117
      %p872 = pneg %p141
      %p873 = pneg %p138
      %p874 = pneg %p162
      %p875 = pneg %p159
      %p876 = pneg %p183
      %p877 = pneg %p180
      %p878 = pneg %p204
      %p879 = pneg %p201
      %p880 = pneg %p225
      %p881 = pneg %p222
      %p882 = pneg %p246
      %p883 = pneg %p243
      %p884 = pneg %p267
      %p885 = pneg %p264
      %p886 = pneg %p288
      %p887 = pneg %p285
      %p888 = pneg %p309
      %p889 = pneg %p306
      %p890 = pneg %p330
      %p891 = pneg %p327
      %p892 = pneg %p351
      %p893 = pneg %p348
      %p894 = pneg %p372
      %p895 = pneg %p369
      %p896 = pneg %p393
      %p897 = pneg %p390
      %p898 = pneg %p414
      %p899 = pneg %p411
      %p900 = pneg %p435
      %p901 = pneg %p432
      %p902 = pneg %p456
      %p903 = pneg %p453
      %p904 = pneg %p477
      %p905 = pneg %p474
      %p906 = pneg %p498
      %p907 = pneg %p495
      %p908 = pneg %p519
      %p909 = pneg %p516
      %p910 = pneg %p540
      %p911 = pneg %p537
      %p912 = pneg %p561
      %p913 = pneg %p558
      %p914 = pneg %p582
      %p915 = pneg %p579
      %p916 = pneg %p603
      %p917 = pneg %p600
      %p918 = pneg %p624
      %p919 = pneg %p621
      %p920 = pneg %p645
      %p921 = pneg %p642
      %p922 = pneg %p666
      %p923 = pneg %p663
      %p924 = pneg %p687
      %p925 = pneg %p684
      %p926 = pneg %p713
      %p927 = pneg %p710
      %p928 = scmp.lt.s32.totalorder %s73, 1
      %s929 = scalar_select %p928, %s73, 1
      %s930 = smul.addr %s929, 2
      %s931 = smul.addr %s930, 8
      %s932 = scalar_lea.vmem %s59, %s931
      %p933 = pneg %p739
      %p934 = pneg %p736
      %p935 = scmp.lt.s32.totalorder %s73, 1
      %s936 = scalar_select %p935, %s73, 1
      %s937 = smul.addr %s936, 2
      %s938 = smul.addr %s937, 8
      %s939 = scalar_lea.vmem %s61, %s938
      %p940 = scmp.lt.s32.totalorder %s73, 1
      %s941 = scalar_select %p940, %s73, 1
      %s942 = smul.addr %s941, 8
      %s943 = scalar_lea.vmem %s1, %s942
      %p944 = scmp.lt.s32.totalorder %s73, 1
      %s945 = scalar_select %p944, %s73, 1
      %s946 = smul.addr %s945, 8
      %s947 = scalar_lea.vmem %s3, %s946
      %p948 = scmp.lt.s32.totalorder %s73, 1
      %s949 = scalar_select %p948, %s73, 1
      %s950 = smul.addr %s949, 2
      %s951 = smul.addr %s950, 8
      %s952 = scalar_lea.vmem %s59, %s951
      %p953 = scmp.lt.s32.totalorder %s73, 1
      %s954 = scalar_select %p953, %s73, 1
      %s955 = smul.addr %s954, 2
      %s956 = smul.addr %s955, 8
      %s957 = scalar_lea.vmem %s61, %s956
      %v959 = vld [vmem:[%s5] sm:$0xff]
      %v960 = vlaneseq
      %v961 = vshrl.u32 %v960, 7
      %v962 = vlaneseq
      %v963 = vand.u32 %v962, 127
      %vm964 = vcmp.gt.s32.totalorder %v963, %v961
      %v965 = vsel %vm964, -1e+30, 0.0
      %v966 = vadd.s32 %v963, 1
      %vm967 = vcmp.eq.s32.totalorder %v961, %v966
      %v968 = vsel %vm967, 1, 0
      %v969 = vcvt.s32.f32 %v968
      %v970 = vld [vmem:[%s943] sm:$0xff]
      %v971 = vld [vmem:[%s7] sm:$0xff]
      %v972 = vld [vmem:[%s7 + $0x8] sm:$0xff]
      %v973 = vld [vmem:[%s9] sm:$0x1]
      %v975 = vperm.slane %v973, 0
      %vm977 = vcmask 130048
      %v979 = vsel %vm977, %v970, 0
      %981 = vmatpush.msra.mxu0 0.0
      %982 = vmatpush.msra.mxu0 0.0
      %983 = vmatpush.msra.mxu0 0.0
      %984 = vmatpush.msra.mxu0 0.0
      %985 = vmatpush.msra.mxu0 0.0
      %986 = vmatpush.msra.mxu0 0.0
      %987 = vmatpush.msra.mxu0 0.0
      %988 = vmatpush.msra.mxu0 0.0
      %989 = vmatpush.msra.mxu0 0.0
      %990 = vmatpush.msra.mxu0 0.0
      %991 = vmatpush.msra.mxu0 0.0
      %992 = vmatpush.msra.mxu0 0.0
      %993 = vmatpush.msra.mxu0 0.0
      %994 = vmatpush.msra.mxu0 0.0
      %995 = vmatpush.msra.mxu0 %v972
      %996 = vmatpush.msra.mxu0 %v971
      %997 = vmatmul.f32.gmra.mxu0 %v979
      %v998 = vpop.f32.mrf.mxu0
      %v999 = vadd.f32 %v975, %v998
      %1000 = vdwg.mxu0
      %v1001 = vmul.f32 %v999, 0.5
      %v1002 = vmul.f32 %v999, 0.70710677
      %vm1003 = vcmp.lt.f32.partialorder %v1002, 0.0
      %v1004 = vsel %vm1003, -1.0, 1.0
      %v1005 = vand.u32 2147483647, %v1002
      %v1006 = vmul.f32 %v1005, 0.3275911
      %v1007 = vadd.f32 %v1006, 1.0
      %v1008 = vrcp.pop %v1007
      %v1009 = vmul.f32 %v1007, %v1008
      %v1010 = vsub.f32 1.0, %v1009
      %v1011 = vmul.f32 %v1008, %v1010
      %v1012 = vadd.f32 %v1008, %v1011
      %vm1013 = vweird.f32 %v1007
      %vm1014 = vweird.f32 %v1008
      %vm1015 = vmor %vm1013, %vm1014
      %v1016 = vsel %vm1015, %v1008, %v1012
      %v1017 = vand.u32 2147483647, %v1007
      %vm1018 = vcmp.eq.f32.partialorder %v1017, 8.507059e+37
      %v1019 = vand.u32 %v1007, 2147483648
      %v1020 = vor.u32 1.1754944e-38, %v1019
      %v1021 = vsel %vm1018, %v1020, %v1016
      %v1022 = vmul.f32 1.0, %v1021
      %v1023 = vmul.f32 %v1022, 1.0614054
      %v1024 = vadd.f32 %v1023, -1.4531521
      %v1025 = vmul.f32 %v1024, %v1022
      %v1026 = vadd.f32 %v1025, 1.4214138
      %v1027 = vmul.f32 %v1026, %v1022
      %v1028 = vadd.f32 %v1027, -0.28449672
      %v1029 = vmul.f32 %v1028, %v1022
      %v1030 = vadd.f32 %v1029, 0.2548296
      %v1031 = vmul.f32 %v1030, %v1022
      %v1032 = vsub.f32 0.0, %v1005
      %v1033 = vmul.f32 %v1032, %v1005
      %v1034 = vmul.f32 %v1033, 1.442695
      %v1035 = vpow.pop %v1034
      %v1036 = vmul.f32 %v1031, %v1035
      %v1037 = vsub.f32 1.0, %v1036
      %v1038 = vmul.f32 %v1004, %v1037
      %v1039 = vadd.f32 %v1038, 1.0
      %v1040 = vmul.f32 %v1001, %v1039
      %v1041 = vld [vmem:[%s11] sm:$0xff]
      %v1042 = vld [vmem:[%s11 + $0x8] sm:$0xff]
      %v1043 = vld [vmem:[%s11 + $0x10] sm:$0xff]
      %v1044 = vld [vmem:[%s11 + $0x18] sm:$0xff]
      %v1045 = vld [vmem:[%s13] sm:$0x1]
      %v1047 = vperm.slane %v1045, 0
      %vm1049 = vcmask 261120
      %v1051 = vsel %vm1049, %v1040, 0
      %1053 = vmatpush.msra.mxu0 0.0
      %1054 = vmatpush.msra.mxu0 0.0
      %1055 = vmatpush.msra.mxu0 0.0
      %1056 = vmatpush.msra.mxu0 0.0
      %1057 = vmatpush.msra.mxu0 0.0
      %1058 = vmatpush.msra.mxu0 0.0
      %1059 = vmatpush.msra.mxu0 0.0
      %1060 = vmatpush.msra.mxu0 0.0
      %1061 = vmatpush.msra.mxu0 0.0
      %1062 = vmatpush.msra.mxu0 0.0
      %1063 = vmatpush.msra.mxu0 0.0
      %1064 = vmatpush.msra.mxu0 0.0
      %1065 = vmatpush.msra.mxu0 %v1044
      %1066 = vmatpush.msra.mxu0 %v1043
      %1067 = vmatpush.msra.mxu0 %v1042
      %1068 = vmatpush.msra.mxu0 %v1041
      %1069 = vmatmul.f32.gmra.mxu0 %v1051
      %v1070 = vpop.f32.mrf.mxu0
      %v1071 = vadd.f32 %v1047, %v1070
      %1072 = vdwg.mxu0
      %v1073 = vmul.f32 %v1071, 5.656854
      %v1074 = vadd.f32 %v1073, %v959
      %v1075 = vld [vmem:[%s27] sm:$0x3f]
      %v1076 = vld [vmem:[%s15] sm:$0xff]
      %v1077 = vld [vmem:[%s15 + $0x8] sm:$0xff]
      %v1078 = vld [vmem:[%s15 + $0x10] sm:$0xff]
      %v1079 = vld [vmem:[%s15 + $0x18] sm:$0xff]
      %v1080 = vld [vmem:[%s17] sm:$0x1]
      %v1081 = vld [vmem:[%s19] sm:$0xff]
      %v1082 = vld [vmem:[%s19 + $0x8] sm:$0xff]
      %v1083 = vld [vmem:[%s19 + $0x10] sm:$0xff]
      %v1084 = vld [vmem:[%s19 + $0x18] sm:$0xff]
      %v1086 = vperm.slane %v1080, 0
      %v1089 = vsel %vm1049, %v1074, 0
      %1091 = vmatpush.msra.mxu0 0.0
      %1092 = vmatpush.msra.mxu0 0.0
      %1093 = vmatpush.msra.mxu0 0.0
      %1094 = vmatpush.msra.mxu0 0.0
      %1095 = vmatpush.msra.mxu0 0.0
      %1096 = vmatpush.msra.mxu0 0.0
      %1097 = vmatpush.msra.mxu0 0.0
      %1098 = vmatpush.msra.mxu0 0.0
      %1099 = vmatpush.msra.mxu0 0.0
      %1100 = vmatpush.msra.mxu0 0.0
      %1101 = vmatpush.msra.mxu0 0.0
      %1102 = vmatpush.msra.mxu0 0.0
      %1103 = vmatpush.msra.mxu0 %v1079
      %1104 = vmatpush.msra.mxu0 %v1078
      %1105 = vmatpush.msra.mxu0 %v1077
      %1106 = vmatpush.msra.mxu0 %v1076
      %1107 = vmatmul.f32.gmra.mxu0 %v1089
      %v1108 = vpop.f32.mrf.mxu0
      %v1109 = vadd.f32 %v1086, %v1108
      %1110 = vdwg.mxu0
      %1112 = vrot.lane.b32.xlu0 %v1109, 96
      %v1113 = vpop.permute.xlu0 %1112
      %vm1114 = vcmask 64512
      %v1115 = vsel %vm1114, %v1109, 0
      %v1117 = vsel %vm1114, %v1113, 0
      %1119 = vmatpush.xpose.msra.mxu0 0.0
      %1120 = vmatpush.xpose.msra.mxu0 0.0
      %1121 = vmatpush.xpose.msra.mxu0 0.0
      %1122 = vmatpush.xpose.msra.mxu0 0.0
      %1123 = vmatpush.xpose.msra.mxu0 0.0
      %1124 = vmatpush.xpose.msra.mxu0 0.0
      %1125 = vmatpush.xpose.msra.mxu0 0.0
      %1126 = vmatpush.xpose.msra.mxu0 0.0
      %1127 = vmatpush.xpose.msra.mxu0 0.0
      %1128 = vmatpush.xpose.msra.mxu0 0.0
      %1129 = vmatpush.xpose.msra.mxu0 0.0
      %1130 = vmatpush.xpose.msra.mxu0 0.0
      %1131 = vmatpush.xpose.msra.mxu0 0.0
      %1132 = vmatpush.xpose.msra.mxu0 0.0
      %1133 = vmatpush.xpose.msra.mxu0 0.0
      %1134 = vmatpush.xpose.msra.mxu0 %v1117
      %1135 = vmatmul.f32.gmra.mxu0 %v1115
      %v1136 = vpop.f32.mrf.mxu0
      %v1137 = vadd.f32 0.0, %v1136
      %1138 = vdwg.mxu0
      %v1139 = vmul.f32 %v1137, 0.35355338
      %v1140 = vsel %vm1114, %v1139, -inf
      %1141 = vmax.xlane.f32.xlu0 %v1140
      %v1142 = vpop.xlane.xlu0 %1141
      %v1143 = vsub.f32 %v1139, %v1142
      %v1144 = vmul.f32 %v1143, 1.442695
      %v1145 = vpow.pop %v1144
      %v1146 = vsel %vm1114, %v1145, 0.0
      %1147 = vadd.xlane.f32.xlu0 %v1146
      %v1148 = vpop.xlane.xlu0 %1147
      %v1149 = vrcp.pop %v1148
      %v1150 = vmul.f32 %v1145, %v1149
      %1151 = vrot.lane.b32.xlu0 %v1109, 64
      %v1152 = vpop.permute.xlu0 %1151
      %v1155 = vsel %vm1114, %v1150, 0
      %1157 = vmatpush.msra.mxu0 0.0
      %1158 = vmatpush.msra.mxu0 0.0
      %1159 = vmatpush.msra.mxu0 0.0
      %1160 = vmatpush.msra.mxu0 0.0
      %1161 = vmatpush.msra.mxu0 0.0
      %1162 = vmatpush.msra.mxu0 0.0
      %1163 = vmatpush.msra.mxu0 0.0
      %1164 = vmatpush.msra.mxu0 0.0
      %1165 = vmatpush.msra.mxu0 0.0
      %1166 = vmatpush.msra.mxu0 0.0
      %1167 = vmatpush.msra.mxu0 0.0
      %1168 = vmatpush.msra.mxu0 0.0
      %1169 = vmatpush.msra.mxu0 0.0
      %1170 = vmatpush.msra.mxu0 0.0
      %1171 = vmatpush.msra.mxu0 0.0
      %1172 = vmatpush.msra.mxu0 %v1152
      %1173 = vmatmul.f32.gmra.mxu0 %v1155
      %v1174 = vpop.f32.mrf.mxu0
      %v1175 = vadd.f32 0.0, %v1174
      %1176 = vdwg.mxu0
      %1177 = vrot.lane.b32.xlu0 %v1109, 120
      %v1178 = vpop.permute.xlu0 %1177
      %1179 = vrot.lane.b32.xlu0 %v1109, 88
      %v1180 = vpop.permute.xlu0 %1179
      %v1181 = vsel %vm1114, %v1178, 0
      %v1183 = vsel %vm1114, %v1180, 0
      %1185 = vmatpush.xpose.msra.mxu0 0.0
      %1186 = vmatpush.xpose.msra.mxu0 0.0
      %1187 = vmatpush.xpose.msra.mxu0 0.0
      %1188 = vmatpush.xpose.msra.mxu0 0.0
      %1189 = vmatpush.xpose.msra.mxu0 0.0
      %1190 = vmatpush.xpose.msra.mxu0 0.0
      %1191 = vmatpush.xpose.msra.mxu0 0.0
      %1192 = vmatpush.xpose.msra.mxu0 0.0
      %1193 = vmatpush.xpose.msra.mxu0 0.0
      %1194 = vmatpush.xpose.msra.mxu0 0.0
      %1195 = vmatpush.xpose.msra.mxu0 0.0
      %1196 = vmatpush.xpose.msra.mxu0 0.0
      %1197 = vmatpush.xpose.msra.mxu0 0.0
      %1198 = vmatpush.xpose.msra.mxu0 0.0
      %1199 = vmatpush.xpose.msra.mxu0 0.0
      %1200 = vmatpush.xpose.msra.mxu0 %v1183
      %1201 = vmatmul.f32.gmra.mxu0 %v1181
      %v1202 = vpop.f32.mrf.mxu0
      %v1203 = vadd.f32 0.0, %v1202
      %1204 = vdwg.mxu0
      %v1205 = vmul.f32 %v1203, 0.35355338
      %v1206 = vsel %vm1114, %v1205, -inf
      %1207 = vmax.xlane.f32.xlu0 %v1206
      %v1208 = vpop.xlane.xlu0 %1207
      %v1209 = vsub.f32 %v1205, %v1208
      %v1210 = vmul.f32 %v1209, 1.442695
      %v1211 = vpow.pop %v1210
      %v1212 = vsel %vm1114, %v1211, 0.0
      %1213 = vadd.xlane.f32.xlu0 %v1212
      %v1214 = vpop.xlane.xlu0 %1213
      %v1215 = vrcp.pop %v1214
      %v1216 = vmul.f32 %v1211, %v1215
      %1217 = vrot.lane.b32.xlu0 %v1109, 56
      %v1218 = vpop.permute.xlu0 %1217
      %v1221 = vsel %vm1114, %v1216, 0
      %1223 = vmatpush.msra.mxu0 0.0
      %1224 = vmatpush.msra.mxu0 0.0
      %1225 = vmatpush.msra.mxu0 0.0
      %1226 = vmatpush.msra.mxu0 0.0
      %1227 = vmatpush.msra.mxu0 0.0
      %1228 = vmatpush.msra.mxu0 0.0
      %1229 = vmatpush.msra.mxu0 0.0
      %1230 = vmatpush.msra.mxu0 0.0
      %1231 = vmatpush.msra.mxu0 0.0
      %1232 = vmatpush.msra.mxu0 0.0
      %1233 = vmatpush.msra.mxu0 0.0
      %1234 = vmatpush.msra.mxu0 0.0
      %1235 = vmatpush.msra.mxu0 0.0
      %1236 = vmatpush.msra.mxu0 0.0
      %1237 = vmatpush.msra.mxu0 0.0
      %1238 = vmatpush.msra.mxu0 %v1218
      %1239 = vmatmul.f32.gmra.mxu0 %v1221
      %v1240 = vpop.f32.mrf.mxu0
      %v1241 = vadd.f32 0.0, %v1240
      %1242 = vdwg.mxu0
      %v1244 = vsel %vm1114, %v1241, 0
      %1246 = vmatpush.msra.mxu0 0.0
      %1247 = vmatpush.msra.mxu0 0.0
      %1248 = vmatpush.msra.mxu0 0.0
      %1249 = vmatpush.msra.mxu0 0.0
      %1250 = vmatpush.msra.mxu0 0.0
      %1251 = vmatpush.msra.mxu0 0.0
      %1252 = vmatpush.msra.mxu0 0.0
      %1253 = vmatpush.msra.mxu0 0.0
      %1254 = vmatpush.msra.mxu0 0.0
      %1255 = vmatpush.msra.mxu0 0.0
      %1256 = vmatpush.msra.mxu0 0.0
      %1257 = vmatpush.msra.mxu0 0.0
      %1258 = vmatpush.msra.mxu0 0.0
      %1259 = vmatpush.msra.mxu0 0.0
      %1260 = vmatpush.msra.mxu0 0.0
      %1261 = vmatpush.msra.mxu0 %v1082
      %1262 = vmatmul.f32.gmra.mxu0 %v1244
      %v1263 = vpop.f32.mrf.mxu0
      %v1264 = vadd.f32 0.0, %v1263
      %1265 = vdwg.mxu0
      %v1267 = vsel %vm1114, %v1175, 0
      %1269 = vmatpush.msra.mxu0 0.0
      %1270 = vmatpush.msra.mxu0 0.0
      %1271 = vmatpush.msra.mxu0 0.0
      %1272 = vmatpush.msra.mxu0 0.0
      %1273 = vmatpush.msra.mxu0 0.0
      %1274 = vmatpush.msra.mxu0 0.0
      %1275 = vmatpush.msra.mxu0 0.0
      %1276 = vmatpush.msra.mxu0 0.0
      %1277 = vmatpush.msra.mxu0 0.0
      %1278 = vmatpush.msra.mxu0 0.0
      %1279 = vmatpush.msra.mxu0 0.0
      %1280 = vmatpush.msra.mxu0 0.0
      %1281 = vmatpush.msra.mxu0 0.0
      %1282 = vmatpush.msra.mxu0 0.0
      %1283 = vmatpush.msra.mxu0 0.0
      %1284 = vmatpush.msra.mxu0 %v1081
      %1285 = vmatmul.f32.gmra.mxu0 %v1267
      %v1286 = vpop.f32.mrf.mxu0
      %v1287 = vadd.f32 %v1264, %v1286
      %1288 = vdwg.mxu0
      %1289 = vrot.lane.b32.xlu0 %v1109, 112
      %v1290 = vpop.permute.xlu0 %1289
      %1291 = vrot.lane.b32.xlu0 %v1109, 80
      %v1292 = vpop.permute.xlu0 %1291
      %v1293 = vsel %vm1114, %v1290, 0
      %v1295 = vsel %vm1114, %v1292, 0
      %1297 = vmatpush.xpose.msra.mxu0 0.0
      %1298 = vmatpush.xpose.msra.mxu0 0.0
      %1299 = vmatpush.xpose.msra.mxu0 0.0
      %1300 = vmatpush.xpose.msra.mxu0 0.0
      %1301 = vmatpush.xpose.msra.mxu0 0.0
      %1302 = vmatpush.xpose.msra.mxu0 0.0
      %1303 = vmatpush.xpose.msra.mxu0 0.0
      %1304 = vmatpush.xpose.msra.mxu0 0.0
      %1305 = vmatpush.xpose.msra.mxu0 0.0
      %1306 = vmatpush.xpose.msra.mxu0 0.0
      %1307 = vmatpush.xpose.msra.mxu0 0.0
      %1308 = vmatpush.xpose.msra.mxu0 0.0
      %1309 = vmatpush.xpose.msra.mxu0 0.0
      %1310 = vmatpush.xpose.msra.mxu0 0.0
      %1311 = vmatpush.xpose.msra.mxu0 0.0
      %1312 = vmatpush.xpose.msra.mxu0 %v1295
      %1313 = vmatmul.f32.gmra.mxu0 %v1293
      %v1314 = vpop.f32.mrf.mxu0
      %v1315 = vadd.f32 0.0, %v1314
      %1316 = vdwg.mxu0
      %v1317 = vmul.f32 %v1315, 0.35355338
      %v1318 = vsel %vm1114, %v1317, -inf
      %1319 = vmax.xlane.f32.xlu0 %v1318
      %v1320 = vpop.xlane.xlu0 %1319
      %v1321 = vsub.f32 %v1317, %v1320
      %v1322 = vmul.f32 %v1321, 1.442695
      %v1323 = vpow.pop %v1322
      %v1324 = vsel %vm1114, %v1323, 0.0
      %1325 = vadd.xlane.f32.xlu0 %v1324
      %v1326 = vpop.xlane.xlu0 %1325
      %v1327 = vrcp.pop %v1326
      %v1328 = vmul.f32 %v1323, %v1327
      %1329 = vrot.lane.b32.xlu0 %v1109, 48
      %v1330 = vpop.permute.xlu0 %1329
      %v1333 = vsel %vm1114, %v1328, 0
      %1335 = vmatpush.msra.mxu0 0.0
      %1336 = vmatpush.msra.mxu0 0.0
      %1337 = vmatpush.msra.mxu0 0.0
      %1338 = vmatpush.msra.mxu0 0.0
      %1339 = vmatpush.msra.mxu0 0.0
      %1340 = vmatpush.msra.mxu0 0.0
      %1341 = vmatpush.msra.mxu0 0.0
      %1342 = vmatpush.msra.mxu0 0.0
      %1343 = vmatpush.msra.mxu0 0.0
      %1344 = vmatpush.msra.mxu0 0.0
      %1345 = vmatpush.msra.mxu0 0.0
      %1346 = vmatpush.msra.mxu0 0.0
      %1347 = vmatpush.msra.mxu0 0.0
      %1348 = vmatpush.msra.mxu0 0.0
      %1349 = vmatpush.msra.mxu0 0.0
      %1350 = vmatpush.msra.mxu0 %v1330
      %1351 = vmatmul.f32.gmra.mxu0 %v1333
      %v1352 = vpop.f32.mrf.mxu0
      %v1353 = vadd.f32 0.0, %v1352
      %1354 = vdwg.mxu0
      %v1356 = vsel %vm1114, %v1353, 0
      %1358 = vmatpush.msra.mxu0 0.0
      %1359 = vmatpush.msra.mxu0 0.0
      %1360 = vmatpush.msra.mxu0 0.0
      %1361 = vmatpush.msra.mxu0 0.0
      %1362 = vmatpush.msra.mxu0 0.0
      %1363 = vmatpush.msra.mxu0 0.0
      %1364 = vmatpush.msra.mxu0 0.0
      %1365 = vmatpush.msra.mxu0 0.0
      %1366 = vmatpush.msra.mxu0 0.0
      %1367 = vmatpush.msra.mxu0 0.0
      %1368 = vmatpush.msra.mxu0 0.0
      %1369 = vmatpush.msra.mxu0 0.0
      %1370 = vmatpush.msra.mxu0 0.0
      %1371 = vmatpush.msra.mxu0 0.0
      %1372 = vmatpush.msra.mxu0 0.0
      %1373 = vmatpush.msra.mxu0 %v1083
      %1374 = vmatmul.f32.gmra.mxu0 %v1356
      %v1375 = vpop.f32.mrf.mxu0
      %v1376 = vadd.f32 0.0, %v1375
      %1377 = vdwg.mxu0
      %v1378 = vadd.f32 %v1287, %v1376
      %1379 = vrot.lane.b32.xlu0 %v1109, 104
      %v1380 = vpop.permute.xlu0 %1379
      %1381 = vrot.lane.b32.xlu0 %v1109, 72
      %v1382 = vpop.permute.xlu0 %1381
      %v1383 = vsel %vm1114, %v1380, 0
      %v1385 = vsel %vm1114, %v1382, 0
      %1387 = vmatpush.xpose.msra.mxu0 0.0
      %1388 = vmatpush.xpose.msra.mxu0 0.0
      %1389 = vmatpush.xpose.msra.mxu0 0.0
      %1390 = vmatpush.xpose.msra.mxu0 0.0
      %1391 = vmatpush.xpose.msra.mxu0 0.0
      %1392 = vmatpush.xpose.msra.mxu0 0.0
      %1393 = vmatpush.xpose.msra.mxu0 0.0
      %1394 = vmatpush.xpose.msra.mxu0 0.0
      %1395 = vmatpush.xpose.msra.mxu0 0.0
      %1396 = vmatpush.xpose.msra.mxu0 0.0
      %1397 = vmatpush.xpose.msra.mxu0 0.0
      %1398 = vmatpush.xpose.msra.mxu0 0.0
      %1399 = vmatpush.xpose.msra.mxu0 0.0
      %1400 = vmatpush.xpose.msra.mxu0 0.0
      %1401 = vmatpush.xpose.msra.mxu0 0.0
      %1402 = vmatpush.xpose.msra.mxu0 %v1385
      %1403 = vmatmul.f32.gmra.mxu0 %v1383
      %v1404 = vpop.f32.mrf.mxu0
      %v1405 = vadd.f32 0.0, %v1404
      %1406 = vdwg.mxu0
      %v1407 = vmul.f32 %v1405, 0.35355338
      %v1408 = vsel %vm1114, %v1407, -inf
      %1409 = vmax.xlane.f32.xlu0 %v1408
      %v1410 = vpop.xlane.xlu0 %1409
      %v1411 = vsub.f32 %v1407, %v1410
      %v1412 = vmul.f32 %v1411, 1.442695
      %v1413 = vpow.pop %v1412
      %v1414 = vsel %vm1114, %v1413, 0.0
      %1415 = vadd.xlane.f32.xlu0 %v1414
      %v1416 = vpop.xlane.xlu0 %1415
      %v1417 = vrcp.pop %v1416
      %v1418 = vmul.f32 %v1413, %v1417
      %1419 = vrot.lane.b32.xlu0 %v1109, 40
      %v1420 = vpop.permute.xlu0 %1419
      %v1423 = vsel %vm1114, %v1418, 0
      %1425 = vmatpush.msra.mxu0 0.0
      %1426 = vmatpush.msra.mxu0 0.0
      %1427 = vmatpush.msra.mxu0 0.0
      %1428 = vmatpush.msra.mxu0 0.0
      %1429 = vmatpush.msra.mxu0 0.0
      %1430 = vmatpush.msra.mxu0 0.0
      %1431 = vmatpush.msra.mxu0 0.0
      %1432 = vmatpush.msra.mxu0 0.0
      %1433 = vmatpush.msra.mxu0 0.0
      %1434 = vmatpush.msra.mxu0 0.0
      %1435 = vmatpush.msra.mxu0 0.0
      %1436 = vmatpush.msra.mxu0 0.0
      %1437 = vmatpush.msra.mxu0 0.0
      %1438 = vmatpush.msra.mxu0 0.0
      %1439 = vmatpush.msra.mxu0 0.0
      %1440 = vmatpush.msra.mxu0 %v1420
      %1441 = vmatmul.f32.gmra.mxu0 %v1423
      %v1442 = vpop.f32.mrf.mxu0
      %v1443 = vadd.f32 0.0, %v1442
      %1444 = vdwg.mxu0
      %v1446 = vsel %vm1114, %v1443, 0
      %1448 = vmatpush.msra.mxu0 0.0
      %1449 = vmatpush.msra.mxu0 0.0
      %1450 = vmatpush.msra.mxu0 0.0
      %1451 = vmatpush.msra.mxu0 0.0
      %1452 = vmatpush.msra.mxu0 0.0
      %1453 = vmatpush.msra.mxu0 0.0
      %1454 = vmatpush.msra.mxu0 0.0
      %1455 = vmatpush.msra.mxu0 0.0
      %1456 = vmatpush.msra.mxu0 0.0
      %1457 = vmatpush.msra.mxu0 0.0
      %1458 = vmatpush.msra.mxu0 0.0
      %1459 = vmatpush.msra.mxu0 0.0
      %1460 = vmatpush.msra.mxu0 0.0
      %1461 = vmatpush.msra.mxu0 0.0
      %1462 = vmatpush.msra.mxu0 0.0
      %1463 = vmatpush.msra.mxu0 %v1084
      %1464 = vmatmul.f32.gmra.mxu0 %v1446
      %v1465 = vpop.f32.mrf.mxu0
      %v1466 = vadd.f32 0.0, %v1465
      %1467 = vdwg.mxu0
      %v1468 = vadd.f32 %v1378, %v1466
      %v1469 = vperm.slane %v1075, 0
      %v1470 = vadd.f32 %v1468, %v1469
      %v1471 = vadd.f32 %v1074, %v1470
      %v1472 = vsel %vm1049, %v1471, 0.0
      %1473 = vadd.xlane.f32.xlu0 %v1472
      %v1474 = vpop.xlane.xlu0 %1473
      %v1475 = vrcp.pop 32.0
      %v1476 = vmul.f32 32.0, %v1475
      %v1477 = vsub.f32 1.0, %v1476
      %v1478 = vmul.f32 %v1475, %v1477
      %v1479 = vadd.f32 %v1475, %v1478
      %vm1480 = vweird.f32 %v1475
      %v1481 = vsel %vm1480, %v1475, %v1479
      %v1482 = vmul.f32 %v1474, %v1481
      %v1483 = vsub.f32 %v1471, %v1482
      %v1484 = vmul.f32 %v1483, %v1483
      %v1485 = vsel %vm1049, %v1484, 0.0
      %1486 = vadd.xlane.f32.xlu0 %v1485
      %v1487 = vpop.xlane.xlu0 %1486
      %v1488 = vmul.f32 %v1487, %v1481
      %v1489 = vadd.f32 %v1488, 1e-05
      %v1490 = vrsqrt.pop %v1489
      %v1491 = vmul.f32 %v1490, %v1489
      %v1492 = vmul.f32 %v1491, %v1490
      %v1493 = vmul.f32 0.5, %v1492
      %v1494 = vsub.f32 1.5, %v1493
      %v1495 = vmul.f32 %v1490, %v1494
      %vm1496 = vweird.f32 %v1489
      %vm1497 = vweird.f32 %v1490
      %vm1498 = vmor %vm1496, %vm1497
      %v1499 = vsel %vm1498, %v1490, %v1495
      %v1500 = vmul.f32 %v1483, %v1499
      %v1501 = vperm.slane %v1075, 1
      %v1502 = vmul.f32 %v1500, %v1501
      %v1503 = vperm.slane %v1075, 2
      %v1504 = vadd.f32 %v1502, %v1503
      %v1505 = vld [vmem:[%s21] sm:$0xff]
      %v1506 = vld [vmem:[%s21 + $0x8] sm:$0xff]
      %v1507 = vld [vmem:[%s21 + $0x10] sm:$0xff]
      %v1508 = vld [vmem:[%s21 + $0x18] sm:$0xff]
      %v1509 = vld [vmem:[%s23] sm:$0x1]
      %v1511 = vperm.slane %v1509, 0
      %v1514 = vsel %vm1049, %v1504, 0
      %1516 = vmatpush.msra.mxu0 0.0
      %1517 = vmatpush.msra.mxu0 0.0
      %1518 = vmatpush.msra.mxu0 0.0
      %1519 = vmatpush.msra.mxu0 0.0
      %1520 = vmatpush.msra.mxu0 0.0
      %1521 = vmatpush.msra.mxu0 0.0
      %1522 = vmatpush.msra.mxu0 0.0
      %1523 = vmatpush.msra.mxu0 0.0
      %1524 = vmatpush.msra.mxu0 0.0
      %1525 = vmatpush.msra.mxu0 0.0
      %1526 = vmatpush.msra.mxu0 0.0
      %1527 = vmatpush.msra.mxu0 0.0
      %1528 = vmatpush.msra.mxu0 %v1508
      %1529 = vmatpush.msra.mxu0 %v1507
      %1530 = vmatpush.msra.mxu0 %v1506
      %1531 = vmatpush.msra.mxu0 %v1505
      %1532 = vmatmul.f32.gmra.mxu0 %v1514
      %v1533 = vpop.f32.mrf.mxu0
      %v1534 = vadd.f32 %v1511, %v1533
      %1535 = vdwg.mxu0
      %v1536 = vmax.f32 %v1534, 0.0
      %v1537 = vld [vmem:[%s25] sm:$0xff]
      %v1538 = vld [vmem:[%s25 + $0x8] sm:$0xff]
      %v1539 = vld [vmem:[%s25 + $0x10] sm:$0xff]
      %v1540 = vld [vmem:[%s25 + $0x18] sm:$0xff]
      %v1541 = vld [vmem:[%s25 + $0x20] sm:$0xff]
      %v1542 = vld [vmem:[%s25 + $0x28] sm:$0xff]
      %v1543 = vld [vmem:[%s25 + $0x30] sm:$0xff]
      %v1544 = vld [vmem:[%s25 + $0x38] sm:$0xff]
      %v1545 = vperm.slane %v1075, 3
      %vm1546 = vcmask 523264
      %v1548 = vsel %vm1546, %v1536, 0
      %1550 = vmatpush.msra.mxu0 0.0
      %1551 = vmatpush.msra.mxu0 0.0
      %1552 = vmatpush.msra.mxu0 0.0
      %1553 = vmatpush.msra.mxu0 0.0
      %1554 = vmatpush.msra.mxu0 0.0
      %1555 = vmatpush.msra.mxu0 0.0
      %1556 = vmatpush.msra.mxu0 0.0
      %1557 = vmatpush.msra.mxu0 0.0
      %1558 = vmatpush.msra.mxu0 %v1544
      %1559 = vmatpush.msra.mxu0 %v1543
      %1560 = vmatpush.msra.mxu0 %v1542
      %1561 = vmatpush.msra.mxu0 %v1541
      %1562 = vmatpush.msra.mxu0 %v1540
      %1563 = vmatpush.msra.mxu0 %v1539
      %1564 = vmatpush.msra.mxu0 %v1538
      %1565 = vmatpush.msra.mxu0 %v1537
      %1566 = vmatmul.f32.gmra.mxu0 %v1548
      %v1567 = vpop.f32.mrf.mxu0
      %v1568 = vadd.f32 %v1545, %v1567
      %1569 = vdwg.mxu0
      %v1570 = vadd.f32 %v1504, %v1568
      %v1571 = vsel %vm1049, %v1570, 0.0
      %1572 = vadd.xlane.f32.xlu0 %v1571
      %v1573 = vpop.xlane.xlu0 %1572
      %v1574 = vmul.f32 %v1573, %v1481
      %v1575 = vsub.f32 %v1570, %v1574
      %v1576 = vmul.f32 %v1575, %v1575
      %v1577 = vsel %vm1049, %v1576, 0.0
      %1578 = vadd.xlane.f32.xlu0 %v1577
      %v1579 = vpop.xlane.xlu0 %1578
      %v1580 = vmul.f32 %v1579, %v1481
      %v1581 = vadd.f32 %v1580, 1e-05
      %v1582 = vrsqrt.pop %v1581
      %v1583 = vmul.f32 %v1582, %v1581
      %v1584 = vmul.f32 %v1583, %v1582
      %v1585 = vmul.f32 0.5, %v1584
      %v1586 = vsub.f32 1.5, %v1585
      %v1587 = vmul.f32 %v1582, %v1586
      %vm1588 = vweird.f32 %v1581
      %vm1589 = vweird.f32 %v1582
      %vm1590 = vmor %vm1588, %vm1589
      %v1591 = vsel %vm1590, %v1582, %v1587
      %v1592 = vmul.f32 %v1575, %v1591
      %v1593 = vperm.slane %v1075, 4
      %v1594 = vmul.f32 %v1592, %v1593
      %v1595 = vperm.slane %v1075, 5
      %v1596 = vadd.f32 %v1594, %v1595
      %s1597 = scalar_lea.vmem %s27, 8
      %v1598 = vld [vmem:[%s1597] sm:$0x3f]
      %s1599 = scalar_lea.vmem %s15, 32
      %v1600 = vld [vmem:[%s1599] sm:$0xff]
      %v1601 = vld [vmem:[%s1599 + $0x8] sm:$0xff]
      %v1602 = vld [vmem:[%s1599 + $0x10] sm:$0xff]
      %v1603 = vld [vmem:[%s1599 + $0x18] sm:$0xff]
      %s1604 = scalar_lea.vmem %s17, 1
      %v1605 = vld [vmem:[%s1604] sm:$0x1]
      %s1606 = scalar_lea.vmem %s19, 32
      %v1607 = vld [vmem:[%s1606] sm:$0xff]
      %v1608 = vld [vmem:[%s1606 + $0x8] sm:$0xff]
      %v1609 = vld [vmem:[%s1606 + $0x10] sm:$0xff]
      %v1610 = vld [vmem:[%s1606 + $0x18] sm:$0xff]
      %v1612 = vperm.slane %v1605, 0
      %v1615 = vsel %vm1049, %v1596, 0
      %1617 = vmatpush.msra.mxu0 0.0
      %1618 = vmatpush.msra.mxu0 0.0
      %1619 = vmatpush.msra.mxu0 0.0
      %1620 = vmatpush.msra.mxu0 0.0
      %1621 = vmatpush.msra.mxu0 0.0
      %1622 = vmatpush.msra.mxu0 0.0
      %1623 = vmatpush.msra.mxu0 0.0
      %1624 = vmatpush.msra.mxu0 0.0
      %1625 = vmatpush.msra.mxu0 0.0
      %1626 = vmatpush.msra.mxu0 0.0
      %1627 = vmatpush.msra.mxu0 0.0
      %1628 = vmatpush.msra.mxu0 0.0
      %1629 = vmatpush.msra.mxu0 %v1603
      %1630 = vmatpush.msra.mxu0 %v1602
      %1631 = vmatpush.msra.mxu0 %v1601
      %1632 = vmatpush.msra.mxu0 %v1600
      %1633 = vmatmul.f32.gmra.mxu0 %v1615
      %v1634 = vpop.f32.mrf.mxu0
      %v1635 = vadd.f32 %v1612, %v1634
      %1636 = vdwg.mxu0
      %1638 = vrot.lane.b32.xlu0 %v1635, 96
      %v1639 = vpop.permute.xlu0 %1638
      %v1640 = vsel %vm1114, %v1635, 0
      %v1642 = vsel %vm1114, %v1639, 0
      %1644 = vmatpush.xpose.msra.mxu0 0.0
      %1645 = vmatpush.xpose.msra.mxu0 0.0
      %1646 = vmatpush.xpose.msra.mxu0 0.0
      %1647 = vmatpush.xpose.msra.mxu0 0.0
      %1648 = vmatpush.xpose.msra.mxu0 0.0
      %1649 = vmatpush.xpose.msra.mxu0 0.0
      %1650 = vmatpush.xpose.msra.mxu0 0.0
      %1651 = vmatpush.xpose.msra.mxu0 0.0
      %1652 = vmatpush.xpose.msra.mxu0 0.0
      %1653 = vmatpush.xpose.msra.mxu0 0.0
      %1654 = vmatpush.xpose.msra.mxu0 0.0
      %1655 = vmatpush.xpose.msra.mxu0 0.0
      %1656 = vmatpush.xpose.msra.mxu0 0.0
      %1657 = vmatpush.xpose.msra.mxu0 0.0
      %1658 = vmatpush.xpose.msra.mxu0 0.0
      %1659 = vmatpush.xpose.msra.mxu0 %v1642
      %1660 = vmatmul.f32.gmra.mxu0 %v1640
      %v1661 = vpop.f32.mrf.mxu0
      %v1662 = vadd.f32 0.0, %v1661
      %1663 = vdwg.mxu0
      %v1664 = vmul.f32 %v1662, 0.35355338
      %v1665 = vsel %vm1114, %v1664, -inf
      %1666 = vmax.xlane.f32.xlu0 %v1665
      %v1667 = vpop.xlane.xlu0 %1666
      %v1668 = vsub.f32 %v1664, %v1667
      %v1669 = vmul.f32 %v1668, 1.442695
      %v1670 = vpow.pop %v1669
      %v1671 = vsel %vm1114, %v1670, 0.0
      %1672 = vadd.xlane.f32.xlu0 %v1671
      %v1673 = vpop.xlane.xlu0 %1672
      %v1674 = vrcp.pop %v1673
      %v1675 = vmul.f32 %v1670, %v1674
      %1676 = vrot.lane.b32.xlu0 %v1635, 64
      %v1677 = vpop.permute.xlu0 %1676
      %v1680 = vsel %vm1114, %v1675, 0
      %1682 = vmatpush.msra.mxu0 0.0
      %1683 = vmatpush.msra.mxu0 0.0
      %1684 = vmatpush.msra.mxu0 0.0
      %1685 = vmatpush.msra.mxu0 0.0
      %1686 = vmatpush.msra.mxu0 0.0
      %1687 = vmatpush.msra.mxu0 0.0
      %1688 = vmatpush.msra.mxu0 0.0
      %1689 = vmatpush.msra.mxu0 0.0
      %1690 = vmatpush.msra.mxu0 0.0
      %1691 = vmatpush.msra.mxu0 0.0
      %1692 = vmatpush.msra.mxu0 0.0
      %1693 = vmatpush.msra.mxu0 0.0
      %1694 = vmatpush.msra.mxu0 0.0
      %1695 = vmatpush.msra.mxu0 0.0
      %1696 = vmatpush.msra.mxu0 0.0
      %1697 = vmatpush.msra.mxu0 %v1677
      %1698 = vmatmul.f32.gmra.mxu0 %v1680
      %v1699 = vpop.f32.mrf.mxu0
      %v1700 = vadd.f32 0.0, %v1699
      %1701 = vdwg.mxu0
      %1702 = vrot.lane.b32.xlu0 %v1635, 120
      %v1703 = vpop.permute.xlu0 %1702
      %1704 = vrot.lane.b32.xlu0 %v1635, 88
      %v1705 = vpop.permute.xlu0 %1704
      %v1706 = vsel %vm1114, %v1703, 0
      %v1708 = vsel %vm1114, %v1705, 0
      %1710 = vmatpush.xpose.msra.mxu0 0.0
      %1711 = vmatpush.xpose.msra.mxu0 0.0
      %1712 = vmatpush.xpose.msra.mxu0 0.0
      %1713 = vmatpush.xpose.msra.mxu0 0.0
      %1714 = vmatpush.xpose.msra.mxu0 0.0
      %1715 = vmatpush.xpose.msra.mxu0 0.0
      %1716 = vmatpush.xpose.msra.mxu0 0.0
      %1717 = vmatpush.xpose.msra.mxu0 0.0
      %1718 = vmatpush.xpose.msra.mxu0 0.0
      %1719 = vmatpush.xpose.msra.mxu0 0.0
      %1720 = vmatpush.xpose.msra.mxu0 0.0
      %1721 = vmatpush.xpose.msra.mxu0 0.0
      %1722 = vmatpush.xpose.msra.mxu0 0.0
      %1723 = vmatpush.xpose.msra.mxu0 0.0
      %1724 = vmatpush.xpose.msra.mxu0 0.0
      %1725 = vmatpush.xpose.msra.mxu0 %v1708
      %1726 = vmatmul.f32.gmra.mxu0 %v1706
      %v1727 = vpop.f32.mrf.mxu0
      %v1728 = vadd.f32 0.0, %v1727
      %1729 = vdwg.mxu0
      %v1730 = vmul.f32 %v1728, 0.35355338
      %v1731 = vsel %vm1114, %v1730, -inf
      %1732 = vmax.xlane.f32.xlu0 %v1731
      %v1733 = vpop.xlane.xlu0 %1732
      %v1734 = vsub.f32 %v1730, %v1733
      %v1735 = vmul.f32 %v1734, 1.442695
      %v1736 = vpow.pop %v1735
      %v1737 = vsel %vm1114, %v1736, 0.0
      %1738 = vadd.xlane.f32.xlu0 %v1737
      %v1739 = vpop.xlane.xlu0 %1738
      %v1740 = vrcp.pop %v1739
      %v1741 = vmul.f32 %v1736, %v1740
      %1742 = vrot.lane.b32.xlu0 %v1635, 56
      %v1743 = vpop.permute.xlu0 %1742
      %v1746 = vsel %vm1114, %v1741, 0
      %1748 = vmatpush.msra.mxu0 0.0
      %1749 = vmatpush.msra.mxu0 0.0
      %1750 = vmatpush.msra.mxu0 0.0
      %1751 = vmatpush.msra.mxu0 0.0
      %1752 = vmatpush.msra.mxu0 0.0
      %1753 = vmatpush.msra.mxu0 0.0
      %1754 = vmatpush.msra.mxu0 0.0
      %1755 = vmatpush.msra.mxu0 0.0
      %1756 = vmatpush.msra.mxu0 0.0
      %1757 = vmatpush.msra.mxu0 0.0
      %1758 = vmatpush.msra.mxu0 0.0
      %1759 = vmatpush.msra.mxu0 0.0
      %1760 = vmatpush.msra.mxu0 0.0
      %1761 = vmatpush.msra.mxu0 0.0
      %1762 = vmatpush.msra.mxu0 0.0
      %1763 = vmatpush.msra.mxu0 %v1743
      %1764 = vmatmul.f32.gmra.mxu0 %v1746
      %v1765 = vpop.f32.mrf.mxu0
      %v1766 = vadd.f32 0.0, %v1765
      %1767 = vdwg.mxu0
      %v1769 = vsel %vm1114, %v1766, 0
      %1771 = vmatpush.msra.mxu0 0.0
      %1772 = vmatpush.msra.mxu0 0.0
      %1773 = vmatpush.msra.mxu0 0.0
      %1774 = vmatpush.msra.mxu0 0.0
      %1775 = vmatpush.msra.mxu0 0.0
      %1776 = vmatpush.msra.mxu0 0.0
      %1777 = vmatpush.msra.mxu0 0.0
      %1778 = vmatpush.msra.mxu0 0.0
      %1779 = vmatpush.msra.mxu0 0.0
      %1780 = vmatpush.msra.mxu0 0.0
      %1781 = vmatpush.msra.mxu0 0.0
      %1782 = vmatpush.msra.mxu0 0.0
      %1783 = vmatpush.msra.mxu0 0.0
      %1784 = vmatpush.msra.mxu0 0.0
      %1785 = vmatpush.msra.mxu0 0.0
      %1786 = vmatpush.msra.mxu0 %v1608
      %1787 = vmatmul.f32.gmra.mxu0 %v1769
      %v1788 = vpop.f32.mrf.mxu0
      %v1789 = vadd.f32 0.0, %v1788
      %1790 = vdwg.mxu0
      %v1792 = vsel %vm1114, %v1700, 0
      %1794 = vmatpush.msra.mxu0 0.0
      %1795 = vmatpush.msra.mxu0 0.0
      %1796 = vmatpush.msra.mxu0 0.0
      %1797 = vmatpush.msra.mxu0 0.0
      %1798 = vmatpush.msra.mxu0 0.0
      %1799 = vmatpush.msra.mxu0 0.0
      %1800 = vmatpush.msra.mxu0 0.0
      %1801 = vmatpush.msra.mxu0 0.0
      %1802 = vmatpush.msra.mxu0 0.0
      %1803 = vmatpush.msra.mxu0 0.0
      %1804 = vmatpush.msra.mxu0 0.0
      %1805 = vmatpush.msra.mxu0 0.0
      %1806 = vmatpush.msra.mxu0 0.0
      %1807 = vmatpush.msra.mxu0 0.0
      %1808 = vmatpush.msra.mxu0 0.0
      %1809 = vmatpush.msra.mxu0 %v1607
      %1810 = vmatmul.f32.gmra.mxu0 %v1792
      %v1811 = vpop.f32.mrf.mxu0
      %v1812 = vadd.f32 %v1789, %v1811
      %1813 = vdwg.mxu0
      %1814 = vrot.lane.b32.xlu0 %v1635, 112
      %v1815 = vpop.permute.xlu0 %1814
      %1816 = vrot.lane.b32.xlu0 %v1635, 80
      %v1817 = vpop.permute.xlu0 %1816
      %v1818 = vsel %vm1114, %v1815, 0
      %v1820 = vsel %vm1114, %v1817, 0
      %1822 = vmatpush.xpose.msra.mxu0 0.0
      %1823 = vmatpush.xpose.msra.mxu0 0.0
      %1824 = vmatpush.xpose.msra.mxu0 0.0
      %1825 = vmatpush.xpose.msra.mxu0 0.0
      %1826 = vmatpush.xpose.msra.mxu0 0.0
      %1827 = vmatpush.xpose.msra.mxu0 0.0
      %1828 = vmatpush.xpose.msra.mxu0 0.0
      %1829 = vmatpush.xpose.msra.mxu0 0.0
      %1830 = vmatpush.xpose.msra.mxu0 0.0
      %1831 = vmatpush.xpose.msra.mxu0 0.0
      %1832 = vmatpush.xpose.msra.mxu0 0.0
      %1833 = vmatpush.xpose.msra.mxu0 0.0
      %1834 = vmatpush.xpose.msra.mxu0 0.0
      %1835 = vmatpush.xpose.msra.mxu0 0.0
      %1836 = vmatpush.xpose.msra.mxu0 0.0
      %1837 = vmatpush.xpose.msra.mxu0 %v1820
      %1838 = vmatmul.f32.gmra.mxu0 %v1818
      %v1839 = vpop.f32.mrf.mxu0
      %v1840 = vadd.f32 0.0, %v1839
      %1841 = vdwg.mxu0
      %v1842 = vmul.f32 %v1840, 0.35355338
      %v1843 = vsel %vm1114, %v1842, -inf
      %1844 = vmax.xlane.f32.xlu0 %v1843
      %v1845 = vpop.xlane.xlu0 %1844
      %v1846 = vsub.f32 %v1842, %v1845
      %v1847 = vmul.f32 %v1846, 1.442695
      %v1848 = vpow.pop %v1847
      %v1849 = vsel %vm1114, %v1848, 0.0
      %1850 = vadd.xlane.f32.xlu0 %v1849
      %v1851 = vpop.xlane.xlu0 %1850
      %v1852 = vrcp.pop %v1851
      %v1853 = vmul.f32 %v1848, %v1852
      %1854 = vrot.lane.b32.xlu0 %v1635, 48
      %v1855 = vpop.permute.xlu0 %1854
      %v1858 = vsel %vm1114, %v1853, 0
      %1860 = vmatpush.msra.mxu0 0.0
      %1861 = vmatpush.msra.mxu0 0.0
      %1862 = vmatpush.msra.mxu0 0.0
      %1863 = vmatpush.msra.mxu0 0.0
      %1864 = vmatpush.msra.mxu0 0.0
      %1865 = vmatpush.msra.mxu0 0.0
      %1866 = vmatpush.msra.mxu0 0.0
      %1867 = vmatpush.msra.mxu0 0.0
      %1868 = vmatpush.msra.mxu0 0.0
      %1869 = vmatpush.msra.mxu0 0.0
      %1870 = vmatpush.msra.mxu0 0.0
      %1871 = vmatpush.msra.mxu0 0.0
      %1872 = vmatpush.msra.mxu0 0.0
      %1873 = vmatpush.msra.mxu0 0.0
      %1874 = vmatpush.msra.mxu0 0.0
      %1875 = vmatpush.msra.mxu0 %v1855
      %1876 = vmatmul.f32.gmra.mxu0 %v1858
      %v1877 = vpop.f32.mrf.mxu0
      %v1878 = vadd.f32 0.0, %v1877
      %1879 = vdwg.mxu0
      %v1881 = vsel %vm1114, %v1878, 0
      %1883 = vmatpush.msra.mxu0 0.0
      %1884 = vmatpush.msra.mxu0 0.0
      %1885 = vmatpush.msra.mxu0 0.0
      %1886 = vmatpush.msra.mxu0 0.0
      %1887 = vmatpush.msra.mxu0 0.0
      %1888 = vmatpush.msra.mxu0 0.0
      %1889 = vmatpush.msra.mxu0 0.0
      %1890 = vmatpush.msra.mxu0 0.0
      %1891 = vmatpush.msra.mxu0 0.0
      %1892 = vmatpush.msra.mxu0 0.0
      %1893 = vmatpush.msra.mxu0 0.0
      %1894 = vmatpush.msra.mxu0 0.0
      %1895 = vmatpush.msra.mxu0 0.0
      %1896 = vmatpush.msra.mxu0 0.0
      %1897 = vmatpush.msra.mxu0 0.0
      %1898 = vmatpush.msra.mxu0 %v1609
      %1899 = vmatmul.f32.gmra.mxu0 %v1881
      %v1900 = vpop.f32.mrf.mxu0
      %v1901 = vadd.f32 0.0, %v1900
      %1902 = vdwg.mxu0
      %v1903 = vadd.f32 %v1812, %v1901
      %1904 = vrot.lane.b32.xlu0 %v1635, 104
      %v1905 = vpop.permute.xlu0 %1904
      %1906 = vrot.lane.b32.xlu0 %v1635, 72
      %v1907 = vpop.permute.xlu0 %1906
      %v1908 = vsel %vm1114, %v1905, 0
      %v1910 = vsel %vm1114, %v1907, 0
      %1912 = vmatpush.xpose.msra.mxu0 0.0
      %1913 = vmatpush.xpose.msra.mxu0 0.0
      %1914 = vmatpush.xpose.msra.mxu0 0.0
      %1915 = vmatpush.xpose.msra.mxu0 0.0
      %1916 = vmatpush.xpose.msra.mxu0 0.0
      %1917 = vmatpush.xpose.msra.mxu0 0.0
      %1918 = vmatpush.xpose.msra.mxu0 0.0
      %1919 = vmatpush.xpose.msra.mxu0 0.0
      %1920 = vmatpush.xpose.msra.mxu0 0.0
      %1921 = vmatpush.xpose.msra.mxu0 0.0
      %1922 = vmatpush.xpose.msra.mxu0 0.0
      %1923 = vmatpush.xpose.msra.mxu0 0.0
      %1924 = vmatpush.xpose.msra.mxu0 0.0
      %1925 = vmatpush.xpose.msra.mxu0 0.0
      %1926 = vmatpush.xpose.msra.mxu0 0.0
      %1927 = vmatpush.xpose.msra.mxu0 %v1910
      %1928 = vmatmul.f32.gmra.mxu0 %v1908
      %v1929 = vpop.f32.mrf.mxu0
      %v1930 = vadd.f32 0.0, %v1929
      %1931 = vdwg.mxu0
      %v1932 = vmul.f32 %v1930, 0.35355338
      %v1933 = vsel %vm1114, %v1932, -inf
      %1934 = vmax.xlane.f32.xlu0 %v1933
      %v1935 = vpop.xlane.xlu0 %1934
      %v1936 = vsub.f32 %v1932, %v1935
      %v1937 = vmul.f32 %v1936, 1.442695
      %v1938 = vpow.pop %v1937
      %v1939 = vsel %vm1114, %v1938, 0.0
      %1940 = vadd.xlane.f32.xlu0 %v1939
      %v1941 = vpop.xlane.xlu0 %1940
      %v1942 = vrcp.pop %v1941
      %v1943 = vmul.f32 %v1938, %v1942
      %1944 = vrot.lane.b32.xlu0 %v1635, 40
      %v1945 = vpop.permute.xlu0 %1944
      %v1948 = vsel %vm1114, %v1943, 0
      %1950 = vmatpush.msra.mxu0 0.0
      %1951 = vmatpush.msra.mxu0 0.0
      %1952 = vmatpush.msra.mxu0 0.0
      %1953 = vmatpush.msra.mxu0 0.0
      %1954 = vmatpush.msra.mxu0 0.0
      %1955 = vmatpush.msra.mxu0 0.0
      %1956 = vmatpush.msra.mxu0 0.0
      %1957 = vmatpush.msra.mxu0 0.0
      %1958 = vmatpush.msra.mxu0 0.0
      %1959 = vmatpush.msra.mxu0 0.0
      %1960 = vmatpush.msra.mxu0 0.0
      %1961 = vmatpush.msra.mxu0 0.0
      %1962 = vmatpush.msra.mxu0 0.0
      %1963 = vmatpush.msra.mxu0 0.0
      %1964 = vmatpush.msra.mxu0 0.0
      %1965 = vmatpush.msra.mxu0 %v1945
      %1966 = vmatmul.f32.gmra.mxu0 %v1948
      %v1967 = vpop.f32.mrf.mxu0
      %v1968 = vadd.f32 0.0, %v1967
      %1969 = vdwg.mxu0
      %v1971 = vsel %vm1114, %v1968, 0
      %1973 = vmatpush.msra.mxu0 0.0
      %1974 = vmatpush.msra.mxu0 0.0
      %1975 = vmatpush.msra.mxu0 0.0
      %1976 = vmatpush.msra.mxu0 0.0
      %1977 = vmatpush.msra.mxu0 0.0
      %1978 = vmatpush.msra.mxu0 0.0
      %1979 = vmatpush.msra.mxu0 0.0
      %1980 = vmatpush.msra.mxu0 0.0
      %1981 = vmatpush.msra.mxu0 0.0
      %1982 = vmatpush.msra.mxu0 0.0
      %1983 = vmatpush.msra.mxu0 0.0
      %1984 = vmatpush.msra.mxu0 0.0
      %1985 = vmatpush.msra.mxu0 0.0
      %1986 = vmatpush.msra.mxu0 0.0
      %1987 = vmatpush.msra.mxu0 0.0
      %1988 = vmatpush.msra.mxu0 %v1610
      %1989 = vmatmul.f32.gmra.mxu0 %v1971
      %v1990 = vpop.f32.mrf.mxu0
      %v1991 = vadd.f32 0.0, %v1990
      %1992 = vdwg.mxu0
      %v1993 = vadd.f32 %v1903, %v1991
      %v1994 = vperm.slane %v1598, 0
      %v1995 = vadd.f32 %v1993, %v1994
      %v1996 = vadd.f32 %v1596, %v1995
      %v1997 = vsel %vm1049, %v1996, 0.0
      %1998 = vadd.xlane.f32.xlu0 %v1997
      %v1999 = vpop.xlane.xlu0 %1998
      %v2000 = vmul.f32 %v1999, %v1481
      %v2001 = vsub.f32 %v1996, %v2000
      %v2002 = vmul.f32 %v2001, %v2001
      %v2003 = vsel %vm1049, %v2002, 0.0
      %2004 = vadd.xlane.f32.xlu0 %v2003
      %v2005 = vpop.xlane.xlu0 %2004
      %v2006 = vmul.f32 %v2005, %v1481
      %v2007 = vadd.f32 %v2006, 1e-05
      %v2008 = vrsqrt.pop %v2007
      %v2009 = vmul.f32 %v2008, %v2007
      %v2010 = vmul.f32 %v2009, %v2008
      %v2011 = vmul.f32 0.5, %v2010
      %v2012 = vsub.f32 1.5, %v2011
      %v2013 = vmul.f32 %v2008, %v2012
      %vm2014 = vweird.f32 %v2007
      %vm2015 = vweird.f32 %v2008
      %vm2016 = vmor %vm2014, %vm2015
      %v2017 = vsel %vm2016, %v2008, %v2013
      %v2018 = vmul.f32 %v2001, %v2017
      %v2019 = vperm.slane %v1598, 1
      %v2020 = vmul.f32 %v2018, %v2019
      %v2021 = vperm.slane %v1598, 2
      %v2022 = vadd.f32 %v2020, %v2021
      %s2023 = scalar_lea.vmem %s21, 32
      %v2024 = vld [vmem:[%s2023] sm:$0xff]
      %v2025 = vld [vmem:[%s2023 + $0x8] sm:$0xff]
      %v2026 = vld [vmem:[%s2023 + $0x10] sm:$0xff]
      %v2027 = vld [vmem:[%s2023 + $0x18] sm:$0xff]
      %s2028 = scalar_lea.vmem %s23, 1
      %v2029 = vld [vmem:[%s2028] sm:$0x1]
      %v2031 = vperm.slane %v2029, 0
      %v2034 = vsel %vm1049, %v2022, 0
      %2036 = vmatpush.msra.mxu0 0.0
      %2037 = vmatpush.msra.mxu0 0.0
      %2038 = vmatpush.msra.mxu0 0.0
      %2039 = vmatpush.msra.mxu0 0.0
      %2040 = vmatpush.msra.mxu0 0.0
      %2041 = vmatpush.msra.mxu0 0.0
      %2042 = vmatpush.msra.mxu0 0.0
      %2043 = vmatpush.msra.mxu0 0.0
      %2044 = vmatpush.msra.mxu0 0.0
      %2045 = vmatpush.msra.mxu0 0.0
      %2046 = vmatpush.msra.mxu0 0.0
      %2047 = vmatpush.msra.mxu0 0.0
      %2048 = vmatpush.msra.mxu0 %v2027
      %2049 = vmatpush.msra.mxu0 %v2026
      %2050 = vmatpush.msra.mxu0 %v2025
      %2051 = vmatpush.msra.mxu0 %v2024
      %2052 = vmatmul.f32.gmra.mxu0 %v2034
      %v2053 = vpop.f32.mrf.mxu0
      %v2054 = vadd.f32 %v2031, %v2053
      %2055 = vdwg.mxu0
      %v2056 = vmax.f32 %v2054, 0.0
      %s2057 = scalar_lea.vmem %s25, 64
      %v2058 = vld [vmem:[%s2057] sm:$0xff]
      %v2059 = vld [vmem:[%s2057 + $0x8] sm:$0xff]
      %v2060 = vld [vmem:[%s2057 + $0x10] sm:$0xff]
      %v2061 = vld [vmem:[%s2057 + $0x18] sm:$0xff]
      %v2062 = vld [vmem:[%s2057 + $0x20] sm:$0xff]
      %v2063 = vld [vmem:[%s2057 + $0x28] sm:$0xff]
      %v2064 = vld [vmem:[%s2057 + $0x30] sm:$0xff]
      %v2065 = vld [vmem:[%s2057 + $0x38] sm:$0xff]
      %v2066 = vperm.slane %v1598, 3
      %v2068 = vsel %vm1546, %v2056, 0
      %2070 = vmatpush.msra.mxu0 0.0
      %2071 = vmatpush.msra.mxu0 0.0
      %2072 = vmatpush.msra.mxu0 0.0
      %2073 = vmatpush.msra.mxu0 0.0
      %2074 = vmatpush.msra.mxu0 0.0
      %2075 = vmatpush.msra.mxu0 0.0
      %2076 = vmatpush.msra.mxu0 0.0
      %2077 = vmatpush.msra.mxu0 0.0
      %2078 = vmatpush.msra.mxu0 %v2065
      %2079 = vmatpush.msra.mxu0 %v2064
      %2080 = vmatpush.msra.mxu0 %v2063
      %2081 = vmatpush.msra.mxu0 %v2062
      %2082 = vmatpush.msra.mxu0 %v2061
      %2083 = vmatpush.msra.mxu0 %v2060
      %2084 = vmatpush.msra.mxu0 %v2059
      %2085 = vmatpush.msra.mxu0 %v2058
      %2086 = vmatmul.f32.gmra.mxu0 %v2068
      %v2087 = vpop.f32.mrf.mxu0
      %v2088 = vadd.f32 %v2066, %v2087
      %2089 = vdwg.mxu0
      %v2090 = vadd.f32 %v2022, %v2088
      %v2091 = vsel %vm1049, %v2090, 0.0
      %2092 = vadd.xlane.f32.xlu0 %v2091
      %v2093 = vpop.xlane.xlu0 %2092
      %v2094 = vmul.f32 %v2093, %v1481
      %v2095 = vsub.f32 %v2090, %v2094
      %v2096 = vmul.f32 %v2095, %v2095
      %v2097 = vsel %vm1049, %v2096, 0.0
      %2098 = vadd.xlane.f32.xlu0 %v2097
      %v2099 = vpop.xlane.xlu0 %2098
      %v2100 = vmul.f32 %v2099, %v1481
      %v2101 = vadd.f32 %v2100, 1e-05
      %v2102 = vrsqrt.pop %v2101
      %v2103 = vmul.f32 %v2102, %v2101
      %v2104 = vmul.f32 %v2103, %v2102
      %v2105 = vmul.f32 0.5, %v2104
      %v2106 = vsub.f32 1.5, %v2105
      %v2107 = vmul.f32 %v2102, %v2106
      %vm2108 = vweird.f32 %v2101
      %vm2109 = vweird.f32 %v2102
      %vm2110 = vmor %vm2108, %vm2109
      %v2111 = vsel %vm2110, %v2102, %v2107
      %v2112 = vmul.f32 %v2095, %v2111
      %v2113 = vperm.slane %v1598, 4
      %v2114 = vmul.f32 %v2112, %v2113
      %v2115 = vperm.slane %v1598, 5
      %v2116 = vadd.f32 %v2114, %v2115
      %v2117 = vld [vmem:[%s947] sm:$0xff]
      %v2119 = vsel %vm977, %v2117, 0
      %2121 = vmatpush.msra.mxu0 0.0
      %2122 = vmatpush.msra.mxu0 0.0
      %2123 = vmatpush.msra.mxu0 0.0
      %2124 = vmatpush.msra.mxu0 0.0
      %2125 = vmatpush.msra.mxu0 0.0
      %2126 = vmatpush.msra.mxu0 0.0
      %2127 = vmatpush.msra.mxu0 0.0
      %2128 = vmatpush.msra.mxu0 0.0
      %2129 = vmatpush.msra.mxu0 0.0
      %2130 = vmatpush.msra.mxu0 0.0
      %2131 = vmatpush.msra.mxu0 0.0
      %2132 = vmatpush.msra.mxu0 0.0
      %2133 = vmatpush.msra.mxu0 0.0
      %2134 = vmatpush.msra.mxu0 0.0
      %2135 = vmatpush.msra.mxu0 %v972
      %2136 = vmatpush.msra.mxu0 %v971
      %2137 = vmatmul.f32.gmra.mxu0 %v2119
      %v2138 = vpop.f32.mrf.mxu0
      %v2139 = vadd.f32 %v975, %v2138
      %2140 = vdwg.mxu0
      %v2141 = vmul.f32 %v2139, 0.5
      %v2142 = vmul.f32 %v2139, 0.70710677
      %vm2143 = vcmp.lt.f32.partialorder %v2142, 0.0
      %v2144 = vsel %vm2143, -1.0, 1.0
      %v2145 = vand.u32 2147483647, %v2142
      %v2146 = vmul.f32 %v2145, 0.3275911
      %v2147 = vadd.f32 %v2146, 1.0
      %v2148 = vrcp.pop %v2147
      %v2149 = vmul.f32 %v2147, %v2148
      %v2150 = vsub.f32 1.0, %v2149
      %v2151 = vmul.f32 %v2148, %v2150
      %v2152 = vadd.f32 %v2148, %v2151
      %vm2153 = vweird.f32 %v2147
      %vm2154 = vweird.f32 %v2148
      %vm2155 = vmor %vm2153, %vm2154
      %v2156 = vsel %vm2155, %v2148, %v2152
      %v2157 = vand.u32 2147483647, %v2147
      %vm2158 = vcmp.eq.f32.partialorder %v2157, 8.507059e+37
      %v2159 = vand.u32 %v2147, 2147483648
      %v2160 = vor.u32 1.1754944e-38, %v2159
      %v2161 = vsel %vm2158, %v2160, %v2156
      %v2162 = vmul.f32 1.0, %v2161
      %v2163 = vmul.f32 %v2162, 1.0614054
      %v2164 = vadd.f32 %v2163, -1.4531521
      %v2165 = vmul.f32 %v2164, %v2162
      %v2166 = vadd.f32 %v2165, 1.4214138
      %v2167 = vmul.f32 %v2166, %v2162
      %v2168 = vadd.f32 %v2167, -0.28449672
      %v2169 = vmul.f32 %v2168, %v2162
      %v2170 = vadd.f32 %v2169, 0.2548296
      %v2171 = vmul.f32 %v2170, %v2162
      %v2172 = vsub.f32 0.0, %v2145
      %v2173 = vmul.f32 %v2172, %v2145
      %v2174 = vmul.f32 %v2173, 1.442695
      %v2175 = vpow.pop %v2174
      %v2176 = vmul.f32 %v2171, %v2175
      %v2177 = vsub.f32 1.0, %v2176
      %v2178 = vmul.f32 %v2144, %v2177
      %v2179 = vadd.f32 %v2178, 1.0
      %v2180 = vmul.f32 %v2141, %v2179
      %v2182 = vsel %vm1049, %v2180, 0
      %2184 = vmatpush.msra.mxu0 0.0
      %2185 = vmatpush.msra.mxu0 0.0
      %2186 = vmatpush.msra.mxu0 0.0
      %2187 = vmatpush.msra.mxu0 0.0
      %2188 = vmatpush.msra.mxu0 0.0
      %2189 = vmatpush.msra.mxu0 0.0
      %2190 = vmatpush.msra.mxu0 0.0
      %2191 = vmatpush.msra.mxu0 0.0
      %2192 = vmatpush.msra.mxu0 0.0
      %2193 = vmatpush.msra.mxu0 0.0
      %2194 = vmatpush.msra.mxu0 0.0
      %2195 = vmatpush.msra.mxu0 0.0
      %2196 = vmatpush.msra.mxu0 %v1044
      %2197 = vmatpush.msra.mxu0 %v1043
      %2198 = vmatpush.msra.mxu0 %v1042
      %2199 = vmatpush.msra.mxu0 %v1041
      %2200 = vmatmul.f32.gmra.mxu0 %v2182
      %v2201 = vpop.f32.mrf.mxu0
      %v2202 = vadd.f32 %v1047, %v2201
      %2203 = vdwg.mxu0
      %v2205 = vsel %vm1114, %v969, 0
      %2207 = vmatpush.msra.mxu0 0.0
      %2208 = vmatpush.msra.mxu0 0.0
      %2209 = vmatpush.msra.mxu0 0.0
      %2210 = vmatpush.msra.mxu0 0.0
      %2211 = vmatpush.msra.mxu0 0.0
      %2212 = vmatpush.msra.mxu0 0.0
      %2213 = vmatpush.msra.mxu0 0.0
      %2214 = vmatpush.msra.mxu0 0.0
      %2215 = vmatpush.msra.mxu0 0.0
      %2216 = vmatpush.msra.mxu0 0.0
      %2217 = vmatpush.msra.mxu0 0.0
      %2218 = vmatpush.msra.mxu0 0.0
      %2219 = vmatpush.msra.mxu0 0.0
      %2220 = vmatpush.msra.mxu0 0.0
      %2221 = vmatpush.msra.mxu0 0.0
      %2222 = vmatpush.msra.mxu0 %v2202
      %2223 = vmatmul.f32.gmra.mxu0 %v2205
      %v2224 = vpop.f32.mrf.mxu0
      %v2225 = vadd.f32 0.0, %v2224
      %2226 = vdwg.mxu0
      %v2227 = vmul.f32 %v2225, 5.656854
      %v2228 = vadd.f32 %v2227, %v959
      %v2229 = vld [vmem:[%s49] sm:$0xff]
      %v2230 = vld [vmem:[%s49 + $0x8] sm:$0x3]
      %v2231 = vld [vmem:[%s29] sm:$0xff]
      %v2232 = vld [vmem:[%s29 + $0x8] sm:$0xff]
      %v2233 = vld [vmem:[%s29 + $0x10] sm:$0xff]
      %v2234 = vld [vmem:[%s29 + $0x18] sm:$0xff]
      %v2235 = vld [vmem:[%s31] sm:$0x1]
      %v2236 = vld [vmem:[%s33] sm:$0xff]
      %v2237 = vld [vmem:[%s33 + $0x8] sm:$0xff]
      %v2238 = vld [vmem:[%s33 + $0x10] sm:$0xff]
      %v2239 = vld [vmem:[%s33 + $0x18] sm:$0xff]
      %v2241 = vperm.slane %v2235, 0
      %v2244 = vsel %vm1049, %v2228, 0
      %2246 = vmatpush.msra.mxu0 0.0
      %2247 = vmatpush.msra.mxu0 0.0
      %2248 = vmatpush.msra.mxu0 0.0
      %2249 = vmatpush.msra.mxu0 0.0
      %2250 = vmatpush.msra.mxu0 0.0
      %2251 = vmatpush.msra.mxu0 0.0
      %2252 = vmatpush.msra.mxu0 0.0
      %2253 = vmatpush.msra.mxu0 0.0
      %2254 = vmatpush.msra.mxu0 0.0
      %2255 = vmatpush.msra.mxu0 0.0
      %2256 = vmatpush.msra.mxu0 0.0
      %2257 = vmatpush.msra.mxu0 0.0
      %2258 = vmatpush.msra.mxu0 %v2234
      %2259 = vmatpush.msra.mxu0 %v2233
      %2260 = vmatpush.msra.mxu0 %v2232
      %2261 = vmatpush.msra.mxu0 %v2231
      %2262 = vmatmul.f32.gmra.mxu0 %v2244
      %v2263 = vpop.f32.mrf.mxu0
      %v2264 = vadd.f32 %v2241, %v2263
      %2265 = vdwg.mxu0
      %2267 = vrot.lane.b32.xlu0 %v2264, 96
      %v2268 = vpop.permute.xlu0 %2267
      %v2269 = vsel %vm1114, %v2264, 0
      %v2271 = vsel %vm1114, %v2268, 0
      %2273 = vmatpush.xpose.msra.mxu0 0.0
      %2274 = vmatpush.xpose.msra.mxu0 0.0
      %2275 = vmatpush.xpose.msra.mxu0 0.0
      %2276 = vmatpush.xpose.msra.mxu0 0.0
      %2277 = vmatpush.xpose.msra.mxu0 0.0
      %2278 = vmatpush.xpose.msra.mxu0 0.0
      %2279 = vmatpush.xpose.msra.mxu0 0.0
      %2280 = vmatpush.xpose.msra.mxu0 0.0
      %2281 = vmatpush.xpose.msra.mxu0 0.0
      %2282 = vmatpush.xpose.msra.mxu0 0.0
      %2283 = vmatpush.xpose.msra.mxu0 0.0
      %2284 = vmatpush.xpose.msra.mxu0 0.0
      %2285 = vmatpush.xpose.msra.mxu0 0.0
      %2286 = vmatpush.xpose.msra.mxu0 0.0
      %2287 = vmatpush.xpose.msra.mxu0 0.0
      %2288 = vmatpush.xpose.msra.mxu0 %v2271
      %2289 = vmatmul.f32.gmra.mxu0 %v2269
      %v2290 = vpop.f32.mrf.mxu0
      %v2291 = vadd.f32 0.0, %v2290
      %2292 = vdwg.mxu0
      %v2293 = vmul.f32 %v2291, 0.35355338
      %v2294 = vadd.f32 %v2293, %v965
      %v2295 = vsel %vm1114, %v2294, -inf
      %2296 = vmax.xlane.f32.xlu0 %v2295
      %v2297 = vpop.xlane.xlu0 %2296
      %v2298 = vsub.f32 %v2294, %v2297
      %v2299 = vmul.f32 %v2298, 1.442695
      %v2300 = vpow.pop %v2299
      %v2301 = vsel %vm1114, %v2300, 0.0
      %2302 = vadd.xlane.f32.xlu0 %v2301
      %v2303 = vpop.xlane.xlu0 %2302
      %v2304 = vrcp.pop %v2303
      %v2305 = vmul.f32 %v2300, %v2304
      %2306 = vrot.lane.b32.xlu0 %v2264, 64
      %v2307 = vpop.permute.xlu0 %2306
      %v2310 = vsel %vm1114, %v2305, 0
      %2312 = vmatpush.msra.mxu0 0.0
      %2313 = vmatpush.msra.mxu0 0.0
      %2314 = vmatpush.msra.mxu0 0.0
      %2315 = vmatpush.msra.mxu0 0.0
      %2316 = vmatpush.msra.mxu0 0.0
      %2317 = vmatpush.msra.mxu0 0.0
      %2318 = vmatpush.msra.mxu0 0.0
      %2319 = vmatpush.msra.mxu0 0.0
      %2320 = vmatpush.msra.mxu0 0.0
      %2321 = vmatpush.msra.mxu0 0.0
      %2322 = vmatpush.msra.mxu0 0.0
      %2323 = vmatpush.msra.mxu0 0.0
      %2324 = vmatpush.msra.mxu0 0.0
      %2325 = vmatpush.msra.mxu0 0.0
      %2326 = vmatpush.msra.mxu0 0.0
      %2327 = vmatpush.msra.mxu0 %v2307
      %2328 = vmatmul.f32.gmra.mxu0 %v2310
      %v2329 = vpop.f32.mrf.mxu0
      %v2330 = vadd.f32 0.0, %v2329
      %2331 = vdwg.mxu0
      %2332 = vrot.lane.b32.xlu0 %v2264, 120
      %v2333 = vpop.permute.xlu0 %2332
      %2334 = vrot.lane.b32.xlu0 %v2264, 88
      %v2335 = vpop.permute.xlu0 %2334
      %v2336 = vsel %vm1114, %v2333, 0
      %v2338 = vsel %vm1114, %v2335, 0
      %2340 = vmatpush.xpose.msra.mxu0 0.0
      %2341 = vmatpush.xpose.msra.mxu0 0.0
      %2342 = vmatpush.xpose.msra.mxu0 0.0
      %2343 = vmatpush.xpose.msra.mxu0 0.0
      %2344 = vmatpush.xpose.msra.mxu0 0.0
      %2345 = vmatpush.xpose.msra.mxu0 0.0
      %2346 = vmatpush.xpose.msra.mxu0 0.0
      %2347 = vmatpush.xpose.msra.mxu0 0.0
      %2348 = vmatpush.xpose.msra.mxu0 0.0
      %2349 = vmatpush.xpose.msra.mxu0 0.0
      %2350 = vmatpush.xpose.msra.mxu0 0.0
      %2351 = vmatpush.xpose.msra.mxu0 0.0
      %2352 = vmatpush.xpose.msra.mxu0 0.0
      %2353 = vmatpush.xpose.msra.mxu0 0.0
      %2354 = vmatpush.xpose.msra.mxu0 0.0
      %2355 = vmatpush.xpose.msra.mxu0 %v2338
      %2356 = vmatmul.f32.gmra.mxu0 %v2336
      %v2357 = vpop.f32.mrf.mxu0
      %v2358 = vadd.f32 0.0, %v2357
      %2359 = vdwg.mxu0
      %v2360 = vmul.f32 %v2358, 0.35355338
      %v2361 = vadd.f32 %v2360, %v965
      %v2362 = vsel %vm1114, %v2361, -inf
      %2363 = vmax.xlane.f32.xlu0 %v2362
      %v2364 = vpop.xlane.xlu0 %2363
      %v2365 = vsub.f32 %v2361, %v2364
      %v2366 = vmul.f32 %v2365, 1.442695
      %v2367 = vpow.pop %v2366
      %v2368 = vsel %vm1114, %v2367, 0.0
      %2369 = vadd.xlane.f32.xlu0 %v2368
      %v2370 = vpop.xlane.xlu0 %2369
      %v2371 = vrcp.pop %v2370
      %v2372 = vmul.f32 %v2367, %v2371
      %2373 = vrot.lane.b32.xlu0 %v2264, 56
      %v2374 = vpop.permute.xlu0 %2373
      %v2377 = vsel %vm1114, %v2372, 0
      %2379 = vmatpush.msra.mxu0 0.0
      %2380 = vmatpush.msra.mxu0 0.0
      %2381 = vmatpush.msra.mxu0 0.0
      %2382 = vmatpush.msra.mxu0 0.0
      %2383 = vmatpush.msra.mxu0 0.0
      %2384 = vmatpush.msra.mxu0 0.0
      %2385 = vmatpush.msra.mxu0 0.0
      %2386 = vmatpush.msra.mxu0 0.0
      %2387 = vmatpush.msra.mxu0 0.0
      %2388 = vmatpush.msra.mxu0 0.0
      %2389 = vmatpush.msra.mxu0 0.0
      %2390 = vmatpush.msra.mxu0 0.0
      %2391 = vmatpush.msra.mxu0 0.0
      %2392 = vmatpush.msra.mxu0 0.0
      %2393 = vmatpush.msra.mxu0 0.0
      %2394 = vmatpush.msra.mxu0 %v2374
      %2395 = vmatmul.f32.gmra.mxu0 %v2377
      %v2396 = vpop.f32.mrf.mxu0
      %v2397 = vadd.f32 0.0, %v2396
      %2398 = vdwg.mxu0
      %v2400 = vsel %vm1114, %v2397, 0
      %2402 = vmatpush.msra.mxu0 0.0
      %2403 = vmatpush.msra.mxu0 0.0
      %2404 = vmatpush.msra.mxu0 0.0
      %2405 = vmatpush.msra.mxu0 0.0
      %2406 = vmatpush.msra.mxu0 0.0
      %2407 = vmatpush.msra.mxu0 0.0
      %2408 = vmatpush.msra.mxu0 0.0
      %2409 = vmatpush.msra.mxu0 0.0
      %2410 = vmatpush.msra.mxu0 0.0
      %2411 = vmatpush.msra.mxu0 0.0
      %2412 = vmatpush.msra.mxu0 0.0
      %2413 = vmatpush.msra.mxu0 0.0
      %2414 = vmatpush.msra.mxu0 0.0
      %2415 = vmatpush.msra.mxu0 0.0
      %2416 = vmatpush.msra.mxu0 0.0
      %2417 = vmatpush.msra.mxu0 %v2237
      %2418 = vmatmul.f32.gmra.mxu0 %v2400
      %v2419 = vpop.f32.mrf.mxu0
      %v2420 = vadd.f32 0.0, %v2419
      %2421 = vdwg.mxu0
      %v2423 = vsel %vm1114, %v2330, 0
      %2425 = vmatpush.msra.mxu0 0.0
      %2426 = vmatpush.msra.mxu0 0.0
      %2427 = vmatpush.msra.mxu0 0.0
      %2428 = vmatpush.msra.mxu0 0.0
      %2429 = vmatpush.msra.mxu0 0.0
      %2430 = vmatpush.msra.mxu0 0.0
      %2431 = vmatpush.msra.mxu0 0.0
      %2432 = vmatpush.msra.mxu0 0.0
      %2433 = vmatpush.msra.mxu0 0.0
      %2434 = vmatpush.msra.mxu0 0.0
      %2435 = vmatpush.msra.mxu0 0.0
      %2436 = vmatpush.msra.mxu0 0.0
      %2437 = vmatpush.msra.mxu0 0.0
      %2438 = vmatpush.msra.mxu0 0.0
      %2439 = vmatpush.msra.mxu0 0.0
      %2440 = vmatpush.msra.mxu0 %v2236
      %2441 = vmatmul.f32.gmra.mxu0 %v2423
      %v2442 = vpop.f32.mrf.mxu0
      %v2443 = vadd.f32 %v2420, %v2442
      %2444 = vdwg.mxu0
      %2445 = vrot.lane.b32.xlu0 %v2264, 112
      %v2446 = vpop.permute.xlu0 %2445
      %2447 = vrot.lane.b32.xlu0 %v2264, 80
      %v2448 = vpop.permute.xlu0 %2447
      %v2449 = vsel %vm1114, %v2446, 0
      %v2451 = vsel %vm1114, %v2448, 0
      %2453 = vmatpush.xpose.msra.mxu0 0.0
      %2454 = vmatpush.xpose.msra.mxu0 0.0
      %2455 = vmatpush.xpose.msra.mxu0 0.0
      %2456 = vmatpush.xpose.msra.mxu0 0.0
      %2457 = vmatpush.xpose.msra.mxu0 0.0
      %2458 = vmatpush.xpose.msra.mxu0 0.0
      %2459 = vmatpush.xpose.msra.mxu0 0.0
      %2460 = vmatpush.xpose.msra.mxu0 0.0
      %2461 = vmatpush.xpose.msra.mxu0 0.0
      %2462 = vmatpush.xpose.msra.mxu0 0.0
      %2463 = vmatpush.xpose.msra.mxu0 0.0
      %2464 = vmatpush.xpose.msra.mxu0 0.0
      %2465 = vmatpush.xpose.msra.mxu0 0.0
      %2466 = vmatpush.xpose.msra.mxu0 0.0
      %2467 = vmatpush.xpose.msra.mxu0 0.0
      %2468 = vmatpush.xpose.msra.mxu0 %v2451
      %2469 = vmatmul.f32.gmra.mxu0 %v2449
      %v2470 = vpop.f32.mrf.mxu0
      %v2471 = vadd.f32 0.0, %v2470
      %2472 = vdwg.mxu0
      %v2473 = vmul.f32 %v2471, 0.35355338
      %v2474 = vadd.f32 %v2473, %v965
      %v2475 = vsel %vm1114, %v2474, -inf
      %2476 = vmax.xlane.f32.xlu0 %v2475
      %v2477 = vpop.xlane.xlu0 %2476
      %v2478 = vsub.f32 %v2474, %v2477
      %v2479 = vmul.f32 %v2478, 1.442695
      %v2480 = vpow.pop %v2479
      %v2481 = vsel %vm1114, %v2480, 0.0
      %2482 = vadd.xlane.f32.xlu0 %v2481
      %v2483 = vpop.xlane.xlu0 %2482
      %v2484 = vrcp.pop %v2483
      %v2485 = vmul.f32 %v2480, %v2484
      %2486 = vrot.lane.b32.xlu0 %v2264, 48
      %v2487 = vpop.permute.xlu0 %2486
      %v2490 = vsel %vm1114, %v2485, 0
      %2492 = vmatpush.msra.mxu0 0.0
      %2493 = vmatpush.msra.mxu0 0.0
      %2494 = vmatpush.msra.mxu0 0.0
      %2495 = vmatpush.msra.mxu0 0.0
      %2496 = vmatpush.msra.mxu0 0.0
      %2497 = vmatpush.msra.mxu0 0.0
      %2498 = vmatpush.msra.mxu0 0.0
      %2499 = vmatpush.msra.mxu0 0.0
      %2500 = vmatpush.msra.mxu0 0.0
      %2501 = vmatpush.msra.mxu0 0.0
      %2502 = vmatpush.msra.mxu0 0.0
      %2503 = vmatpush.msra.mxu0 0.0
      %2504 = vmatpush.msra.mxu0 0.0
      %2505 = vmatpush.msra.mxu0 0.0
      %2506 = vmatpush.msra.mxu0 0.0
      %2507 = vmatpush.msra.mxu0 %v2487
      %2508 = vmatmul.f32.gmra.mxu0 %v2490
      %v2509 = vpop.f32.mrf.mxu0
      %v2510 = vadd.f32 0.0, %v2509
      %2511 = vdwg.mxu0
      %v2513 = vsel %vm1114, %v2510, 0
      %2515 = vmatpush.msra.mxu0 0.0
      %2516 = vmatpush.msra.mxu0 0.0
      %2517 = vmatpush.msra.mxu0 0.0
      %2518 = vmatpush.msra.mxu0 0.0
      %2519 = vmatpush.msra.mxu0 0.0
      %2520 = vmatpush.msra.mxu0 0.0
      %2521 = vmatpush.msra.mxu0 0.0
      %2522 = vmatpush.msra.mxu0 0.0
      %2523 = vmatpush.msra.mxu0 0.0
      %2524 = vmatpush.msra.mxu0 0.0
      %2525 = vmatpush.msra.mxu0 0.0
      %2526 = vmatpush.msra.mxu0 0.0
      %2527 = vmatpush.msra.mxu0 0.0
      %2528 = vmatpush.msra.mxu0 0.0
      %2529 = vmatpush.msra.mxu0 0.0
      %2530 = vmatpush.msra.mxu0 %v2238
      %2531 = vmatmul.f32.gmra.mxu0 %v2513
      %v2532 = vpop.f32.mrf.mxu0
      %v2533 = vadd.f32 0.0, %v2532
      %2534 = vdwg.mxu0
      %v2535 = vadd.f32 %v2443, %v2533
      %2536 = vrot.lane.b32.xlu0 %v2264, 104
      %v2537 = vpop.permute.xlu0 %2536
      %2538 = vrot.lane.b32.xlu0 %v2264, 72
      %v2539 = vpop.permute.xlu0 %2538
      %v2540 = vsel %vm1114, %v2537, 0
      %v2542 = vsel %vm1114, %v2539, 0
      %2544 = vmatpush.xpose.msra.mxu0 0.0
      %2545 = vmatpush.xpose.msra.mxu0 0.0
      %2546 = vmatpush.xpose.msra.mxu0 0.0
      %2547 = vmatpush.xpose.msra.mxu0 0.0
      %2548 = vmatpush.xpose.msra.mxu0 0.0
      %2549 = vmatpush.xpose.msra.mxu0 0.0
      %2550 = vmatpush.xpose.msra.mxu0 0.0
      %2551 = vmatpush.xpose.msra.mxu0 0.0
      %2552 = vmatpush.xpose.msra.mxu0 0.0
      %2553 = vmatpush.xpose.msra.mxu0 0.0
      %2554 = vmatpush.xpose.msra.mxu0 0.0
      %2555 = vmatpush.xpose.msra.mxu0 0.0
      %2556 = vmatpush.xpose.msra.mxu0 0.0
      %2557 = vmatpush.xpose.msra.mxu0 0.0
      %2558 = vmatpush.xpose.msra.mxu0 0.0
      %2559 = vmatpush.xpose.msra.mxu0 %v2542
      %2560 = vmatmul.f32.gmra.mxu0 %v2540
      %v2561 = vpop.f32.mrf.mxu0
      %v2562 = vadd.f32 0.0, %v2561
      %2563 = vdwg.mxu0
      %v2564 = vmul.f32 %v2562, 0.35355338
      %v2565 = vadd.f32 %v2564, %v965
      %v2566 = vsel %vm1114, %v2565, -inf
      %2567 = vmax.xlane.f32.xlu0 %v2566
      %v2568 = vpop.xlane.xlu0 %2567
      %v2569 = vsub.f32 %v2565, %v2568
      %v2570 = vmul.f32 %v2569, 1.442695
      %v2571 = vpow.pop %v2570
      %v2572 = vsel %vm1114, %v2571, 0.0
      %2573 = vadd.xlane.f32.xlu0 %v2572
      %v2574 = vpop.xlane.xlu0 %2573
      %v2575 = vrcp.pop %v2574
      %v2576 = vmul.f32 %v2571, %v2575
      %2577 = vrot.lane.b32.xlu0 %v2264, 40
      %v2578 = vpop.permute.xlu0 %2577
      %v2581 = vsel %vm1114, %v2576, 0
      %2583 = vmatpush.msra.mxu0 0.0
      %2584 = vmatpush.msra.mxu0 0.0
      %2585 = vmatpush.msra.mxu0 0.0
      %2586 = vmatpush.msra.mxu0 0.0
      %2587 = vmatpush.msra.mxu0 0.0
      %2588 = vmatpush.msra.mxu0 0.0
      %2589 = vmatpush.msra.mxu0 0.0
      %2590 = vmatpush.msra.mxu0 0.0
      %2591 = vmatpush.msra.mxu0 0.0
      %2592 = vmatpush.msra.mxu0 0.0
      %2593 = vmatpush.msra.mxu0 0.0
      %2594 = vmatpush.msra.mxu0 0.0
      %2595 = vmatpush.msra.mxu0 0.0
      %2596 = vmatpush.msra.mxu0 0.0
      %2597 = vmatpush.msra.mxu0 0.0
      %2598 = vmatpush.msra.mxu0 %v2578
      %2599 = vmatmul.f32.gmra.mxu0 %v2581
      %v2600 = vpop.f32.mrf.mxu0
      %v2601 = vadd.f32 0.0, %v2600
      %2602 = vdwg.mxu0
      %v2604 = vsel %vm1114, %v2601, 0
      %2606 = vmatpush.msra.mxu0 0.0
      %2607 = vmatpush.msra.mxu0 0.0
      %2608 = vmatpush.msra.mxu0 0.0
      %2609 = vmatpush.msra.mxu0 0.0
      %2610 = vmatpush.msra.mxu0 0.0
      %2611 = vmatpush.msra.mxu0 0.0
      %2612 = vmatpush.msra.mxu0 0.0
      %2613 = vmatpush.msra.mxu0 0.0
      %2614 = vmatpush.msra.mxu0 0.0
      %2615 = vmatpush.msra.mxu0 0.0
      %2616 = vmatpush.msra.mxu0 0.0
      %2617 = vmatpush.msra.mxu0 0.0
      %2618 = vmatpush.msra.mxu0 0.0
      %2619 = vmatpush.msra.mxu0 0.0
      %2620 = vmatpush.msra.mxu0 0.0
      %2621 = vmatpush.msra.mxu0 %v2239
      %2622 = vmatmul.f32.gmra.mxu0 %v2604
      %v2623 = vpop.f32.mrf.mxu0
      %v2624 = vadd.f32 0.0, %v2623
      %2625 = vdwg.mxu0
      %v2626 = vadd.f32 %v2535, %v2624
      %v2627 = vperm.slane %v2229, 0
      %v2628 = vadd.f32 %v2626, %v2627
      %v2629 = vadd.f32 %v2228, %v2628
      %v2630 = vsel %vm1049, %v2629, 0.0
      %2631 = vadd.xlane.f32.xlu0 %v2630
      %v2632 = vpop.xlane.xlu0 %2631
      %v2633 = vmul.f32 %v2632, %v1481
      %v2634 = vsub.f32 %v2629, %v2633
      %v2635 = vmul.f32 %v2634, %v2634
      %v2636 = vsel %vm1049, %v2635, 0.0
      %2637 = vadd.xlane.f32.xlu0 %v2636
      %v2638 = vpop.xlane.xlu0 %2637
      %v2639 = vmul.f32 %v2638, %v1481
      %v2640 = vadd.f32 %v2639, 1e-05
      %v2641 = vrsqrt.pop %v2640
      %v2642 = vmul.f32 %v2641, %v2640
      %v2643 = vmul.f32 %v2642, %v2641
      %v2644 = vmul.f32 0.5, %v2643
      %v2645 = vsub.f32 1.5, %v2644
      %v2646 = vmul.f32 %v2641, %v2645
      %vm2647 = vweird.f32 %v2640
      %vm2648 = vweird.f32 %v2641
      %vm2649 = vmor %vm2647, %vm2648
      %v2650 = vsel %vm2649, %v2641, %v2646
      %v2651 = vmul.f32 %v2634, %v2650
      %v2652 = vperm.slane %v2229, 1
      %v2653 = vmul.f32 %v2651, %v2652
      %v2654 = vperm.slane %v2229, 2
      %v2655 = vadd.f32 %v2653, %v2654
      %v2656 = vld [vmem:[%s35] sm:$0xff]
      %v2657 = vld [vmem:[%s35 + $0x8] sm:$0xff]
      %v2658 = vld [vmem:[%s35 + $0x10] sm:$0xff]
      %v2659 = vld [vmem:[%s35 + $0x18] sm:$0xff]
      %v2660 = vld [vmem:[%s37] sm:$0xff]
      %v2661 = vld [vmem:[%s37 + $0x8] sm:$0xff]
      %v2662 = vld [vmem:[%s37 + $0x10] sm:$0xff]
      %v2663 = vld [vmem:[%s37 + $0x18] sm:$0xff]
      %v2664 = vld [vmem:[%s39] sm:$0x1]
      %v2665 = vld [vmem:[%s41] sm:$0xff]
      %v2666 = vld [vmem:[%s41 + $0x8] sm:$0xff]
      %v2667 = vld [vmem:[%s41 + $0x10] sm:$0xff]
      %v2668 = vld [vmem:[%s41 + $0x18] sm:$0xff]
      %v2669 = vperm.slane %v2229, 3
      %v2671 = vsel %vm1049, %v2655, 0
      %2673 = vmatpush.msra.mxu0 0.0
      %2674 = vmatpush.msra.mxu0 0.0
      %2675 = vmatpush.msra.mxu0 0.0
      %2676 = vmatpush.msra.mxu0 0.0
      %2677 = vmatpush.msra.mxu0 0.0
      %2678 = vmatpush.msra.mxu0 0.0
      %2679 = vmatpush.msra.mxu0 0.0
      %2680 = vmatpush.msra.mxu0 0.0
      %2681 = vmatpush.msra.mxu0 0.0
      %2682 = vmatpush.msra.mxu0 0.0
      %2683 = vmatpush.msra.mxu0 0.0
      %2684 = vmatpush.msra.mxu0 0.0
      %2685 = vmatpush.msra.mxu0 %v2659
      %2686 = vmatpush.msra.mxu0 %v2658
      %2687 = vmatpush.msra.mxu0 %v2657
      %2688 = vmatpush.msra.mxu0 %v2656
      %2689 = vmatmul.f32.gmra.mxu0 %v2671
      %v2690 = vpop.f32.mrf.mxu0
      %v2691 = vadd.f32 %v2669, %v2690
      %2692 = vdwg.mxu0
      %v2694 = vperm.slane %v2664, 0
      %v2697 = vsel %vm1049, %v2116, 0
      %2699 = vmatpush.msra.mxu0 0.0
      %2700 = vmatpush.msra.mxu0 0.0
      %2701 = vmatpush.msra.mxu0 0.0
      %2702 = vmatpush.msra.mxu0 0.0
      %2703 = vmatpush.msra.mxu0 0.0
      %2704 = vmatpush.msra.mxu0 0.0
      %2705 = vmatpush.msra.mxu0 0.0
      %2706 = vmatpush.msra.mxu0 0.0
      %2707 = vmatpush.msra.mxu0 0.0
      %2708 = vmatpush.msra.mxu0 0.0
      %2709 = vmatpush.msra.mxu0 0.0
      %2710 = vmatpush.msra.mxu0 0.0
      %2711 = vmatpush.msra.mxu0 %v2663
      %2712 = vmatpush.msra.mxu0 %v2662
      %2713 = vmatpush.msra.mxu0 %v2661
      %2714 = vmatpush.msra.mxu0 %v2660
      %2715 = vmatmul.f32.gmra.mxu0 %v2697
      %v2716 = vpop.f32.mrf.mxu0
      %v2717 = vadd.f32 %v2694, %v2716
      %2718 = vdwg.mxu0
      %v2720 = vsel %vm1114, %v2691, 0
      %v2723 = vsel %vm1114, %v2717, 0
      %2725 = vmatpush.xpose.msra.mxu0 0.0
      %2726 = vmatpush.xpose.msra.mxu0 0.0
      %2727 = vmatpush.xpose.msra.mxu0 0.0
      %2728 = vmatpush.xpose.msra.mxu0 0.0
      %2729 = vmatpush.xpose.msra.mxu0 0.0
      %2730 = vmatpush.xpose.msra.mxu0 0.0
      %2731 = vmatpush.xpose.msra.mxu0 0.0
      %2732 = vmatpush.xpose.msra.mxu0 0.0
      %2733 = vmatpush.xpose.msra.mxu0 0.0
      %2734 = vmatpush.xpose.msra.mxu0 0.0
      %2735 = vmatpush.xpose.msra.mxu0 0.0
      %2736 = vmatpush.xpose.msra.mxu0 0.0
      %2737 = vmatpush.xpose.msra.mxu0 0.0
      %2738 = vmatpush.xpose.msra.mxu0 0.0
      %2739 = vmatpush.xpose.msra.mxu0 0.0
      %2740 = vmatpush.xpose.msra.mxu0 %v2723
      %2741 = vmatmul.f32.gmra.mxu0 %v2720
      %v2742 = vpop.f32.mrf.mxu0
      %v2743 = vadd.f32 0.0, %v2742
      %2744 = vdwg.mxu0
      %v2745 = vmul.f32 %v2743, 0.35355338
      %v2746 = vsel %vm1114, %v2745, -inf
      %2747 = vmax.xlane.f32.xlu0 %v2746
      %v2748 = vpop.xlane.xlu0 %2747
      %v2749 = vsub.f32 %v2745, %v2748
      %v2750 = vmul.f32 %v2749, 1.442695
      %v2751 = vpow.pop %v2750
      %v2752 = vsel %vm1114, %v2751, 0.0
      %2753 = vadd.xlane.f32.xlu0 %v2752
      %v2754 = vpop.xlane.xlu0 %2753
      %v2755 = vrcp.pop %v2754
      %v2756 = vmul.f32 %v2751, %v2755
      %2757 = vrot.lane.b32.xlu0 %v2717, 96
      %v2758 = vpop.permute.xlu0 %2757
      %v2761 = vsel %vm1114, %v2756, 0
      %2763 = vmatpush.msra.mxu0 0.0
      %2764 = vmatpush.msra.mxu0 0.0
      %2765 = vmatpush.msra.mxu0 0.0
      %2766 = vmatpush.msra.mxu0 0.0
      %2767 = vmatpush.msra.mxu0 0.0
      %2768 = vmatpush.msra.mxu0 0.0
      %2769 = vmatpush.msra.mxu0 0.0
      %2770 = vmatpush.msra.mxu0 0.0
      %2771 = vmatpush.msra.mxu0 0.0
      %2772 = vmatpush.msra.mxu0 0.0
      %2773 = vmatpush.msra.mxu0 0.0
      %2774 = vmatpush.msra.mxu0 0.0
      %2775 = vmatpush.msra.mxu0 0.0
      %2776 = vmatpush.msra.mxu0 0.0
      %2777 = vmatpush.msra.mxu0 0.0
      %2778 = vmatpush.msra.mxu0 %v2758
      %2779 = vmatmul.f32.gmra.mxu0 %v2761
      %v2780 = vpop.f32.mrf.mxu0
      %v2781 = vadd.f32 0.0, %v2780
      %2782 = vdwg.mxu0
      %2783 = vrot.lane.b32.xlu0 %v2691, 120
      %v2784 = vpop.permute.xlu0 %2783
      %2785 = vrot.lane.b32.xlu0 %v2717, 120
      %v2786 = vpop.permute.xlu0 %2785
      %v2787 = vsel %vm1114, %v2784, 0
      %v2789 = vsel %vm1114, %v2786, 0
      %2791 = vmatpush.xpose.msra.mxu0 0.0
      %2792 = vmatpush.xpose.msra.mxu0 0.0
      %2793 = vmatpush.xpose.msra.mxu0 0.0
      %2794 = vmatpush.xpose.msra.mxu0 0.0
      %2795 = vmatpush.xpose.msra.mxu0 0.0
      %2796 = vmatpush.xpose.msra.mxu0 0.0
      %2797 = vmatpush.xpose.msra.mxu0 0.0
      %2798 = vmatpush.xpose.msra.mxu0 0.0
      %2799 = vmatpush.xpose.msra.mxu0 0.0
      %2800 = vmatpush.xpose.msra.mxu0 0.0
      %2801 = vmatpush.xpose.msra.mxu0 0.0
      %2802 = vmatpush.xpose.msra.mxu0 0.0
      %2803 = vmatpush.xpose.msra.mxu0 0.0
      %2804 = vmatpush.xpose.msra.mxu0 0.0
      %2805 = vmatpush.xpose.msra.mxu0 0.0
      %2806 = vmatpush.xpose.msra.mxu0 %v2789
      %2807 = vmatmul.f32.gmra.mxu0 %v2787
      %v2808 = vpop.f32.mrf.mxu0
      %v2809 = vadd.f32 0.0, %v2808
      %2810 = vdwg.mxu0
      %v2811 = vmul.f32 %v2809, 0.35355338
      %v2812 = vsel %vm1114, %v2811, -inf
      %2813 = vmax.xlane.f32.xlu0 %v2812
      %v2814 = vpop.xlane.xlu0 %2813
      %v2815 = vsub.f32 %v2811, %v2814
      %v2816 = vmul.f32 %v2815, 1.442695
      %v2817 = vpow.pop %v2816
      %v2818 = vsel %vm1114, %v2817, 0.0
      %2819 = vadd.xlane.f32.xlu0 %v2818
      %v2820 = vpop.xlane.xlu0 %2819
      %v2821 = vrcp.pop %v2820
      %v2822 = vmul.f32 %v2817, %v2821
      %2823 = vrot.lane.b32.xlu0 %v2717, 88
      %v2824 = vpop.permute.xlu0 %2823
      %v2827 = vsel %vm1114, %v2822, 0
      %2829 = vmatpush.msra.mxu0 0.0
      %2830 = vmatpush.msra.mxu0 0.0
      %2831 = vmatpush.msra.mxu0 0.0
      %2832 = vmatpush.msra.mxu0 0.0
      %2833 = vmatpush.msra.mxu0 0.0
      %2834 = vmatpush.msra.mxu0 0.0
      %2835 = vmatpush.msra.mxu0 0.0
      %2836 = vmatpush.msra.mxu0 0.0
      %2837 = vmatpush.msra.mxu0 0.0
      %2838 = vmatpush.msra.mxu0 0.0
      %2839 = vmatpush.msra.mxu0 0.0
      %2840 = vmatpush.msra.mxu0 0.0
      %2841 = vmatpush.msra.mxu0 0.0
      %2842 = vmatpush.msra.mxu0 0.0
      %2843 = vmatpush.msra.mxu0 0.0
      %2844 = vmatpush.msra.mxu0 %v2824
      %2845 = vmatmul.f32.gmra.mxu0 %v2827
      %v2846 = vpop.f32.mrf.mxu0
      %v2847 = vadd.f32 0.0, %v2846
      %2848 = vdwg.mxu0
      %v2850 = vsel %vm1114, %v2847, 0
      %2852 = vmatpush.msra.mxu0 0.0
      %2853 = vmatpush.msra.mxu0 0.0
      %2854 = vmatpush.msra.mxu0 0.0
      %2855 = vmatpush.msra.mxu0 0.0
      %2856 = vmatpush.msra.mxu0 0.0
      %2857 = vmatpush.msra.mxu0 0.0
      %2858 = vmatpush.msra.mxu0 0.0
      %2859 = vmatpush.msra.mxu0 0.0
      %2860 = vmatpush.msra.mxu0 0.0
      %2861 = vmatpush.msra.mxu0 0.0
      %2862 = vmatpush.msra.mxu0 0.0
      %2863 = vmatpush.msra.mxu0 0.0
      %2864 = vmatpush.msra.mxu0 0.0
      %2865 = vmatpush.msra.mxu0 0.0
      %2866 = vmatpush.msra.mxu0 0.0
      %2867 = vmatpush.msra.mxu0 %v2666
      %2868 = vmatmul.f32.gmra.mxu0 %v2850
      %v2869 = vpop.f32.mrf.mxu0
      %v2870 = vadd.f32 0.0, %v2869
      %2871 = vdwg.mxu0
      %v2873 = vsel %vm1114, %v2781, 0
      %2875 = vmatpush.msra.mxu0 0.0
      %2876 = vmatpush.msra.mxu0 0.0
      %2877 = vmatpush.msra.mxu0 0.0
      %2878 = vmatpush.msra.mxu0 0.0
      %2879 = vmatpush.msra.mxu0 0.0
      %2880 = vmatpush.msra.mxu0 0.0
      %2881 = vmatpush.msra.mxu0 0.0
      %2882 = vmatpush.msra.mxu0 0.0
      %2883 = vmatpush.msra.mxu0 0.0
      %2884 = vmatpush.msra.mxu0 0.0
      %2885 = vmatpush.msra.mxu0 0.0
      %2886 = vmatpush.msra.mxu0 0.0
      %2887 = vmatpush.msra.mxu0 0.0
      %2888 = vmatpush.msra.mxu0 0.0
      %2889 = vmatpush.msra.mxu0 0.0
      %2890 = vmatpush.msra.mxu0 %v2665
      %2891 = vmatmul.f32.gmra.mxu0 %v2873
      %v2892 = vpop.f32.mrf.mxu0
      %v2893 = vadd.f32 %v2870, %v2892
      %2894 = vdwg.mxu0
      %2895 = vrot.lane.b32.xlu0 %v2691, 112
      %v2896 = vpop.permute.xlu0 %2895
      %2897 = vrot.lane.b32.xlu0 %v2717, 112
      %v2898 = vpop.permute.xlu0 %2897
      %v2899 = vsel %vm1114, %v2896, 0
      %v2901 = vsel %vm1114, %v2898, 0
      %2903 = vmatpush.xpose.msra.mxu0 0.0
      %2904 = vmatpush.xpose.msra.mxu0 0.0
      %2905 = vmatpush.xpose.msra.mxu0 0.0
      %2906 = vmatpush.xpose.msra.mxu0 0.0
      %2907 = vmatpush.xpose.msra.mxu0 0.0
      %2908 = vmatpush.xpose.msra.mxu0 0.0
      %2909 = vmatpush.xpose.msra.mxu0 0.0
      %2910 = vmatpush.xpose.msra.mxu0 0.0
      %2911 = vmatpush.xpose.msra.mxu0 0.0
      %2912 = vmatpush.xpose.msra.mxu0 0.0
      %2913 = vmatpush.xpose.msra.mxu0 0.0
      %2914 = vmatpush.xpose.msra.mxu0 0.0
      %2915 = vmatpush.xpose.msra.mxu0 0.0
      %2916 = vmatpush.xpose.msra.mxu0 0.0
      %2917 = vmatpush.xpose.msra.mxu0 0.0
      %2918 = vmatpush.xpose.msra.mxu0 %v2901
      %2919 = vmatmul.f32.gmra.mxu0 %v2899
      %v2920 = vpop.f32.mrf.mxu0
      %v2921 = vadd.f32 0.0, %v2920
      %2922 = vdwg.mxu0
      %v2923 = vmul.f32 %v2921, 0.35355338
      %v2924 = vsel %vm1114, %v2923, -inf
      %2925 = vmax.xlane.f32.xlu0 %v2924
      %v2926 = vpop.xlane.xlu0 %2925
      %v2927 = vsub.f32 %v2923, %v2926
      %v2928 = vmul.f32 %v2927, 1.442695
      %v2929 = vpow.pop %v2928
      %v2930 = vsel %vm1114, %v2929, 0.0
      %2931 = vadd.xlane.f32.xlu0 %v2930
      %v2932 = vpop.xlane.xlu0 %2931
      %v2933 = vrcp.pop %v2932
      %v2934 = vmul.f32 %v2929, %v2933
      %2935 = vrot.lane.b32.xlu0 %v2717, 80
      %v2936 = vpop.permute.xlu0 %2935
      %v2939 = vsel %vm1114, %v2934, 0
      %2941 = vmatpush.msra.mxu0 0.0
      %2942 = vmatpush.msra.mxu0 0.0
      %2943 = vmatpush.msra.mxu0 0.0
      %2944 = vmatpush.msra.mxu0 0.0
      %2945 = vmatpush.msra.mxu0 0.0
      %2946 = vmatpush.msra.mxu0 0.0
      %2947 = vmatpush.msra.mxu0 0.0
      %2948 = vmatpush.msra.mxu0 0.0
      %2949 = vmatpush.msra.mxu0 0.0
      %2950 = vmatpush.msra.mxu0 0.0
      %2951 = vmatpush.msra.mxu0 0.0
      %2952 = vmatpush.msra.mxu0 0.0
      %2953 = vmatpush.msra.mxu0 0.0
      %2954 = vmatpush.msra.mxu0 0.0
      %2955 = vmatpush.msra.mxu0 0.0
      %2956 = vmatpush.msra.mxu0 %v2936
      %2957 = vmatmul.f32.gmra.mxu0 %v2939
      %v2958 = vpop.f32.mrf.mxu0
      %v2959 = vadd.f32 0.0, %v2958
      %2960 = vdwg.mxu0
      %v2962 = vsel %vm1114, %v2959, 0
      %2964 = vmatpush.msra.mxu0 0.0
      %2965 = vmatpush.msra.mxu0 0.0
      %2966 = vmatpush.msra.mxu0 0.0
      %2967 = vmatpush.msra.mxu0 0.0
      %2968 = vmatpush.msra.mxu0 0.0
      %2969 = vmatpush.msra.mxu0 0.0
      %2970 = vmatpush.msra.mxu0 0.0
      %2971 = vmatpush.msra.mxu0 0.0
      %2972 = vmatpush.msra.mxu0 0.0
      %2973 = vmatpush.msra.mxu0 0.0
      %2974 = vmatpush.msra.mxu0 0.0
      %2975 = vmatpush.msra.mxu0 0.0
      %2976 = vmatpush.msra.mxu0 0.0
      %2977 = vmatpush.msra.mxu0 0.0
      %2978 = vmatpush.msra.mxu0 0.0
      %2979 = vmatpush.msra.mxu0 %v2667
      %2980 = vmatmul.f32.gmra.mxu0 %v2962
      %v2981 = vpop.f32.mrf.mxu0
      %v2982 = vadd.f32 0.0, %v2981
      %2983 = vdwg.mxu0
      %v2984 = vadd.f32 %v2893, %v2982
      %2985 = vrot.lane.b32.xlu0 %v2691, 104
      %v2986 = vpop.permute.xlu0 %2985
      %2987 = vrot.lane.b32.xlu0 %v2717, 104
      %v2988 = vpop.permute.xlu0 %2987
      %v2989 = vsel %vm1114, %v2986, 0
      %v2991 = vsel %vm1114, %v2988, 0
      %2993 = vmatpush.xpose.msra.mxu0 0.0
      %2994 = vmatpush.xpose.msra.mxu0 0.0
      %2995 = vmatpush.xpose.msra.mxu0 0.0
      %2996 = vmatpush.xpose.msra.mxu0 0.0
      %2997 = vmatpush.xpose.msra.mxu0 0.0
      %2998 = vmatpush.xpose.msra.mxu0 0.0
      %2999 = vmatpush.xpose.msra.mxu0 0.0
      %3000 = vmatpush.xpose.msra.mxu0 0.0
      %3001 = vmatpush.xpose.msra.mxu0 0.0
      %3002 = vmatpush.xpose.msra.mxu0 0.0
      %3003 = vmatpush.xpose.msra.mxu0 0.0
      %3004 = vmatpush.xpose.msra.mxu0 0.0
      %3005 = vmatpush.xpose.msra.mxu0 0.0
      %3006 = vmatpush.xpose.msra.mxu0 0.0
      %3007 = vmatpush.xpose.msra.mxu0 0.0
      %3008 = vmatpush.xpose.msra.mxu0 %v2991
      %3009 = vmatmul.f32.gmra.mxu0 %v2989
      %v3010 = vpop.f32.mrf.mxu0
      %v3011 = vadd.f32 0.0, %v3010
      %3012 = vdwg.mxu0
      %v3013 = vmul.f32 %v3011, 0.35355338
      %v3014 = vsel %vm1114, %v3013, -inf
      %3015 = vmax.xlane.f32.xlu0 %v3014
      %v3016 = vpop.xlane.xlu0 %3015
      %v3017 = vsub.f32 %v3013, %v3016
      %v3018 = vmul.f32 %v3017, 1.442695
      %v3019 = vpow.pop %v3018
      %v3020 = vsel %vm1114, %v3019, 0.0
      %3021 = vadd.xlane.f32.xlu0 %v3020
      %v3022 = vpop.xlane.xlu0 %3021
      %v3023 = vrcp.pop %v3022
      %v3024 = vmul.f32 %v3019, %v3023
      %3025 = vrot.lane.b32.xlu0 %v2717, 72
      %v3026 = vpop.permute.xlu0 %3025
      %v3029 = vsel %vm1114, %v3024, 0
      %3031 = vmatpush.msra.mxu0 0.0
      %3032 = vmatpush.msra.mxu0 0.0
      %3033 = vmatpush.msra.mxu0 0.0
      %3034 = vmatpush.msra.mxu0 0.0
      %3035 = vmatpush.msra.mxu0 0.0
      %3036 = vmatpush.msra.mxu0 0.0
      %3037 = vmatpush.msra.mxu0 0.0
      %3038 = vmatpush.msra.mxu0 0.0
      %3039 = vmatpush.msra.mxu0 0.0
      %3040 = vmatpush.msra.mxu0 0.0
      %3041 = vmatpush.msra.mxu0 0.0
      %3042 = vmatpush.msra.mxu0 0.0
      %3043 = vmatpush.msra.mxu0 0.0
      %3044 = vmatpush.msra.mxu0 0.0
      %3045 = vmatpush.msra.mxu0 0.0
      %3046 = vmatpush.msra.mxu0 %v3026
      %3047 = vmatmul.f32.gmra.mxu0 %v3029
      %v3048 = vpop.f32.mrf.mxu0
      %v3049 = vadd.f32 0.0, %v3048
      %3050 = vdwg.mxu0
      %v3052 = vsel %vm1114, %v3049, 0
      %3054 = vmatpush.msra.mxu0 0.0
      %3055 = vmatpush.msra.mxu0 0.0
      %3056 = vmatpush.msra.mxu0 0.0
      %3057 = vmatpush.msra.mxu0 0.0
      %3058 = vmatpush.msra.mxu0 0.0
      %3059 = vmatpush.msra.mxu0 0.0
      %3060 = vmatpush.msra.mxu0 0.0
      %3061 = vmatpush.msra.mxu0 0.0
      %3062 = vmatpush.msra.mxu0 0.0
      %3063 = vmatpush.msra.mxu0 0.0
      %3064 = vmatpush.msra.mxu0 0.0
      %3065 = vmatpush.msra.mxu0 0.0
      %3066 = vmatpush.msra.mxu0 0.0
      %3067 = vmatpush.msra.mxu0 0.0
      %3068 = vmatpush.msra.mxu0 0.0
      %3069 = vmatpush.msra.mxu0 %v2668
      %3070 = vmatmul.f32.gmra.mxu0 %v3052
      %v3071 = vpop.f32.mrf.mxu0
      %v3072 = vadd.f32 0.0, %v3071
      %3073 = vdwg.mxu0
      %v3074 = vadd.f32 %v2984, %v3072
      %v3075 = vperm.slane %v2229, 4
      %v3076 = vadd.f32 %v3074, %v3075
      %v3077 = vadd.f32 %v2655, %v3076
      %v3078 = vsel %vm1049, %v3077, 0.0
      %3079 = vadd.xlane.f32.xlu0 %v3078
      %v3080 = vpop.xlane.xlu0 %3079
      %v3081 = vmul.f32 %v3080, %v1481
      %v3082 = vsub.f32 %v3077, %v3081
      %v3083 = vmul.f32 %v3082, %v3082
      %v3084 = vsel %vm1049, %v3083, 0.0
      %3085 = vadd.xlane.f32.xlu0 %v3084
      %v3086 = vpop.xlane.xlu0 %3085
      %v3087 = vmul.f32 %v3086, %v1481
      %v3088 = vadd.f32 %v3087, 1e-05
      %v3089 = vrsqrt.pop %v3088
      %v3090 = vmul.f32 %v3089, %v3088
      %v3091 = vmul.f32 %v3090, %v3089
      %v3092 = vmul.f32 0.5, %v3091
      %v3093 = vsub.f32 1.5, %v3092
      %v3094 = vmul.f32 %v3089, %v3093
      %vm3095 = vweird.f32 %v3088
      %vm3096 = vweird.f32 %v3089
      %vm3097 = vmor %vm3095, %vm3096
      %v3098 = vsel %vm3097, %v3089, %v3094
      %v3099 = vmul.f32 %v3082, %v3098
      %v3100 = vperm.slane %v2229, 5
      %v3101 = vmul.f32 %v3099, %v3100
      %v3102 = vperm.slane %v2229, 6
      %v3103 = vadd.f32 %v3101, %v3102
      %v3104 = vpack.c.bf16 %v3103, %v3103
      %v3105 = vld [vmem:[%s43] sm:$0xff]
      %v3106 = vld [vmem:[%s43 + $0x8] sm:$0xff]
      %v3107 = vld [vmem:[%s43 + $0x10] sm:$0xff]
      %v3108 = vld [vmem:[%s43 + $0x18] sm:$0xff]
      %v3109 = vld [vmem:[%s43 + $0x20] sm:$0xff]
      %v3110 = vld [vmem:[%s43 + $0x28] sm:$0xff]
      %v3111 = vld [vmem:[%s43 + $0x30] sm:$0xff]
      %v3112 = vld [vmem:[%s43 + $0x38] sm:$0xff]
      %v3113 = vld [vmem:[%s43 + $0x40] sm:$0xff]
      %v3114 = vld [vmem:[%s43 + $0x48] sm:$0xff]
      %v3115 = vld [vmem:[%s43 + $0x50] sm:$0xff]
      %v3116 = vld [vmem:[%s43 + $0x58] sm:$0xff]
      %v3117 = vld [vmem:[%s43 + $0x60] sm:$0xff]
      %v3118 = vld [vmem:[%s43 + $0x68] sm:$0xff]
      %v3119 = vld [vmem:[%s43 + $0x70] sm:$0xff]
      %v3120 = vld [vmem:[%s43 + $0x78] sm:$0xff]
      %v3121 = vld [vmem:[%s43 + $0x80] sm:$0xff]
      %v3122 = vld [vmem:[%s43 + $0x88] sm:$0xff]
      %v3123 = vld [vmem:[%s43 + $0x90] sm:$0xff]
      %v3124 = vld [vmem:[%s43 + $0x98] sm:$0xff]
      %v3125 = vld [vmem:[%s43 + $0xa0] sm:$0xff]
      %v3126 = vld [vmem:[%s43 + $0xa8] sm:$0xff]
      %v3127 = vld [vmem:[%s43 + $0xb0] sm:$0xff]
      %v3128 = vld [vmem:[%s43 + $0xb8] sm:$0xff]
      %v3129 = vld [vmem:[%s43 + $0xc0] sm:$0xff]
      %v3130 = vld [vmem:[%s43 + $0xc8] sm:$0xff]
      %v3131 = vld [vmem:[%s43 + $0xd0] sm:$0xff]
      %v3132 = vld [vmem:[%s43 + $0xd8] sm:$0xff]
      %v3133 = vld [vmem:[%s43 + $0xe0] sm:$0xff]
      %v3134 = vld [vmem:[%s43 + $0xe8] sm:$0xff]
      %v3135 = vld [vmem:[%s43 + $0xf0] sm:$0xff]
      %v3136 = vld [vmem:[%s43 + $0xf8] sm:$0xff]
      %v3137 = vld [vmem:[%s45] sm:$0xff]
      %v3138 = vld [vmem:[%s45 + $0x8] sm:$0xff]
      %v3141 = vperm.slane %v3137, 0
      %v3142 = vperm.slane %v3137, 1
      %v3143 = vperm.slane %v3137, 2
      %v3144 = vperm.slane %v3137, 3
      %v3145 = vperm.slane %v3137, 4
      %v3146 = vperm.slane %v3137, 5
      %v3147 = vperm.slane %v3137, 6
      %v3148 = vperm.slane %v3137, 7
      %v3149 = vperm.slane %v3138, 0
      %v3150 = vperm.slane %v3138, 1
      %v3151 = vperm.slane %v3138, 2
      %v3152 = vperm.slane %v3138, 3
      %v3153 = vperm.slane %v3138, 4
      %v3154 = vperm.slane %v3138, 5
      %v3155 = vperm.slane %v3138, 6
      %v3156 = vperm.slane %v3138, 7
      %v3205 = vunpack.c.l.b16 %v3105
      %v3206 = vunpack.c.h.b16 %v3105
      %v3207 = vunpack.c.l.b16 %v3106
      %v3208 = vunpack.c.h.b16 %v3106
      %v3209 = vunpack.c.l.b16 %v3107
      %v3210 = vunpack.c.h.b16 %v3107
      %v3211 = vunpack.c.l.b16 %v3108
      %v3212 = vunpack.c.h.b16 %v3108
      %v3213 = vunpack.c.l.b16 %v3109
      %v3214 = vunpack.c.h.b16 %v3109
      %v3215 = vunpack.c.l.b16 %v3110
      %v3216 = vunpack.c.h.b16 %v3110
      %v3217 = vunpack.c.l.b16 %v3111
      %v3218 = vunpack.c.h.b16 %v3111
      %v3219 = vunpack.c.l.b16 %v3112
      %v3220 = vunpack.c.h.b16 %v3112
      %v3221 = vunpack.c.l.b16 %v3113
      %v3222 = vunpack.c.h.b16 %v3113
      %v3223 = vunpack.c.l.b16 %v3114
      %v3224 = vunpack.c.h.b16 %v3114
      %v3225 = vunpack.c.l.b16 %v3115
      %v3226 = vunpack.c.h.b16 %v3115
      %v3227 = vunpack.c.l.b16 %v3116
      %v3228 = vunpack.c.h.b16 %v3116
      %v3229 = vunpack.c.l.b16 %v3117
      %v3230 = vunpack.c.h.b16 %v3117
      %v3231 = vunpack.c.l.b16 %v3118
      %v3232 = vunpack.c.h.b16 %v3118
      %v3233 = vunpack.c.l.b16 %v3119
      %v3234 = vunpack.c.h.b16 %v3119
      %v3235 = vunpack.c.l.b16 %v3120
      %v3236 = vunpack.c.h.b16 %v3120
      %v3237 = vunpack.c.l.b16 %v3121
      %v3238 = vunpack.c.h.b16 %v3121
      %v3239 = vunpack.c.l.b16 %v3122
      %v3240 = vunpack.c.h.b16 %v3122
      %v3241 = vunpack.c.l.b16 %v3123
      %v3242 = vunpack.c.h.b16 %v3123
      %v3243 = vunpack.c.l.b16 %v3124
      %v3244 = vunpack.c.h.b16 %v3124
      %v3245 = vunpack.c.l.b16 %v3125
      %v3246 = vunpack.c.h.b16 %v3125
      %v3247 = vunpack.c.l.b16 %v3126
      %v3248 = vunpack.c.h.b16 %v3126
      %v3249 = vunpack.c.l.b16 %v3127
      %v3250 = vunpack.c.h.b16 %v3127
      %v3251 = vunpack.c.l.b16 %v3128
      %v3252 = vunpack.c.h.b16 %v3128
      %v3253 = vunpack.c.l.b16 %v3129
      %v3254 = vunpack.c.h.b16 %v3129
      %v3255 = vunpack.c.l.b16 %v3130
      %v3256 = vunpack.c.h.b16 %v3130
      %v3257 = vunpack.c.l.b16 %v3131
      %v3258 = vunpack.c.h.b16 %v3131
      %v3259 = vunpack.c.l.b16 %v3132
      %v3260 = vunpack.c.h.b16 %v3132
      %v3261 = vunpack.c.l.b16 %v3133
      %v3262 = vunpack.c.h.b16 %v3133
      %v3263 = vunpack.c.l.b16 %v3134
      %v3264 = vunpack.c.h.b16 %v3134
      %v3265 = vunpack.c.l.b16 %v3135
      %v3266 = vunpack.c.h.b16 %v3135
      %v3267 = vunpack.c.l.b16 %v3136
      %v3268 = vunpack.c.h.b16 %v3136
      %v3269 = vpack.c.b16 %v3221, %v3205
      %v3270 = vpack.c.b16 %v3222, %v3206
      %v3271 = vpack.c.b16 %v3223, %v3207
      %v3272 = vpack.c.b16 %v3224, %v3208
      %v3273 = vpack.c.b16 %v3225, %v3209
      %v3274 = vpack.c.b16 %v3226, %v3210
      %v3275 = vpack.c.b16 %v3227, %v3211
      %v3276 = vpack.c.b16 %v3228, %v3212
      %v3277 = vpack.c.b16 %v3229, %v3213
      %v3278 = vpack.c.b16 %v3230, %v3214
      %v3279 = vpack.c.b16 %v3231, %v3215
      %v3280 = vpack.c.b16 %v3232, %v3216
      %v3281 = vpack.c.b16 %v3233, %v3217
      %v3282 = vpack.c.b16 %v3234, %v3218
      %v3283 = vpack.c.b16 %v3235, %v3219
      %v3284 = vpack.c.b16 %v3236, %v3220
      %v3285 = vpack.c.b16 %v3253, %v3237
      %v3286 = vpack.c.b16 %v3254, %v3238
      %v3287 = vpack.c.b16 %v3255, %v3239
      %v3288 = vpack.c.b16 %v3256, %v3240
      %v3289 = vpack.c.b16 %v3257, %v3241
      %v3290 = vpack.c.b16 %v3258, %v3242
      %v3291 = vpack.c.b16 %v3259, %v3243
      %v3292 = vpack.c.b16 %v3260, %v3244
      %v3293 = vpack.c.b16 %v3261, %v3245
      %v3294 = vpack.c.b16 %v3262, %v3246
      %v3295 = vpack.c.b16 %v3263, %v3247
      %v3296 = vpack.c.b16 %v3264, %v3248
      %v3297 = vpack.c.b16 %v3265, %v3249
      %v3298 = vpack.c.b16 %v3266, %v3250
      %v3299 = vpack.c.b16 %v3267, %v3251
      %v3300 = vpack.c.b16 %v3268, %v3252
      %v3334 = vsel %vm1049, %v3104, 0
      %3336 = vmatpush.bf16.msra.mxu0 0
      %3337 = vmatpush.bf16.msra.mxu0 0
      %3338 = vmatpush.bf16.msra.mxu0 0
      %3339 = vmatpush.bf16.msra.mxu0 0
      %3340 = vmatpush.bf16.msra.mxu0 0
      %3341 = vmatpush.bf16.msra.mxu0 0
      %3342 = vmatpush.bf16.msra.mxu0 %v3285
      %3343 = vmatpush.bf16.msra.mxu0 %v3269
      %3344 = vmatmul.bf16.gmra.mxu0 %v3334
      %v3345 = vpop.f32.mrf.mxu0
      %v3346 = vadd.f32 %v3141, %v3345
      %v3347 = vpop.f32.mrf.mxu0
      %3348 = vdwg.mxu0
      %3349 = vmatpush.bf16.msra.mxu0 0
      %3350 = vmatpush.bf16.msra.mxu0 0
      %3351 = vmatpush.bf16.msra.mxu0 0
      %3352 = vmatpush.bf16.msra.mxu0 0
      %3353 = vmatpush.bf16.msra.mxu0 0
      %3354 = vmatpush.bf16.msra.mxu0 0
      %3355 = vmatpush.bf16.msra.mxu0 %v3286
      %3356 = vmatpush.bf16.msra.mxu0 %v3270
      %3357 = vmatmul.bf16.gmra.mxu0 %v3334
      %v3358 = vpop.f32.mrf.mxu0
      %v3359 = vadd.f32 %v3142, %v3358
      %v3360 = vpop.f32.mrf.mxu0
      %3361 = vdwg.mxu0
      %3362 = vmatpush.bf16.msra.mxu0 0
      %3363 = vmatpush.bf16.msra.mxu0 0
      %3364 = vmatpush.bf16.msra.mxu0 0
      %3365 = vmatpush.bf16.msra.mxu0 0
      %3366 = vmatpush.bf16.msra.mxu0 0
      %3367 = vmatpush.bf16.msra.mxu0 0
      %3368 = vmatpush.bf16.msra.mxu0 %v3287
      %3369 = vmatpush.bf16.msra.mxu0 %v3271
      %3370 = vmatmul.bf16.gmra.mxu0 %v3334
      %v3371 = vpop.f32.mrf.mxu0
      %v3372 = vadd.f32 %v3143, %v3371
      %v3373 = vpop.f32.mrf.mxu0
      %3374 = vdwg.mxu0
      %3375 = vmatpush.bf16.msra.mxu0 0
      %3376 = vmatpush.bf16.msra.mxu0 0
      %3377 = vmatpush.bf16.msra.mxu0 0
      %3378 = vmatpush.bf16.msra.mxu0 0
      %3379 = vmatpush.bf16.msra.mxu0 0
      %3380 = vmatpush.bf16.msra.mxu0 0
      %3381 = vmatpush.bf16.msra.mxu0 %v3288
      %3382 = vmatpush.bf16.msra.mxu0 %v3272
      %3383 = vmatmul.bf16.gmra.mxu0 %v3334
      %v3384 = vpop.f32.mrf.mxu0
      %v3385 = vadd.f32 %v3144, %v3384
      %v3386 = vpop.f32.mrf.mxu0
      %3387 = vdwg.mxu0
      %3388 = vmatpush.bf16.msra.mxu0 0
      %3389 = vmatpush.bf16.msra.mxu0 0
      %3390 = vmatpush.bf16.msra.mxu0 0
      %3391 = vmatpush.bf16.msra.mxu0 0
      %3392 = vmatpush.bf16.msra.mxu0 0
      %3393 = vmatpush.bf16.msra.mxu0 0
      %3394 = vmatpush.bf16.msra.mxu0 %v3289
      %3395 = vmatpush.bf16.msra.mxu0 %v3273
      %3396 = vmatmul.bf16.gmra.mxu0 %v3334
      %v3397 = vpop.f32.mrf.mxu0
      %v3398 = vadd.f32 %v3145, %v3397
      %v3399 = vpop.f32.mrf.mxu0
      %3400 = vdwg.mxu0
      %3401 = vmatpush.bf16.msra.mxu0 0
      %3402 = vmatpush.bf16.msra.mxu0 0
      %3403 = vmatpush.bf16.msra.mxu0 0
      %3404 = vmatpush.bf16.msra.mxu0 0
      %3405 = vmatpush.bf16.msra.mxu0 0
      %3406 = vmatpush.bf16.msra.mxu0 0
      %3407 = vmatpush.bf16.msra.mxu0 %v3290
      %3408 = vmatpush.bf16.msra.mxu0 %v3274
      %3409 = vmatmul.bf16.gmra.mxu0 %v3334
      %v3410 = vpop.f32.mrf.mxu0
      %v3411 = vadd.f32 %v3146, %v3410
      %v3412 = vpop.f32.mrf.mxu0
      %3413 = vdwg.mxu0
      %3414 = vmatpush.bf16.msra.mxu0 0
      %3415 = vmatpush.bf16.msra.mxu0 0
      %3416 = vmatpush.bf16.msra.mxu0 0
      %3417 = vmatpush.bf16.msra.mxu0 0
      %3418 = vmatpush.bf16.msra.mxu0 0
      %3419 = vmatpush.bf16.msra.mxu0 0
      %3420 = vmatpush.bf16.msra.mxu0 %v3291
      %3421 = vmatpush.bf16.msra.mxu0 %v3275
      %3422 = vmatmul.bf16.gmra.mxu0 %v3334
      %v3423 = vpop.f32.mrf.mxu0
      %v3424 = vadd.f32 %v3147, %v3423
      %v3425 = vpop.f32.mrf.mxu0
      %3426 = vdwg.mxu0
      %3427 = vmatpush.bf16.msra.mxu0 0
      %3428 = vmatpush.bf16.msra.mxu0 0
      %3429 = vmatpush.bf16.msra.mxu0 0
      %3430 = vmatpush.bf16.msra.mxu0 0
      %3431 = vmatpush.bf16.msra.mxu0 0
      %3432 = vmatpush.bf16.msra.mxu0 0
      %3433 = vmatpush.bf16.msra.mxu0 %v3292
      %3434 = vmatpush.bf16.msra.mxu0 %v3276
      %3435 = vmatmul.bf16.gmra.mxu0 %v3334
      %v3436 = vpop.f32.mrf.mxu0
      %v3437 = vadd.f32 %v3148, %v3436
      %v3438 = vpop.f32.mrf.mxu0
      %3439 = vdwg.mxu0
      %3440 = vmatpush.bf16.msra.mxu0 0
      %3441 = vmatpush.bf16.msra.mxu0 0
      %3442 = vmatpush.bf16.msra.mxu0 0
      %3443 = vmatpush.bf16.msra.mxu0 0
      %3444 = vmatpush.bf16.msra.mxu0 0
      %3445 = vmatpush.bf16.msra.mxu0 0
      %3446 = vmatpush.bf16.msra.mxu0 %v3293
      %3447 = vmatpush.bf16.msra.mxu0 %v3277
      %3448 = vmatmul.bf16.gmra.mxu0 %v3334
      %v3449 = vpop.f32.mrf.mxu0
      %v3450 = vadd.f32 %v3149, %v3449
      %v3451 = vpop.f32.mrf.mxu0
      %3452 = vdwg.mxu0
      %3453 = vmatpush.bf16.msra.mxu0 0
      %3454 = vmatpush.bf16.msra.mxu0 0
      %3455 = vmatpush.bf16.msra.mxu0 0
      %3456 = vmatpush.bf16.msra.mxu0 0
      %3457 = vmatpush.bf16.msra.mxu0 0
      %3458 = vmatpush.bf16.msra.mxu0 0
      %3459 = vmatpush.bf16.msra.mxu0 %v3294
      %3460 = vmatpush.bf16.msra.mxu0 %v3278
      %3461 = vmatmul.bf16.gmra.mxu0 %v3334
      %v3462 = vpop.f32.mrf.mxu0
      %v3463 = vadd.f32 %v3150, %v3462
      %v3464 = vpop.f32.mrf.mxu0
      %3465 = vdwg.mxu0
      %3466 = vmatpush.bf16.msra.mxu0 0
      %3467 = vmatpush.bf16.msra.mxu0 0
      %3468 = vmatpush.bf16.msra.mxu0 0
      %3469 = vmatpush.bf16.msra.mxu0 0
      %3470 = vmatpush.bf16.msra.mxu0 0
      %3471 = vmatpush.bf16.msra.mxu0 0
      %3472 = vmatpush.bf16.msra.mxu0 %v3295
      %3473 = vmatpush.bf16.msra.mxu0 %v3279
      %3474 = vmatmul.bf16.gmra.mxu0 %v3334
      %v3475 = vpop.f32.mrf.mxu0
      %v3476 = vadd.f32 %v3151, %v3475
      %v3477 = vpop.f32.mrf.mxu0
      %3478 = vdwg.mxu0
      %3479 = vmatpush.bf16.msra.mxu0 0
      %3480 = vmatpush.bf16.msra.mxu0 0
      %3481 = vmatpush.bf16.msra.mxu0 0
      %3482 = vmatpush.bf16.msra.mxu0 0
      %3483 = vmatpush.bf16.msra.mxu0 0
      %3484 = vmatpush.bf16.msra.mxu0 0
      %3485 = vmatpush.bf16.msra.mxu0 %v3296
      %3486 = vmatpush.bf16.msra.mxu0 %v3280
      %3487 = vmatmul.bf16.gmra.mxu0 %v3334
      %v3488 = vpop.f32.mrf.mxu0
      %v3489 = vadd.f32 %v3152, %v3488
      %v3490 = vpop.f32.mrf.mxu0
      %3491 = vdwg.mxu0
      %3492 = vmatpush.bf16.msra.mxu0 0
      %3493 = vmatpush.bf16.msra.mxu0 0
      %3494 = vmatpush.bf16.msra.mxu0 0
      %3495 = vmatpush.bf16.msra.mxu0 0
      %3496 = vmatpush.bf16.msra.mxu0 0
      %3497 = vmatpush.bf16.msra.mxu0 0
      %3498 = vmatpush.bf16.msra.mxu0 %v3297
      %3499 = vmatpush.bf16.msra.mxu0 %v3281
      %3500 = vmatmul.bf16.gmra.mxu0 %v3334
      %v3501 = vpop.f32.mrf.mxu0
      %v3502 = vadd.f32 %v3153, %v3501
      %v3503 = vpop.f32.mrf.mxu0
      %3504 = vdwg.mxu0
      %3505 = vmatpush.bf16.msra.mxu0 0
      %3506 = vmatpush.bf16.msra.mxu0 0
      %3507 = vmatpush.bf16.msra.mxu0 0
      %3508 = vmatpush.bf16.msra.mxu0 0
      %3509 = vmatpush.bf16.msra.mxu0 0
      %3510 = vmatpush.bf16.msra.mxu0 0
      %3511 = vmatpush.bf16.msra.mxu0 %v3298
      %3512 = vmatpush.bf16.msra.mxu0 %v3282
      %3513 = vmatmul.bf16.gmra.mxu0 %v3334
      %v3514 = vpop.f32.mrf.mxu0
      %v3515 = vadd.f32 %v3154, %v3514
      %v3516 = vpop.f32.mrf.mxu0
      %3517 = vdwg.mxu0
      %3518 = vmatpush.bf16.msra.mxu0 0
      %3519 = vmatpush.bf16.msra.mxu0 0
      %3520 = vmatpush.bf16.msra.mxu0 0
      %3521 = vmatpush.bf16.msra.mxu0 0
      %3522 = vmatpush.bf16.msra.mxu0 0
      %3523 = vmatpush.bf16.msra.mxu0 0
      %3524 = vmatpush.bf16.msra.mxu0 %v3299
      %3525 = vmatpush.bf16.msra.mxu0 %v3283
      %3526 = vmatmul.bf16.gmra.mxu0 %v3334
      %v3527 = vpop.f32.mrf.mxu0
      %v3528 = vadd.f32 %v3155, %v3527
      %v3529 = vpop.f32.mrf.mxu0
      %3530 = vdwg.mxu0
      %3531 = vmatpush.bf16.msra.mxu0 0
      %3532 = vmatpush.bf16.msra.mxu0 0
      %3533 = vmatpush.bf16.msra.mxu0 0
      %3534 = vmatpush.bf16.msra.mxu0 0
      %3535 = vmatpush.bf16.msra.mxu0 0
      %3536 = vmatpush.bf16.msra.mxu0 0
      %3537 = vmatpush.bf16.msra.mxu0 %v3300
      %3538 = vmatpush.bf16.msra.mxu0 %v3284
      %3539 = vmatmul.bf16.gmra.mxu0 %v3334
      %v3540 = vpop.f32.mrf.mxu0
      %v3541 = vadd.f32 %v3156, %v3540
      %v3542 = vpop.f32.mrf.mxu0
      %3543 = vdwg.mxu0
      %v3544 = vmax.f32 %v3346, 0.0
      %v3545 = vmax.f32 %v3359, 0.0
      %v3546 = vmax.f32 %v3372, 0.0
      %v3547 = vmax.f32 %v3385, 0.0
      %v3548 = vmax.f32 %v3398, 0.0
      %v3549 = vmax.f32 %v3411, 0.0
      %v3550 = vmax.f32 %v3424, 0.0
      %v3551 = vmax.f32 %v3437, 0.0
      %v3552 = vmax.f32 %v3450, 0.0
      %v3553 = vmax.f32 %v3463, 0.0
      %v3554 = vmax.f32 %v3476, 0.0
      %v3555 = vmax.f32 %v3489, 0.0
      %v3556 = vmax.f32 %v3502, 0.0
      %v3557 = vmax.f32 %v3515, 0.0
      %v3558 = vmax.f32 %v3528, 0.0
      %v3559 = vmax.f32 %v3541, 0.0
      %v3560 = vpack.c.bf16 %v3544, %v3544
      %v3561 = vpack.c.bf16 %v3545, %v3545
      %v3562 = vpack.c.bf16 %v3546, %v3546
      %v3563 = vpack.c.bf16 %v3547, %v3547
      %v3564 = vpack.c.bf16 %v3548, %v3548
      %v3565 = vpack.c.bf16 %v3549, %v3549
      %v3566 = vpack.c.bf16 %v3550, %v3550
      %v3567 = vpack.c.bf16 %v3551, %v3551
      %v3568 = vpack.c.bf16 %v3552, %v3552
      %v3569 = vpack.c.bf16 %v3553, %v3553
      %v3570 = vpack.c.bf16 %v3554, %v3554
      %v3571 = vpack.c.bf16 %v3555, %v3555
      %v3572 = vpack.c.bf16 %v3556, %v3556
      %v3573 = vpack.c.bf16 %v3557, %v3557
      %v3574 = vpack.c.bf16 %v3558, %v3558
      %v3575 = vpack.c.bf16 %v3559, %v3559
      %v3576 = vld [vmem:[%s47] sm:$0xf]
      %v3577 = vld [vmem:[%s47 + $0x4] sm:$0xf]
      %v3578 = vld [vmem:[%s47 + $0x8] sm:$0xf]
      %v3579 = vld [vmem:[%s47 + $0xc] sm:$0xf]
      %v3580 = vld [vmem:[%s47 + $0x10] sm:$0xf]
      %v3581 = vld [vmem:[%s47 + $0x14] sm:$0xf]
      %v3582 = vld [vmem:[%s47 + $0x18] sm:$0xf]
      %v3583 = vld [vmem:[%s47 + $0x1c] sm:$0xf]
      %v3584 = vld [vmem:[%s47 + $0x20] sm:$0xf]
      %v3585 = vld [vmem:[%s47 + $0x24] sm:$0xf]
      %v3586 = vld [vmem:[%s47 + $0x28] sm:$0xf]
      %v3587 = vld [vmem:[%s47 + $0x2c] sm:$0xf]
      %v3588 = vld [vmem:[%s47 + $0x30] sm:$0xf]
      %v3589 = vld [vmem:[%s47 + $0x34] sm:$0xf]
      %v3590 = vld [vmem:[%s47 + $0x38] sm:$0xf]
      %v3591 = vld [vmem:[%s47 + $0x3c] sm:$0xf]
      %v3592 = vld [vmem:[%s47 + $0x40] sm:$0xf]
      %v3593 = vld [vmem:[%s47 + $0x44] sm:$0xf]
      %v3594 = vld [vmem:[%s47 + $0x48] sm:$0xf]
      %v3595 = vld [vmem:[%s47 + $0x4c] sm:$0xf]
      %v3596 = vld [vmem:[%s47 + $0x50] sm:$0xf]
      %v3597 = vld [vmem:[%s47 + $0x54] sm:$0xf]
      %v3598 = vld [vmem:[%s47 + $0x58] sm:$0xf]
      %v3599 = vld [vmem:[%s47 + $0x5c] sm:$0xf]
      %v3600 = vld [vmem:[%s47 + $0x60] sm:$0xf]
      %v3601 = vld [vmem:[%s47 + $0x64] sm:$0xf]
      %v3602 = vld [vmem:[%s47 + $0x68] sm:$0xf]
      %v3603 = vld [vmem:[%s47 + $0x6c] sm:$0xf]
      %v3604 = vld [vmem:[%s47 + $0x70] sm:$0xf]
      %v3605 = vld [vmem:[%s47 + $0x74] sm:$0xf]
      %v3606 = vld [vmem:[%s47 + $0x78] sm:$0xf]
      %v3607 = vld [vmem:[%s47 + $0x7c] sm:$0xf]
      %v3608 = vld [vmem:[%s47 + $0x80] sm:$0xf]
      %v3609 = vld [vmem:[%s47 + $0x84] sm:$0xf]
      %v3610 = vld [vmem:[%s47 + $0x88] sm:$0xf]
      %v3611 = vld [vmem:[%s47 + $0x8c] sm:$0xf]
      %v3612 = vld [vmem:[%s47 + $0x90] sm:$0xf]
      %v3613 = vld [vmem:[%s47 + $0x94] sm:$0xf]
      %v3614 = vld [vmem:[%s47 + $0x98] sm:$0xf]
      %v3615 = vld [vmem:[%s47 + $0x9c] sm:$0xf]
      %v3616 = vld [vmem:[%s47 + $0xa0] sm:$0xf]
      %v3617 = vld [vmem:[%s47 + $0xa4] sm:$0xf]
      %v3618 = vld [vmem:[%s47 + $0xa8] sm:$0xf]
      %v3619 = vld [vmem:[%s47 + $0xac] sm:$0xf]
      %v3620 = vld [vmem:[%s47 + $0xb0] sm:$0xf]
      %v3621 = vld [vmem:[%s47 + $0xb4] sm:$0xf]
      %v3622 = vld [vmem:[%s47 + $0xb8] sm:$0xf]
      %v3623 = vld [vmem:[%s47 + $0xbc] sm:$0xf]
      %v3624 = vld [vmem:[%s47 + $0xc0] sm:$0xf]
      %v3625 = vld [vmem:[%s47 + $0xc4] sm:$0xf]
      %v3626 = vld [vmem:[%s47 + $0xc8] sm:$0xf]
      %v3627 = vld [vmem:[%s47 + $0xcc] sm:$0xf]
      %v3628 = vld [vmem:[%s47 + $0xd0] sm:$0xf]
      %v3629 = vld [vmem:[%s47 + $0xd4] sm:$0xf]
      %v3630 = vld [vmem:[%s47 + $0xd8] sm:$0xf]
      %v3631 = vld [vmem:[%s47 + $0xdc] sm:$0xf]
      %v3632 = vld [vmem:[%s47 + $0xe0] sm:$0xf]
      %v3633 = vld [vmem:[%s47 + $0xe4] sm:$0xf]
      %v3634 = vld [vmem:[%s47 + $0xe8] sm:$0xf]
      %v3635 = vld [vmem:[%s47 + $0xec] sm:$0xf]
      %v3636 = vld [vmem:[%s47 + $0xf0] sm:$0xf]
      %v3637 = vld [vmem:[%s47 + $0xf4] sm:$0xf]
      %v3638 = vld [vmem:[%s47 + $0xf8] sm:$0xf]
      %v3639 = vld [vmem:[%s47 + $0xfc] sm:$0xf]
      %v3640 = vld [vmem:[%s47 + $0x100] sm:$0xf]
      %v3641 = vld [vmem:[%s47 + $0x104] sm:$0xf]
      %v3642 = vld [vmem:[%s47 + $0x108] sm:$0xf]
      %v3643 = vld [vmem:[%s47 + $0x10c] sm:$0xf]
      %v3644 = vld [vmem:[%s47 + $0x110] sm:$0xf]
      %v3645 = vld [vmem:[%s47 + $0x114] sm:$0xf]
      %v3646 = vld [vmem:[%s47 + $0x118] sm:$0xf]
      %v3647 = vld [vmem:[%s47 + $0x11c] sm:$0xf]
      %v3648 = vld [vmem:[%s47 + $0x120] sm:$0xf]
      %v3649 = vld [vmem:[%s47 + $0x124] sm:$0xf]
      %v3650 = vld [vmem:[%s47 + $0x128] sm:$0xf]
      %v3651 = vld [vmem:[%s47 + $0x12c] sm:$0xf]
      %v3652 = vld [vmem:[%s47 + $0x130] sm:$0xf]
      %v3653 = vld [vmem:[%s47 + $0x134] sm:$0xf]
      %v3654 = vld [vmem:[%s47 + $0x138] sm:$0xf]
      %v3655 = vld [vmem:[%s47 + $0x13c] sm:$0xf]
      %v3656 = vld [vmem:[%s47 + $0x140] sm:$0xf]
      %v3657 = vld [vmem:[%s47 + $0x144] sm:$0xf]
      %v3658 = vld [vmem:[%s47 + $0x148] sm:$0xf]
      %v3659 = vld [vmem:[%s47 + $0x14c] sm:$0xf]
      %v3660 = vld [vmem:[%s47 + $0x150] sm:$0xf]
      %v3661 = vld [vmem:[%s47 + $0x154] sm:$0xf]
      %v3662 = vld [vmem:[%s47 + $0x158] sm:$0xf]
      %v3663 = vld [vmem:[%s47 + $0x15c] sm:$0xf]
      %v3664 = vld [vmem:[%s47 + $0x160] sm:$0xf]
      %v3665 = vld [vmem:[%s47 + $0x164] sm:$0xf]
      %v3666 = vld [vmem:[%s47 + $0x168] sm:$0xf]
      %v3667 = vld [vmem:[%s47 + $0x16c] sm:$0xf]
      %v3668 = vld [vmem:[%s47 + $0x170] sm:$0xf]
      %v3669 = vld [vmem:[%s47 + $0x174] sm:$0xf]
      %v3670 = vld [vmem:[%s47 + $0x178] sm:$0xf]
      %v3671 = vld [vmem:[%s47 + $0x17c] sm:$0xf]
      %v3672 = vld [vmem:[%s47 + $0x180] sm:$0xf]
      %v3673 = vld [vmem:[%s47 + $0x184] sm:$0xf]
      %v3674 = vld [vmem:[%s47 + $0x188] sm:$0xf]
      %v3675 = vld [vmem:[%s47 + $0x18c] sm:$0xf]
      %v3676 = vld [vmem:[%s47 + $0x190] sm:$0xf]
      %v3677 = vld [vmem:[%s47 + $0x194] sm:$0xf]
      %v3678 = vld [vmem:[%s47 + $0x198] sm:$0xf]
      %v3679 = vld [vmem:[%s47 + $0x19c] sm:$0xf]
      %v3680 = vld [vmem:[%s47 + $0x1a0] sm:$0xf]
      %v3681 = vld [vmem:[%s47 + $0x1a4] sm:$0xf]
      %v3682 = vld [vmem:[%s47 + $0x1a8] sm:$0xf]
      %v3683 = vld [vmem:[%s47 + $0x1ac] sm:$0xf]
      %v3684 = vld [vmem:[%s47 + $0x1b0] sm:$0xf]
      %v3685 = vld [vmem:[%s47 + $0x1b4] sm:$0xf]
      %v3686 = vld [vmem:[%s47 + $0x1b8] sm:$0xf]
      %v3687 = vld [vmem:[%s47 + $0x1bc] sm:$0xf]
      %v3688 = vld [vmem:[%s47 + $0x1c0] sm:$0xf]
      %v3689 = vld [vmem:[%s47 + $0x1c4] sm:$0xf]
      %v3690 = vld [vmem:[%s47 + $0x1c8] sm:$0xf]
      %v3691 = vld [vmem:[%s47 + $0x1cc] sm:$0xf]
      %v3692 = vld [vmem:[%s47 + $0x1d0] sm:$0xf]
      %v3693 = vld [vmem:[%s47 + $0x1d4] sm:$0xf]
      %v3694 = vld [vmem:[%s47 + $0x1d8] sm:$0xf]
      %v3695 = vld [vmem:[%s47 + $0x1dc] sm:$0xf]
      %v3696 = vld [vmem:[%s47 + $0x1e0] sm:$0xf]
      %v3697 = vld [vmem:[%s47 + $0x1e4] sm:$0xf]
      %v3698 = vld [vmem:[%s47 + $0x1e8] sm:$0xf]
      %v3699 = vld [vmem:[%s47 + $0x1ec] sm:$0xf]
      %v3700 = vld [vmem:[%s47 + $0x1f0] sm:$0xf]
      %v3701 = vld [vmem:[%s47 + $0x1f4] sm:$0xf]
      %v3702 = vld [vmem:[%s47 + $0x1f8] sm:$0xf]
      %v3703 = vld [vmem:[%s47 + $0x1fc] sm:$0xf]
      %v3704 = vld [vmem:[%s47 + $0x200] sm:$0xf]
      %v3705 = vld [vmem:[%s47 + $0x204] sm:$0xf]
      %v3706 = vld [vmem:[%s47 + $0x208] sm:$0xf]
      %v3707 = vld [vmem:[%s47 + $0x20c] sm:$0xf]
      %v3708 = vld [vmem:[%s47 + $0x210] sm:$0xf]
      %v3709 = vld [vmem:[%s47 + $0x214] sm:$0xf]
      %v3710 = vld [vmem:[%s47 + $0x218] sm:$0xf]
      %v3711 = vld [vmem:[%s47 + $0x21c] sm:$0xf]
      %v3712 = vld [vmem:[%s47 + $0x220] sm:$0xf]
      %v3713 = vld [vmem:[%s47 + $0x224] sm:$0xf]
      %v3714 = vld [vmem:[%s47 + $0x228] sm:$0xf]
      %v3715 = vld [vmem:[%s47 + $0x22c] sm:$0xf]
      %v3716 = vld [vmem:[%s47 + $0x230] sm:$0xf]
      %v3717 = vld [vmem:[%s47 + $0x234] sm:$0xf]
      %v3718 = vld [vmem:[%s47 + $0x238] sm:$0xf]
      %v3719 = vld [vmem:[%s47 + $0x23c] sm:$0xf]
      %v3720 = vld [vmem:[%s47 + $0x240] sm:$0xf]
      %v3721 = vld [vmem:[%s47 + $0x244] sm:$0xf]
      %v3722 = vld [vmem:[%s47 + $0x248] sm:$0xf]
      %v3723 = vld [vmem:[%s47 + $0x24c] sm:$0xf]
      %v3724 = vld [vmem:[%s47 + $0x250] sm:$0xf]
      %v3725 = vld [vmem:[%s47 + $0x254] sm:$0xf]
      %v3726 = vld [vmem:[%s47 + $0x258] sm:$0xf]
      %v3727 = vld [vmem:[%s47 + $0x25c] sm:$0xf]
      %v3728 = vld [vmem:[%s47 + $0x260] sm:$0xf]
      %v3729 = vld [vmem:[%s47 + $0x264] sm:$0xf]
      %v3730 = vld [vmem:[%s47 + $0x268] sm:$0xf]
      %v3731 = vld [vmem:[%s47 + $0x26c] sm:$0xf]
      %v3732 = vld [vmem:[%s47 + $0x270] sm:$0xf]
      %v3733 = vld [vmem:[%s47 + $0x274] sm:$0xf]
      %v3734 = vld [vmem:[%s47 + $0x278] sm:$0xf]
      %v3735 = vld [vmem:[%s47 + $0x27c] sm:$0xf]
      %v3736 = vld [vmem:[%s47 + $0x280] sm:$0xf]
      %v3737 = vld [vmem:[%s47 + $0x284] sm:$0xf]
      %v3738 = vld [vmem:[%s47 + $0x288] sm:$0xf]
      %v3739 = vld [vmem:[%s47 + $0x28c] sm:$0xf]
      %v3740 = vld [vmem:[%s47 + $0x290] sm:$0xf]
      %v3741 = vld [vmem:[%s47 + $0x294] sm:$0xf]
      %v3742 = vld [vmem:[%s47 + $0x298] sm:$0xf]
      %v3743 = vld [vmem:[%s47 + $0x29c] sm:$0xf]
      %v3744 = vld [vmem:[%s47 + $0x2a0] sm:$0xf]
      %v3745 = vld [vmem:[%s47 + $0x2a4] sm:$0xf]
      %v3746 = vld [vmem:[%s47 + $0x2a8] sm:$0xf]
      %v3747 = vld [vmem:[%s47 + $0x2ac] sm:$0xf]
      %v3748 = vld [vmem:[%s47 + $0x2b0] sm:$0xf]
      %v3749 = vld [vmem:[%s47 + $0x2b4] sm:$0xf]
      %v3750 = vld [vmem:[%s47 + $0x2b8] sm:$0xf]
      %v3751 = vld [vmem:[%s47 + $0x2bc] sm:$0xf]
      %v3752 = vld [vmem:[%s47 + $0x2c0] sm:$0xf]
      %v3753 = vld [vmem:[%s47 + $0x2c4] sm:$0xf]
      %v3754 = vld [vmem:[%s47 + $0x2c8] sm:$0xf]
      %v3755 = vld [vmem:[%s47 + $0x2cc] sm:$0xf]
      %v3756 = vld [vmem:[%s47 + $0x2d0] sm:$0xf]
      %v3757 = vld [vmem:[%s47 + $0x2d4] sm:$0xf]
      %v3758 = vld [vmem:[%s47 + $0x2d8] sm:$0xf]
      %v3759 = vld [vmem:[%s47 + $0x2dc] sm:$0xf]
      %v3760 = vld [vmem:[%s47 + $0x2e0] sm:$0xf]
      %v3761 = vld [vmem:[%s47 + $0x2e4] sm:$0xf]
      %v3762 = vld [vmem:[%s47 + $0x2e8] sm:$0xf]
      %v3763 = vld [vmem:[%s47 + $0x2ec] sm:$0xf]
      %v3764 = vld [vmem:[%s47 + $0x2f0] sm:$0xf]
      %v3765 = vld [vmem:[%s47 + $0x2f4] sm:$0xf]
      %v3766 = vld [vmem:[%s47 + $0x2f8] sm:$0xf]
      %v3767 = vld [vmem:[%s47 + $0x2fc] sm:$0xf]
      %v3768 = vld [vmem:[%s47 + $0x300] sm:$0xf]
      %v3769 = vld [vmem:[%s47 + $0x304] sm:$0xf]
      %v3770 = vld [vmem:[%s47 + $0x308] sm:$0xf]
      %v3771 = vld [vmem:[%s47 + $0x30c] sm:$0xf]
      %v3772 = vld [vmem:[%s47 + $0x310] sm:$0xf]
      %v3773 = vld [vmem:[%s47 + $0x314] sm:$0xf]
      %v3774 = vld [vmem:[%s47 + $0x318] sm:$0xf]
      %v3775 = vld [vmem:[%s47 + $0x31c] sm:$0xf]
      %v3776 = vld [vmem:[%s47 + $0x320] sm:$0xf]
      %v3777 = vld [vmem:[%s47 + $0x324] sm:$0xf]
      %v3778 = vld [vmem:[%s47 + $0x328] sm:$0xf]
      %v3779 = vld [vmem:[%s47 + $0x32c] sm:$0xf]
      %v3780 = vld [vmem:[%s47 + $0x330] sm:$0xf]
      %v3781 = vld [vmem:[%s47 + $0x334] sm:$0xf]
      %v3782 = vld [vmem:[%s47 + $0x338] sm:$0xf]
      %v3783 = vld [vmem:[%s47 + $0x33c] sm:$0xf]
      %v3784 = vld [vmem:[%s47 + $0x340] sm:$0xf]
      %v3785 = vld [vmem:[%s47 + $0x344] sm:$0xf]
      %v3786 = vld [vmem:[%s47 + $0x348] sm:$0xf]
      %v3787 = vld [vmem:[%s47 + $0x34c] sm:$0xf]
      %v3788 = vld [vmem:[%s47 + $0x350] sm:$0xf]
      %v3789 = vld [vmem:[%s47 + $0x354] sm:$0xf]
      %v3790 = vld [vmem:[%s47 + $0x358] sm:$0xf]
      %v3791 = vld [vmem:[%s47 + $0x35c] sm:$0xf]
      %v3792 = vld [vmem:[%s47 + $0x360] sm:$0xf]
      %v3793 = vld [vmem:[%s47 + $0x364] sm:$0xf]
      %v3794 = vld [vmem:[%s47 + $0x368] sm:$0xf]
      %v3795 = vld [vmem:[%s47 + $0x36c] sm:$0xf]
      %v3796 = vld [vmem:[%s47 + $0x370] sm:$0xf]
      %v3797 = vld [vmem:[%s47 + $0x374] sm:$0xf]
      %v3798 = vld [vmem:[%s47 + $0x378] sm:$0xf]
      %v3799 = vld [vmem:[%s47 + $0x37c] sm:$0xf]
      %v3800 = vld [vmem:[%s47 + $0x380] sm:$0xf]
      %v3801 = vld [vmem:[%s47 + $0x384] sm:$0xf]
      %v3802 = vld [vmem:[%s47 + $0x388] sm:$0xf]
      %v3803 = vld [vmem:[%s47 + $0x38c] sm:$0xf]
      %v3804 = vld [vmem:[%s47 + $0x390] sm:$0xf]
      %v3805 = vld [vmem:[%s47 + $0x394] sm:$0xf]
      %v3806 = vld [vmem:[%s47 + $0x398] sm:$0xf]
      %v3807 = vld [vmem:[%s47 + $0x39c] sm:$0xf]
      %v3808 = vld [vmem:[%s47 + $0x3a0] sm:$0xf]
      %v3809 = vld [vmem:[%s47 + $0x3a4] sm:$0xf]
      %v3810 = vld [vmem:[%s47 + $0x3a8] sm:$0xf]
      %v3811 = vld [vmem:[%s47 + $0x3ac] sm:$0xf]
      %v3812 = vld [vmem:[%s47 + $0x3b0] sm:$0xf]
      %v3813 = vld [vmem:[%s47 + $0x3b4] sm:$0xf]
      %v3814 = vld [vmem:[%s47 + $0x3b8] sm:$0xf]
      %v3815 = vld [vmem:[%s47 + $0x3bc] sm:$0xf]
      %v3816 = vld [vmem:[%s47 + $0x3c0] sm:$0xf]
      %v3817 = vld [vmem:[%s47 + $0x3c4] sm:$0xf]
      %v3818 = vld [vmem:[%s47 + $0x3c8] sm:$0xf]
      %v3819 = vld [vmem:[%s47 + $0x3cc] sm:$0xf]
      %v3820 = vld [vmem:[%s47 + $0x3d0] sm:$0xf]
      %v3821 = vld [vmem:[%s47 + $0x3d4] sm:$0xf]
      %v3822 = vld [vmem:[%s47 + $0x3d8] sm:$0xf]
      %v3823 = vld [vmem:[%s47 + $0x3dc] sm:$0xf]
      %v3824 = vld [vmem:[%s47 + $0x3e0] sm:$0xf]
      %v3825 = vld [vmem:[%s47 + $0x3e4] sm:$0xf]
      %v3826 = vld [vmem:[%s47 + $0x3e8] sm:$0xf]
      %v3827 = vld [vmem:[%s47 + $0x3ec] sm:$0xf]
      %v3828 = vld [vmem:[%s47 + $0x3f0] sm:$0xf]
      %v3829 = vld [vmem:[%s47 + $0x3f4] sm:$0xf]
      %v3830 = vld [vmem:[%s47 + $0x3f8] sm:$0xf]
      %v3831 = vld [vmem:[%s47 + $0x3fc] sm:$0xf]
      %v3832 = vperm.slane %v2229, 7
      %v4089 = vunpack.c.l.b16 %v3576
      %v4090 = vunpack.c.l.b16 %v3577
      %v4091 = vunpack.c.l.b16 %v3578
      %v4092 = vunpack.c.l.b16 %v3579
      %v4093 = vunpack.c.l.b16 %v3580
      %v4094 = vunpack.c.l.b16 %v3581
      %v4095 = vunpack.c.l.b16 %v3582
      %v4096 = vunpack.c.l.b16 %v3583
      %v4097 = vunpack.c.l.b16 %v3584
      %v4098 = vunpack.c.l.b16 %v3585
      %v4099 = vunpack.c.l.b16 %v3586
      %v4100 = vunpack.c.l.b16 %v3587
      %v4101 = vunpack.c.l.b16 %v3588
      %v4102 = vunpack.c.l.b16 %v3589
      %v4103 = vunpack.c.l.b16 %v3590
      %v4104 = vunpack.c.l.b16 %v3591
      %v4105 = vunpack.c.l.b16 %v3592
      %v4106 = vunpack.c.l.b16 %v3593
      %v4107 = vunpack.c.l.b16 %v3594
      %v4108 = vunpack.c.l.b16 %v3595
      %v4109 = vunpack.c.l.b16 %v3596
      %v4110 = vunpack.c.l.b16 %v3597
      %v4111 = vunpack.c.l.b16 %v3598
      %v4112 = vunpack.c.l.b16 %v3599
      %v4113 = vunpack.c.l.b16 %v3600
      %v4114 = vunpack.c.l.b16 %v3601
      %v4115 = vunpack.c.l.b16 %v3602
      %v4116 = vunpack.c.l.b16 %v3603
      %v4117 = vunpack.c.l.b16 %v3604
      %v4118 = vunpack.c.l.b16 %v3605
      %v4119 = vunpack.c.l.b16 %v3606
      %v4120 = vunpack.c.l.b16 %v3607
      %v4121 = vunpack.c.l.b16 %v3608
      %v4122 = vunpack.c.l.b16 %v3609
      %v4123 = vunpack.c.l.b16 %v3610
      %v4124 = vunpack.c.l.b16 %v3611
      %v4125 = vunpack.c.l.b16 %v3612
      %v4126 = vunpack.c.l.b16 %v3613
      %v4127 = vunpack.c.l.b16 %v3614
      %v4128 = vunpack.c.l.b16 %v3615
      %v4129 = vunpack.c.l.b16 %v3616
      %v4130 = vunpack.c.l.b16 %v3617
      %v4131 = vunpack.c.l.b16 %v3618
      %v4132 = vunpack.c.l.b16 %v3619
      %v4133 = vunpack.c.l.b16 %v3620
      %v4134 = vunpack.c.l.b16 %v3621
      %v4135 = vunpack.c.l.b16 %v3622
      %v4136 = vunpack.c.l.b16 %v3623
      %v4137 = vunpack.c.l.b16 %v3624
      %v4138 = vunpack.c.l.b16 %v3625
      %v4139 = vunpack.c.l.b16 %v3626
      %v4140 = vunpack.c.l.b16 %v3627
      %v4141 = vunpack.c.l.b16 %v3628
      %v4142 = vunpack.c.l.b16 %v3629
      %v4143 = vunpack.c.l.b16 %v3630
      %v4144 = vunpack.c.l.b16 %v3631
      %v4145 = vunpack.c.l.b16 %v3632
      %v4146 = vunpack.c.l.b16 %v3633
      %v4147 = vunpack.c.l.b16 %v3634
      %v4148 = vunpack.c.l.b16 %v3635
      %v4149 = vunpack.c.l.b16 %v3636
      %v4150 = vunpack.c.l.b16 %v3637
      %v4151 = vunpack.c.l.b16 %v3638
      %v4152 = vunpack.c.l.b16 %v3639
      %v4153 = vunpack.c.l.b16 %v3640
      %v4154 = vunpack.c.l.b16 %v3641
      %v4155 = vunpack.c.l.b16 %v3642
      %v4156 = vunpack.c.l.b16 %v3643
      %v4157 = vunpack.c.l.b16 %v3644
      %v4158 = vunpack.c.l.b16 %v3645
      %v4159 = vunpack.c.l.b16 %v3646
      %v4160 = vunpack.c.l.b16 %v3647
      %v4161 = vunpack.c.l.b16 %v3648
      %v4162 = vunpack.c.l.b16 %v3649
      %v4163 = vunpack.c.l.b16 %v3650
      %v4164 = vunpack.c.l.b16 %v3651
      %v4165 = vunpack.c.l.b16 %v3652
      %v4166 = vunpack.c.l.b16 %v3653
      %v4167 = vunpack.c.l.b16 %v3654
      %v4168 = vunpack.c.l.b16 %v3655
      %v4169 = vunpack.c.l.b16 %v3656
      %v4170 = vunpack.c.l.b16 %v3657
      %v4171 = vunpack.c.l.b16 %v3658
      %v4172 = vunpack.c.l.b16 %v3659
      %v4173 = vunpack.c.l.b16 %v3660
      %v4174 = vunpack.c.l.b16 %v3661
      %v4175 = vunpack.c.l.b16 %v3662
      %v4176 = vunpack.c.l.b16 %v3663
      %v4177 = vunpack.c.l.b16 %v3664
      %v4178 = vunpack.c.l.b16 %v3665
      %v4179 = vunpack.c.l.b16 %v3666
      %v4180 = vunpack.c.l.b16 %v3667
      %v4181 = vunpack.c.l.b16 %v3668
      %v4182 = vunpack.c.l.b16 %v3669
      %v4183 = vunpack.c.l.b16 %v3670
      %v4184 = vunpack.c.l.b16 %v3671
      %v4185 = vunpack.c.l.b16 %v3672
      %v4186 = vunpack.c.l.b16 %v3673
      %v4187 = vunpack.c.l.b16 %v3674
      %v4188 = vunpack.c.l.b16 %v3675
      %v4189 = vunpack.c.l.b16 %v3676
      %v4190 = vunpack.c.l.b16 %v3677
      %v4191 = vunpack.c.l.b16 %v3678
      %v4192 = vunpack.c.l.b16 %v3679
      %v4193 = vunpack.c.l.b16 %v3680
      %v4194 = vunpack.c.l.b16 %v3681
      %v4195 = vunpack.c.l.b16 %v3682
      %v4196 = vunpack.c.l.b16 %v3683
      %v4197 = vunpack.c.l.b16 %v3684
      %v4198 = vunpack.c.l.b16 %v3685
      %v4199 = vunpack.c.l.b16 %v3686
      %v4200 = vunpack.c.l.b16 %v3687
      %v4201 = vunpack.c.l.b16 %v3688
      %v4202 = vunpack.c.l.b16 %v3689
      %v4203 = vunpack.c.l.b16 %v3690
      %v4204 = vunpack.c.l.b16 %v3691
      %v4205 = vunpack.c.l.b16 %v3692
      %v4206 = vunpack.c.l.b16 %v3693
      %v4207 = vunpack.c.l.b16 %v3694
      %v4208 = vunpack.c.l.b16 %v3695
      %v4209 = vunpack.c.l.b16 %v3696
      %v4210 = vunpack.c.l.b16 %v3697
      %v4211 = vunpack.c.l.b16 %v3698
      %v4212 = vunpack.c.l.b16 %v3699
      %v4213 = vunpack.c.l.b16 %v3700
      %v4214 = vunpack.c.l.b16 %v3701
      %v4215 = vunpack.c.l.b16 %v3702
      %v4216 = vunpack.c.l.b16 %v3703
      %v4217 = vunpack.c.l.b16 %v3704
      %v4218 = vunpack.c.l.b16 %v3705
      %v4219 = vunpack.c.l.b16 %v3706
      %v4220 = vunpack.c.l.b16 %v3707
      %v4221 = vunpack.c.l.b16 %v3708
      %v4222 = vunpack.c.l.b16 %v3709
      %v4223 = vunpack.c.l.b16 %v3710
      %v4224 = vunpack.c.l.b16 %v3711
      %v4225 = vunpack.c.l.b16 %v3712
      %v4226 = vunpack.c.l.b16 %v3713
      %v4227 = vunpack.c.l.b16 %v3714
      %v4228 = vunpack.c.l.b16 %v3715
      %v4229 = vunpack.c.l.b16 %v3716
      %v4230 = vunpack.c.l.b16 %v3717
      %v4231 = vunpack.c.l.b16 %v3718
      %v4232 = vunpack.c.l.b16 %v3719
      %v4233 = vunpack.c.l.b16 %v3720
      %v4234 = vunpack.c.l.b16 %v3721
      %v4235 = vunpack.c.l.b16 %v3722
      %v4236 = vunpack.c.l.b16 %v3723
      %v4237 = vunpack.c.l.b16 %v3724
      %v4238 = vunpack.c.l.b16 %v3725
      %v4239 = vunpack.c.l.b16 %v3726
      %v4240 = vunpack.c.l.b16 %v3727
      %v4241 = vunpack.c.l.b16 %v3728
      %v4242 = vunpack.c.l.b16 %v3729
      %v4243 = vunpack.c.l.b16 %v3730
      %v4244 = vunpack.c.l.b16 %v3731
      %v4245 = vunpack.c.l.b16 %v3732
      %v4246 = vunpack.c.l.b16 %v3733
      %v4247 = vunpack.c.l.b16 %v3734
      %v4248 = vunpack.c.l.b16 %v3735
      %v4249 = vunpack.c.l.b16 %v3736
      %v4250 = vunpack.c.l.b16 %v3737
      %v4251 = vunpack.c.l.b16 %v3738
      %v4252 = vunpack.c.l.b16 %v3739
      %v4253 = vunpack.c.l.b16 %v3740
      %v4254 = vunpack.c.l.b16 %v3741
      %v4255 = vunpack.c.l.b16 %v3742
      %v4256 = vunpack.c.l.b16 %v3743
      %v4257 = vunpack.c.l.b16 %v3744
      %v4258 = vunpack.c.l.b16 %v3745
      %v4259 = vunpack.c.l.b16 %v3746
      %v4260 = vunpack.c.l.b16 %v3747
      %v4261 = vunpack.c.l.b16 %v3748
      %v4262 = vunpack.c.l.b16 %v3749
      %v4263 = vunpack.c.l.b16 %v3750
      %v4264 = vunpack.c.l.b16 %v3751
      %v4265 = vunpack.c.l.b16 %v3752
      %v4266 = vunpack.c.l.b16 %v3753
      %v4267 = vunpack.c.l.b16 %v3754
      %v4268 = vunpack.c.l.b16 %v3755
      %v4269 = vunpack.c.l.b16 %v3756
      %v4270 = vunpack.c.l.b16 %v3757
      %v4271 = vunpack.c.l.b16 %v3758
      %v4272 = vunpack.c.l.b16 %v3759
      %v4273 = vunpack.c.l.b16 %v3760
      %v4274 = vunpack.c.l.b16 %v3761
      %v4275 = vunpack.c.l.b16 %v3762
      %v4276 = vunpack.c.l.b16 %v3763
      %v4277 = vunpack.c.l.b16 %v3764
      %v4278 = vunpack.c.l.b16 %v3765
      %v4279 = vunpack.c.l.b16 %v3766
      %v4280 = vunpack.c.l.b16 %v3767
      %v4281 = vunpack.c.l.b16 %v3768
      %v4282 = vunpack.c.l.b16 %v3769
      %v4283 = vunpack.c.l.b16 %v3770
      %v4284 = vunpack.c.l.b16 %v3771
      %v4285 = vunpack.c.l.b16 %v3772
      %v4286 = vunpack.c.l.b16 %v3773
      %v4287 = vunpack.c.l.b16 %v3774
      %v4288 = vunpack.c.l.b16 %v3775
      %v4289 = vunpack.c.l.b16 %v3776
      %v4290 = vunpack.c.l.b16 %v3777
      %v4291 = vunpack.c.l.b16 %v3778
      %v4292 = vunpack.c.l.b16 %v3779
      %v4293 = vunpack.c.l.b16 %v3780
      %v4294 = vunpack.c.l.b16 %v3781
      %v4295 = vunpack.c.l.b16 %v3782
      %v4296 = vunpack.c.l.b16 %v3783
      %v4297 = vunpack.c.l.b16 %v3784
      %v4298 = vunpack.c.l.b16 %v3785
      %v4299 = vunpack.c.l.b16 %v3786
      %v4300 = vunpack.c.l.b16 %v3787
      %v4301 = vunpack.c.l.b16 %v3788
      %v4302 = vunpack.c.l.b16 %v3789
      %v4303 = vunpack.c.l.b16 %v3790
      %v4304 = vunpack.c.l.b16 %v3791
      %v4305 = vunpack.c.l.b16 %v3792
      %v4306 = vunpack.c.l.b16 %v3793
      %v4307 = vunpack.c.l.b16 %v3794
      %v4308 = vunpack.c.l.b16 %v3795
      %v4309 = vunpack.c.l.b16 %v3796
      %v4310 = vunpack.c.l.b16 %v3797
      %v4311 = vunpack.c.l.b16 %v3798
      %v4312 = vunpack.c.l.b16 %v3799
      %v4313 = vunpack.c.l.b16 %v3800
      %v4314 = vunpack.c.l.b16 %v3801
      %v4315 = vunpack.c.l.b16 %v3802
      %v4316 = vunpack.c.l.b16 %v3803
      %v4317 = vunpack.c.l.b16 %v3804
      %v4318 = vunpack.c.l.b16 %v3805
      %v4319 = vunpack.c.l.b16 %v3806
      %v4320 = vunpack.c.l.b16 %v3807
      %v4321 = vunpack.c.l.b16 %v3808
      %v4322 = vunpack.c.l.b16 %v3809
      %v4323 = vunpack.c.l.b16 %v3810
      %v4324 = vunpack.c.l.b16 %v3811
      %v4325 = vunpack.c.l.b16 %v3812
      %v4326 = vunpack.c.l.b16 %v3813
      %v4327 = vunpack.c.l.b16 %v3814
      %v4328 = vunpack.c.l.b16 %v3815
      %v4329 = vunpack.c.l.b16 %v3816
      %v4330 = vunpack.c.l.b16 %v3817
      %v4331 = vunpack.c.l.b16 %v3818
      %v4332 = vunpack.c.l.b16 %v3819
      %v4333 = vunpack.c.l.b16 %v3820
      %v4334 = vunpack.c.l.b16 %v3821
      %v4335 = vunpack.c.l.b16 %v3822
      %v4336 = vunpack.c.l.b16 %v3823
      %v4337 = vunpack.c.l.b16 %v3824
      %v4338 = vunpack.c.l.b16 %v3825
      %v4339 = vunpack.c.l.b16 %v3826
      %v4340 = vunpack.c.l.b16 %v3827
      %v4341 = vunpack.c.l.b16 %v3828
      %v4342 = vunpack.c.l.b16 %v3829
      %v4343 = vunpack.c.l.b16 %v3830
      %v4344 = vunpack.c.l.b16 %v3831
      %v4345 = vpack.c.b16 %v4090, %v4089
      %v4346 = vpack.c.b16 %v4092, %v4091
      %v4347 = vpack.c.b16 %v4094, %v4093
      %v4348 = vpack.c.b16 %v4096, %v4095
      %v4349 = vpack.c.b16 %v4098, %v4097
      %v4350 = vpack.c.b16 %v4100, %v4099
      %v4351 = vpack.c.b16 %v4102, %v4101
      %v4352 = vpack.c.b16 %v4104, %v4103
      %v4353 = vpack.c.b16 %v4106, %v4105
      %v4354 = vpack.c.b16 %v4108, %v4107
      %v4355 = vpack.c.b16 %v4110, %v4109
      %v4356 = vpack.c.b16 %v4112, %v4111
      %v4357 = vpack.c.b16 %v4114, %v4113
      %v4358 = vpack.c.b16 %v4116, %v4115
      %v4359 = vpack.c.b16 %v4118, %v4117
      %v4360 = vpack.c.b16 %v4120, %v4119
      %v4361 = vpack.c.b16 %v4122, %v4121
      %v4362 = vpack.c.b16 %v4124, %v4123
      %v4363 = vpack.c.b16 %v4126, %v4125
      %v4364 = vpack.c.b16 %v4128, %v4127
      %v4365 = vpack.c.b16 %v4130, %v4129
      %v4366 = vpack.c.b16 %v4132, %v4131
      %v4367 = vpack.c.b16 %v4134, %v4133
      %v4368 = vpack.c.b16 %v4136, %v4135
      %v4369 = vpack.c.b16 %v4138, %v4137
      %v4370 = vpack.c.b16 %v4140, %v4139
      %v4371 = vpack.c.b16 %v4142, %v4141
      %v4372 = vpack.c.b16 %v4144, %v4143
      %v4373 = vpack.c.b16 %v4146, %v4145
      %v4374 = vpack.c.b16 %v4148, %v4147
      %v4375 = vpack.c.b16 %v4150, %v4149
      %v4376 = vpack.c.b16 %v4152, %v4151
      %v4377 = vpack.c.b16 %v4154, %v4153
      %v4378 = vpack.c.b16 %v4156, %v4155
      %v4379 = vpack.c.b16 %v4158, %v4157
      %v4380 = vpack.c.b16 %v4160, %v4159
      %v4381 = vpack.c.b16 %v4162, %v4161
      %v4382 = vpack.c.b16 %v4164, %v4163
      %v4383 = vpack.c.b16 %v4166, %v4165
      %v4384 = vpack.c.b16 %v4168, %v4167
      %v4385 = vpack.c.b16 %v4170, %v4169
      %v4386 = vpack.c.b16 %v4172, %v4171
      %v4387 = vpack.c.b16 %v4174, %v4173
      %v4388 = vpack.c.b16 %v4176, %v4175
      %v4389 = vpack.c.b16 %v4178, %v4177
      %v4390 = vpack.c.b16 %v4180, %v4179
      %v4391 = vpack.c.b16 %v4182, %v4181
      %v4392 = vpack.c.b16 %v4184, %v4183
      %v4393 = vpack.c.b16 %v4186, %v4185
      %v4394 = vpack.c.b16 %v4188, %v4187
      %v4395 = vpack.c.b16 %v4190, %v4189
      %v4396 = vpack.c.b16 %v4192, %v4191
      %v4397 = vpack.c.b16 %v4194, %v4193
      %v4398 = vpack.c.b16 %v4196, %v4195
      %v4399 = vpack.c.b16 %v4198, %v4197
      %v4400 = vpack.c.b16 %v4200, %v4199
      %v4401 = vpack.c.b16 %v4202, %v4201
      %v4402 = vpack.c.b16 %v4204, %v4203
      %v4403 = vpack.c.b16 %v4206, %v4205
      %v4404 = vpack.c.b16 %v4208, %v4207
      %v4405 = vpack.c.b16 %v4210, %v4209
      %v4406 = vpack.c.b16 %v4212, %v4211
      %v4407 = vpack.c.b16 %v4214, %v4213
      %v4408 = vpack.c.b16 %v4216, %v4215
      %v4409 = vpack.c.b16 %v4218, %v4217
      %v4410 = vpack.c.b16 %v4220, %v4219
      %v4411 = vpack.c.b16 %v4222, %v4221
      %v4412 = vpack.c.b16 %v4224, %v4223
      %v4413 = vpack.c.b16 %v4226, %v4225
      %v4414 = vpack.c.b16 %v4228, %v4227
      %v4415 = vpack.c.b16 %v4230, %v4229
      %v4416 = vpack.c.b16 %v4232, %v4231
      %v4417 = vpack.c.b16 %v4234, %v4233
      %v4418 = vpack.c.b16 %v4236, %v4235
      %v4419 = vpack.c.b16 %v4238, %v4237
      %v4420 = vpack.c.b16 %v4240, %v4239
      %v4421 = vpack.c.b16 %v4242, %v4241
      %v4422 = vpack.c.b16 %v4244, %v4243
      %v4423 = vpack.c.b16 %v4246, %v4245
      %v4424 = vpack.c.b16 %v4248, %v4247
      %v4425 = vpack.c.b16 %v4250, %v4249
      %v4426 = vpack.c.b16 %v4252, %v4251
      %v4427 = vpack.c.b16 %v4254, %v4253
      %v4428 = vpack.c.b16 %v4256, %v4255
      %v4429 = vpack.c.b16 %v4258, %v4257
      %v4430 = vpack.c.b16 %v4260, %v4259
      %v4431 = vpack.c.b16 %v4262, %v4261
      %v4432 = vpack.c.b16 %v4264, %v4263
      %v4433 = vpack.c.b16 %v4266, %v4265
      %v4434 = vpack.c.b16 %v4268, %v4267
      %v4435 = vpack.c.b16 %v4270, %v4269
      %v4436 = vpack.c.b16 %v4272, %v4271
      %v4437 = vpack.c.b16 %v4274, %v4273
      %v4438 = vpack.c.b16 %v4276, %v4275
      %v4439 = vpack.c.b16 %v4278, %v4277
      %v4440 = vpack.c.b16 %v4280, %v4279
      %v4441 = vpack.c.b16 %v4282, %v4281
      %v4442 = vpack.c.b16 %v4284, %v4283
      %v4443 = vpack.c.b16 %v4286, %v4285
      %v4444 = vpack.c.b16 %v4288, %v4287
      %v4445 = vpack.c.b16 %v4290, %v4289
      %v4446 = vpack.c.b16 %v4292, %v4291
      %v4447 = vpack.c.b16 %v4294, %v4293
      %v4448 = vpack.c.b16 %v4296, %v4295
      %v4449 = vpack.c.b16 %v4298, %v4297
      %v4450 = vpack.c.b16 %v4300, %v4299
      %v4451 = vpack.c.b16 %v4302, %v4301
      %v4452 = vpack.c.b16 %v4304, %v4303
      %v4453 = vpack.c.b16 %v4306, %v4305
      %v4454 = vpack.c.b16 %v4308, %v4307
      %v4455 = vpack.c.b16 %v4310, %v4309
      %v4456 = vpack.c.b16 %v4312, %v4311
      %v4457 = vpack.c.b16 %v4314, %v4313
      %v4458 = vpack.c.b16 %v4316, %v4315
      %v4459 = vpack.c.b16 %v4318, %v4317
      %v4460 = vpack.c.b16 %v4320, %v4319
      %v4461 = vpack.c.b16 %v4322, %v4321
      %v4462 = vpack.c.b16 %v4324, %v4323
      %v4463 = vpack.c.b16 %v4326, %v4325
      %v4464 = vpack.c.b16 %v4328, %v4327
      %v4465 = vpack.c.b16 %v4330, %v4329
      %v4466 = vpack.c.b16 %v4332, %v4331
      %v4467 = vpack.c.b16 %v4334, %v4333
      %v4468 = vpack.c.b16 %v4336, %v4335
      %v4469 = vpack.c.b16 %v4338, %v4337
      %v4470 = vpack.c.b16 %v4340, %v4339
      %v4471 = vpack.c.b16 %v4342, %v4341
      %v4472 = vpack.c.b16 %v4344, %v4343
      %4601 = vmatpush.bf16.msra.mxu0 %v4352
      %4602 = vmatpush.bf16.msra.mxu0 %v4351
      %4603 = vmatpush.bf16.msra.mxu0 %v4350
      %4604 = vmatpush.bf16.msra.mxu0 %v4349
      %4605 = vmatpush.bf16.msra.mxu0 %v4348
      %4606 = vmatpush.bf16.msra.mxu0 %v4347
      %4607 = vmatpush.bf16.msra.mxu0 %v4346
      %4608 = vmatpush.bf16.msra.mxu0 %v4345
      %4609 = vmatmul.bf16.gmra.mxu0 %v3560
      %v4610 = vpop.f32.mrf.mxu0
      %v4611 = vadd.f32 %v3832, %v4610
      %v4612 = vpop.f32.mrf.mxu0
      %4613 = vdwg.mxu0
      %4614 = vmatpush.bf16.msra.mxu0 %v4360
      %4615 = vmatpush.bf16.msra.mxu0 %v4359
      %4616 = vmatpush.bf16.msra.mxu0 %v4358
      %4617 = vmatpush.bf16.msra.mxu0 %v4357
      %4618 = vmatpush.bf16.msra.mxu0 %v4356
      %4619 = vmatpush.bf16.msra.mxu0 %v4355
      %4620 = vmatpush.bf16.msra.mxu0 %v4354
      %4621 = vmatpush.bf16.msra.mxu0 %v4353
      %4622 = vmatmul.bf16.gmra.mxu0 %v3561
      %v4623 = vpop.f32.mrf.mxu0
      %v4624 = vadd.f32 %v4611, %v4623
      %v4625 = vpop.f32.mrf.mxu0
      %4626 = vdwg.mxu0
      %4627 = vmatpush.bf16.msra.mxu0 %v4368
      %4628 = vmatpush.bf16.msra.mxu0 %v4367
      %4629 = vmatpush.bf16.msra.mxu0 %v4366
      %4630 = vmatpush.bf16.msra.mxu0 %v4365
      %4631 = vmatpush.bf16.msra.mxu0 %v4364
      %4632 = vmatpush.bf16.msra.mxu0 %v4363
      %4633 = vmatpush.bf16.msra.mxu0 %v4362
      %4634 = vmatpush.bf16.msra.mxu0 %v4361
      %4635 = vmatmul.bf16.gmra.mxu0 %v3562
      %v4636 = vpop.f32.mrf.mxu0
      %v4637 = vadd.f32 %v4624, %v4636
      %v4638 = vpop.f32.mrf.mxu0
      %4639 = vdwg.mxu0
      %4640 = vmatpush.bf16.msra.mxu0 %v4376
      %4641 = vmatpush.bf16.msra.mxu0 %v4375
      %4642 = vmatpush.bf16.msra.mxu0 %v4374
      %4643 = vmatpush.bf16.msra.mxu0 %v4373
      %4644 = vmatpush.bf16.msra.mxu0 %v4372
      %4645 = vmatpush.bf16.msra.mxu0 %v4371
      %4646 = vmatpush.bf16.msra.mxu0 %v4370
      %4647 = vmatpush.bf16.msra.mxu0 %v4369
      %4648 = vmatmul.bf16.gmra.mxu0 %v3563
      %v4649 = vpop.f32.mrf.mxu0
      %v4650 = vadd.f32 %v4637, %v4649
      %v4651 = vpop.f32.mrf.mxu0
      %4652 = vdwg.mxu0
      %4653 = vmatpush.bf16.msra.mxu0 %v4384
      %4654 = vmatpush.bf16.msra.mxu0 %v4383
      %4655 = vmatpush.bf16.msra.mxu0 %v4382
      %4656 = vmatpush.bf16.msra.mxu0 %v4381
      %4657 = vmatpush.bf16.msra.mxu0 %v4380
      %4658 = vmatpush.bf16.msra.mxu0 %v4379
      %4659 = vmatpush.bf16.msra.mxu0 %v4378
      %4660 = vmatpush.bf16.msra.mxu0 %v4377
      %4661 = vmatmul.bf16.gmra.mxu0 %v3564
      %v4662 = vpop.f32.mrf.mxu0
      %v4663 = vadd.f32 %v4650, %v4662
      %v4664 = vpop.f32.mrf.mxu0
      %4665 = vdwg.mxu0
      %4666 = vmatpush.bf16.msra.mxu0 %v4392
      %4667 = vmatpush.bf16.msra.mxu0 %v4391
      %4668 = vmatpush.bf16.msra.mxu0 %v4390
      %4669 = vmatpush.bf16.msra.mxu0 %v4389
      %4670 = vmatpush.bf16.msra.mxu0 %v4388
      %4671 = vmatpush.bf16.msra.mxu0 %v4387
      %4672 = vmatpush.bf16.msra.mxu0 %v4386
      %4673 = vmatpush.bf16.msra.mxu0 %v4385
      %4674 = vmatmul.bf16.gmra.mxu0 %v3565
      %v4675 = vpop.f32.mrf.mxu0
      %v4676 = vadd.f32 %v4663, %v4675
      %v4677 = vpop.f32.mrf.mxu0
      %4678 = vdwg.mxu0
      %4679 = vmatpush.bf16.msra.mxu0 %v4400
      %4680 = vmatpush.bf16.msra.mxu0 %v4399
      %4681 = vmatpush.bf16.msra.mxu0 %v4398
      %4682 = vmatpush.bf16.msra.mxu0 %v4397
      %4683 = vmatpush.bf16.msra.mxu0 %v4396
      %4684 = vmatpush.bf16.msra.mxu0 %v4395
      %4685 = vmatpush.bf16.msra.mxu0 %v4394
      %4686 = vmatpush.bf16.msra.mxu0 %v4393
      %4687 = vmatmul.bf16.gmra.mxu0 %v3566
      %v4688 = vpop.f32.mrf.mxu0
      %v4689 = vadd.f32 %v4676, %v4688
      %v4690 = vpop.f32.mrf.mxu0
      %4691 = vdwg.mxu0
      %4692 = vmatpush.bf16.msra.mxu0 %v4408
      %4693 = vmatpush.bf16.msra.mxu0 %v4407
      %4694 = vmatpush.bf16.msra.mxu0 %v4406
      %4695 = vmatpush.bf16.msra.mxu0 %v4405
      %4696 = vmatpush.bf16.msra.mxu0 %v4404
      %4697 = vmatpush.bf16.msra.mxu0 %v4403
      %4698 = vmatpush.bf16.msra.mxu0 %v4402
      %4699 = vmatpush.bf16.msra.mxu0 %v4401
      %4700 = vmatmul.bf16.gmra.mxu0 %v3567
      %v4701 = vpop.f32.mrf.mxu0
      %v4702 = vadd.f32 %v4689, %v4701
      %v4703 = vpop.f32.mrf.mxu0
      %4704 = vdwg.mxu0
      %4705 = vmatpush.bf16.msra.mxu0 %v4416
      %4706 = vmatpush.bf16.msra.mxu0 %v4415
      %4707 = vmatpush.bf16.msra.mxu0 %v4414
      %4708 = vmatpush.bf16.msra.mxu0 %v4413
      %4709 = vmatpush.bf16.msra.mxu0 %v4412
      %4710 = vmatpush.bf16.msra.mxu0 %v4411
      %4711 = vmatpush.bf16.msra.mxu0 %v4410
      %4712 = vmatpush.bf16.msra.mxu0 %v4409
      %4713 = vmatmul.bf16.gmra.mxu0 %v3568
      %v4714 = vpop.f32.mrf.mxu0
      %v4715 = vadd.f32 %v4702, %v4714
      %v4716 = vpop.f32.mrf.mxu0
      %4717 = vdwg.mxu0
      %4718 = vmatpush.bf16.msra.mxu0 %v4424
      %4719 = vmatpush.bf16.msra.mxu0 %v4423
      %4720 = vmatpush.bf16.msra.mxu0 %v4422
      %4721 = vmatpush.bf16.msra.mxu0 %v4421
      %4722 = vmatpush.bf16.msra.mxu0 %v4420
      %4723 = vmatpush.bf16.msra.mxu0 %v4419
      %4724 = vmatpush.bf16.msra.mxu0 %v4418
      %4725 = vmatpush.bf16.msra.mxu0 %v4417
      %4726 = vmatmul.bf16.gmra.mxu0 %v3569
      %v4727 = vpop.f32.mrf.mxu0
      %v4728 = vadd.f32 %v4715, %v4727
      %v4729 = vpop.f32.mrf.mxu0
      %4730 = vdwg.mxu0
      %4731 = vmatpush.bf16.msra.mxu0 %v4432
      %4732 = vmatpush.bf16.msra.mxu0 %v4431
      %4733 = vmatpush.bf16.msra.mxu0 %v4430
      %4734 = vmatpush.bf16.msra.mxu0 %v4429
      %4735 = vmatpush.bf16.msra.mxu0 %v4428
      %4736 = vmatpush.bf16.msra.mxu0 %v4427
      %4737 = vmatpush.bf16.msra.mxu0 %v4426
      %4738 = vmatpush.bf16.msra.mxu0 %v4425
      %4739 = vmatmul.bf16.gmra.mxu0 %v3570
      %v4740 = vpop.f32.mrf.mxu0
      %v4741 = vadd.f32 %v4728, %v4740
      %v4742 = vpop.f32.mrf.mxu0
      %4743 = vdwg.mxu0
      %4744 = vmatpush.bf16.msra.mxu0 %v4440
      %4745 = vmatpush.bf16.msra.mxu0 %v4439
      %4746 = vmatpush.bf16.msra.mxu0 %v4438
      %4747 = vmatpush.bf16.msra.mxu0 %v4437
      %4748 = vmatpush.bf16.msra.mxu0 %v4436
      %4749 = vmatpush.bf16.msra.mxu0 %v4435
      %4750 = vmatpush.bf16.msra.mxu0 %v4434
      %4751 = vmatpush.bf16.msra.mxu0 %v4433
      %4752 = vmatmul.bf16.gmra.mxu0 %v3571
      %v4753 = vpop.f32.mrf.mxu0
      %v4754 = vadd.f32 %v4741, %v4753
      %v4755 = vpop.f32.mrf.mxu0
      %4756 = vdwg.mxu0
      %4757 = vmatpush.bf16.msra.mxu0 %v4448
      %4758 = vmatpush.bf16.msra.mxu0 %v4447
      %4759 = vmatpush.bf16.msra.mxu0 %v4446
      %4760 = vmatpush.bf16.msra.mxu0 %v4445
      %4761 = vmatpush.bf16.msra.mxu0 %v4444
      %4762 = vmatpush.bf16.msra.mxu0 %v4443
      %4763 = vmatpush.bf16.msra.mxu0 %v4442
      %4764 = vmatpush.bf16.msra.mxu0 %v4441
      %4765 = vmatmul.bf16.gmra.mxu0 %v3572
      %v4766 = vpop.f32.mrf.mxu0
      %v4767 = vadd.f32 %v4754, %v4766
      %v4768 = vpop.f32.mrf.mxu0
      %4769 = vdwg.mxu0
      %4770 = vmatpush.bf16.msra.mxu0 %v4456
      %4771 = vmatpush.bf16.msra.mxu0 %v4455
      %4772 = vmatpush.bf16.msra.mxu0 %v4454
      %4773 = vmatpush.bf16.msra.mxu0 %v4453
      %4774 = vmatpush.bf16.msra.mxu0 %v4452
      %4775 = vmatpush.bf16.msra.mxu0 %v4451
      %4776 = vmatpush.bf16.msra.mxu0 %v4450
      %4777 = vmatpush.bf16.msra.mxu0 %v4449
      %4778 = vmatmul.bf16.gmra.mxu0 %v3573
      %v4779 = vpop.f32.mrf.mxu0
      %v4780 = vadd.f32 %v4767, %v4779
      %v4781 = vpop.f32.mrf.mxu0
      %4782 = vdwg.mxu0
      %4783 = vmatpush.bf16.msra.mxu0 %v4464
      %4784 = vmatpush.bf16.msra.mxu0 %v4463
      %4785 = vmatpush.bf16.msra.mxu0 %v4462
      %4786 = vmatpush.bf16.msra.mxu0 %v4461
      %4787 = vmatpush.bf16.msra.mxu0 %v4460
      %4788 = vmatpush.bf16.msra.mxu0 %v4459
      %4789 = vmatpush.bf16.msra.mxu0 %v4458
      %4790 = vmatpush.bf16.msra.mxu0 %v4457
      %4791 = vmatmul.bf16.gmra.mxu0 %v3574
      %v4792 = vpop.f32.mrf.mxu0
      %v4793 = vadd.f32 %v4780, %v4792
      %v4794 = vpop.f32.mrf.mxu0
      %4795 = vdwg.mxu0
      %4796 = vmatpush.bf16.msra.mxu0 %v4472
      %4797 = vmatpush.bf16.msra.mxu0 %v4471
      %4798 = vmatpush.bf16.msra.mxu0 %v4470
      %4799 = vmatpush.bf16.msra.mxu0 %v4469
      %4800 = vmatpush.bf16.msra.mxu0 %v4468
      %4801 = vmatpush.bf16.msra.mxu0 %v4467
      %4802 = vmatpush.bf16.msra.mxu0 %v4466
      %4803 = vmatpush.bf16.msra.mxu0 %v4465
      %4804 = vmatmul.bf16.gmra.mxu0 %v3575
      %v4805 = vpop.f32.mrf.mxu0
      %v4806 = vadd.f32 %v4793, %v4805
      %v4807 = vpop.f32.mrf.mxu0
      %4808 = vdwg.mxu0
      %v4809 = vadd.f32 %v3103, %v4806
      %v4810 = vsel %vm1049, %v4809, 0.0
      %4811 = vadd.xlane.f32.xlu0 %v4810
      %v4812 = vpop.xlane.xlu0 %4811
      %v4813 = vmul.f32 %v4812, %v1481
      %v4814 = vsub.f32 %v4809, %v4813
      %v4815 = vmul.f32 %v4814, %v4814
      %v4816 = vsel %vm1049, %v4815, 0.0
      %4817 = vadd.xlane.f32.xlu0 %v4816
      %v4818 = vpop.xlane.xlu0 %4817
      %v4819 = vmul.f32 %v4818, %v1481
      %v4820 = vadd.f32 %v4819, 1e-05
      %v4821 = vrsqrt.pop %v4820
      %v4822 = vmul.f32 %v4821, %v4820
      %v4823 = vmul.f32 %v4822, %v4821
      %v4824 = vmul.f32 0.5, %v4823
      %v4825 = vsub.f32 1.5, %v4824
      %v4826 = vmul.f32 %v4821, %v4825
      %vm4827 = vweird.f32 %v4820
      %vm4828 = vweird.f32 %v4821
      %vm4829 = vmor %vm4827, %vm4828
      %v4830 = vsel %vm4829, %v4821, %v4826
      %v4831 = vmul.f32 %v4814, %v4830
      %v4832 = vperm.slane %v2230, 0
      %v4833 = vmul.f32 %v4831, %v4832
      %v4834 = vperm.slane %v2230, 1
      %v4835 = vadd.f32 %v4833, %v4834
      %s4836 = scalar_lea.vmem %s49, 16
      %v4837 = vld [vmem:[%s4836] sm:$0xff]
      %v4838 = vld [vmem:[%s4836 + $0x8] sm:$0x3]
      %s4839 = scalar_lea.vmem %s29, 32
      %v4840 = vld [vmem:[%s4839] sm:$0xff]
      %v4841 = vld [vmem:[%s4839 + $0x8] sm:$0xff]
      %v4842 = vld [vmem:[%s4839 + $0x10] sm:$0xff]
      %v4843 = vld [vmem:[%s4839 + $0x18] sm:$0xff]
      %s4844 = scalar_lea.vmem %s31, 1
      %v4845 = vld [vmem:[%s4844] sm:$0x1]
      %s4846 = scalar_lea.vmem %s33, 32
      %v4847 = vld [vmem:[%s4846] sm:$0xff]
      %v4848 = vld [vmem:[%s4846 + $0x8] sm:$0xff]
      %v4849 = vld [vmem:[%s4846 + $0x10] sm:$0xff]
      %v4850 = vld [vmem:[%s4846 + $0x18] sm:$0xff]
      %v4852 = vperm.slane %v4845, 0
      %v4855 = vsel %vm1049, %v4835, 0
      %4857 = vmatpush.msra.mxu0 0.0
      %4858 = vmatpush.msra.mxu0 0.0
      %4859 = vmatpush.msra.mxu0 0.0
      %4860 = vmatpush.msra.mxu0 0.0
      %4861 = vmatpush.msra.mxu0 0.0
      %4862 = vmatpush.msra.mxu0 0.0
      %4863 = vmatpush.msra.mxu0 0.0
      %4864 = vmatpush.msra.mxu0 0.0
      %4865 = vmatpush.msra.mxu0 0.0
      %4866 = vmatpush.msra.mxu0 0.0
      %4867 = vmatpush.msra.mxu0 0.0
      %4868 = vmatpush.msra.mxu0 0.0
      %4869 = vmatpush.msra.mxu0 %v4843
      %4870 = vmatpush.msra.mxu0 %v4842
      %4871 = vmatpush.msra.mxu0 %v4841
      %4872 = vmatpush.msra.mxu0 %v4840
      %4873 = vmatmul.f32.gmra.mxu0 %v4855
      %v4874 = vpop.f32.mrf.mxu0
      %v4875 = vadd.f32 %v4852, %v4874
      %4876 = vdwg.mxu0
      %4878 = vrot.lane.b32.xlu0 %v4875, 96
      %v4879 = vpop.permute.xlu0 %4878
      %v4880 = vsel %vm1114, %v4875, 0
      %v4882 = vsel %vm1114, %v4879, 0
      %4884 = vmatpush.xpose.msra.mxu0 0.0
      %4885 = vmatpush.xpose.msra.mxu0 0.0
      %4886 = vmatpush.xpose.msra.mxu0 0.0
      %4887 = vmatpush.xpose.msra.mxu0 0.0
      %4888 = vmatpush.xpose.msra.mxu0 0.0
      %4889 = vmatpush.xpose.msra.mxu0 0.0
      %4890 = vmatpush.xpose.msra.mxu0 0.0
      %4891 = vmatpush.xpose.msra.mxu0 0.0
      %4892 = vmatpush.xpose.msra.mxu0 0.0
      %4893 = vmatpush.xpose.msra.mxu0 0.0
      %4894 = vmatpush.xpose.msra.mxu0 0.0
      %4895 = vmatpush.xpose.msra.mxu0 0.0
      %4896 = vmatpush.xpose.msra.mxu0 0.0
      %4897 = vmatpush.xpose.msra.mxu0 0.0
      %4898 = vmatpush.xpose.msra.mxu0 0.0
      %4899 = vmatpush.xpose.msra.mxu0 %v4882
      %4900 = vmatmul.f32.gmra.mxu0 %v4880
      %v4901 = vpop.f32.mrf.mxu0
      %v4902 = vadd.f32 0.0, %v4901
      %4903 = vdwg.mxu0
      %v4904 = vmul.f32 %v4902, 0.35355338
      %v4905 = vadd.f32 %v4904, %v965
      %v4906 = vsel %vm1114, %v4905, -inf
      %4907 = vmax.xlane.f32.xlu0 %v4906
      %v4908 = vpop.xlane.xlu0 %4907
      %v4909 = vsub.f32 %v4905, %v4908
      %v4910 = vmul.f32 %v4909, 1.442695
      %v4911 = vpow.pop %v4910
      %v4912 = vsel %vm1114, %v4911, 0.0
      %4913 = vadd.xlane.f32.xlu0 %v4912
      %v4914 = vpop.xlane.xlu0 %4913
      %v4915 = vrcp.pop %v4914
      %v4916 = vmul.f32 %v4911, %v4915
      %4917 = vrot.lane.b32.xlu0 %v4875, 64
      %v4918 = vpop.permute.xlu0 %4917
      %v4921 = vsel %vm1114, %v4916, 0
      %4923 = vmatpush.msra.mxu0 0.0
      %4924 = vmatpush.msra.mxu0 0.0
      %4925 = vmatpush.msra.mxu0 0.0
      %4926 = vmatpush.msra.mxu0 0.0
      %4927 = vmatpush.msra.mxu0 0.0
      %4928 = vmatpush.msra.mxu0 0.0
      %4929 = vmatpush.msra.mxu0 0.0
      %4930 = vmatpush.msra.mxu0 0.0
      %4931 = vmatpush.msra.mxu0 0.0
      %4932 = vmatpush.msra.mxu0 0.0
      %4933 = vmatpush.msra.mxu0 0.0
      %4934 = vmatpush.msra.mxu0 0.0
      %4935 = vmatpush.msra.mxu0 0.0
      %4936 = vmatpush.msra.mxu0 0.0
      %4937 = vmatpush.msra.mxu0 0.0
      %4938 = vmatpush.msra.mxu0 %v4918
      %4939 = vmatmul.f32.gmra.mxu0 %v4921
      %v4940 = vpop.f32.mrf.mxu0
      %v4941 = vadd.f32 0.0, %v4940
      %4942 = vdwg.mxu0
      %4943 = vrot.lane.b32.xlu0 %v4875, 120
      %v4944 = vpop.permute.xlu0 %4943
      %4945 = vrot.lane.b32.xlu0 %v4875, 88
      %v4946 = vpop.permute.xlu0 %4945
      %v4947 = vsel %vm1114, %v4944, 0
      %v4949 = vsel %vm1114, %v4946, 0
      %4951 = vmatpush.xpose.msra.mxu0 0.0
      %4952 = vmatpush.xpose.msra.mxu0 0.0
      %4953 = vmatpush.xpose.msra.mxu0 0.0
      %4954 = vmatpush.xpose.msra.mxu0 0.0
      %4955 = vmatpush.xpose.msra.mxu0 0.0
      %4956 = vmatpush.xpose.msra.mxu0 0.0
      %4957 = vmatpush.xpose.msra.mxu0 0.0
      %4958 = vmatpush.xpose.msra.mxu0 0.0
      %4959 = vmatpush.xpose.msra.mxu0 0.0
      %4960 = vmatpush.xpose.msra.mxu0 0.0
      %4961 = vmatpush.xpose.msra.mxu0 0.0
      %4962 = vmatpush.xpose.msra.mxu0 0.0
      %4963 = vmatpush.xpose.msra.mxu0 0.0
      %4964 = vmatpush.xpose.msra.mxu0 0.0
      %4965 = vmatpush.xpose.msra.mxu0 0.0
      %4966 = vmatpush.xpose.msra.mxu0 %v4949
      %4967 = vmatmul.f32.gmra.mxu0 %v4947
      %v4968 = vpop.f32.mrf.mxu0
      %v4969 = vadd.f32 0.0, %v4968
      %4970 = vdwg.mxu0
      %v4971 = vmul.f32 %v4969, 0.35355338
      %v4972 = vadd.f32 %v4971, %v965
      %v4973 = vsel %vm1114, %v4972, -inf
      %4974 = vmax.xlane.f32.xlu0 %v4973
      %v4975 = vpop.xlane.xlu0 %4974
      %v4976 = vsub.f32 %v4972, %v4975
      %v4977 = vmul.f32 %v4976, 1.442695
      %v4978 = vpow.pop %v4977
      %v4979 = vsel %vm1114, %v4978, 0.0
      %4980 = vadd.xlane.f32.xlu0 %v4979
      %v4981 = vpop.xlane.xlu0 %4980
      %v4982 = vrcp.pop %v4981
      %v4983 = vmul.f32 %v4978, %v4982
      %4984 = vrot.lane.b32.xlu0 %v4875, 56
      %v4985 = vpop.permute.xlu0 %4984
      %v4988 = vsel %vm1114, %v4983, 0
      %4990 = vmatpush.msra.mxu0 0.0
      %4991 = vmatpush.msra.mxu0 0.0
      %4992 = vmatpush.msra.mxu0 0.0
      %4993 = vmatpush.msra.mxu0 0.0
      %4994 = vmatpush.msra.mxu0 0.0
      %4995 = vmatpush.msra.mxu0 0.0
      %4996 = vmatpush.msra.mxu0 0.0
      %4997 = vmatpush.msra.mxu0 0.0
      %4998 = vmatpush.msra.mxu0 0.0
      %4999 = vmatpush.msra.mxu0 0.0
      %5000 = vmatpush.msra.mxu0 0.0
      %5001 = vmatpush.msra.mxu0 0.0
      %5002 = vmatpush.msra.mxu0 0.0
      %5003 = vmatpush.msra.mxu0 0.0
      %5004 = vmatpush.msra.mxu0 0.0
      %5005 = vmatpush.msra.mxu0 %v4985
      %5006 = vmatmul.f32.gmra.mxu0 %v4988
      %v5007 = vpop.f32.mrf.mxu0
      %v5008 = vadd.f32 0.0, %v5007
      %5009 = vdwg.mxu0
      %v5011 = vsel %vm1114, %v5008, 0
      %5013 = vmatpush.msra.mxu0 0.0
      %5014 = vmatpush.msra.mxu0 0.0
      %5015 = vmatpush.msra.mxu0 0.0
      %5016 = vmatpush.msra.mxu0 0.0
      %5017 = vmatpush.msra.mxu0 0.0
      %5018 = vmatpush.msra.mxu0 0.0
      %5019 = vmatpush.msra.mxu0 0.0
      %5020 = vmatpush.msra.mxu0 0.0
      %5021 = vmatpush.msra.mxu0 0.0
      %5022 = vmatpush.msra.mxu0 0.0
      %5023 = vmatpush.msra.mxu0 0.0
      %5024 = vmatpush.msra.mxu0 0.0
      %5025 = vmatpush.msra.mxu0 0.0
      %5026 = vmatpush.msra.mxu0 0.0
      %5027 = vmatpush.msra.mxu0 0.0
      %5028 = vmatpush.msra.mxu0 %v4848
      %5029 = vmatmul.f32.gmra.mxu0 %v5011
      %v5030 = vpop.f32.mrf.mxu0
      %v5031 = vadd.f32 0.0, %v5030
      %5032 = vdwg.mxu0
      %v5034 = vsel %vm1114, %v4941, 0
      %5036 = vmatpush.msra.mxu0 0.0
      %5037 = vmatpush.msra.mxu0 0.0
      %5038 = vmatpush.msra.mxu0 0.0
      %5039 = vmatpush.msra.mxu0 0.0
      %5040 = vmatpush.msra.mxu0 0.0
      %5041 = vmatpush.msra.mxu0 0.0
      %5042 = vmatpush.msra.mxu0 0.0
      %5043 = vmatpush.msra.mxu0 0.0
      %5044 = vmatpush.msra.mxu0 0.0
      %5045 = vmatpush.msra.mxu0 0.0
      %5046 = vmatpush.msra.mxu0 0.0
      %5047 = vmatpush.msra.mxu0 0.0
      %5048 = vmatpush.msra.mxu0 0.0
      %5049 = vmatpush.msra.mxu0 0.0
      %5050 = vmatpush.msra.mxu0 0.0
      %5051 = vmatpush.msra.mxu0 %v4847
      %5052 = vmatmul.f32.gmra.mxu0 %v5034
      %v5053 = vpop.f32.mrf.mxu0
      %v5054 = vadd.f32 %v5031, %v5053
      %5055 = vdwg.mxu0
      %5056 = vrot.lane.b32.xlu0 %v4875, 112
      %v5057 = vpop.permute.xlu0 %5056
      %5058 = vrot.lane.b32.xlu0 %v4875, 80
      %v5059 = vpop.permute.xlu0 %5058
      %v5060 = vsel %vm1114, %v5057, 0
      %v5062 = vsel %vm1114, %v5059, 0
      %5064 = vmatpush.xpose.msra.mxu0 0.0
      %5065 = vmatpush.xpose.msra.mxu0 0.0
      %5066 = vmatpush.xpose.msra.mxu0 0.0
      %5067 = vmatpush.xpose.msra.mxu0 0.0
      %5068 = vmatpush.xpose.msra.mxu0 0.0
      %5069 = vmatpush.xpose.msra.mxu0 0.0
      %5070 = vmatpush.xpose.msra.mxu0 0.0
      %5071 = vmatpush.xpose.msra.mxu0 0.0
      %5072 = vmatpush.xpose.msra.mxu0 0.0
      %5073 = vmatpush.xpose.msra.mxu0 0.0
      %5074 = vmatpush.xpose.msra.mxu0 0.0
      %5075 = vmatpush.xpose.msra.mxu0 0.0
      %5076 = vmatpush.xpose.msra.mxu0 0.0
      %5077 = vmatpush.xpose.msra.mxu0 0.0
      %5078 = vmatpush.xpose.msra.mxu0 0.0
      %5079 = vmatpush.xpose.msra.mxu0 %v5062
      %5080 = vmatmul.f32.gmra.mxu0 %v5060
      %v5081 = vpop.f32.mrf.mxu0
      %v5082 = vadd.f32 0.0, %v5081
      %5083 = vdwg.mxu0
      %v5084 = vmul.f32 %v5082, 0.35355338
      %v5085 = vadd.f32 %v5084, %v965
      %v5086 = vsel %vm1114, %v5085, -inf
      %5087 = vmax.xlane.f32.xlu0 %v5086
      %v5088 = vpop.xlane.xlu0 %5087
      %v5089 = vsub.f32 %v5085, %v5088
      %v5090 = vmul.f32 %v5089, 1.442695
      %v5091 = vpow.pop %v5090
      %v5092 = vsel %vm1114, %v5091, 0.0
      %5093 = vadd.xlane.f32.xlu0 %v5092
      %v5094 = vpop.xlane.xlu0 %5093
      %v5095 = vrcp.pop %v5094
      %v5096 = vmul.f32 %v5091, %v5095
      %5097 = vrot.lane.b32.xlu0 %v4875, 48
      %v5098 = vpop.permute.xlu0 %5097
      %v5101 = vsel %vm1114, %v5096, 0
      %5103 = vmatpush.msra.mxu0 0.0
      %5104 = vmatpush.msra.mxu0 0.0
      %5105 = vmatpush.msra.mxu0 0.0
      %5106 = vmatpush.msra.mxu0 0.0
      %5107 = vmatpush.msra.mxu0 0.0
      %5108 = vmatpush.msra.mxu0 0.0
      %5109 = vmatpush.msra.mxu0 0.0
      %5110 = vmatpush.msra.mxu0 0.0
      %5111 = vmatpush.msra.mxu0 0.0
      %5112 = vmatpush.msra.mxu0 0.0
      %5113 = vmatpush.msra.mxu0 0.0
      %5114 = vmatpush.msra.mxu0 0.0
      %5115 = vmatpush.msra.mxu0 0.0
      %5116 = vmatpush.msra.mxu0 0.0
      %5117 = vmatpush.msra.mxu0 0.0
      %5118 = vmatpush.msra.mxu0 %v5098
      %5119 = vmatmul.f32.gmra.mxu0 %v5101
      %v5120 = vpop.f32.mrf.mxu0
      %v5121 = vadd.f32 0.0, %v5120
      %5122 = vdwg.mxu0
      %v5124 = vsel %vm1114, %v5121, 0
      %5126 = vmatpush.msra.mxu0 0.0
      %5127 = vmatpush.msra.mxu0 0.0
      %5128 = vmatpush.msra.mxu0 0.0
      %5129 = vmatpush.msra.mxu0 0.0
      %5130 = vmatpush.msra.mxu0 0.0
      %5131 = vmatpush.msra.mxu0 0.0
      %5132 = vmatpush.msra.mxu0 0.0
      %5133 = vmatpush.msra.mxu0 0.0
      %5134 = vmatpush.msra.mxu0 0.0
      %5135 = vmatpush.msra.mxu0 0.0
      %5136 = vmatpush.msra.mxu0 0.0
      %5137 = vmatpush.msra.mxu0 0.0
      %5138 = vmatpush.msra.mxu0 0.0
      %5139 = vmatpush.msra.mxu0 0.0
      %5140 = vmatpush.msra.mxu0 0.0
      %5141 = vmatpush.msra.mxu0 %v4849
      %5142 = vmatmul.f32.gmra.mxu0 %v5124
      %v5143 = vpop.f32.mrf.mxu0
      %v5144 = vadd.f32 0.0, %v5143
      %5145 = vdwg.mxu0
      %v5146 = vadd.f32 %v5054, %v5144
      %5147 = vrot.lane.b32.xlu0 %v4875, 104
      %v5148 = vpop.permute.xlu0 %5147
      %5149 = vrot.lane.b32.xlu0 %v4875, 72
      %v5150 = vpop.permute.xlu0 %5149
      %v5151 = vsel %vm1114, %v5148, 0
      %v5153 = vsel %vm1114, %v5150, 0
      %5155 = vmatpush.xpose.msra.mxu0 0.0
      %5156 = vmatpush.xpose.msra.mxu0 0.0
      %5157 = vmatpush.xpose.msra.mxu0 0.0
      %5158 = vmatpush.xpose.msra.mxu0 0.0
      %5159 = vmatpush.xpose.msra.mxu0 0.0
      %5160 = vmatpush.xpose.msra.mxu0 0.0
      %5161 = vmatpush.xpose.msra.mxu0 0.0
      %5162 = vmatpush.xpose.msra.mxu0 0.0
      %5163 = vmatpush.xpose.msra.mxu0 0.0
      %5164 = vmatpush.xpose.msra.mxu0 0.0
      %5165 = vmatpush.xpose.msra.mxu0 0.0
      %5166 = vmatpush.xpose.msra.mxu0 0.0
      %5167 = vmatpush.xpose.msra.mxu0 0.0
      %5168 = vmatpush.xpose.msra.mxu0 0.0
      %5169 = vmatpush.xpose.msra.mxu0 0.0
      %5170 = vmatpush.xpose.msra.mxu0 %v5153
      %5171 = vmatmul.f32.gmra.mxu0 %v5151
      %v5172 = vpop.f32.mrf.mxu0
      %v5173 = vadd.f32 0.0, %v5172
      %5174 = vdwg.mxu0
      %v5175 = vmul.f32 %v5173, 0.35355338
      %v5176 = vadd.f32 %v5175, %v965
      %v5177 = vsel %vm1114, %v5176, -inf
      %5178 = vmax.xlane.f32.xlu0 %v5177
      %v5179 = vpop.xlane.xlu0 %5178
      %v5180 = vsub.f32 %v5176, %v5179
      %v5181 = vmul.f32 %v5180, 1.442695
      %v5182 = vpow.pop %v5181
      %v5183 = vsel %vm1114, %v5182, 0.0
      %5184 = vadd.xlane.f32.xlu0 %v5183
      %v5185 = vpop.xlane.xlu0 %5184
      %v5186 = vrcp.pop %v5185
      %v5187 = vmul.f32 %v5182, %v5186
      %5188 = vrot.lane.b32.xlu0 %v4875, 40
      %v5189 = vpop.permute.xlu0 %5188
      %v5192 = vsel %vm1114, %v5187, 0
      %5194 = vmatpush.msra.mxu0 0.0
      %5195 = vmatpush.msra.mxu0 0.0
      %5196 = vmatpush.msra.mxu0 0.0
      %5197 = vmatpush.msra.mxu0 0.0
      %5198 = vmatpush.msra.mxu0 0.0
      %5199 = vmatpush.msra.mxu0 0.0
      %5200 = vmatpush.msra.mxu0 0.0
      %5201 = vmatpush.msra.mxu0 0.0
      %5202 = vmatpush.msra.mxu0 0.0
      %5203 = vmatpush.msra.mxu0 0.0
      %5204 = vmatpush.msra.mxu0 0.0
      %5205 = vmatpush.msra.mxu0 0.0
      %5206 = vmatpush.msra.mxu0 0.0
      %5207 = vmatpush.msra.mxu0 0.0
      %5208 = vmatpush.msra.mxu0 0.0
      %5209 = vmatpush.msra.mxu0 %v5189
      %5210 = vmatmul.f32.gmra.mxu0 %v5192
      %v5211 = vpop.f32.mrf.mxu0
      %v5212 = vadd.f32 0.0, %v5211
      %5213 = vdwg.mxu0
      %v5215 = vsel %vm1114, %v5212, 0
      %5217 = vmatpush.msra.mxu0 0.0
      %5218 = vmatpush.msra.mxu0 0.0
      %5219 = vmatpush.msra.mxu0 0.0
      %5220 = vmatpush.msra.mxu0 0.0
      %5221 = vmatpush.msra.mxu0 0.0
      %5222 = vmatpush.msra.mxu0 0.0
      %5223 = vmatpush.msra.mxu0 0.0
      %5224 = vmatpush.msra.mxu0 0.0
      %5225 = vmatpush.msra.mxu0 0.0
      %5226 = vmatpush.msra.mxu0 0.0
      %5227 = vmatpush.msra.mxu0 0.0
      %5228 = vmatpush.msra.mxu0 0.0
      %5229 = vmatpush.msra.mxu0 0.0
      %5230 = vmatpush.msra.mxu0 0.0
      %5231 = vmatpush.msra.mxu0 0.0
      %5232 = vmatpush.msra.mxu0 %v4850
      %5233 = vmatmul.f32.gmra.mxu0 %v5215
      %v5234 = vpop.f32.mrf.mxu0
      %v5235 = vadd.f32 0.0, %v5234
      %5236 = vdwg.mxu0
      %v5237 = vadd.f32 %v5146, %v5235
      %v5238 = vperm.slane %v4837, 0
      %v5239 = vadd.f32 %v5237, %v5238
      %v5240 = vadd.f32 %v4835, %v5239
      %v5241 = vsel %vm1049, %v5240, 0.0
      %5242 = vadd.xlane.f32.xlu0 %v5241
      %v5243 = vpop.xlane.xlu0 %5242
      %v5244 = vmul.f32 %v5243, %v1481
      %v5245 = vsub.f32 %v5240, %v5244
      %v5246 = vmul.f32 %v5245, %v5245
      %v5247 = vsel %vm1049, %v5246, 0.0
      %5248 = vadd.xlane.f32.xlu0 %v5247
      %v5249 = vpop.xlane.xlu0 %5248
      %v5250 = vmul.f32 %v5249, %v1481
      %v5251 = vadd.f32 %v5250, 1e-05
      %v5252 = vrsqrt.pop %v5251
      %v5253 = vmul.f32 %v5252, %v5251
      %v5254 = vmul.f32 %v5253, %v5252
      %v5255 = vmul.f32 0.5, %v5254
      %v5256 = vsub.f32 1.5, %v5255
      %v5257 = vmul.f32 %v5252, %v5256
      %vm5258 = vweird.f32 %v5251
      %vm5259 = vweird.f32 %v5252
      %vm5260 = vmor %vm5258, %vm5259
      %v5261 = vsel %vm5260, %v5252, %v5257
      %v5262 = vmul.f32 %v5245, %v5261
      %v5263 = vperm.slane %v4837, 1
      %v5264 = vmul.f32 %v5262, %v5263
      %v5265 = vperm.slane %v4837, 2
      %v5266 = vadd.f32 %v5264, %v5265
      %s5267 = scalar_lea.vmem %s35, 32
      %v5268 = vld [vmem:[%s5267] sm:$0xff]
      %v5269 = vld [vmem:[%s5267 + $0x8] sm:$0xff]
      %v5270 = vld [vmem:[%s5267 + $0x10] sm:$0xff]
      %v5271 = vld [vmem:[%s5267 + $0x18] sm:$0xff]
      %s5272 = scalar_lea.vmem %s37, 32
      %v5273 = vld [vmem:[%s5272] sm:$0xff]
      %v5274 = vld [vmem:[%s5272 + $0x8] sm:$0xff]
      %v5275 = vld [vmem:[%s5272 + $0x10] sm:$0xff]
      %v5276 = vld [vmem:[%s5272 + $0x18] sm:$0xff]
      %s5277 = scalar_lea.vmem %s39, 1
      %v5278 = vld [vmem:[%s5277] sm:$0x1]
      %s5279 = scalar_lea.vmem %s41, 32
      %v5280 = vld [vmem:[%s5279] sm:$0xff]
      %v5281 = vld [vmem:[%s5279 + $0x8] sm:$0xff]
      %v5282 = vld [vmem:[%s5279 + $0x10] sm:$0xff]
      %v5283 = vld [vmem:[%s5279 + $0x18] sm:$0xff]
      %v5284 = vperm.slane %v4837, 3
      %v5286 = vsel %vm1049, %v5266, 0
      %5288 = vmatpush.msra.mxu0 0.0
      %5289 = vmatpush.msra.mxu0 0.0
      %5290 = vmatpush.msra.mxu0 0.0
      %5291 = vmatpush.msra.mxu0 0.0
      %5292 = vmatpush.msra.mxu0 0.0
      %5293 = vmatpush.msra.mxu0 0.0
      %5294 = vmatpush.msra.mxu0 0.0
      %5295 = vmatpush.msra.mxu0 0.0
      %5296 = vmatpush.msra.mxu0 0.0
      %5297 = vmatpush.msra.mxu0 0.0
      %5298 = vmatpush.msra.mxu0 0.0
      %5299 = vmatpush.msra.mxu0 0.0
      %5300 = vmatpush.msra.mxu0 %v5271
      %5301 = vmatpush.msra.mxu0 %v5270
      %5302 = vmatpush.msra.mxu0 %v5269
      %5303 = vmatpush.msra.mxu0 %v5268
      %5304 = vmatmul.f32.gmra.mxu0 %v5286
      %v5305 = vpop.f32.mrf.mxu0
      %v5306 = vadd.f32 %v5284, %v5305
      %5307 = vdwg.mxu0
      %v5309 = vperm.slane %v5278, 0
      %5311 = vmatpush.msra.mxu0 0.0
      %5312 = vmatpush.msra.mxu0 0.0
      %5313 = vmatpush.msra.mxu0 0.0
      %5314 = vmatpush.msra.mxu0 0.0
      %5315 = vmatpush.msra.mxu0 0.0
      %5316 = vmatpush.msra.mxu0 0.0
      %5317 = vmatpush.msra.mxu0 0.0
      %5318 = vmatpush.msra.mxu0 0.0
      %5319 = vmatpush.msra.mxu0 0.0
      %5320 = vmatpush.msra.mxu0 0.0
      %5321 = vmatpush.msra.mxu0 0.0
      %5322 = vmatpush.msra.mxu0 0.0
      %5323 = vmatpush.msra.mxu0 %v5276
      %5324 = vmatpush.msra.mxu0 %v5275
      %5325 = vmatpush.msra.mxu0 %v5274
      %5326 = vmatpush.msra.mxu0 %v5273
      %5327 = vmatmul.f32.gmra.mxu0 %v2697
      %v5328 = vpop.f32.mrf.mxu0
      %v5329 = vadd.f32 %v5309, %v5328
      %5330 = vdwg.mxu0
      %v5332 = vsel %vm1114, %v5306, 0
      %v5335 = vsel %vm1114, %v5329, 0
      %5337 = vmatpush.xpose.msra.mxu0 0.0
      %5338 = vmatpush.xpose.msra.mxu0 0.0
      %5339 = vmatpush.xpose.msra.mxu0 0.0
      %5340 = vmatpush.xpose.msra.mxu0 0.0
      %5341 = vmatpush.xpose.msra.mxu0 0.0
      %5342 = vmatpush.xpose.msra.mxu0 0.0
      %5343 = vmatpush.xpose.msra.mxu0 0.0
      %5344 = vmatpush.xpose.msra.mxu0 0.0
      %5345 = vmatpush.xpose.msra.mxu0 0.0
      %5346 = vmatpush.xpose.msra.mxu0 0.0
      %5347 = vmatpush.xpose.msra.mxu0 0.0
      %5348 = vmatpush.xpose.msra.mxu0 0.0
      %5349 = vmatpush.xpose.msra.mxu0 0.0
      %5350 = vmatpush.xpose.msra.mxu0 0.0
      %5351 = vmatpush.xpose.msra.mxu0 0.0
      %5352 = vmatpush.xpose.msra.mxu0 %v5335
      %5353 = vmatmul.f32.gmra.mxu0 %v5332
      %v5354 = vpop.f32.mrf.mxu0
      %v5355 = vadd.f32 0.0, %v5354
      %5356 = vdwg.mxu0
      %v5357 = vmul.f32 %v5355, 0.35355338
      %v5358 = vsel %vm1114, %v5357, -inf
      %5359 = vmax.xlane.f32.xlu0 %v5358
      %v5360 = vpop.xlane.xlu0 %5359
      %v5361 = vsub.f32 %v5357, %v5360
      %v5362 = vmul.f32 %v5361, 1.442695
      %v5363 = vpow.pop %v5362
      %v5364 = vsel %vm1114, %v5363, 0.0
      %5365 = vadd.xlane.f32.xlu0 %v5364
      %v5366 = vpop.xlane.xlu0 %5365
      %v5367 = vrcp.pop %v5366
      %v5368 = vmul.f32 %v5363, %v5367
      %5369 = vrot.lane.b32.xlu0 %v5329, 96
      %v5370 = vpop.permute.xlu0 %5369
      %v5373 = vsel %vm1114, %v5368, 0
      %5375 = vmatpush.msra.mxu0 0.0
      %5376 = vmatpush.msra.mxu0 0.0
      %5377 = vmatpush.msra.mxu0 0.0
      %5378 = vmatpush.msra.mxu0 0.0
      %5379 = vmatpush.msra.mxu0 0.0
      %5380 = vmatpush.msra.mxu0 0.0
      %5381 = vmatpush.msra.mxu0 0.0
      %5382 = vmatpush.msra.mxu0 0.0
      %5383 = vmatpush.msra.mxu0 0.0
      %5384 = vmatpush.msra.mxu0 0.0
      %5385 = vmatpush.msra.mxu0 0.0
      %5386 = vmatpush.msra.mxu0 0.0
      %5387 = vmatpush.msra.mxu0 0.0
      %5388 = vmatpush.msra.mxu0 0.0
      %5389 = vmatpush.msra.mxu0 0.0
      %5390 = vmatpush.msra.mxu0 %v5370
      %5391 = vmatmul.f32.gmra.mxu0 %v5373
      %v5392 = vpop.f32.mrf.mxu0
      %v5393 = vadd.f32 0.0, %v5392
      %5394 = vdwg.mxu0
      %5395 = vrot.lane.b32.xlu0 %v5306, 120
      %v5396 = vpop.permute.xlu0 %5395
      %5397 = vrot.lane.b32.xlu0 %v5329, 120
      %v5398 = vpop.permute.xlu0 %5397
      %v5399 = vsel %vm1114, %v5396, 0
      %v5401 = vsel %vm1114, %v5398, 0
      %5403 = vmatpush.xpose.msra.mxu0 0.0
      %5404 = vmatpush.xpose.msra.mxu0 0.0
      %5405 = vmatpush.xpose.msra.mxu0 0.0
      %5406 = vmatpush.xpose.msra.mxu0 0.0
      %5407 = vmatpush.xpose.msra.mxu0 0.0
      %5408 = vmatpush.xpose.msra.mxu0 0.0
      %5409 = vmatpush.xpose.msra.mxu0 0.0
      %5410 = vmatpush.xpose.msra.mxu0 0.0
      %5411 = vmatpush.xpose.msra.mxu0 0.0
      %5412 = vmatpush.xpose.msra.mxu0 0.0
      %5413 = vmatpush.xpose.msra.mxu0 0.0
      %5414 = vmatpush.xpose.msra.mxu0 0.0
      %5415 = vmatpush.xpose.msra.mxu0 0.0
      %5416 = vmatpush.xpose.msra.mxu0 0.0
      %5417 = vmatpush.xpose.msra.mxu0 0.0
      %5418 = vmatpush.xpose.msra.mxu0 %v5401
      %5419 = vmatmul.f32.gmra.mxu0 %v5399
      %v5420 = vpop.f32.mrf.mxu0
      %v5421 = vadd.f32 0.0, %v5420
      %5422 = vdwg.mxu0
      %v5423 = vmul.f32 %v5421, 0.35355338
      %v5424 = vsel %vm1114, %v5423, -inf
      %5425 = vmax.xlane.f32.xlu0 %v5424
      %v5426 = vpop.xlane.xlu0 %5425
      %v5427 = vsub.f32 %v5423, %v5426
      %v5428 = vmul.f32 %v5427, 1.442695
      %v5429 = vpow.pop %v5428
      %v5430 = vsel %vm1114, %v5429, 0.0
      %5431 = vadd.xlane.f32.xlu0 %v5430
      %v5432 = vpop.xlane.xlu0 %5431
      %v5433 = vrcp.pop %v5432
      %v5434 = vmul.f32 %v5429, %v5433
      %5435 = vrot.lane.b32.xlu0 %v5329, 88
      %v5436 = vpop.permute.xlu0 %5435
      %v5439 = vsel %vm1114, %v5434, 0
      %5441 = vmatpush.msra.mxu0 0.0
      %5442 = vmatpush.msra.mxu0 0.0
      %5443 = vmatpush.msra.mxu0 0.0
      %5444 = vmatpush.msra.mxu0 0.0
      %5445 = vmatpush.msra.mxu0 0.0
      %5446 = vmatpush.msra.mxu0 0.0
      %5447 = vmatpush.msra.mxu0 0.0
      %5448 = vmatpush.msra.mxu0 0.0
      %5449 = vmatpush.msra.mxu0 0.0
      %5450 = vmatpush.msra.mxu0 0.0
      %5451 = vmatpush.msra.mxu0 0.0
      %5452 = vmatpush.msra.mxu0 0.0
      %5453 = vmatpush.msra.mxu0 0.0
      %5454 = vmatpush.msra.mxu0 0.0
      %5455 = vmatpush.msra.mxu0 0.0
      %5456 = vmatpush.msra.mxu0 %v5436
      %5457 = vmatmul.f32.gmra.mxu0 %v5439
      %v5458 = vpop.f32.mrf.mxu0
      %v5459 = vadd.f32 0.0, %v5458
      %5460 = vdwg.mxu0
      %v5462 = vsel %vm1114, %v5459, 0
      %5464 = vmatpush.msra.mxu0 0.0
      %5465 = vmatpush.msra.mxu0 0.0
      %5466 = vmatpush.msra.mxu0 0.0
      %5467 = vmatpush.msra.mxu0 0.0
      %5468 = vmatpush.msra.mxu0 0.0
      %5469 = vmatpush.msra.mxu0 0.0
      %5470 = vmatpush.msra.mxu0 0.0
      %5471 = vmatpush.msra.mxu0 0.0
      %5472 = vmatpush.msra.mxu0 0.0
      %5473 = vmatpush.msra.mxu0 0.0
      %5474 = vmatpush.msra.mxu0 0.0
      %5475 = vmatpush.msra.mxu0 0.0
      %5476 = vmatpush.msra.mxu0 0.0
      %5477 = vmatpush.msra.mxu0 0.0
      %5478 = vmatpush.msra.mxu0 0.0
      %5479 = vmatpush.msra.mxu0 %v5281
      %5480 = vmatmul.f32.gmra.mxu0 %v5462
      %v5481 = vpop.f32.mrf.mxu0
      %v5482 = vadd.f32 0.0, %v5481
      %5483 = vdwg.mxu0
      %v5485 = vsel %vm1114, %v5393, 0
      %5487 = vmatpush.msra.mxu0 0.0
      %5488 = vmatpush.msra.mxu0 0.0
      %5489 = vmatpush.msra.mxu0 0.0
      %5490 = vmatpush.msra.mxu0 0.0
      %5491 = vmatpush.msra.mxu0 0.0
      %5492 = vmatpush.msra.mxu0 0.0
      %5493 = vmatpush.msra.mxu0 0.0
      %5494 = vmatpush.msra.mxu0 0.0
      %5495 = vmatpush.msra.mxu0 0.0
      %5496 = vmatpush.msra.mxu0 0.0
      %5497 = vmatpush.msra.mxu0 0.0
      %5498 = vmatpush.msra.mxu0 0.0
      %5499 = vmatpush.msra.mxu0 0.0
      %5500 = vmatpush.msra.mxu0 0.0
      %5501 = vmatpush.msra.mxu0 0.0
      %5502 = vmatpush.msra.mxu0 %v5280
      %5503 = vmatmul.f32.gmra.mxu0 %v5485
      %v5504 = vpop.f32.mrf.mxu0
      %v5505 = vadd.f32 %v5482, %v5504
      %5506 = vdwg.mxu0
      %5507 = vrot.lane.b32.xlu0 %v5306, 112
      %v5508 = vpop.permute.xlu0 %5507
      %5509 = vrot.lane.b32.xlu0 %v5329, 112
      %v5510 = vpop.permute.xlu0 %5509
      %v5511 = vsel %vm1114, %v5508, 0
      %v5513 = vsel %vm1114, %v5510, 0
      %5515 = vmatpush.xpose.msra.mxu0 0.0
      %5516 = vmatpush.xpose.msra.mxu0 0.0
      %5517 = vmatpush.xpose.msra.mxu0 0.0
      %5518 = vmatpush.xpose.msra.mxu0 0.0
      %5519 = vmatpush.xpose.msra.mxu0 0.0
      %5520 = vmatpush.xpose.msra.mxu0 0.0
      %5521 = vmatpush.xpose.msra.mxu0 0.0
      %5522 = vmatpush.xpose.msra.mxu0 0.0
      %5523 = vmatpush.xpose.msra.mxu0 0.0
      %5524 = vmatpush.xpose.msra.mxu0 0.0
      %5525 = vmatpush.xpose.msra.mxu0 0.0
      %5526 = vmatpush.xpose.msra.mxu0 0.0
      %5527 = vmatpush.xpose.msra.mxu0 0.0
      %5528 = vmatpush.xpose.msra.mxu0 0.0
      %5529 = vmatpush.xpose.msra.mxu0 0.0
      %5530 = vmatpush.xpose.msra.mxu0 %v5513
      %5531 = vmatmul.f32.gmra.mxu0 %v5511
      %v5532 = vpop.f32.mrf.mxu0
      %v5533 = vadd.f32 0.0, %v5532
      %5534 = vdwg.mxu0
      %v5535 = vmul.f32 %v5533, 0.35355338
      %v5536 = vsel %vm1114, %v5535, -inf
      %5537 = vmax.xlane.f32.xlu0 %v5536
      %v5538 = vpop.xlane.xlu0 %5537
      %v5539 = vsub.f32 %v5535, %v5538
      %v5540 = vmul.f32 %v5539, 1.442695
      %v5541 = vpow.pop %v5540
      %v5542 = vsel %vm1114, %v5541, 0.0
      %5543 = vadd.xlane.f32.xlu0 %v5542
      %v5544 = vpop.xlane.xlu0 %5543
      %v5545 = vrcp.pop %v5544
      %v5546 = vmul.f32 %v5541, %v5545
      %5547 = vrot.lane.b32.xlu0 %v5329, 80
      %v5548 = vpop.permute.xlu0 %5547
      %v5551 = vsel %vm1114, %v5546, 0
      %5553 = vmatpush.msra.mxu0 0.0
      %5554 = vmatpush.msra.mxu0 0.0
      %5555 = vmatpush.msra.mxu0 0.0
      %5556 = vmatpush.msra.mxu0 0.0
      %5557 = vmatpush.msra.mxu0 0.0
      %5558 = vmatpush.msra.mxu0 0.0
      %5559 = vmatpush.msra.mxu0 0.0
      %5560 = vmatpush.msra.mxu0 0.0
      %5561 = vmatpush.msra.mxu0 0.0
      %5562 = vmatpush.msra.mxu0 0.0
      %5563 = vmatpush.msra.mxu0 0.0
      %5564 = vmatpush.msra.mxu0 0.0
      %5565 = vmatpush.msra.mxu0 0.0
      %5566 = vmatpush.msra.mxu0 0.0
      %5567 = vmatpush.msra.mxu0 0.0
      %5568 = vmatpush.msra.mxu0 %v5548
      %5569 = vmatmul.f32.gmra.mxu0 %v5551
      %v5570 = vpop.f32.mrf.mxu0
      %v5571 = vadd.f32 0.0, %v5570
      %5572 = vdwg.mxu0
      %v5574 = vsel %vm1114, %v5571, 0
      %5576 = vmatpush.msra.mxu0 0.0
      %5577 = vmatpush.msra.mxu0 0.0
      %5578 = vmatpush.msra.mxu0 0.0
      %5579 = vmatpush.msra.mxu0 0.0
      %5580 = vmatpush.msra.mxu0 0.0
      %5581 = vmatpush.msra.mxu0 0.0
      %5582 = vmatpush.msra.mxu0 0.0
      %5583 = vmatpush.msra.mxu0 0.0
      %5584 = vmatpush.msra.mxu0 0.0
      %5585 = vmatpush.msra.mxu0 0.0
      %5586 = vmatpush.msra.mxu0 0.0
      %5587 = vmatpush.msra.mxu0 0.0
      %5588 = vmatpush.msra.mxu0 0.0
      %5589 = vmatpush.msra.mxu0 0.0
      %5590 = vmatpush.msra.mxu0 0.0
      %5591 = vmatpush.msra.mxu0 %v5282
      %5592 = vmatmul.f32.gmra.mxu0 %v5574
      %v5593 = vpop.f32.mrf.mxu0
      %v5594 = vadd.f32 0.0, %v5593
      %5595 = vdwg.mxu0
      %v5596 = vadd.f32 %v5505, %v5594
      %5597 = vrot.lane.b32.xlu0 %v5306, 104
      %v5598 = vpop.permute.xlu0 %5597
      %5599 = vrot.lane.b32.xlu0 %v5329, 104
      %v5600 = vpop.permute.xlu0 %5599
      %v5601 = vsel %vm1114, %v5598, 0
      %v5603 = vsel %vm1114, %v5600, 0
      %5605 = vmatpush.xpose.msra.mxu0 0.0
      %5606 = vmatpush.xpose.msra.mxu0 0.0
      %5607 = vmatpush.xpose.msra.mxu0 0.0
      %5608 = vmatpush.xpose.msra.mxu0 0.0
      %5609 = vmatpush.xpose.msra.mxu0 0.0
      %5610 = vmatpush.xpose.msra.mxu0 0.0
      %5611 = vmatpush.xpose.msra.mxu0 0.0
      %5612 = vmatpush.xpose.msra.mxu0 0.0
      %5613 = vmatpush.xpose.msra.mxu0 0.0
      %5614 = vmatpush.xpose.msra.mxu0 0.0
      %5615 = vmatpush.xpose.msra.mxu0 0.0
      %5616 = vmatpush.xpose.msra.mxu0 0.0
      %5617 = vmatpush.xpose.msra.mxu0 0.0
      %5618 = vmatpush.xpose.msra.mxu0 0.0
      %5619 = vmatpush.xpose.msra.mxu0 0.0
      %5620 = vmatpush.xpose.msra.mxu0 %v5603
      %5621 = vmatmul.f32.gmra.mxu0 %v5601
      %v5622 = vpop.f32.mrf.mxu0
      %v5623 = vadd.f32 0.0, %v5622
      %5624 = vdwg.mxu0
      %v5625 = vmul.f32 %v5623, 0.35355338
      %v5626 = vsel %vm1114, %v5625, -inf
      %5627 = vmax.xlane.f32.xlu0 %v5626
      %v5628 = vpop.xlane.xlu0 %5627
      %v5629 = vsub.f32 %v5625, %v5628
      %v5630 = vmul.f32 %v5629, 1.442695
      %v5631 = vpow.pop %v5630
      %v5632 = vsel %vm1114, %v5631, 0.0
      %5633 = vadd.xlane.f32.xlu0 %v5632
      %v5634 = vpop.xlane.xlu0 %5633
      %v5635 = vrcp.pop %v5634
      %v5636 = vmul.f32 %v5631, %v5635
      %5637 = vrot.lane.b32.xlu0 %v5329, 72
      %v5638 = vpop.permute.xlu0 %5637
      %v5641 = vsel %vm1114, %v5636, 0
      %5643 = vmatpush.msra.mxu0 0.0
      %5644 = vmatpush.msra.mxu0 0.0
      %5645 = vmatpush.msra.mxu0 0.0
      %5646 = vmatpush.msra.mxu0 0.0
      %5647 = vmatpush.msra.mxu0 0.0
      %5648 = vmatpush.msra.mxu0 0.0
      %5649 = vmatpush.msra.mxu0 0.0
      %5650 = vmatpush.msra.mxu0 0.0
      %5651 = vmatpush.msra.mxu0 0.0
      %5652 = vmatpush.msra.mxu0 0.0
      %5653 = vmatpush.msra.mxu0 0.0
      %5654 = vmatpush.msra.mxu0 0.0
      %5655 = vmatpush.msra.mxu0 0.0
      %5656 = vmatpush.msra.mxu0 0.0
      %5657 = vmatpush.msra.mxu0 0.0
      %5658 = vmatpush.msra.mxu0 %v5638
      %5659 = vmatmul.f32.gmra.mxu0 %v5641
      %v5660 = vpop.f32.mrf.mxu0
      %v5661 = vadd.f32 0.0, %v5660
      %5662 = vdwg.mxu0
      %v5664 = vsel %vm1114, %v5661, 0
      %5666 = vmatpush.msra.mxu0 0.0
      %5667 = vmatpush.msra.mxu0 0.0
      %5668 = vmatpush.msra.mxu0 0.0
      %5669 = vmatpush.msra.mxu0 0.0
      %5670 = vmatpush.msra.mxu0 0.0
      %5671 = vmatpush.msra.mxu0 0.0
      %5672 = vmatpush.msra.mxu0 0.0
      %5673 = vmatpush.msra.mxu0 0.0
      %5674 = vmatpush.msra.mxu0 0.0
      %5675 = vmatpush.msra.mxu0 0.0
      %5676 = vmatpush.msra.mxu0 0.0
      %5677 = vmatpush.msra.mxu0 0.0
      %5678 = vmatpush.msra.mxu0 0.0
      %5679 = vmatpush.msra.mxu0 0.0
      %5680 = vmatpush.msra.mxu0 0.0
      %5681 = vmatpush.msra.mxu0 %v5283
      %5682 = vmatmul.f32.gmra.mxu0 %v5664
      %v5683 = vpop.f32.mrf.mxu0
      %v5684 = vadd.f32 0.0, %v5683
      %5685 = vdwg.mxu0
      %v5686 = vadd.f32 %v5596, %v5684
      %v5687 = vperm.slane %v4837, 4
      %v5688 = vadd.f32 %v5686, %v5687
      %v5689 = vadd.f32 %v5266, %v5688
      %v5690 = vsel %vm1049, %v5689, 0.0
      %5691 = vadd.xlane.f32.xlu0 %v5690
      %v5692 = vpop.xlane.xlu0 %5691
      %v5693 = vmul.f32 %v5692, %v1481
      %v5694 = vsub.f32 %v5689, %v5693
      %v5695 = vmul.f32 %v5694, %v5694
      %v5696 = vsel %vm1049, %v5695, 0.0
      %5697 = vadd.xlane.f32.xlu0 %v5696
      %v5698 = vpop.xlane.xlu0 %5697
      %v5699 = vmul.f32 %v5698, %v1481
      %v5700 = vadd.f32 %v5699, 1e-05
      %v5701 = vrsqrt.pop %v5700
      %v5702 = vmul.f32 %v5701, %v5700
      %v5703 = vmul.f32 %v5702, %v5701
      %v5704 = vmul.f32 0.5, %v5703
      %v5705 = vsub.f32 1.5, %v5704
      %v5706 = vmul.f32 %v5701, %v5705
      %vm5707 = vweird.f32 %v5700
      %vm5708 = vweird.f32 %v5701
      %vm5709 = vmor %vm5707, %vm5708
      %v5710 = vsel %vm5709, %v5701, %v5706
      %v5711 = vmul.f32 %v5694, %v5710
      %v5712 = vperm.slane %v4837, 5
      %v5713 = vmul.f32 %v5711, %v5712
      %v5714 = vperm.slane %v4837, 6
      %v5715 = vadd.f32 %v5713, %v5714
      %v5716 = vpack.c.bf16 %v5715, %v5715
      %s5717 = scalar_lea.vmem %s43, 256
      %v5718 = vld [vmem:[%s5717] sm:$0xff]
      %v5719 = vld [vmem:[%s5717 + $0x8] sm:$0xff]
      %v5720 = vld [vmem:[%s5717 + $0x10] sm:$0xff]
      %v5721 = vld [vmem:[%s5717 + $0x18] sm:$0xff]
      %v5722 = vld [vmem:[%s5717 + $0x20] sm:$0xff]
      %v5723 = vld [vmem:[%s5717 + $0x28] sm:$0xff]
      %v5724 = vld [vmem:[%s5717 + $0x30] sm:$0xff]
      %v5725 = vld [vmem:[%s5717 + $0x38] sm:$0xff]
      %v5726 = vld [vmem:[%s5717 + $0x40] sm:$0xff]
      %v5727 = vld [vmem:[%s5717 + $0x48] sm:$0xff]
      %v5728 = vld [vmem:[%s5717 + $0x50] sm:$0xff]
      %v5729 = vld [vmem:[%s5717 + $0x58] sm:$0xff]
      %v5730 = vld [vmem:[%s5717 + $0x60] sm:$0xff]
      %v5731 = vld [vmem:[%s5717 + $0x68] sm:$0xff]
      %v5732 = vld [vmem:[%s5717 + $0x70] sm:$0xff]
      %v5733 = vld [vmem:[%s5717 + $0x78] sm:$0xff]
      %v5734 = vld [vmem:[%s5717 + $0x80] sm:$0xff]
      %v5735 = vld [vmem:[%s5717 + $0x88] sm:$0xff]
      %v5736 = vld [vmem:[%s5717 + $0x90] sm:$0xff]
      %v5737 = vld [vmem:[%s5717 + $0x98] sm:$0xff]
      %v5738 = vld [vmem:[%s5717 + $0xa0] sm:$0xff]
      %v5739 = vld [vmem:[%s5717 + $0xa8] sm:$0xff]
      %v5740 = vld [vmem:[%s5717 + $0xb0] sm:$0xff]
      %v5741 = vld [vmem:[%s5717 + $0xb8] sm:$0xff]
      %v5742 = vld [vmem:[%s5717 + $0xc0] sm:$0xff]
      %v5743 = vld [vmem:[%s5717 + $0xc8] sm:$0xff]
      %v5744 = vld [vmem:[%s5717 + $0xd0] sm:$0xff]
      %v5745 = vld [vmem:[%s5717 + $0xd8] sm:$0xff]
      %v5746 = vld [vmem:[%s5717 + $0xe0] sm:$0xff]
      %v5747 = vld [vmem:[%s5717 + $0xe8] sm:$0xff]
      %v5748 = vld [vmem:[%s5717 + $0xf0] sm:$0xff]
      %v5749 = vld [vmem:[%s5717 + $0xf8] sm:$0xff]
      %s5750 = scalar_lea.vmem %s45, 16
      %v5751 = vld [vmem:[%s5750] sm:$0xff]
      %v5752 = vld [vmem:[%s5750 + $0x8] sm:$0xff]
      %v5755 = vperm.slane %v5751, 0
      %v5756 = vperm.slane %v5751, 1
      %v5757 = vperm.slane %v5751, 2
      %v5758 = vperm.slane %v5751, 3
      %v5759 = vperm.slane %v5751, 4
      %v5760 = vperm.slane %v5751, 5
      %v5761 = vperm.slane %v5751, 6
      %v5762 = vperm.slane %v5751, 7
      %v5763 = vperm.slane %v5752, 0
      %v5764 = vperm.slane %v5752, 1
      %v5765 = vperm.slane %v5752, 2
      %v5766 = vperm.slane %v5752, 3
      %v5767 = vperm.slane %v5752, 4
      %v5768 = vperm.slane %v5752, 5
      %v5769 = vperm.slane %v5752, 6
      %v5770 = vperm.slane %v5752, 7
      %v5819 = vunpack.c.l.b16 %v5718
      %v5820 = vunpack.c.h.b16 %v5718
      %v5821 = vunpack.c.l.b16 %v5719
      %v5822 = vunpack.c.h.b16 %v5719
      %v5823 = vunpack.c.l.b16 %v5720
      %v5824 = vunpack.c.h.b16 %v5720
      %v5825 = vunpack.c.l.b16 %v5721
      %v5826 = vunpack.c.h.b16 %v5721
      %v5827 = vunpack.c.l.b16 %v5722
      %v5828 = vunpack.c.h.b16 %v5722
      %v5829 = vunpack.c.l.b16 %v5723
      %v5830 = vunpack.c.h.b16 %v5723
      %v5831 = vunpack.c.l.b16 %v5724
      %v5832 = vunpack.c.h.b16 %v5724
      %v5833 = vunpack.c.l.b16 %v5725
      %v5834 = vunpack.c.h.b16 %v5725
      %v5835 = vunpack.c.l.b16 %v5726
      %v5836 = vunpack.c.h.b16 %v5726
      %v5837 = vunpack.c.l.b16 %v5727
      %v5838 = vunpack.c.h.b16 %v5727
      %v5839 = vunpack.c.l.b16 %v5728
      %v5840 = vunpack.c.h.b16 %v5728
      %v5841 = vunpack.c.l.b16 %v5729
      %v5842 = vunpack.c.h.b16 %v5729
      %v5843 = vunpack.c.l.b16 %v5730
      %v5844 = vunpack.c.h.b16 %v5730
      %v5845 = vunpack.c.l.b16 %v5731
      %v5846 = vunpack.c.h.b16 %v5731
      %v5847 = vunpack.c.l.b16 %v5732
      %v5848 = vunpack.c.h.b16 %v5732
      %v5849 = vunpack.c.l.b16 %v5733
      %v5850 = vunpack.c.h.b16 %v5733
      %v5851 = vunpack.c.l.b16 %v5734
      %v5852 = vunpack.c.h.b16 %v5734
      %v5853 = vunpack.c.l.b16 %v5735
      %v5854 = vunpack.c.h.b16 %v5735
      %v5855 = vunpack.c.l.b16 %v5736
      %v5856 = vunpack.c.h.b16 %v5736
      %v5857 = vunpack.c.l.b16 %v5737
      %v5858 = vunpack.c.h.b16 %v5737
      %v5859 = vunpack.c.l.b16 %v5738
      %v5860 = vunpack.c.h.b16 %v5738
      %v5861 = vunpack.c.l.b16 %v5739
      %v5862 = vunpack.c.h.b16 %v5739
      %v5863 = vunpack.c.l.b16 %v5740
      %v5864 = vunpack.c.h.b16 %v5740
      %v5865 = vunpack.c.l.b16 %v5741
      %v5866 = vunpack.c.h.b16 %v5741
      %v5867 = vunpack.c.l.b16 %v5742
      %v5868 = vunpack.c.h.b16 %v5742
      %v5869 = vunpack.c.l.b16 %v5743
      %v5870 = vunpack.c.h.b16 %v5743
      %v5871 = vunpack.c.l.b16 %v5744
      %v5872 = vunpack.c.h.b16 %v5744
      %v5873 = vunpack.c.l.b16 %v5745
      %v5874 = vunpack.c.h.b16 %v5745
      %v5875 = vunpack.c.l.b16 %v5746
      %v5876 = vunpack.c.h.b16 %v5746
      %v5877 = vunpack.c.l.b16 %v5747
      %v5878 = vunpack.c.h.b16 %v5747
      %v5879 = vunpack.c.l.b16 %v5748
      %v5880 = vunpack.c.h.b16 %v5748
      %v5881 = vunpack.c.l.b16 %v5749
      %v5882 = vunpack.c.h.b16 %v5749
      %v5883 = vpack.c.b16 %v5835, %v5819
      %v5884 = vpack.c.b16 %v5836, %v5820
      %v5885 = vpack.c.b16 %v5837, %v5821
      %v5886 = vpack.c.b16 %v5838, %v5822
      %v5887 = vpack.c.b16 %v5839, %v5823
      %v5888 = vpack.c.b16 %v5840, %v5824
      %v5889 = vpack.c.b16 %v5841, %v5825
      %v5890 = vpack.c.b16 %v5842, %v5826
      %v5891 = vpack.c.b16 %v5843, %v5827
      %v5892 = vpack.c.b16 %v5844, %v5828
      %v5893 = vpack.c.b16 %v5845, %v5829
      %v5894 = vpack.c.b16 %v5846, %v5830
      %v5895 = vpack.c.b16 %v5847, %v5831
      %v5896 = vpack.c.b16 %v5848, %v5832
      %v5897 = vpack.c.b16 %v5849, %v5833
      %v5898 = vpack.c.b16 %v5850, %v5834
      %v5899 = vpack.c.b16 %v5867, %v5851
      %v5900 = vpack.c.b16 %v5868, %v5852
      %v5901 = vpack.c.b16 %v5869, %v5853
      %v5902 = vpack.c.b16 %v5870, %v5854
      %v5903 = vpack.c.b16 %v5871, %v5855
      %v5904 = vpack.c.b16 %v5872, %v5856
      %v5905 = vpack.c.b16 %v5873, %v5857
      %v5906 = vpack.c.b16 %v5874, %v5858
      %v5907 = vpack.c.b16 %v5875, %v5859
      %v5908 = vpack.c.b16 %v5876, %v5860
      %v5909 = vpack.c.b16 %v5877, %v5861
      %v5910 = vpack.c.b16 %v5878, %v5862
      %v5911 = vpack.c.b16 %v5879, %v5863
      %v5912 = vpack.c.b16 %v5880, %v5864
      %v5913 = vpack.c.b16 %v5881, %v5865
      %v5914 = vpack.c.b16 %v5882, %v5866
      %v5948 = vsel %vm1049, %v5716, 0
      %5950 = vmatpush.bf16.msra.mxu0 0
      %5951 = vmatpush.bf16.msra.mxu0 0
      %5952 = vmatpush.bf16.msra.mxu0 0
      %5953 = vmatpush.bf16.msra.mxu0 0
      %5954 = vmatpush.bf16.msra.mxu0 0
      %5955 = vmatpush.bf16.msra.mxu0 0
      %5956 = vmatpush.bf16.msra.mxu0 %v5899
      %5957 = vmatpush.bf16.msra.mxu0 %v5883
      %5958 = vmatmul.bf16.gmra.mxu0 %v5948
      %v5959 = vpop.f32.mrf.mxu0
      %v5960 = vadd.f32 %v5755, %v5959
      %v5961 = vpop.f32.mrf.mxu0
      %5962 = vdwg.mxu0
      %5963 = vmatpush.bf16.msra.mxu0 0
      %5964 = vmatpush.bf16.msra.mxu0 0
      %5965 = vmatpush.bf16.msra.mxu0 0
      %5966 = vmatpush.bf16.msra.mxu0 0
      %5967 = vmatpush.bf16.msra.mxu0 0
      %5968 = vmatpush.bf16.msra.mxu0 0
      %5969 = vmatpush.bf16.msra.mxu0 %v5900
      %5970 = vmatpush.bf16.msra.mxu0 %v5884
      %5971 = vmatmul.bf16.gmra.mxu0 %v5948
      %v5972 = vpop.f32.mrf.mxu0
      %v5973 = vadd.f32 %v5756, %v5972
      %v5974 = vpop.f32.mrf.mxu0
      %5975 = vdwg.mxu0
      %5976 = vmatpush.bf16.msra.mxu0 0
      %5977 = vmatpush.bf16.msra.mxu0 0
      %5978 = vmatpush.bf16.msra.mxu0 0
      %5979 = vmatpush.bf16.msra.mxu0 0
      %5980 = vmatpush.bf16.msra.mxu0 0
      %5981 = vmatpush.bf16.msra.mxu0 0
      %5982 = vmatpush.bf16.msra.mxu0 %v5901
      %5983 = vmatpush.bf16.msra.mxu0 %v5885
      %5984 = vmatmul.bf16.gmra.mxu0 %v5948
      %v5985 = vpop.f32.mrf.mxu0
      %v5986 = vadd.f32 %v5757, %v5985
      %v5987 = vpop.f32.mrf.mxu0
      %5988 = vdwg.mxu0
      %5989 = vmatpush.bf16.msra.mxu0 0
      %5990 = vmatpush.bf16.msra.mxu0 0
      %5991 = vmatpush.bf16.msra.mxu0 0
      %5992 = vmatpush.bf16.msra.mxu0 0
      %5993 = vmatpush.bf16.msra.mxu0 0
      %5994 = vmatpush.bf16.msra.mxu0 0
      %5995 = vmatpush.bf16.msra.mxu0 %v5902
      %5996 = vmatpush.bf16.msra.mxu0 %v5886
      %5997 = vmatmul.bf16.gmra.mxu0 %v5948
      %v5998 = vpop.f32.mrf.mxu0
      %v5999 = vadd.f32 %v5758, %v5998
      %v6000 = vpop.f32.mrf.mxu0
      %6001 = vdwg.mxu0
      %6002 = vmatpush.bf16.msra.mxu0 0
      %6003 = vmatpush.bf16.msra.mxu0 0
      %6004 = vmatpush.bf16.msra.mxu0 0
      %6005 = vmatpush.bf16.msra.mxu0 0
      %6006 = vmatpush.bf16.msra.mxu0 0
      %6007 = vmatpush.bf16.msra.mxu0 0
      %6008 = vmatpush.bf16.msra.mxu0 %v5903
      %6009 = vmatpush.bf16.msra.mxu0 %v5887
      %6010 = vmatmul.bf16.gmra.mxu0 %v5948
      %v6011 = vpop.f32.mrf.mxu0
      %v6012 = vadd.f32 %v5759, %v6011
      %v6013 = vpop.f32.mrf.mxu0
      %6014 = vdwg.mxu0
      %6015 = vmatpush.bf16.msra.mxu0 0
      %6016 = vmatpush.bf16.msra.mxu0 0
      %6017 = vmatpush.bf16.msra.mxu0 0
      %6018 = vmatpush.bf16.msra.mxu0 0
      %6019 = vmatpush.bf16.msra.mxu0 0
      %6020 = vmatpush.bf16.msra.mxu0 0
      %6021 = vmatpush.bf16.msra.mxu0 %v5904
      %6022 = vmatpush.bf16.msra.mxu0 %v5888
      %6023 = vmatmul.bf16.gmra.mxu0 %v5948
      %v6024 = vpop.f32.mrf.mxu0
      %v6025 = vadd.f32 %v5760, %v6024
      %v6026 = vpop.f32.mrf.mxu0
      %6027 = vdwg.mxu0
      %6028 = vmatpush.bf16.msra.mxu0 0
      %6029 = vmatpush.bf16.msra.mxu0 0
      %6030 = vmatpush.bf16.msra.mxu0 0
      %6031 = vmatpush.bf16.msra.mxu0 0
      %6032 = vmatpush.bf16.msra.mxu0 0
      %6033 = vmatpush.bf16.msra.mxu0 0
      %6034 = vmatpush.bf16.msra.mxu0 %v5905
      %6035 = vmatpush.bf16.msra.mxu0 %v5889
      %6036 = vmatmul.bf16.gmra.mxu0 %v5948
      %v6037 = vpop.f32.mrf.mxu0
      %v6038 = vadd.f32 %v5761, %v6037
      %v6039 = vpop.f32.mrf.mxu0
      %6040 = vdwg.mxu0
      %6041 = vmatpush.bf16.msra.mxu0 0
      %6042 = vmatpush.bf16.msra.mxu0 0
      %6043 = vmatpush.bf16.msra.mxu0 0
      %6044 = vmatpush.bf16.msra.mxu0 0
      %6045 = vmatpush.bf16.msra.mxu0 0
      %6046 = vmatpush.bf16.msra.mxu0 0
      %6047 = vmatpush.bf16.msra.mxu0 %v5906
      %6048 = vmatpush.bf16.msra.mxu0 %v5890
      %6049 = vmatmul.bf16.gmra.mxu0 %v5948
      %v6050 = vpop.f32.mrf.mxu0
      %v6051 = vadd.f32 %v5762, %v6050
      %v6052 = vpop.f32.mrf.mxu0
      %6053 = vdwg.mxu0
      %6054 = vmatpush.bf16.msra.mxu0 0
      %6055 = vmatpush.bf16.msra.mxu0 0
      %6056 = vmatpush.bf16.msra.mxu0 0
      %6057 = vmatpush.bf16.msra.mxu0 0
      %6058 = vmatpush.bf16.msra.mxu0 0
      %6059 = vmatpush.bf16.msra.mxu0 0
      %6060 = vmatpush.bf16.msra.mxu0 %v5907
      %6061 = vmatpush.bf16.msra.mxu0 %v5891
      %6062 = vmatmul.bf16.gmra.mxu0 %v5948
      %v6063 = vpop.f32.mrf.mxu0
      %v6064 = vadd.f32 %v5763, %v6063
      %v6065 = vpop.f32.mrf.mxu0
      %6066 = vdwg.mxu0
      %6067 = vmatpush.bf16.msra.mxu0 0
      %6068 = vmatpush.bf16.msra.mxu0 0
      %6069 = vmatpush.bf16.msra.mxu0 0
      %6070 = vmatpush.bf16.msra.mxu0 0
      %6071 = vmatpush.bf16.msra.mxu0 0
      %6072 = vmatpush.bf16.msra.mxu0 0
      %6073 = vmatpush.bf16.msra.mxu0 %v5908
      %6074 = vmatpush.bf16.msra.mxu0 %v5892
      %6075 = vmatmul.bf16.gmra.mxu0 %v5948
      %v6076 = vpop.f32.mrf.mxu0
      %v6077 = vadd.f32 %v5764, %v6076
      %v6078 = vpop.f32.mrf.mxu0
      %6079 = vdwg.mxu0
      %6080 = vmatpush.bf16.msra.mxu0 0
      %6081 = vmatpush.bf16.msra.mxu0 0
      %6082 = vmatpush.bf16.msra.mxu0 0
      %6083 = vmatpush.bf16.msra.mxu0 0
      %6084 = vmatpush.bf16.msra.mxu0 0
      %6085 = vmatpush.bf16.msra.mxu0 0
      %6086 = vmatpush.bf16.msra.mxu0 %v5909
      %6087 = vmatpush.bf16.msra.mxu0 %v5893
      %6088 = vmatmul.bf16.gmra.mxu0 %v5948
      %v6089 = vpop.f32.mrf.mxu0
      %v6090 = vadd.f32 %v5765, %v6089
      %v6091 = vpop.f32.mrf.mxu0
      %6092 = vdwg.mxu0
      %6093 = vmatpush.bf16.msra.mxu0 0
      %6094 = vmatpush.bf16.msra.mxu0 0
      %6095 = vmatpush.bf16.msra.mxu0 0
      %6096 = vmatpush.bf16.msra.mxu0 0
      %6097 = vmatpush.bf16.msra.mxu0 0
      %6098 = vmatpush.bf16.msra.mxu0 0
      %6099 = vmatpush.bf16.msra.mxu0 %v5910
      %6100 = vmatpush.bf16.msra.mxu0 %v5894
      %6101 = vmatmul.bf16.gmra.mxu0 %v5948
      %v6102 = vpop.f32.mrf.mxu0
      %v6103 = vadd.f32 %v5766, %v6102
      %v6104 = vpop.f32.mrf.mxu0
      %6105 = vdwg.mxu0
      %6106 = vmatpush.bf16.msra.mxu0 0
      %6107 = vmatpush.bf16.msra.mxu0 0
      %6108 = vmatpush.bf16.msra.mxu0 0
      %6109 = vmatpush.bf16.msra.mxu0 0
      %6110 = vmatpush.bf16.msra.mxu0 0
      %6111 = vmatpush.bf16.msra.mxu0 0
      %6112 = vmatpush.bf16.msra.mxu0 %v5911
      %6113 = vmatpush.bf16.msra.mxu0 %v5895
      %6114 = vmatmul.bf16.gmra.mxu0 %v5948
      %v6115 = vpop.f32.mrf.mxu0
      %v6116 = vadd.f32 %v5767, %v6115
      %v6117 = vpop.f32.mrf.mxu0
      %6118 = vdwg.mxu0
      %6119 = vmatpush.bf16.msra.mxu0 0
      %6120 = vmatpush.bf16.msra.mxu0 0
      %6121 = vmatpush.bf16.msra.mxu0 0
      %6122 = vmatpush.bf16.msra.mxu0 0
      %6123 = vmatpush.bf16.msra.mxu0 0
      %6124 = vmatpush.bf16.msra.mxu0 0
      %6125 = vmatpush.bf16.msra.mxu0 %v5912
      %6126 = vmatpush.bf16.msra.mxu0 %v5896
      %6127 = vmatmul.bf16.gmra.mxu0 %v5948
      %v6128 = vpop.f32.mrf.mxu0
      %v6129 = vadd.f32 %v5768, %v6128
      %v6130 = vpop.f32.mrf.mxu0
      %6131 = vdwg.mxu0
      %6132 = vmatpush.bf16.msra.mxu0 0
      %6133 = vmatpush.bf16.msra.mxu0 0
      %6134 = vmatpush.bf16.msra.mxu0 0
      %6135 = vmatpush.bf16.msra.mxu0 0
      %6136 = vmatpush.bf16.msra.mxu0 0
      %6137 = vmatpush.bf16.msra.mxu0 0
      %6138 = vmatpush.bf16.msra.mxu0 %v5913
      %6139 = vmatpush.bf16.msra.mxu0 %v5897
      %6140 = vmatmul.bf16.gmra.mxu0 %v5948
      %v6141 = vpop.f32.mrf.mxu0
      %v6142 = vadd.f32 %v5769, %v6141
      %v6143 = vpop.f32.mrf.mxu0
      %6144 = vdwg.mxu0
      %6145 = vmatpush.bf16.msra.mxu0 0
      %6146 = vmatpush.bf16.msra.mxu0 0
      %6147 = vmatpush.bf16.msra.mxu0 0
      %6148 = vmatpush.bf16.msra.mxu0 0
      %6149 = vmatpush.bf16.msra.mxu0 0
      %6150 = vmatpush.bf16.msra.mxu0 0
      %6151 = vmatpush.bf16.msra.mxu0 %v5914
      %6152 = vmatpush.bf16.msra.mxu0 %v5898
      %6153 = vmatmul.bf16.gmra.mxu0 %v5948
      %v6154 = vpop.f32.mrf.mxu0
      %v6155 = vadd.f32 %v5770, %v6154
      %v6156 = vpop.f32.mrf.mxu0
      %6157 = vdwg.mxu0
      %v6158 = vmax.f32 %v5960, 0.0
      %v6159 = vmax.f32 %v5973, 0.0
      %v6160 = vmax.f32 %v5986, 0.0
      %v6161 = vmax.f32 %v5999, 0.0
      %v6162 = vmax.f32 %v6012, 0.0
      %v6163 = vmax.f32 %v6025, 0.0
      %v6164 = vmax.f32 %v6038, 0.0
      %v6165 = vmax.f32 %v6051, 0.0
      %v6166 = vmax.f32 %v6064, 0.0
      %v6167 = vmax.f32 %v6077, 0.0
      %v6168 = vmax.f32 %v6090, 0.0
      %v6169 = vmax.f32 %v6103, 0.0
      %v6170 = vmax.f32 %v6116, 0.0
      %v6171 = vmax.f32 %v6129, 0.0
      %v6172 = vmax.f32 %v6142, 0.0
      %v6173 = vmax.f32 %v6155, 0.0
      %v6174 = vpack.c.bf16 %v6158, %v6158
      %v6175 = vpack.c.bf16 %v6159, %v6159
      %v6176 = vpack.c.bf16 %v6160, %v6160
      %v6177 = vpack.c.bf16 %v6161, %v6161
      %v6178 = vpack.c.bf16 %v6162, %v6162
      %v6179 = vpack.c.bf16 %v6163, %v6163
      %v6180 = vpack.c.bf16 %v6164, %v6164
      %v6181 = vpack.c.bf16 %v6165, %v6165
      %v6182 = vpack.c.bf16 %v6166, %v6166
      %v6183 = vpack.c.bf16 %v6167, %v6167
      %v6184 = vpack.c.bf16 %v6168, %v6168
      %v6185 = vpack.c.bf16 %v6169, %v6169
      %v6186 = vpack.c.bf16 %v6170, %v6170
      %v6187 = vpack.c.bf16 %v6171, %v6171
      %v6188 = vpack.c.bf16 %v6172, %v6172
      %v6189 = vpack.c.bf16 %v6173, %v6173
      %s6190 = scalar_lea.vmem %s47, 1024
      %v6191 = vld [vmem:[%s6190] sm:$0xf]
      %v6192 = vld [vmem:[%s6190 + $0x4] sm:$0xf]
      %v6193 = vld [vmem:[%s6190 + $0x8] sm:$0xf]
      %v6194 = vld [vmem:[%s6190 + $0xc] sm:$0xf]
      %v6195 = vld [vmem:[%s6190 + $0x10] sm:$0xf]
      %v6196 = vld [vmem:[%s6190 + $0x14] sm:$0xf]
      %v6197 = vld [vmem:[%s6190 + $0x18] sm:$0xf]
      %v6198 = vld [vmem:[%s6190 + $0x1c] sm:$0xf]
      %v6199 = vld [vmem:[%s6190 + $0x20] sm:$0xf]
      %v6200 = vld [vmem:[%s6190 + $0x24] sm:$0xf]
      %v6201 = vld [vmem:[%s6190 + $0x28] sm:$0xf]
      %v6202 = vld [vmem:[%s6190 + $0x2c] sm:$0xf]
      %v6203 = vld [vmem:[%s6190 + $0x30] sm:$0xf]
      %v6204 = vld [vmem:[%s6190 + $0x34] sm:$0xf]
      %v6205 = vld [vmem:[%s6190 + $0x38] sm:$0xf]
      %v6206 = vld [vmem:[%s6190 + $0x3c] sm:$0xf]
      %v6207 = vld [vmem:[%s6190 + $0x40] sm:$0xf]
      %v6208 = vld [vmem:[%s6190 + $0x44] sm:$0xf]
      %v6209 = vld [vmem:[%s6190 + $0x48] sm:$0xf]
      %v6210 = vld [vmem:[%s6190 + $0x4c] sm:$0xf]
      %v6211 = vld [vmem:[%s6190 + $0x50] sm:$0xf]
      %v6212 = vld [vmem:[%s6190 + $0x54] sm:$0xf]
      %v6213 = vld [vmem:[%s6190 + $0x58] sm:$0xf]
      %v6214 = vld [vmem:[%s6190 + $0x5c] sm:$0xf]
      %v6215 = vld [vmem:[%s6190 + $0x60] sm:$0xf]
      %v6216 = vld [vmem:[%s6190 + $0x64] sm:$0xf]
      %v6217 = vld [vmem:[%s6190 + $0x68] sm:$0xf]
      %v6218 = vld [vmem:[%s6190 + $0x6c] sm:$0xf]
      %v6219 = vld [vmem:[%s6190 + $0x70] sm:$0xf]
      %v6220 = vld [vmem:[%s6190 + $0x74] sm:$0xf]
      %v6221 = vld [vmem:[%s6190 + $0x78] sm:$0xf]
      %v6222 = vld [vmem:[%s6190 + $0x7c] sm:$0xf]
      %v6223 = vld [vmem:[%s6190 + $0x80] sm:$0xf]
      %v6224 = vld [vmem:[%s6190 + $0x84] sm:$0xf]
      %v6225 = vld [vmem:[%s6190 + $0x88] sm:$0xf]
      %v6226 = vld [vmem:[%s6190 + $0x8c] sm:$0xf]
      %v6227 = vld [vmem:[%s6190 + $0x90] sm:$0xf]
      %v6228 = vld [vmem:[%s6190 + $0x94] sm:$0xf]
      %v6229 = vld [vmem:[%s6190 + $0x98] sm:$0xf]
      %v6230 = vld [vmem:[%s6190 + $0x9c] sm:$0xf]
      %v6231 = vld [vmem:[%s6190 + $0xa0] sm:$0xf]
      %v6232 = vld [vmem:[%s6190 + $0xa4] sm:$0xf]
      %v6233 = vld [vmem:[%s6190 + $0xa8] sm:$0xf]
      %v6234 = vld [vmem:[%s6190 + $0xac] sm:$0xf]
      %v6235 = vld [vmem:[%s6190 + $0xb0] sm:$0xf]
      %v6236 = vld [vmem:[%s6190 + $0xb4] sm:$0xf]
      %v6237 = vld [vmem:[%s6190 + $0xb8] sm:$0xf]
      %v6238 = vld [vmem:[%s6190 + $0xbc] sm:$0xf]
      %v6239 = vld [vmem:[%s6190 + $0xc0] sm:$0xf]
      %v6240 = vld [vmem:[%s6190 + $0xc4] sm:$0xf]
      %v6241 = vld [vmem:[%s6190 + $0xc8] sm:$0xf]
      %v6242 = vld [vmem:[%s6190 + $0xcc] sm:$0xf]
      %v6243 = vld [vmem:[%s6190 + $0xd0] sm:$0xf]
      %v6244 = vld [vmem:[%s6190 + $0xd4] sm:$0xf]
      %v6245 = vld [vmem:[%s6190 + $0xd8] sm:$0xf]
      %v6246 = vld [vmem:[%s6190 + $0xdc] sm:$0xf]
      %v6247 = vld [vmem:[%s6190 + $0xe0] sm:$0xf]
      %v6248 = vld [vmem:[%s6190 + $0xe4] sm:$0xf]
      %v6249 = vld [vmem:[%s6190 + $0xe8] sm:$0xf]
      %v6250 = vld [vmem:[%s6190 + $0xec] sm:$0xf]
      %v6251 = vld [vmem:[%s6190 + $0xf0] sm:$0xf]
      %v6252 = vld [vmem:[%s6190 + $0xf4] sm:$0xf]
      %v6253 = vld [vmem:[%s6190 + $0xf8] sm:$0xf]
      %v6254 = vld [vmem:[%s6190 + $0xfc] sm:$0xf]
      %v6255 = vld [vmem:[%s6190 + $0x100] sm:$0xf]
      %v6256 = vld [vmem:[%s6190 + $0x104] sm:$0xf]
      %v6257 = vld [vmem:[%s6190 + $0x108] sm:$0xf]
      %v6258 = vld [vmem:[%s6190 + $0x10c] sm:$0xf]
      %v6259 = vld [vmem:[%s6190 + $0x110] sm:$0xf]
      %v6260 = vld [vmem:[%s6190 + $0x114] sm:$0xf]
      %v6261 = vld [vmem:[%s6190 + $0x118] sm:$0xf]
      %v6262 = vld [vmem:[%s6190 + $0x11c] sm:$0xf]
      %v6263 = vld [vmem:[%s6190 + $0x120] sm:$0xf]
      %v6264 = vld [vmem:[%s6190 + $0x124] sm:$0xf]
      %v6265 = vld [vmem:[%s6190 + $0x128] sm:$0xf]
      %v6266 = vld [vmem:[%s6190 + $0x12c] sm:$0xf]
      %v6267 = vld [vmem:[%s6190 + $0x130] sm:$0xf]
      %v6268 = vld [vmem:[%s6190 + $0x134] sm:$0xf]
      %v6269 = vld [vmem:[%s6190 + $0x138] sm:$0xf]
      %v6270 = vld [vmem:[%s6190 + $0x13c] sm:$0xf]
      %v6271 = vld [vmem:[%s6190 + $0x140] sm:$0xf]
      %v6272 = vld [vmem:[%s6190 + $0x144] sm:$0xf]
      %v6273 = vld [vmem:[%s6190 + $0x148] sm:$0xf]
      %v6274 = vld [vmem:[%s6190 + $0x14c] sm:$0xf]
      %v6275 = vld [vmem:[%s6190 + $0x150] sm:$0xf]
      %v6276 = vld [vmem:[%s6190 + $0x154] sm:$0xf]
      %v6277 = vld [vmem:[%s6190 + $0x158] sm:$0xf]
      %v6278 = vld [vmem:[%s6190 + $0x15c] sm:$0xf]
      %v6279 = vld [vmem:[%s6190 + $0x160] sm:$0xf]
      %v6280 = vld [vmem:[%s6190 + $0x164] sm:$0xf]
      %v6281 = vld [vmem:[%s6190 + $0x168] sm:$0xf]
      %v6282 = vld [vmem:[%s6190 + $0x16c] sm:$0xf]
      %v6283 = vld [vmem:[%s6190 + $0x170] sm:$0xf]
      %v6284 = vld [vmem:[%s6190 + $0x174] sm:$0xf]
      %v6285 = vld [vmem:[%s6190 + $0x178] sm:$0xf]
      %v6286 = vld [vmem:[%s6190 + $0x17c] sm:$0xf]
      %v6287 = vld [vmem:[%s6190 + $0x180] sm:$0xf]
      %v6288 = vld [vmem:[%s6190 + $0x184] sm:$0xf]
      %v6289 = vld [vmem:[%s6190 + $0x188] sm:$0xf]
      %v6290 = vld [vmem:[%s6190 + $0x18c] sm:$0xf]
      %v6291 = vld [vmem:[%s6190 + $0x190] sm:$0xf]
      %v6292 = vld [vmem:[%s6190 + $0x194] sm:$0xf]
      %v6293 = vld [vmem:[%s6190 + $0x198] sm:$0xf]
      %v6294 = vld [vmem:[%s6190 + $0x19c] sm:$0xf]
      %v6295 = vld [vmem:[%s6190 + $0x1a0] sm:$0xf]
      %v6296 = vld [vmem:[%s6190 + $0x1a4] sm:$0xf]
      %v6297 = vld [vmem:[%s6190 + $0x1a8] sm:$0xf]
      %v6298 = vld [vmem:[%s6190 + $0x1ac] sm:$0xf]
      %v6299 = vld [vmem:[%s6190 + $0x1b0] sm:$0xf]
      %v6300 = vld [vmem:[%s6190 + $0x1b4] sm:$0xf]
      %v6301 = vld [vmem:[%s6190 + $0x1b8] sm:$0xf]
      %v6302 = vld [vmem:[%s6190 + $0x1bc] sm:$0xf]
      %v6303 = vld [vmem:[%s6190 + $0x1c0] sm:$0xf]
      %v6304 = vld [vmem:[%s6190 + $0x1c4] sm:$0xf]
      %v6305 = vld [vmem:[%s6190 + $0x1c8] sm:$0xf]
      %v6306 = vld [vmem:[%s6190 + $0x1cc] sm:$0xf]
      %v6307 = vld [vmem:[%s6190 + $0x1d0] sm:$0xf]
      %v6308 = vld [vmem:[%s6190 + $0x1d4] sm:$0xf]
      %v6309 = vld [vmem:[%s6190 + $0x1d8] sm:$0xf]
      %v6310 = vld [vmem:[%s6190 + $0x1dc] sm:$0xf]
      %v6311 = vld [vmem:[%s6190 + $0x1e0] sm:$0xf]
      %v6312 = vld [vmem:[%s6190 + $0x1e4] sm:$0xf]
      %v6313 = vld [vmem:[%s6190 + $0x1e8] sm:$0xf]
      %v6314 = vld [vmem:[%s6190 + $0x1ec] sm:$0xf]
      %v6315 = vld [vmem:[%s6190 + $0x1f0] sm:$0xf]
      %v6316 = vld [vmem:[%s6190 + $0x1f4] sm:$0xf]
      %v6317 = vld [vmem:[%s6190 + $0x1f8] sm:$0xf]
      %v6318 = vld [vmem:[%s6190 + $0x1fc] sm:$0xf]
      %v6319 = vld [vmem:[%s6190 + $0x200] sm:$0xf]
      %v6320 = vld [vmem:[%s6190 + $0x204] sm:$0xf]
      %v6321 = vld [vmem:[%s6190 + $0x208] sm:$0xf]
      %v6322 = vld [vmem:[%s6190 + $0x20c] sm:$0xf]
      %v6323 = vld [vmem:[%s6190 + $0x210] sm:$0xf]
      %v6324 = vld [vmem:[%s6190 + $0x214] sm:$0xf]
      %v6325 = vld [vmem:[%s6190 + $0x218] sm:$0xf]
      %v6326 = vld [vmem:[%s6190 + $0x21c] sm:$0xf]
      %v6327 = vld [vmem:[%s6190 + $0x220] sm:$0xf]
      %v6328 = vld [vmem:[%s6190 + $0x224] sm:$0xf]
      %v6329 = vld [vmem:[%s6190 + $0x228] sm:$0xf]
      %v6330 = vld [vmem:[%s6190 + $0x22c] sm:$0xf]
      %v6331 = vld [vmem:[%s6190 + $0x230] sm:$0xf]
      %v6332 = vld [vmem:[%s6190 + $0x234] sm:$0xf]
      %v6333 = vld [vmem:[%s6190 + $0x238] sm:$0xf]
      %v6334 = vld [vmem:[%s6190 + $0x23c] sm:$0xf]
      %v6335 = vld [vmem:[%s6190 + $0x240] sm:$0xf]
      %v6336 = vld [vmem:[%s6190 + $0x244] sm:$0xf]
      %v6337 = vld [vmem:[%s6190 + $0x248] sm:$0xf]
      %v6338 = vld [vmem:[%s6190 + $0x24c] sm:$0xf]
      %v6339 = vld [vmem:[%s6190 + $0x250] sm:$0xf]
      %v6340 = vld [vmem:[%s6190 + $0x254] sm:$0xf]
      %v6341 = vld [vmem:[%s6190 + $0x258] sm:$0xf]
      %v6342 = vld [vmem:[%s6190 + $0x25c] sm:$0xf]
      %v6343 = vld [vmem:[%s6190 + $0x260] sm:$0xf]
      %v6344 = vld [vmem:[%s6190 + $0x264] sm:$0xf]
      %v6345 = vld [vmem:[%s6190 + $0x268] sm:$0xf]
      %v6346 = vld [vmem:[%s6190 + $0x26c] sm:$0xf]
      %v6347 = vld [vmem:[%s6190 + $0x270] sm:$0xf]
      %v6348 = vld [vmem:[%s6190 + $0x274] sm:$0xf]
      %v6349 = vld [vmem:[%s6190 + $0x278] sm:$0xf]
      %v6350 = vld [vmem:[%s6190 + $0x27c] sm:$0xf]
      %v6351 = vld [vmem:[%s6190 + $0x280] sm:$0xf]
      %v6352 = vld [vmem:[%s6190 + $0x284] sm:$0xf]
      %v6353 = vld [vmem:[%s6190 + $0x288] sm:$0xf]
      %v6354 = vld [vmem:[%s6190 + $0x28c] sm:$0xf]
      %v6355 = vld [vmem:[%s6190 + $0x290] sm:$0xf]
      %v6356 = vld [vmem:[%s6190 + $0x294] sm:$0xf]
      %v6357 = vld [vmem:[%s6190 + $0x298] sm:$0xf]
      %v6358 = vld [vmem:[%s6190 + $0x29c] sm:$0xf]
      %v6359 = vld [vmem:[%s6190 + $0x2a0] sm:$0xf]
      %v6360 = vld [vmem:[%s6190 + $0x2a4] sm:$0xf]
      %v6361 = vld [vmem:[%s6190 + $0x2a8] sm:$0xf]
      %v6362 = vld [vmem:[%s6190 + $0x2ac] sm:$0xf]
      %v6363 = vld [vmem:[%s6190 + $0x2b0] sm:$0xf]
      %v6364 = vld [vmem:[%s6190 + $0x2b4] sm:$0xf]
      %v6365 = vld [vmem:[%s6190 + $0x2b8] sm:$0xf]
      %v6366 = vld [vmem:[%s6190 + $0x2bc] sm:$0xf]
      %v6367 = vld [vmem:[%s6190 + $0x2c0] sm:$0xf]
      %v6368 = vld [vmem:[%s6190 + $0x2c4] sm:$0xf]
      %v6369 = vld [vmem:[%s6190 + $0x2c8] sm:$0xf]
      %v6370 = vld [vmem:[%s6190 + $0x2cc] sm:$0xf]
      %v6371 = vld [vmem:[%s6190 + $0x2d0] sm:$0xf]
      %v6372 = vld [vmem:[%s6190 + $0x2d4] sm:$0xf]
      %v6373 = vld [vmem:[%s6190 + $0x2d8] sm:$0xf]
      %v6374 = vld [vmem:[%s6190 + $0x2dc] sm:$0xf]
      %v6375 = vld [vmem:[%s6190 + $0x2e0] sm:$0xf]
      %v6376 = vld [vmem:[%s6190 + $0x2e4] sm:$0xf]
      %v6377 = vld [vmem:[%s6190 + $0x2e8] sm:$0xf]
      %v6378 = vld [vmem:[%s6190 + $0x2ec] sm:$0xf]
      %v6379 = vld [vmem:[%s6190 + $0x2f0] sm:$0xf]
      %v6380 = vld [vmem:[%s6190 + $0x2f4] sm:$0xf]
      %v6381 = vld [vmem:[%s6190 + $0x2f8] sm:$0xf]
      %v6382 = vld [vmem:[%s6190 + $0x2fc] sm:$0xf]
      %v6383 = vld [vmem:[%s6190 + $0x300] sm:$0xf]
      %v6384 = vld [vmem:[%s6190 + $0x304] sm:$0xf]
      %v6385 = vld [vmem:[%s6190 + $0x308] sm:$0xf]
      %v6386 = vld [vmem:[%s6190 + $0x30c] sm:$0xf]
      %v6387 = vld [vmem:[%s6190 + $0x310] sm:$0xf]
      %v6388 = vld [vmem:[%s6190 + $0x314] sm:$0xf]
      %v6389 = vld [vmem:[%s6190 + $0x318] sm:$0xf]
      %v6390 = vld [vmem:[%s6190 + $0x31c] sm:$0xf]
      %v6391 = vld [vmem:[%s6190 + $0x320] sm:$0xf]
      %v6392 = vld [vmem:[%s6190 + $0x324] sm:$0xf]
      %v6393 = vld [vmem:[%s6190 + $0x328] sm:$0xf]
      %v6394 = vld [vmem:[%s6190 + $0x32c] sm:$0xf]
      %v6395 = vld [vmem:[%s6190 + $0x330] sm:$0xf]
      %v6396 = vld [vmem:[%s6190 + $0x334] sm:$0xf]
      %v6397 = vld [vmem:[%s6190 + $0x338] sm:$0xf]
      %v6398 = vld [vmem:[%s6190 + $0x33c] sm:$0xf]
      %v6399 = vld [vmem:[%s6190 + $0x340] sm:$0xf]
      %v6400 = vld [vmem:[%s6190 + $0x344] sm:$0xf]
      %v6401 = vld [vmem:[%s6190 + $0x348] sm:$0xf]
      %v6402 = vld [vmem:[%s6190 + $0x34c] sm:$0xf]
      %v6403 = vld [vmem:[%s6190 + $0x350] sm:$0xf]
      %v6404 = vld [vmem:[%s6190 + $0x354] sm:$0xf]
      %v6405 = vld [vmem:[%s6190 + $0x358] sm:$0xf]
      %v6406 = vld [vmem:[%s6190 + $0x35c] sm:$0xf]
      %v6407 = vld [vmem:[%s6190 + $0x360] sm:$0xf]
      %v6408 = vld [vmem:[%s6190 + $0x364] sm:$0xf]
      %v6409 = vld [vmem:[%s6190 + $0x368] sm:$0xf]
      %v6410 = vld [vmem:[%s6190 + $0x36c] sm:$0xf]
      %v6411 = vld [vmem:[%s6190 + $0x370] sm:$0xf]
      %v6412 = vld [vmem:[%s6190 + $0x374] sm:$0xf]
      %v6413 = vld [vmem:[%s6190 + $0x378] sm:$0xf]
      %v6414 = vld [vmem:[%s6190 + $0x37c] sm:$0xf]
      %v6415 = vld [vmem:[%s6190 + $0x380] sm:$0xf]
      %v6416 = vld [vmem:[%s6190 + $0x384] sm:$0xf]
      %v6417 = vld [vmem:[%s6190 + $0x388] sm:$0xf]
      %v6418 = vld [vmem:[%s6190 + $0x38c] sm:$0xf]
      %v6419 = vld [vmem:[%s6190 + $0x390] sm:$0xf]
      %v6420 = vld [vmem:[%s6190 + $0x394] sm:$0xf]
      %v6421 = vld [vmem:[%s6190 + $0x398] sm:$0xf]
      %v6422 = vld [vmem:[%s6190 + $0x39c] sm:$0xf]
      %v6423 = vld [vmem:[%s6190 + $0x3a0] sm:$0xf]
      %v6424 = vld [vmem:[%s6190 + $0x3a4] sm:$0xf]
      %v6425 = vld [vmem:[%s6190 + $0x3a8] sm:$0xf]
      %v6426 = vld [vmem:[%s6190 + $0x3ac] sm:$0xf]
      %v6427 = vld [vmem:[%s6190 + $0x3b0] sm:$0xf]
      %v6428 = vld [vmem:[%s6190 + $0x3b4] sm:$0xf]
      %v6429 = vld [vmem:[%s6190 + $0x3b8] sm:$0xf]
      %v6430 = vld [vmem:[%s6190 + $0x3bc] sm:$0xf]
      %v6431 = vld [vmem:[%s6190 + $0x3c0] sm:$0xf]
      %v6432 = vld [vmem:[%s6190 + $0x3c4] sm:$0xf]
      %v6433 = vld [vmem:[%s6190 + $0x3c8] sm:$0xf]
      %v6434 = vld [vmem:[%s6190 + $0x3cc] sm:$0xf]
      %v6435 = vld [vmem:[%s6190 + $0x3d0] sm:$0xf]
      %v6436 = vld [vmem:[%s6190 + $0x3d4] sm:$0xf]
      %v6437 = vld [vmem:[%s6190 + $0x3d8] sm:$0xf]
      %v6438 = vld [vmem:[%s6190 + $0x3dc] sm:$0xf]
      %v6439 = vld [vmem:[%s6190 + $0x3e0] sm:$0xf]
      %v6440 = vld [vmem:[%s6190 + $0x3e4] sm:$0xf]
      %v6441 = vld [vmem:[%s6190 + $0x3e8] sm:$0xf]
      %v6442 = vld [vmem:[%s6190 + $0x3ec] sm:$0xf]
      %v6443 = vld [vmem:[%s6190 + $0x3f0] sm:$0xf]
      %v6444 = vld [vmem:[%s6190 + $0x3f4] sm:$0xf]
      %v6445 = vld [vmem:[%s6190 + $0x3f8] sm:$0xf]
      %v6446 = vld [vmem:[%s6190 + $0x3fc] sm:$0xf]
      %v6447 = vperm.slane %v4837, 7
      %v6704 = vunpack.c.l.b16 %v6191
      %v6705 = vunpack.c.l.b16 %v6192
      %v6706 = vunpack.c.l.b16 %v6193
      %v6707 = vunpack.c.l.b16 %v6194
      %v6708 = vunpack.c.l.b16 %v6195
      %v6709 = vunpack.c.l.b16 %v6196
      %v6710 = vunpack.c.l.b16 %v6197
      %v6711 = vunpack.c.l.b16 %v6198
      %v6712 = vunpack.c.l.b16 %v6199
      %v6713 = vunpack.c.l.b16 %v6200
      %v6714 = vunpack.c.l.b16 %v6201
      %v6715 = vunpack.c.l.b16 %v6202
      %v6716 = vunpack.c.l.b16 %v6203
      %v6717 = vunpack.c.l.b16 %v6204
      %v6718 = vunpack.c.l.b16 %v6205
      %v6719 = vunpack.c.l.b16 %v6206
      %v6720 = vunpack.c.l.b16 %v6207
      %v6721 = vunpack.c.l.b16 %v6208
      %v6722 = vunpack.c.l.b16 %v6209
      %v6723 = vunpack.c.l.b16 %v6210
      %v6724 = vunpack.c.l.b16 %v6211
      %v6725 = vunpack.c.l.b16 %v6212
      %v6726 = vunpack.c.l.b16 %v6213
      %v6727 = vunpack.c.l.b16 %v6214
      %v6728 = vunpack.c.l.b16 %v6215
      %v6729 = vunpack.c.l.b16 %v6216
      %v6730 = vunpack.c.l.b16 %v6217
      %v6731 = vunpack.c.l.b16 %v6218
      %v6732 = vunpack.c.l.b16 %v6219
      %v6733 = vunpack.c.l.b16 %v6220
      %v6734 = vunpack.c.l.b16 %v6221
      %v6735 = vunpack.c.l.b16 %v6222
      %v6736 = vunpack.c.l.b16 %v6223
      %v6737 = vunpack.c.l.b16 %v6224
      %v6738 = vunpack.c.l.b16 %v6225
      %v6739 = vunpack.c.l.b16 %v6226
      %v6740 = vunpack.c.l.b16 %v6227
      %v6741 = vunpack.c.l.b16 %v6228
      %v6742 = vunpack.c.l.b16 %v6229
      %v6743 = vunpack.c.l.b16 %v6230
      %v6744 = vunpack.c.l.b16 %v6231
      %v6745 = vunpack.c.l.b16 %v6232
      %v6746 = vunpack.c.l.b16 %v6233
      %v6747 = vunpack.c.l.b16 %v6234
      %v6748 = vunpack.c.l.b16 %v6235
      %v6749 = vunpack.c.l.b16 %v6236
      %v6750 = vunpack.c.l.b16 %v6237
      %v6751 = vunpack.c.l.b16 %v6238
      %v6752 = vunpack.c.l.b16 %v6239
      %v6753 = vunpack.c.l.b16 %v6240
      %v6754 = vunpack.c.l.b16 %v6241
      %v6755 = vunpack.c.l.b16 %v6242
      %v6756 = vunpack.c.l.b16 %v6243
      %v6757 = vunpack.c.l.b16 %v6244
      %v6758 = vunpack.c.l.b16 %v6245
      %v6759 = vunpack.c.l.b16 %v6246
      %v6760 = vunpack.c.l.b16 %v6247
      %v6761 = vunpack.c.l.b16 %v6248
      %v6762 = vunpack.c.l.b16 %v6249
      %v6763 = vunpack.c.l.b16 %v6250
      %v6764 = vunpack.c.l.b16 %v6251
      %v6765 = vunpack.c.l.b16 %v6252
      %v6766 = vunpack.c.l.b16 %v6253
      %v6767 = vunpack.c.l.b16 %v6254
      %v6768 = vunpack.c.l.b16 %v6255
      %v6769 = vunpack.c.l.b16 %v6256
      %v6770 = vunpack.c.l.b16 %v6257
      %v6771 = vunpack.c.l.b16 %v6258
      %v6772 = vunpack.c.l.b16 %v6259
      %v6773 = vunpack.c.l.b16 %v6260
      %v6774 = vunpack.c.l.b16 %v6261
      %v6775 = vunpack.c.l.b16 %v6262
      %v6776 = vunpack.c.l.b16 %v6263
      %v6777 = vunpack.c.l.b16 %v6264
      %v6778 = vunpack.c.l.b16 %v6265
      %v6779 = vunpack.c.l.b16 %v6266
      %v6780 = vunpack.c.l.b16 %v6267
      %v6781 = vunpack.c.l.b16 %v6268
      %v6782 = vunpack.c.l.b16 %v6269
      %v6783 = vunpack.c.l.b16 %v6270
      %v6784 = vunpack.c.l.b16 %v6271
      %v6785 = vunpack.c.l.b16 %v6272
      %v6786 = vunpack.c.l.b16 %v6273
      %v6787 = vunpack.c.l.b16 %v6274
      %v6788 = vunpack.c.l.b16 %v6275
      %v6789 = vunpack.c.l.b16 %v6276
      %v6790 = vunpack.c.l.b16 %v6277
      %v6791 = vunpack.c.l.b16 %v6278
      %v6792 = vunpack.c.l.b16 %v6279
      %v6793 = vunpack.c.l.b16 %v6280
      %v6794 = vunpack.c.l.b16 %v6281
      %v6795 = vunpack.c.l.b16 %v6282
      %v6796 = vunpack.c.l.b16 %v6283
      %v6797 = vunpack.c.l.b16 %v6284
      %v6798 = vunpack.c.l.b16 %v6285
      %v6799 = vunpack.c.l.b16 %v6286
      %v6800 = vunpack.c.l.b16 %v6287
      %v6801 = vunpack.c.l.b16 %v6288
      %v6802 = vunpack.c.l.b16 %v6289
      %v6803 = vunpack.c.l.b16 %v6290
      %v6804 = vunpack.c.l.b16 %v6291
      %v6805 = vunpack.c.l.b16 %v6292
      %v6806 = vunpack.c.l.b16 %v6293
      %v6807 = vunpack.c.l.b16 %v6294
      %v6808 = vunpack.c.l.b16 %v6295
      %v6809 = vunpack.c.l.b16 %v6296
      %v6810 = vunpack.c.l.b16 %v6297
      %v6811 = vunpack.c.l.b16 %v6298
      %v6812 = vunpack.c.l.b16 %v6299
      %v6813 = vunpack.c.l.b16 %v6300
      %v6814 = vunpack.c.l.b16 %v6301
      %v6815 = vunpack.c.l.b16 %v6302
      %v6816 = vunpack.c.l.b16 %v6303
      %v6817 = vunpack.c.l.b16 %v6304
      %v6818 = vunpack.c.l.b16 %v6305
      %v6819 = vunpack.c.l.b16 %v6306
      %v6820 = vunpack.c.l.b16 %v6307
      %v6821 = vunpack.c.l.b16 %v6308
      %v6822 = vunpack.c.l.b16 %v6309
      %v6823 = vunpack.c.l.b16 %v6310
      %v6824 = vunpack.c.l.b16 %v6311
      %v6825 = vunpack.c.l.b16 %v6312
      %v6826 = vunpack.c.l.b16 %v6313
      %v6827 = vunpack.c.l.b16 %v6314
      %v6828 = vunpack.c.l.b16 %v6315
      %v6829 = vunpack.c.l.b16 %v6316
      %v6830 = vunpack.c.l.b16 %v6317
      %v6831 = vunpack.c.l.b16 %v6318
      %v6832 = vunpack.c.l.b16 %v6319
      %v6833 = vunpack.c.l.b16 %v6320
      %v6834 = vunpack.c.l.b16 %v6321
      %v6835 = vunpack.c.l.b16 %v6322
      %v6836 = vunpack.c.l.b16 %v6323
      %v6837 = vunpack.c.l.b16 %v6324
      %v6838 = vunpack.c.l.b16 %v6325
      %v6839 = vunpack.c.l.b16 %v6326
      %v6840 = vunpack.c.l.b16 %v6327
      %v6841 = vunpack.c.l.b16 %v6328
      %v6842 = vunpack.c.l.b16 %v6329
      %v6843 = vunpack.c.l.b16 %v6330
      %v6844 = vunpack.c.l.b16 %v6331
      %v6845 = vunpack.c.l.b16 %v6332
      %v6846 = vunpack.c.l.b16 %v6333
      %v6847 = vunpack.c.l.b16 %v6334
      %v6848 = vunpack.c.l.b16 %v6335
      %v6849 = vunpack.c.l.b16 %v6336
      %v6850 = vunpack.c.l.b16 %v6337
      %v6851 = vunpack.c.l.b16 %v6338
      %v6852 = vunpack.c.l.b16 %v6339
      %v6853 = vunpack.c.l.b16 %v6340
      %v6854 = vunpack.c.l.b16 %v6341
      %v6855 = vunpack.c.l.b16 %v6342
      %v6856 = vunpack.c.l.b16 %v6343
      %v6857 = vunpack.c.l.b16 %v6344
      %v6858 = vunpack.c.l.b16 %v6345
      %v6859 = vunpack.c.l.b16 %v6346
      %v6860 = vunpack.c.l.b16 %v6347
      %v6861 = vunpack.c.l.b16 %v6348
      %v6862 = vunpack.c.l.b16 %v6349
      %v6863 = vunpack.c.l.b16 %v6350
      %v6864 = vunpack.c.l.b16 %v6351
      %v6865 = vunpack.c.l.b16 %v6352
      %v6866 = vunpack.c.l.b16 %v6353
      %v6867 = vunpack.c.l.b16 %v6354
      %v6868 = vunpack.c.l.b16 %v6355
      %v6869 = vunpack.c.l.b16 %v6356
      %v6870 = vunpack.c.l.b16 %v6357
      %v6871 = vunpack.c.l.b16 %v6358
      %v6872 = vunpack.c.l.b16 %v6359
      %v6873 = vunpack.c.l.b16 %v6360
      %v6874 = vunpack.c.l.b16 %v6361
      %v6875 = vunpack.c.l.b16 %v6362
      %v6876 = vunpack.c.l.b16 %v6363
      %v6877 = vunpack.c.l.b16 %v6364
      %v6878 = vunpack.c.l.b16 %v6365
      %v6879 = vunpack.c.l.b16 %v6366
      %v6880 = vunpack.c.l.b16 %v6367
      %v6881 = vunpack.c.l.b16 %v6368
      %v6882 = vunpack.c.l.b16 %v6369
      %v6883 = vunpack.c.l.b16 %v6370
      %v6884 = vunpack.c.l.b16 %v6371
      %v6885 = vunpack.c.l.b16 %v6372
      %v6886 = vunpack.c.l.b16 %v6373
      %v6887 = vunpack.c.l.b16 %v6374
      %v6888 = vunpack.c.l.b16 %v6375
      %v6889 = vunpack.c.l.b16 %v6376
      %v6890 = vunpack.c.l.b16 %v6377
      %v6891 = vunpack.c.l.b16 %v6378
      %v6892 = vunpack.c.l.b16 %v6379
      %v6893 = vunpack.c.l.b16 %v6380
      %v6894 = vunpack.c.l.b16 %v6381
      %v6895 = vunpack.c.l.b16 %v6382
      %v6896 = vunpack.c.l.b16 %v6383
      %v6897 = vunpack.c.l.b16 %v6384
      %v6898 = vunpack.c.l.b16 %v6385
      %v6899 = vunpack.c.l.b16 %v6386
      %v6900 = vunpack.c.l.b16 %v6387
      %v6901 = vunpack.c.l.b16 %v6388
      %v6902 = vunpack.c.l.b16 %v6389
      %v6903 = vunpack.c.l.b16 %v6390
      %v6904 = vunpack.c.l.b16 %v6391
      %v6905 = vunpack.c.l.b16 %v6392
      %v6906 = vunpack.c.l.b16 %v6393
      %v6907 = vunpack.c.l.b16 %v6394
      %v6908 = vunpack.c.l.b16 %v6395
      %v6909 = vunpack.c.l.b16 %v6396
      %v6910 = vunpack.c.l.b16 %v6397
      %v6911 = vunpack.c.l.b16 %v6398
      %v6912 = vunpack.c.l.b16 %v6399
      %v6913 = vunpack.c.l.b16 %v6400
      %v6914 = vunpack.c.l.b16 %v6401
      %v6915 = vunpack.c.l.b16 %v6402
      %v6916 = vunpack.c.l.b16 %v6403
      %v6917 = vunpack.c.l.b16 %v6404
      %v6918 = vunpack.c.l.b16 %v6405
      %v6919 = vunpack.c.l.b16 %v6406
      %v6920 = vunpack.c.l.b16 %v6407
      %v6921 = vunpack.c.l.b16 %v6408
      %v6922 = vunpack.c.l.b16 %v6409
      %v6923 = vunpack.c.l.b16 %v6410
      %v6924 = vunpack.c.l.b16 %v6411
      %v6925 = vunpack.c.l.b16 %v6412
      %v6926 = vunpack.c.l.b16 %v6413
      %v6927 = vunpack.c.l.b16 %v6414
      %v6928 = vunpack.c.l.b16 %v6415
      %v6929 = vunpack.c.l.b16 %v6416
      %v6930 = vunpack.c.l.b16 %v6417
      %v6931 = vunpack.c.l.b16 %v6418
      %v6932 = vunpack.c.l.b16 %v6419
      %v6933 = vunpack.c.l.b16 %v6420
      %v6934 = vunpack.c.l.b16 %v6421
      %v6935 = vunpack.c.l.b16 %v6422
      %v6936 = vunpack.c.l.b16 %v6423
      %v6937 = vunpack.c.l.b16 %v6424
      %v6938 = vunpack.c.l.b16 %v6425
      %v6939 = vunpack.c.l.b16 %v6426
      %v6940 = vunpack.c.l.b16 %v6427
      %v6941 = vunpack.c.l.b16 %v6428
      %v6942 = vunpack.c.l.b16 %v6429
      %v6943 = vunpack.c.l.b16 %v6430
      %v6944 = vunpack.c.l.b16 %v6431
      %v6945 = vunpack.c.l.b16 %v6432
      %v6946 = vunpack.c.l.b16 %v6433
      %v6947 = vunpack.c.l.b16 %v6434
      %v6948 = vunpack.c.l.b16 %v6435
      %v6949 = vunpack.c.l.b16 %v6436
      %v6950 = vunpack.c.l.b16 %v6437
      %v6951 = vunpack.c.l.b16 %v6438
      %v6952 = vunpack.c.l.b16 %v6439
      %v6953 = vunpack.c.l.b16 %v6440
      %v6954 = vunpack.c.l.b16 %v6441
      %v6955 = vunpack.c.l.b16 %v6442
      %v6956 = vunpack.c.l.b16 %v6443
      %v6957 = vunpack.c.l.b16 %v6444
      %v6958 = vunpack.c.l.b16 %v6445
      %v6959 = vunpack.c.l.b16 %v6446
      %v6960 = vpack.c.b16 %v6705, %v6704
      %v6961 = vpack.c.b16 %v6707, %v6706
      %v6962 = vpack.c.b16 %v6709, %v6708
      %v6963 = vpack.c.b16 %v6711, %v6710
      %v6964 = vpack.c.b16 %v6713, %v6712
      %v6965 = vpack.c.b16 %v6715, %v6714
      %v6966 = vpack.c.b16 %v6717, %v6716
      %v6967 = vpack.c.b16 %v6719, %v6718
      %v6968 = vpack.c.b16 %v6721, %v6720
      %v6969 = vpack.c.b16 %v6723, %v6722
      %v6970 = vpack.c.b16 %v6725, %v6724
      %v6971 = vpack.c.b16 %v6727, %v6726
      %v6972 = vpack.c.b16 %v6729, %v6728
      %v6973 = vpack.c.b16 %v6731, %v6730
      %v6974 = vpack.c.b16 %v6733, %v6732
      %v6975 = vpack.c.b16 %v6735, %v6734
      %v6976 = vpack.c.b16 %v6737, %v6736
      %v6977 = vpack.c.b16 %v6739, %v6738
      %v6978 = vpack.c.b16 %v6741, %v6740
      %v6979 = vpack.c.b16 %v6743, %v6742
      %v6980 = vpack.c.b16 %v6745, %v6744
      %v6981 = vpack.c.b16 %v6747, %v6746
      %v6982 = vpack.c.b16 %v6749, %v6748
      %v6983 = vpack.c.b16 %v6751, %v6750
      %v6984 = vpack.c.b16 %v6753, %v6752
      %v6985 = vpack.c.b16 %v6755, %v6754
      %v6986 = vpack.c.b16 %v6757, %v6756
      %v6987 = vpack.c.b16 %v6759, %v6758
      %v6988 = vpack.c.b16 %v6761, %v6760
      %v6989 = vpack.c.b16 %v6763, %v6762
      %v6990 = vpack.c.b16 %v6765, %v6764
      %v6991 = vpack.c.b16 %v6767, %v6766
      %v6992 = vpack.c.b16 %v6769, %v6768
      %v6993 = vpack.c.b16 %v6771, %v6770
      %v6994 = vpack.c.b16 %v6773, %v6772
      %v6995 = vpack.c.b16 %v6775, %v6774
      %v6996 = vpack.c.b16 %v6777, %v6776
      %v6997 = vpack.c.b16 %v6779, %v6778
      %v6998 = vpack.c.b16 %v6781, %v6780
      %v6999 = vpack.c.b16 %v6783, %v6782
      %v7000 = vpack.c.b16 %v6785, %v6784
      %v7001 = vpack.c.b16 %v6787, %v6786
      %v7002 = vpack.c.b16 %v6789, %v6788
      %v7003 = vpack.c.b16 %v6791, %v6790
      %v7004 = vpack.c.b16 %v6793, %v6792
      %v7005 = vpack.c.b16 %v6795, %v6794
      %v7006 = vpack.c.b16 %v6797, %v6796
      %v7007 = vpack.c.b16 %v6799, %v6798
      %v7008 = vpack.c.b16 %v6801, %v6800
      %v7009 = vpack.c.b16 %v6803, %v6802
      %v7010 = vpack.c.b16 %v6805, %v6804
      %v7011 = vpack.c.b16 %v6807, %v6806
      %v7012 = vpack.c.b16 %v6809, %v6808
      %v7013 = vpack.c.b16 %v6811, %v6810
      %v7014 = vpack.c.b16 %v6813, %v6812
      %v7015 = vpack.c.b16 %v6815, %v6814
      %v7016 = vpack.c.b16 %v6817, %v6816
      %v7017 = vpack.c.b16 %v6819, %v6818
      %v7018 = vpack.c.b16 %v6821, %v6820
      %v7019 = vpack.c.b16 %v6823, %v6822
      %v7020 = vpack.c.b16 %v6825, %v6824
      %v7021 = vpack.c.b16 %v6827, %v6826
      %v7022 = vpack.c.b16 %v6829, %v6828
      %v7023 = vpack.c.b16 %v6831, %v6830
      %v7024 = vpack.c.b16 %v6833, %v6832
      %v7025 = vpack.c.b16 %v6835, %v6834
      %v7026 = vpack.c.b16 %v6837, %v6836
      %v7027 = vpack.c.b16 %v6839, %v6838
      %v7028 = vpack.c.b16 %v6841, %v6840
      %v7029 = vpack.c.b16 %v6843, %v6842
      %v7030 = vpack.c.b16 %v6845, %v6844
      %v7031 = vpack.c.b16 %v6847, %v6846
      %v7032 = vpack.c.b16 %v6849, %v6848
      %v7033 = vpack.c.b16 %v6851, %v6850
      %v7034 = vpack.c.b16 %v6853, %v6852
      %v7035 = vpack.c.b16 %v6855, %v6854
      %v7036 = vpack.c.b16 %v6857, %v6856
      %v7037 = vpack.c.b16 %v6859, %v6858
      %v7038 = vpack.c.b16 %v6861, %v6860
      %v7039 = vpack.c.b16 %v6863, %v6862
      %v7040 = vpack.c.b16 %v6865, %v6864
      %v7041 = vpack.c.b16 %v6867, %v6866
      %v7042 = vpack.c.b16 %v6869, %v6868
      %v7043 = vpack.c.b16 %v6871, %v6870
      %v7044 = vpack.c.b16 %v6873, %v6872
      %v7045 = vpack.c.b16 %v6875, %v6874
      %v7046 = vpack.c.b16 %v6877, %v6876
      %v7047 = vpack.c.b16 %v6879, %v6878
      %v7048 = vpack.c.b16 %v6881, %v6880
      %v7049 = vpack.c.b16 %v6883, %v6882
      %v7050 = vpack.c.b16 %v6885, %v6884
      %v7051 = vpack.c.b16 %v6887, %v6886
      %v7052 = vpack.c.b16 %v6889, %v6888
      %v7053 = vpack.c.b16 %v6891, %v6890
      %v7054 = vpack.c.b16 %v6893, %v6892
      %v7055 = vpack.c.b16 %v6895, %v6894
      %v7056 = vpack.c.b16 %v6897, %v6896
      %v7057 = vpack.c.b16 %v6899, %v6898
      %v7058 = vpack.c.b16 %v6901, %v6900
      %v7059 = vpack.c.b16 %v6903, %v6902
      %v7060 = vpack.c.b16 %v6905, %v6904
      %v7061 = vpack.c.b16 %v6907, %v6906
      %v7062 = vpack.c.b16 %v6909, %v6908
      %v7063 = vpack.c.b16 %v6911, %v6910
      %v7064 = vpack.c.b16 %v6913, %v6912
      %v7065 = vpack.c.b16 %v6915, %v6914
      %v7066 = vpack.c.b16 %v6917, %v6916
      %v7067 = vpack.c.b16 %v6919, %v6918
      %v7068 = vpack.c.b16 %v6921, %v6920
      %v7069 = vpack.c.b16 %v6923, %v6922
      %v7070 = vpack.c.b16 %v6925, %v6924
      %v7071 = vpack.c.b16 %v6927, %v6926
      %v7072 = vpack.c.b16 %v6929, %v6928
      %v7073 = vpack.c.b16 %v6931, %v6930
      %v7074 = vpack.c.b16 %v6933, %v6932
      %v7075 = vpack.c.b16 %v6935, %v6934
      %v7076 = vpack.c.b16 %v6937, %v6936
      %v7077 = vpack.c.b16 %v6939, %v6938
      %v7078 = vpack.c.b16 %v6941, %v6940
      %v7079 = vpack.c.b16 %v6943, %v6942
      %v7080 = vpack.c.b16 %v6945, %v6944
      %v7081 = vpack.c.b16 %v6947, %v6946
      %v7082 = vpack.c.b16 %v6949, %v6948
      %v7083 = vpack.c.b16 %v6951, %v6950
      %v7084 = vpack.c.b16 %v6953, %v6952
      %v7085 = vpack.c.b16 %v6955, %v6954
      %v7086 = vpack.c.b16 %v6957, %v6956
      %v7087 = vpack.c.b16 %v6959, %v6958
      %7216 = vmatpush.bf16.msra.mxu0 %v6967
      %7217 = vmatpush.bf16.msra.mxu0 %v6966
      %7218 = vmatpush.bf16.msra.mxu0 %v6965
      %7219 = vmatpush.bf16.msra.mxu0 %v6964
      %7220 = vmatpush.bf16.msra.mxu0 %v6963
      %7221 = vmatpush.bf16.msra.mxu0 %v6962
      %7222 = vmatpush.bf16.msra.mxu0 %v6961
      %7223 = vmatpush.bf16.msra.mxu0 %v6960
      %7224 = vmatmul.bf16.gmra.mxu0 %v6174
      %v7225 = vpop.f32.mrf.mxu0
      %v7226 = vadd.f32 %v6447, %v7225
      %v7227 = vpop.f32.mrf.mxu0
      %7228 = vdwg.mxu0
      %7229 = vmatpush.bf16.msra.mxu0 %v6975
      %7230 = vmatpush.bf16.msra.mxu0 %v6974
      %7231 = vmatpush.bf16.msra.mxu0 %v6973
      %7232 = vmatpush.bf16.msra.mxu0 %v6972
      %7233 = vmatpush.bf16.msra.mxu0 %v6971
      %7234 = vmatpush.bf16.msra.mxu0 %v6970
      %7235 = vmatpush.bf16.msra.mxu0 %v6969
      %7236 = vmatpush.bf16.msra.mxu0 %v6968
      %7237 = vmatmul.bf16.gmra.mxu0 %v6175
      %v7238 = vpop.f32.mrf.mxu0
      %v7239 = vadd.f32 %v7226, %v7238
      %v7240 = vpop.f32.mrf.mxu0
      %7241 = vdwg.mxu0
      %7242 = vmatpush.bf16.msra.mxu0 %v6983
      %7243 = vmatpush.bf16.msra.mxu0 %v6982
      %7244 = vmatpush.bf16.msra.mxu0 %v6981
      %7245 = vmatpush.bf16.msra.mxu0 %v6980
      %7246 = vmatpush.bf16.msra.mxu0 %v6979
      %7247 = vmatpush.bf16.msra.mxu0 %v6978
      %7248 = vmatpush.bf16.msra.mxu0 %v6977
      %7249 = vmatpush.bf16.msra.mxu0 %v6976
      %7250 = vmatmul.bf16.gmra.mxu0 %v6176
      %v7251 = vpop.f32.mrf.mxu0
      %v7252 = vadd.f32 %v7239, %v7251
      %v7253 = vpop.f32.mrf.mxu0
      %7254 = vdwg.mxu0
      %7255 = vmatpush.bf16.msra.mxu0 %v6991
      %7256 = vmatpush.bf16.msra.mxu0 %v6990
      %7257 = vmatpush.bf16.msra.mxu0 %v6989
      %7258 = vmatpush.bf16.msra.mxu0 %v6988
      %7259 = vmatpush.bf16.msra.mxu0 %v6987
      %7260 = vmatpush.bf16.msra.mxu0 %v6986
      %7261 = vmatpush.bf16.msra.mxu0 %v6985
      %7262 = vmatpush.bf16.msra.mxu0 %v6984
      %7263 = vmatmul.bf16.gmra.mxu0 %v6177
      %v7264 = vpop.f32.mrf.mxu0
      %v7265 = vadd.f32 %v7252, %v7264
      %v7266 = vpop.f32.mrf.mxu0
      %7267 = vdwg.mxu0
      %7268 = vmatpush.bf16.msra.mxu0 %v6999
      %7269 = vmatpush.bf16.msra.mxu0 %v6998
      %7270 = vmatpush.bf16.msra.mxu0 %v6997
      %7271 = vmatpush.bf16.msra.mxu0 %v6996
      %7272 = vmatpush.bf16.msra.mxu0 %v6995
      %7273 = vmatpush.bf16.msra.mxu0 %v6994
      %7274 = vmatpush.bf16.msra.mxu0 %v6993
      %7275 = vmatpush.bf16.msra.mxu0 %v6992
      %7276 = vmatmul.bf16.gmra.mxu0 %v6178
      %v7277 = vpop.f32.mrf.mxu0
      %v7278 = vadd.f32 %v7265, %v7277
      %v7279 = vpop.f32.mrf.mxu0
      %7280 = vdwg.mxu0
      %7281 = vmatpush.bf16.msra.mxu0 %v7007
      %7282 = vmatpush.bf16.msra.mxu0 %v7006
      %7283 = vmatpush.bf16.msra.mxu0 %v7005
      %7284 = vmatpush.bf16.msra.mxu0 %v7004
      %7285 = vmatpush.bf16.msra.mxu0 %v7003
      %7286 = vmatpush.bf16.msra.mxu0 %v7002
      %7287 = vmatpush.bf16.msra.mxu0 %v7001
      %7288 = vmatpush.bf16.msra.mxu0 %v7000
      %7289 = vmatmul.bf16.gmra.mxu0 %v6179
      %v7290 = vpop.f32.mrf.mxu0
      %v7291 = vadd.f32 %v7278, %v7290
      %v7292 = vpop.f32.mrf.mxu0
      %7293 = vdwg.mxu0
      %7294 = vmatpush.bf16.msra.mxu0 %v7015
      %7295 = vmatpush.bf16.msra.mxu0 %v7014
      %7296 = vmatpush.bf16.msra.mxu0 %v7013
      %7297 = vmatpush.bf16.msra.mxu0 %v7012
      %7298 = vmatpush.bf16.msra.mxu0 %v7011
      %7299 = vmatpush.bf16.msra.mxu0 %v7010
      %7300 = vmatpush.bf16.msra.mxu0 %v7009
      %7301 = vmatpush.bf16.msra.mxu0 %v7008
      %7302 = vmatmul.bf16.gmra.mxu0 %v6180
      %v7303 = vpop.f32.mrf.mxu0
      %v7304 = vadd.f32 %v7291, %v7303
      %v7305 = vpop.f32.mrf.mxu0
      %7306 = vdwg.mxu0
      %7307 = vmatpush.bf16.msra.mxu0 %v7023
      %7308 = vmatpush.bf16.msra.mxu0 %v7022
      %7309 = vmatpush.bf16.msra.mxu0 %v7021
      %7310 = vmatpush.bf16.msra.mxu0 %v7020
      %7311 = vmatpush.bf16.msra.mxu0 %v7019
      %7312 = vmatpush.bf16.msra.mxu0 %v7018
      %7313 = vmatpush.bf16.msra.mxu0 %v7017
      %7314 = vmatpush.bf16.msra.mxu0 %v7016
      %7315 = vmatmul.bf16.gmra.mxu0 %v6181
      %v7316 = vpop.f32.mrf.mxu0
      %v7317 = vadd.f32 %v7304, %v7316
      %v7318 = vpop.f32.mrf.mxu0
      %7319 = vdwg.mxu0
      %7320 = vmatpush.bf16.msra.mxu0 %v7031
      %7321 = vmatpush.bf16.msra.mxu0 %v7030
      %7322 = vmatpush.bf16.msra.mxu0 %v7029
      %7323 = vmatpush.bf16.msra.mxu0 %v7028
      %7324 = vmatpush.bf16.msra.mxu0 %v7027
      %7325 = vmatpush.bf16.msra.mxu0 %v7026
      %7326 = vmatpush.bf16.msra.mxu0 %v7025
      %7327 = vmatpush.bf16.msra.mxu0 %v7024
      %7328 = vmatmul.bf16.gmra.mxu0 %v6182
      %v7329 = vpop.f32.mrf.mxu0
      %v7330 = vadd.f32 %v7317, %v7329
      %v7331 = vpop.f32.mrf.mxu0
      %7332 = vdwg.mxu0
      %7333 = vmatpush.bf16.msra.mxu0 %v7039
      %7334 = vmatpush.bf16.msra.mxu0 %v7038
      %7335 = vmatpush.bf16.msra.mxu0 %v7037
      %7336 = vmatpush.bf16.msra.mxu0 %v7036
      %7337 = vmatpush.bf16.msra.mxu0 %v7035
      %7338 = vmatpush.bf16.msra.mxu0 %v7034
      %7339 = vmatpush.bf16.msra.mxu0 %v7033
      %7340 = vmatpush.bf16.msra.mxu0 %v7032
      %7341 = vmatmul.bf16.gmra.mxu0 %v6183
      %v7342 = vpop.f32.mrf.mxu0
      %v7343 = vadd.f32 %v7330, %v7342
      %v7344 = vpop.f32.mrf.mxu0
      %7345 = vdwg.mxu0
      %7346 = vmatpush.bf16.msra.mxu0 %v7047
      %7347 = vmatpush.bf16.msra.mxu0 %v7046
      %7348 = vmatpush.bf16.msra.mxu0 %v7045
      %7349 = vmatpush.bf16.msra.mxu0 %v7044
      %7350 = vmatpush.bf16.msra.mxu0 %v7043
      %7351 = vmatpush.bf16.msra.mxu0 %v7042
      %7352 = vmatpush.bf16.msra.mxu0 %v7041
      %7353 = vmatpush.bf16.msra.mxu0 %v7040
      %7354 = vmatmul.bf16.gmra.mxu0 %v6184
      %v7355 = vpop.f32.mrf.mxu0
      %v7356 = vadd.f32 %v7343, %v7355
      %v7357 = vpop.f32.mrf.mxu0
      %7358 = vdwg.mxu0
      %7359 = vmatpush.bf16.msra.mxu0 %v7055
      %7360 = vmatpush.bf16.msra.mxu0 %v7054
      %7361 = vmatpush.bf16.msra.mxu0 %v7053
      %7362 = vmatpush.bf16.msra.mxu0 %v7052
      %7363 = vmatpush.bf16.msra.mxu0 %v7051
      %7364 = vmatpush.bf16.msra.mxu0 %v7050
      %7365 = vmatpush.bf16.msra.mxu0 %v7049
      %7366 = vmatpush.bf16.msra.mxu0 %v7048
      %7367 = vmatmul.bf16.gmra.mxu0 %v6185
      %v7368 = vpop.f32.mrf.mxu0
      %v7369 = vadd.f32 %v7356, %v7368
      %v7370 = vpop.f32.mrf.mxu0
      %7371 = vdwg.mxu0
      %7372 = vmatpush.bf16.msra.mxu0 %v7063
      %7373 = vmatpush.bf16.msra.mxu0 %v7062
      %7374 = vmatpush.bf16.msra.mxu0 %v7061
      %7375 = vmatpush.bf16.msra.mxu0 %v7060
      %7376 = vmatpush.bf16.msra.mxu0 %v7059
      %7377 = vmatpush.bf16.msra.mxu0 %v7058
      %7378 = vmatpush.bf16.msra.mxu0 %v7057
      %7379 = vmatpush.bf16.msra.mxu0 %v7056
      %7380 = vmatmul.bf16.gmra.mxu0 %v6186
      %v7381 = vpop.f32.mrf.mxu0
      %v7382 = vadd.f32 %v7369, %v7381
      %v7383 = vpop.f32.mrf.mxu0
      %7384 = vdwg.mxu0
      %7385 = vmatpush.bf16.msra.mxu0 %v7071
      %7386 = vmatpush.bf16.msra.mxu0 %v7070
      %7387 = vmatpush.bf16.msra.mxu0 %v7069
      %7388 = vmatpush.bf16.msra.mxu0 %v7068
      %7389 = vmatpush.bf16.msra.mxu0 %v7067
      %7390 = vmatpush.bf16.msra.mxu0 %v7066
      %7391 = vmatpush.bf16.msra.mxu0 %v7065
      %7392 = vmatpush.bf16.msra.mxu0 %v7064
      %7393 = vmatmul.bf16.gmra.mxu0 %v6187
      %v7394 = vpop.f32.mrf.mxu0
      %v7395 = vadd.f32 %v7382, %v7394
      %v7396 = vpop.f32.mrf.mxu0
      %7397 = vdwg.mxu0
      %7398 = vmatpush.bf16.msra.mxu0 %v7079
      %7399 = vmatpush.bf16.msra.mxu0 %v7078
      %7400 = vmatpush.bf16.msra.mxu0 %v7077
      %7401 = vmatpush.bf16.msra.mxu0 %v7076
      %7402 = vmatpush.bf16.msra.mxu0 %v7075
      %7403 = vmatpush.bf16.msra.mxu0 %v7074
      %7404 = vmatpush.bf16.msra.mxu0 %v7073
      %7405 = vmatpush.bf16.msra.mxu0 %v7072
      %7406 = vmatmul.bf16.gmra.mxu0 %v6188
      %v7407 = vpop.f32.mrf.mxu0
      %v7408 = vadd.f32 %v7395, %v7407
      %v7409 = vpop.f32.mrf.mxu0
      %7410 = vdwg.mxu0
      %7411 = vmatpush.bf16.msra.mxu0 %v7087
      %7412 = vmatpush.bf16.msra.mxu0 %v7086
      %7413 = vmatpush.bf16.msra.mxu0 %v7085
      %7414 = vmatpush.bf16.msra.mxu0 %v7084
      %7415 = vmatpush.bf16.msra.mxu0 %v7083
      %7416 = vmatpush.bf16.msra.mxu0 %v7082
      %7417 = vmatpush.bf16.msra.mxu0 %v7081
      %7418 = vmatpush.bf16.msra.mxu0 %v7080
      %7419 = vmatmul.bf16.gmra.mxu0 %v6189
      %v7420 = vpop.f32.mrf.mxu0
      %v7421 = vadd.f32 %v7408, %v7420
      %v7422 = vpop.f32.mrf.mxu0
      %7423 = vdwg.mxu0
      %v7424 = vadd.f32 %v5715, %v7421
      %v7425 = vsel %vm1049, %v7424, 0.0
      %7426 = vadd.xlane.f32.xlu0 %v7425
      %v7427 = vpop.xlane.xlu0 %7426
      %v7428 = vmul.f32 %v7427, %v1481
      %v7429 = vsub.f32 %v7424, %v7428
      %v7430 = vmul.f32 %v7429, %v7429
      %v7431 = vsel %vm1049, %v7430, 0.0
      %7432 = vadd.xlane.f32.xlu0 %v7431
      %v7433 = vpop.xlane.xlu0 %7432
      %v7434 = vmul.f32 %v7433, %v1481
      %v7435 = vadd.f32 %v7434, 1e-05
      %v7436 = vrsqrt.pop %v7435
      %v7437 = vmul.f32 %v7436, %v7435
      %v7438 = vmul.f32 %v7437, %v7436
      %v7439 = vmul.f32 0.5, %v7438
      %v7440 = vsub.f32 1.5, %v7439
      %v7441 = vmul.f32 %v7436, %v7440
      %vm7442 = vweird.f32 %v7435
      %vm7443 = vweird.f32 %v7436
      %vm7444 = vmor %vm7442, %vm7443
      %v7445 = vsel %vm7444, %v7436, %v7441
      %v7446 = vmul.f32 %v7429, %v7445
      %v7447 = vperm.slane %v4838, 0
      %v7448 = vmul.f32 %v7446, %v7447
      %v7449 = vperm.slane %v4838, 1
      %v7450 = vadd.f32 %v7448, %v7449
      %v7451 = vld [vmem:[%s51] sm:$0xff]
      %v7452 = vld [vmem:[%s51 + $0x8] sm:$0xff]
      %v7453 = vld [vmem:[%s51 + $0x10] sm:$0xff]
      %v7454 = vld [vmem:[%s51 + $0x18] sm:$0xff]
      %v7455 = vld [vmem:[%s53] sm:$0x1]
      %v7457 = vperm.slane %v7455, 0
      %v7460 = vsel %vm1049, %v7450, 0
      %7462 = vmatpush.msra.mxu0 0.0
      %7463 = vmatpush.msra.mxu0 0.0
      %7464 = vmatpush.msra.mxu0 0.0
      %7465 = vmatpush.msra.mxu0 0.0
      %7466 = vmatpush.msra.mxu0 0.0
      %7467 = vmatpush.msra.mxu0 0.0
      %7468 = vmatpush.msra.mxu0 0.0
      %7469 = vmatpush.msra.mxu0 0.0
      %7470 = vmatpush.msra.mxu0 0.0
      %7471 = vmatpush.msra.mxu0 0.0
      %7472 = vmatpush.msra.mxu0 0.0
      %7473 = vmatpush.msra.mxu0 0.0
      %7474 = vmatpush.msra.mxu0 %v7454
      %7475 = vmatpush.msra.mxu0 %v7453
      %7476 = vmatpush.msra.mxu0 %v7452
      %7477 = vmatpush.msra.mxu0 %v7451
      %7478 = vmatmul.f32.gmra.mxu0 %v7460
      %v7479 = vpop.f32.mrf.mxu0
      %v7480 = vadd.f32 %v7457, %v7479
      %7481 = vdwg.mxu0
      %v7482 = vmul.f32 %v7480, 0.5
      %v7483 = vmul.f32 %v7480, 0.70710677
      %vm7484 = vcmp.lt.f32.partialorder %v7483, 0.0
      %v7485 = vsel %vm7484, -1.0, 1.0
      %v7486 = vand.u32 2147483647, %v7483
      %v7487 = vmul.f32 %v7486, 0.3275911
      %v7488 = vadd.f32 %v7487, 1.0
      %v7489 = vrcp.pop %v7488
      %v7490 = vmul.f32 %v7488, %v7489
      %v7491 = vsub.f32 1.0, %v7490
      %v7492 = vmul.f32 %v7489, %v7491
      %v7493 = vadd.f32 %v7489, %v7492
      %vm7494 = vweird.f32 %v7488
      %vm7495 = vweird.f32 %v7489
      %vm7496 = vmor %vm7494, %vm7495
      %v7497 = vsel %vm7496, %v7489, %v7493
      %v7498 = vand.u32 2147483647, %v7488
      %vm7499 = vcmp.eq.f32.partialorder %v7498, 8.507059e+37
      %v7500 = vand.u32 %v7488, 2147483648
      %v7501 = vor.u32 1.1754944e-38, %v7500
      %v7502 = vsel %vm7499, %v7501, %v7497
      %v7503 = vmul.f32 1.0, %v7502
      %v7504 = vmul.f32 %v7503, 1.0614054
      %v7505 = vadd.f32 %v7504, -1.4531521
      %v7506 = vmul.f32 %v7505, %v7503
      %v7507 = vadd.f32 %v7506, 1.4214138
      %v7508 = vmul.f32 %v7507, %v7503
      %v7509 = vadd.f32 %v7508, -0.28449672
      %v7510 = vmul.f32 %v7509, %v7503
      %v7511 = vadd.f32 %v7510, 0.2548296
      %v7512 = vmul.f32 %v7511, %v7503
      %v7513 = vsub.f32 0.0, %v7486
      %v7514 = vmul.f32 %v7513, %v7486
      %v7515 = vmul.f32 %v7514, 1.442695
      %v7516 = vpow.pop %v7515
      %v7517 = vmul.f32 %v7512, %v7516
      %v7518 = vsub.f32 1.0, %v7517
      %v7519 = vmul.f32 %v7485, %v7518
      %v7520 = vadd.f32 %v7519, 1.0
      %v7521 = vmul.f32 %v7482, %v7520
      %v7522 = vld [vmem:[%s55] sm:$0xff]
      %v7523 = vld [vmem:[%s55 + $0x8] sm:$0xff]
      %v7524 = vld [vmem:[%s55 + $0x10] sm:$0xff]
      %v7525 = vld [vmem:[%s55 + $0x18] sm:$0xff]
      %v7526 = vld [vmem:[%s55 + $0x20] sm:$0xff]
      %v7527 = vld [vmem:[%s55 + $0x28] sm:$0xff]
      %v7528 = vld [vmem:[%s55 + $0x30] sm:$0xff]
      %v7529 = vld [vmem:[%s55 + $0x38] sm:$0xff]
      %v7530 = vld [vmem:[%s57] sm:$0x3]
      %v7532 = vperm.slane %v7530, 0
      %v7533 = vperm.slane %v7530, 1
      %v7537 = vsel %vm1049, %v7521, 0
      %7539 = vmatpush.msra.mxu0 0.0
      %7540 = vmatpush.msra.mxu0 0.0
      %7541 = vmatpush.msra.mxu0 0.0
      %7542 = vmatpush.msra.mxu0 0.0
      %7543 = vmatpush.msra.mxu0 0.0
      %7544 = vmatpush.msra.mxu0 0.0
      %7545 = vmatpush.msra.mxu0 0.0
      %7546 = vmatpush.msra.mxu0 0.0
      %7547 = vmatpush.msra.mxu0 0.0
      %7548 = vmatpush.msra.mxu0 0.0
      %7549 = vmatpush.msra.mxu0 0.0
      %7550 = vmatpush.msra.mxu0 0.0
      %7551 = vmatpush.msra.mxu0 %v7528
      %7552 = vmatpush.msra.mxu0 %v7526
      %7553 = vmatpush.msra.mxu0 %v7524
      %7554 = vmatpush.msra.mxu0 %v7522
      %7555 = vmatmul.f32.gmra.mxu0 %v7537
      %v7556 = vpop.f32.mrf.mxu0
      %v7557 = vadd.f32 %v7532, %v7556
      %7558 = vdwg.mxu0
      %7559 = vmatpush.msra.mxu0 0.0
      %7560 = vmatpush.msra.mxu0 0.0
      %7561 = vmatpush.msra.mxu0 0.0
      %7562 = vmatpush.msra.mxu0 0.0
      %7563 = vmatpush.msra.mxu0 0.0
      %7564 = vmatpush.msra.mxu0 0.0
      %7565 = vmatpush.msra.mxu0 0.0
      %7566 = vmatpush.msra.mxu0 0.0
      %7567 = vmatpush.msra.mxu0 0.0
      %7568 = vmatpush.msra.mxu0 0.0
      %7569 = vmatpush.msra.mxu0 0.0
      %7570 = vmatpush.msra.mxu0 0.0
      %7571 = vmatpush.msra.mxu0 %v7529
      %7572 = vmatpush.msra.mxu0 %v7527
      %7573 = vmatpush.msra.mxu0 %v7525
      %7574 = vmatpush.msra.mxu0 %v7523
      %7575 = vmatmul.f32.gmra.mxu0 %v7537
      %v7576 = vpop.f32.mrf.mxu0
      %v7577 = vadd.f32 %v7533, %v7576
      %7578 = vdwg.mxu0
      %7579 = vst [vmem:[%s952] sm:$0xff] %v7557
      %7580 = vst [vmem:[%s952 + $0x8] sm:$0xff] %v7577
      %s7581 = scalar_lea.vmem %s51, 32
      %v7582 = vld [vmem:[%s7581] sm:$0xff]
      %v7583 = vld [vmem:[%s7581 + $0x8] sm:$0xff]
      %v7584 = vld [vmem:[%s7581 + $0x10] sm:$0xff]
      %v7585 = vld [vmem:[%s7581 + $0x18] sm:$0xff]
      %s7586 = scalar_lea.vmem %s53, 1
      %v7587 = vld [vmem:[%s7586] sm:$0x1]
      %v7589 = vperm.slane %v7587, 0
      %7591 = vmatpush.msra.mxu0 0.0
      %7592 = vmatpush.msra.mxu0 0.0
      %7593 = vmatpush.msra.mxu0 0.0
      %7594 = vmatpush.msra.mxu0 0.0
      %7595 = vmatpush.msra.mxu0 0.0
      %7596 = vmatpush.msra.mxu0 0.0
      %7597 = vmatpush.msra.mxu0 0.0
      %7598 = vmatpush.msra.mxu0 0.0
      %7599 = vmatpush.msra.mxu0 0.0
      %7600 = vmatpush.msra.mxu0 0.0
      %7601 = vmatpush.msra.mxu0 0.0
      %7602 = vmatpush.msra.mxu0 0.0
      %7603 = vmatpush.msra.mxu0 %v7585
      %7604 = vmatpush.msra.mxu0 %v7584
      %7605 = vmatpush.msra.mxu0 %v7583
      %7606 = vmatpush.msra.mxu0 %v7582
      %7607 = vmatmul.f32.gmra.mxu0 %v2697
      %v7608 = vpop.f32.mrf.mxu0
      %v7609 = vadd.f32 %v7589, %v7608
      %7610 = vdwg.mxu0
      %v7611 = vmul.f32 %v7609, 0.5
      %v7612 = vmul.f32 %v7609, 0.70710677
      %vm7613 = vcmp.lt.f32.partialorder %v7612, 0.0
      %v7614 = vsel %vm7613, -1.0, 1.0
      %v7615 = vand.u32 2147483647, %v7612
      %v7616 = vmul.f32 %v7615, 0.3275911
      %v7617 = vadd.f32 %v7616, 1.0
      %v7618 = vrcp.pop %v7617
      %v7619 = vmul.f32 %v7617, %v7618
      %v7620 = vsub.f32 1.0, %v7619
      %v7621 = vmul.f32 %v7618, %v7620
      %v7622 = vadd.f32 %v7618, %v7621
      %vm7623 = vweird.f32 %v7617
      %vm7624 = vweird.f32 %v7618
      %vm7625 = vmor %vm7623, %vm7624
      %v7626 = vsel %vm7625, %v7618, %v7622
      %v7627 = vand.u32 2147483647, %v7617
      %vm7628 = vcmp.eq.f32.partialorder %v7627, 8.507059e+37
      %v7629 = vand.u32 %v7617, 2147483648
      %v7630 = vor.u32 1.1754944e-38, %v7629
      %v7631 = vsel %vm7628, %v7630, %v7626
      %v7632 = vmul.f32 1.0, %v7631
      %v7633 = vmul.f32 %v7632, 1.0614054
      %v7634 = vadd.f32 %v7633, -1.4531521
      %v7635 = vmul.f32 %v7634, %v7632
      %v7636 = vadd.f32 %v7635, 1.4214138
      %v7637 = vmul.f32 %v7636, %v7632
      %v7638 = vadd.f32 %v7637, -0.28449672
      %v7639 = vmul.f32 %v7638, %v7632
      %v7640 = vadd.f32 %v7639, 0.2548296
      %v7641 = vmul.f32 %v7640, %v7632
      %v7642 = vsub.f32 0.0, %v7615
      %v7643 = vmul.f32 %v7642, %v7615
      %v7644 = vmul.f32 %v7643, 1.442695
      %v7645 = vpow.pop %v7644
      %v7646 = vmul.f32 %v7641, %v7645
      %v7647 = vsub.f32 1.0, %v7646
      %v7648 = vmul.f32 %v7614, %v7647
      %v7649 = vadd.f32 %v7648, 1.0
      %v7650 = vmul.f32 %v7611, %v7649
      %s7651 = scalar_lea.vmem %s55, 64
      %v7652 = vld [vmem:[%s7651] sm:$0xff]
      %v7653 = vld [vmem:[%s7651 + $0x8] sm:$0xff]
      %v7654 = vld [vmem:[%s7651 + $0x10] sm:$0xff]
      %v7655 = vld [vmem:[%s7651 + $0x18] sm:$0xff]
      %v7656 = vld [vmem:[%s7651 + $0x20] sm:$0xff]
      %v7657 = vld [vmem:[%s7651 + $0x28] sm:$0xff]
      %v7658 = vld [vmem:[%s7651 + $0x30] sm:$0xff]
      %v7659 = vld [vmem:[%s7651 + $0x38] sm:$0xff]
      %s7660 = scalar_lea.vmem %s57, 2
      %v7661 = vld [vmem:[%s7660] sm:$0x3]
      %v7663 = vperm.slane %v7661, 0
      %v7664 = vperm.slane %v7661, 1
      %v7668 = vsel %vm1049, %v7650, 0
      %7670 = vmatpush.msra.mxu0 0.0
      %7671 = vmatpush.msra.mxu0 0.0
      %7672 = vmatpush.msra.mxu0 0.0
      %7673 = vmatpush.msra.mxu0 0.0
      %7674 = vmatpush.msra.mxu0 0.0
      %7675 = vmatpush.msra.mxu0 0.0
      %7676 = vmatpush.msra.mxu0 0.0
      %7677 = vmatpush.msra.mxu0 0.0
      %7678 = vmatpush.msra.mxu0 0.0
      %7679 = vmatpush.msra.mxu0 0.0
      %7680 = vmatpush.msra.mxu0 0.0
      %7681 = vmatpush.msra.mxu0 0.0
      %7682 = vmatpush.msra.mxu0 %v7658
      %7683 = vmatpush.msra.mxu0 %v7656
      %7684 = vmatpush.msra.mxu0 %v7654
      %7685 = vmatpush.msra.mxu0 %v7652
      %7686 = vmatmul.f32.gmra.mxu0 %v7668
      %v7687 = vpop.f32.mrf.mxu0
      %v7688 = vadd.f32 %v7663, %v7687
      %7689 = vdwg.mxu0
      %7690 = vmatpush.msra.mxu0 0.0
      %7691 = vmatpush.msra.mxu0 0.0
      %7692 = vmatpush.msra.mxu0 0.0
      %7693 = vmatpush.msra.mxu0 0.0
      %7694 = vmatpush.msra.mxu0 0.0
      %7695 = vmatpush.msra.mxu0 0.0
      %7696 = vmatpush.msra.mxu0 0.0
      %7697 = vmatpush.msra.mxu0 0.0
      %7698 = vmatpush.msra.mxu0 0.0
      %7699 = vmatpush.msra.mxu0 0.0
      %7700 = vmatpush.msra.mxu0 0.0
      %7701 = vmatpush.msra.mxu0 0.0
      %7702 = vmatpush.msra.mxu0 %v7659
      %7703 = vmatpush.msra.mxu0 %v7657
      %7704 = vmatpush.msra.mxu0 %v7655
      %7705 = vmatpush.msra.mxu0 %v7653
      %7706 = vmatmul.f32.gmra.mxu0 %v7668
      %v7707 = vpop.f32.mrf.mxu0
      %v7708 = vadd.f32 %v7664, %v7707
      %7709 = vdwg.mxu0
      %v7710 = vadd.s32 %v963, 128
      %vm7711 = vcmp.lt.s32.totalorder %v963, 87
      %vm7712 = vcmp.lt.s32.totalorder %v7710, 87
      %v7713 = vtanh.pop %v7688
      %v7714 = vtanh.pop %v7708
      %v7715 = vmul.f32 %v7713, 500.0
      %v7716 = vmul.f32 %v7714, 500.0
      %v7717 = vadd.f32 %v7715, 510.0
      %v7718 = vadd.f32 %v7716, 510.0
      %v7719 = vsel %vm7711, %v7717, %v7688
      %v7720 = vsel %vm7712, %v7718, %v7708
      %7721 = vst [vmem:[%s957] sm:$0xff] %v7719
      %7722 = vst [vmem:[%s957 + $0x8] sm:$0xff] %v7720
      %p7723 = scmp.lt.s32.totalorder %s73, 1
      %s7724 = scalar_select %p7723, %s73, 1
      %s7725 = smul.addr %s7724, 2
      %s7726 = smul.addr %s7725, 8
      %s7727 = scalar_lea.vmem %s59, %s7726
      %p7728 = scmp.lt.s32.totalorder %s73, 1
      %s7729 = scalar_select %p7728, %s73, 1
      %s7730 = smul.addr %s7729, 2
      %s7731 = smul.addr %s7730, 8
      %s7732 = scalar_lea.vmem %s61, %s7731
      // Predicated region
      $region137: #{_lambda_.1} parent=135 // pred_check
        %p7733 = pneg %p710
      $region138: #{_lambda_.1} parent=135 // pred_check_branch
        %7735 = sbr.rel (%p7733) target = $region140
      $region139: #{_lambda_.1} parent=135 // pred_region
        _
      $region140: #{_lambda_.1} parent=135 // pred_fallthru
        _
      // Predicated region
      $region141: #{_lambda_.1} parent=135 // pred_check
        %p7736 = pneg %p736
      $region142: #{_lambda_.1} parent=135 // pred_check_branch
        %7738 = sbr.rel (%p7736) target = $region144
      $region143: #{_lambda_.1} parent=135 // pred_region
        _
      $region144: #{_lambda_.1} parent=135 // pred_fallthru
        _
    $region136: #{_lambda_.1} parent=5 // pred_fallthru
      _
    %p7739 = scmp.le.s32.totalorder 2, %s68
    // Predicated region
    $region145: #{_lambda_.1} parent=5 // pred_check
      %p7740 = pneg %p7739
    $region146: #{_lambda_.1} parent=5 // pred_check_branch
      %7742 = sbr.rel (%p7740) target = $region148
    $region147: #{_lambda_.1} parent=5 // pred_region
      %s7743 = ssub.s32 %s68, 2
      // Predicated region
      $region149: #{_lambda_.1} parent=147 // pred_check
        %p7744 = pneg %p716
      $region150: #{_lambda_.1} parent=147 // pred_check_branch
        %7746 = sbr.rel (%p7744) target = $region152
      $region151: #{_lambda_.1} parent=147 // pred_region
        %p7747 = scmp.lt.s32.totalorder %s74, 1
        %s7748 = scalar_select %p7747, %s74, 1
        %s7749 = smul.addr %s7748, 2
        %s7750 = smul.addr %s7749, 8
        %s7751 = scalar_lea.vmem %s59, %s7750
      $region152: #{_lambda_.1} parent=147 // pred_fallthru
        _
      // Predicated region
      $region153: #{_lambda_.1} parent=147 // pred_check
        %p7752 = pneg %p742
      $region154: #{_lambda_.1} parent=147 // pred_check_branch
        %7754 = sbr.rel (%p7752) target = $region156
      $region155: #{_lambda_.1} parent=147 // pred_region
        %p7755 = scmp.lt.s32.totalorder %s74, 1
        %s7756 = scalar_select %p7755, %s74, 1
        %s7757 = smul.addr %s7756, 2
        %s7758 = smul.addr %s7757, 8
        %s7759 = scalar_lea.vmem %s61, %s7758
      $region156: #{_lambda_.1} parent=147 // pred_fallthru
        _
    $region148: #{_lambda_.1} parent=5 // pred_fallthru
      _
  $region6: #{_lambda_.1} parent=0 // loop_footer
    %s72 = sadd.s32 1, %s68
  $region7: #{_lambda_.1} parent=0 // loop_footer_branch
    %67 = sbr.rel target = $region3
  $region8: #{_lambda_.1} parent=0 // loop_exit
    _

</llo_original>
